<compile_context>
chip_gen: v6e
topology: v6e:2x2x1
jax: 0.10.0
libtpu: 0.0.40
codegen_flags: <defaults>
</compile_context>

<pallas_src>
import functools
import math

import jax
import jax.numpy as jnp
import numpy as np
from jax.experimental import pallas as pl
from jax.experimental.pallas import tpu as pltpu


# ---------------------------------------------------------------------------
# Fused Pallas kernel: one grid step = one batch element.
# ---------------------------------------------------------------------------
def _mha_fused_kernel(q_ref, k_ref, v_ref, wq_ref, wk_ref, wv_ref,
                      wfc_ref, bfc_ref, o_ref, acc_ref,
                      *, n_head, d_k, d_v, rows, seq, mxu_dtype):
    """
    q_ref/k_ref/v_ref : (1, rows*seq, dim)   channels-last activations, row = (d1, d2)
    wq_ref/wk_ref/wv_ref : (dim, n_head*d)   pre-transposed weights (scale folded into wq)
    wfc_ref : (n_head*d_v, dim_q), bfc_ref : (1, dim_q)
    o_ref   : (1, rows*seq, dim_q)
    acc_ref : (rows*seq, n_head*d_v) f32 VMEM scratch (head-combined attention output)
    """
    def mx(x):
        # Optional bf16 cast for MXU operands only; accumulation stays f32.
        return x if mxu_dtype is None else x.astype(mxu_dtype)

    q = q_ref[0]
    k = k_ref[0]
    v = v_ref[0]

    # Fused Q/K/V projections (all inside the same kernel, f32 accumulation on MXU).
    qp = jnp.dot(mx(q), mx(wq_ref[...]), preferred_element_type=jnp.float32)
    kp = jnp.dot(mx(k), mx(wk_ref[...]), preferred_element_type=jnp.float32)
    vp = jnp.dot(mx(v), mx(wv_ref[...]), preferred_element_type=jnp.float32)

    # Axial attention: batch = non-axial rows (per batch element), sequence = axial dim.
    for h in range(n_head):
        qh = qp[:, h * d_k:(h + 1) * d_k].reshape(rows, seq, d_k)
        kh = kp[:, h * d_k:(h + 1) * d_k].reshape(rows, seq, d_k)
        vh = vp[:, h * d_v:(h + 1) * d_v].reshape(rows, seq, d_v)

        s = jnp.einsum("bqd,bkd->bqk", mx(qh), mx(kh),
                       preferred_element_type=jnp.float32)
        # numerically stable softmax, all f32 (v5e-safe); divide -> EUP reciprocal
        s = s - jnp.max(s, axis=-1, keepdims=True)
        p = jnp.exp(s)
        p = p * pl.reciprocal(jnp.sum(p, axis=-1, keepdims=True), approx=True)
        # TODO(synk): attn_dropout / attention_mask / head_mask not implemented (eval mode, no masks).
        oh = jnp.einsum("bqk,bkd->bqd", mx(p), mx(vh),
                        preferred_element_type=jnp.float32)
        acc_ref[:, h * d_v:(h + 1) * d_v] = oh.reshape(rows * seq, d_v)

    # Output projection + bias, stored lane-dense over the full feature width.
    y = jnp.dot(mx(acc_ref[...]), mx(wfc_ref[...]),
                preferred_element_type=jnp.float32) + bfc_ref[...]
    o_ref[0] = y.astype(o_ref.dtype)


# ---------------------------------------------------------------------------
# One-time parameter preparation (outside the hot path).
# ---------------------------------------------------------------------------
def prepare_params(params, n_head):
    """Transpose torch-layout [out, in] weights to [in, out] once and fold the
    1/sqrt(d_k) attention scale into the q projection weight."""
    d_k = params["w_qs"].shape[0] // n_head
    scale = 1.0 / math.sqrt(d_k)
    return {
        "wq_t": jnp.asarray(params["w_qs"]).T * scale,   # [dim_q, n_head*d_k]
        "wk_t": jnp.asarray(params["w_ks"]).T,           # [dim_kv, n_head*d_k]
        "wv_t": jnp.asarray(params["w_vs"]).T,           # [dim_kv, n_head*d_v]
        "wfc_t": jnp.asarray(params["fc_w"]).T,          # [n_head*d_v, dim_q]
        "fc_b": jnp.asarray(params["fc_b"]).reshape(1, -1),
    }


# ---------------------------------------------------------------------------
# Forward wrapper (glue: free reshapes / axis moves only).
# ---------------------------------------------------------------------------
@functools.partial(jax.jit, static_argnames=("n_head", "axial_dim", "mxu_dtype"))
def multi_head_attention_forward(q, k, v, prepared, *, n_head, axial_dim,
                                 mxu_dtype=None):
    """q: [b, d1, ..., dn, dim_q], k/v: [b, d1, ..., dn, dim_kv]; non-causal AxialAttention."""
    b = q.shape[0]
    n_spatial = q.ndim - 2
    dim_out = prepared["wfc_t"].shape[-1]
    n_head_dk = prepared["wq_t"].shape[-1]
    n_head_dv = prepared["wv_t"].shape[-1]
    d_k = n_head_dk // n_head
    d_v = n_head_dv // n_head

    # Projection is per-position, so moving the axial spatial dim to the last
    # spatial position before projecting is equivalent to the original order.
    src = 1 + axial_dim
    dst = n_spatial
    if src != dst:
        q = jnp.moveaxis(q, src, dst)
        k = jnp.moveaxis(k, src, dst)
        v = jnp.moveaxis(v, src, dst)
    sp = q.shape[1:-1]
    seq = sp[-1]
    rows = int(np.prod(sp[:-1])) if len(sp) > 1 else 1
    R = rows * seq

    qf = q.reshape(b, R, q.shape[-1])
    kf = k.reshape(b, R, k.shape[-1])
    vf = v.reshape(b, R, v.shape[-1])

    kernel = functools.partial(
        _mha_fused_kernel, n_head=n_head, d_k=d_k, d_v=d_v,
        rows=rows, seq=seq, mxu_dtype=mxu_dtype)

    out = pl.pallas_call(
        kernel,
        out_shape=jax.ShapeDtypeStruct((b, R, dim_out), q.dtype),
        grid_spec=pltpu.PrefetchScalarGridSpec(
            num_scalar_prefetch=0,
            grid=(b,),
            in_specs=[
                pl.BlockSpec((1, R, qf.shape[-1]), lambda i: (i, 0, 0)),
                pl.BlockSpec((1, R, kf.shape[-1]), lambda i: (i, 0, 0)),
                pl.BlockSpec((1, R, vf.shape[-1]), lambda i: (i, 0, 0)),
                pl.BlockSpec(prepared["wq_t"].shape, lambda i: (0, 0)),
                pl.BlockSpec(prepared["wk_t"].shape, lambda i: (0, 0)),
                pl.BlockSpec(prepared["wv_t"].shape, lambda i: (0, 0)),
                pl.BlockSpec(prepared["wfc_t"].shape, lambda i: (0, 0)),
                pl.BlockSpec(prepared["fc_b"].shape, lambda i: (0, 0)),
            ],
            out_specs=pl.BlockSpec((1, R, dim_out), lambda i: (i, 0, 0)),
            scratch_shapes=[pltpu.VMEM((R, n_head_dv), jnp.float32)],
        ),
        compiler_params=pltpu.CompilerParams(
            # batch axis is independent end-to-end -> both v7x TensorCores used
            dimension_semantics=("parallel",),
        ),
    )(qf, kf, vf, prepared["wq_t"], prepared["wk_t"], prepared["wv_t"],
      prepared["wfc_t"], prepared["fc_b"])

    out = out.reshape(b, *sp, dim_out)
    if src != dst:
        out = jnp.moveaxis(out, dst, src)
    return out


# ---------------------------------------------------------------------------
# Pure-JAX reference (mirrors the PyTorch module) for correctness checking.
# ---------------------------------------------------------------------------
def _shift_dim(x, src, dst):
    return jnp.moveaxis(x, src, dst)


def _split_multihead(x, n_head):
    x = x.reshape(*x.shape[:-1], n_head, x.shape[-1] // n_head)
    return _shift_dim(x, -2, 1)


def _combine_multihead(x):
    x = _shift_dim(x, 1, -2)
    return x.reshape(*x.shape[:-2], -1)


def _reference_forward(q, k, v, params, n_head, axial_dim):
    def proj(x, w, b=None):
        y = jnp.einsum("...k,nk->...n", x, w)
        return y + b if b is not None else y

    qh = _split_multihead(proj(q, params["w_qs"]), n_head)
    kh = _split_multihead(proj(k, params["w_ks"]), n_head)
    vh = _split_multihead(proj(v, params["w_vs"]), n_head)
    ax = axial_dim + 2
    qs, ks, vs = (_shift_dim(t, ax, -2) for t in (qh, kh, vh))
    attn = jnp.einsum("...qd,...kd->...qk", qs, ks) / jnp.sqrt(jnp.float32(qs.shape[-1]))
    attn = jax.nn.softmax(attn, axis=-1)
    out = jnp.einsum("...qk,...kd->...qd", attn, vs)
    out = _shift_dim(out, -2, ax)
    a = _combine_multihead(out)
    return proj(a, params["fc_w"], params["fc_b"])


# ---------------------------------------------------------------------------
if __name__ == "__main__":
    # MultiHeadAttention(shape=(8, 8), dim_q=32, dim_kv=32, n_head=4, n_layer=1,
    #                    causal=False, attn_module=AxialAttention(axial_dim=1))
    b = 2
    shape = (8, 8)
    dim_q, dim_kv = 32, 32
    n_head, n_layer = 4, 1
    axial_dim = 1
    d_k = dim_q // n_head
    d_v = dim_kv // n_head

    key = jax.random.PRNGKey(0)
    k_qs, k_ks, k_vs, k_fw, k_fb, k_q, k_k, k_v = jax.random.split(key, 8)

    # Weights follow the PyTorch __init__; torch layout [out_features, in_features].
    params = {
        "w_qs": jax.random.normal(k_qs, (n_head * d_k, dim_q), jnp.float32)
        / jnp.sqrt(jnp.float32(dim_q)),
        "w_ks": jax.random.normal(k_ks, (n_head * d_k, dim_kv), jnp.float32)
        / jnp.sqrt(jnp.float32(dim_kv)),
        "w_vs": jax.random.normal(k_vs, (n_head * d_v, dim_kv), jnp.float32)
        / jnp.sqrt(jnp.float32(dim_kv)),
        "fc_w": jax.random.normal(k_fw, (dim_q, n_head * d_v), jnp.float32)
        / jnp.sqrt(jnp.float32(dim_q * n_layer)),
        "fc_b": jax.random.uniform(
            k_fb, (dim_q,), jnp.float32,
            minval=-1.0 / np.sqrt(n_head * d_v), maxval=1.0 / np.sqrt(n_head * d_v),
        ),
    }
    prepared = prepare_params(params, n_head)   # one-time weight prep (outside hot path)

    q = jax.random.normal(k_q, (b, *shape, dim_q), jnp.float32)
    k = jax.random.normal(k_k, (b, *shape, dim_kv), jnp.float32)
    v = jax.random.normal(k_v, (b, *shape, dim_kv), jnp.float32)

    ref = _reference_forward(q, k, v, params, n_head, axial_dim)

    # f32 MXU operands (default; exact path except approx EUP reciprocal in softmax)
    out = multi_head_attention_forward(q, k, v, prepared,
                                       n_head=n_head, axial_dim=axial_dim)
    out = jax.block_until_ready(out)
    assert out.shape == (b, *shape, dim_q)
    np.testing.assert_allclose(np.asarray(out), np.asarray(ref), rtol=1e-2, atol=1e-2)

    # bf16 MXU operands (v6e/v7x fast path), f32 accumulation + f32 softmax math.
    out_bf16 = multi_head_attention_forward(q, k, v, prepared,
                                            n_head=n_head, axial_dim=axial_dim,
                                            mxu_dtype=jnp.bfloat16)
    out_bf16 = jax.block_until_ready(out_bf16)
    np.testing.assert_allclose(np.asarray(out_bf16), np.asarray(ref), rtol=5e-2, atol=5e-2)

    print("KERNEL_OK")
</pallas_src>

<mosaic_0001>
module attributes {stable_mosaic.version = 11 : i64} {
  func.func @_mha_fused_kernel(%arg0: i32, %arg1: memref<1x64x32xf32, #tpu.memory_space<vmem>>, %arg2: memref<1x64x32xf32, #tpu.memory_space<vmem>>, %arg3: memref<1x64x32xf32, #tpu.memory_space<vmem>>, %arg4: memref<32x32xf32, #tpu.memory_space<vmem>>, %arg5: memref<32x32xf32, #tpu.memory_space<vmem>>, %arg6: memref<32x32xf32, #tpu.memory_space<vmem>>, %arg7: memref<32x32xf32, #tpu.memory_space<vmem>>, %arg8: memref<1x32xf32, #tpu.memory_space<vmem>>, %arg9: memref<1x64x32xf32, #tpu.memory_space<vmem>>, %arg10: memref<64x32xf32, #tpu.memory_space<vmem>>) attributes {dimension_semantics = [#tpu.dimension_semantics<parallel>], iteration_bounds = array<i64: 2>, scalar_prefetch = 0 : i64, scratch_operands = 1 : i64, tpu.core_type = #tpu.core_type<tc>, window_params = [{transform_indices = @transform_0, window_bounds = array<i64: 1, 64, 32>}, {transform_indices = @transform_1, window_bounds = array<i64: 1, 64, 32>}, {transform_indices = @transform_2, window_bounds = array<i64: 1, 64, 32>}, {pipeline_mode = #tpu.pipeline_mode<synchronous>, transform_indices = @transform_3, window_bounds = array<i64: 32, 32>}, {pipeline_mode = #tpu.pipeline_mode<synchronous>, transform_indices = @transform_4, window_bounds = array<i64: 32, 32>}, {pipeline_mode = #tpu.pipeline_mode<synchronous>, transform_indices = @transform_5, window_bounds = array<i64: 32, 32>}, {pipeline_mode = #tpu.pipeline_mode<synchronous>, transform_indices = @transform_6, window_bounds = array<i64: 32, 32>}, {pipeline_mode = #tpu.pipeline_mode<synchronous>, transform_indices = @transform_7, window_bounds = array<i64: 1, 32>}, {transform_indices = @transform_8, window_bounds = array<i64: 1, 64, 32>}]} {
    %c0 = arith.constant 0 : index
    %c0_0 = arith.constant 0 : index
    %c0_1 = arith.constant 0 : index
    %0 = vector.load %arg1[%c0, %c0_0, %c0_1] : memref<1x64x32xf32, #tpu.memory_space<vmem>>, vector<1x64x32xf32>
    %1 = vector.shape_cast %0 : vector<1x64x32xf32> to vector<64x32xf32>
    %c0_2 = arith.constant 0 : index
    %c0_3 = arith.constant 0 : index
    %c0_4 = arith.constant 0 : index
    %2 = vector.load %arg2[%c0_2, %c0_3, %c0_4] : memref<1x64x32xf32, #tpu.memory_space<vmem>>, vector<1x64x32xf32>
    %3 = vector.shape_cast %2 : vector<1x64x32xf32> to vector<64x32xf32>
    %c0_5 = arith.constant 0 : index
    %c0_6 = arith.constant 0 : index
    %c0_7 = arith.constant 0 : index
    %4 = vector.load %arg3[%c0_5, %c0_6, %c0_7] : memref<1x64x32xf32, #tpu.memory_space<vmem>>, vector<1x64x32xf32>
    %5 = vector.shape_cast %4 : vector<1x64x32xf32> to vector<64x32xf32>
    %c0_8 = arith.constant 0 : index
    %c0_9 = arith.constant 0 : index
    %6 = vector.load %arg4[%c0_8, %c0_9] : memref<32x32xf32, #tpu.memory_space<vmem>>, vector<32x32xf32>
    %cst = arith.constant dense<0.000000e+00> : vector<64x32xf32>
    %7 = tpu.matmul %1, %6, %cst {dimension_numbers = #tpu.dot_dimension_numbers<[1], [0], [0], [1], [0, 0, 1, 1], [], []>} : vector<64x32xf32>, vector<32x32xf32>, vector<64x32xf32> -> vector<64x32xf32>
    %c0_10 = arith.constant 0 : index
    %c0_11 = arith.constant 0 : index
    %8 = vector.load %arg5[%c0_10, %c0_11] : memref<32x32xf32, #tpu.memory_space<vmem>>, vector<32x32xf32>
    %cst_12 = arith.constant dense<0.000000e+00> : vector<64x32xf32>
    %9 = tpu.matmul %3, %8, %cst_12 {dimension_numbers = #tpu.dot_dimension_numbers<[1], [0], [0], [1], [0, 0, 1, 1], [], []>} : vector<64x32xf32>, vector<32x32xf32>, vector<64x32xf32> -> vector<64x32xf32>
    %c0_13 = arith.constant 0 : index
    %c0_14 = arith.constant 0 : index
    %10 = vector.load %arg6[%c0_13, %c0_14] : memref<32x32xf32, #tpu.memory_space<vmem>>, vector<32x32xf32>
    %cst_15 = arith.constant dense<0.000000e+00> : vector<64x32xf32>
    %11 = tpu.matmul %5, %10, %cst_15 {dimension_numbers = #tpu.dot_dimension_numbers<[1], [0], [0], [1], [0, 0, 1, 1], [], []>} : vector<64x32xf32>, vector<32x32xf32>, vector<64x32xf32> -> vector<64x32xf32>
    %12 = vector.extract_strided_slice %7 {offsets = [0, 0], sizes = [64, 8], strides = [1, 1]} : vector<64x32xf32> to vector<64x8xf32>
    %13 = vector.shape_cast %12 : vector<64x8xf32> to vector<8x8x8xf32>
    %14 = vector.extract_strided_slice %9 {offsets = [0, 0], sizes = [64, 8], strides = [1, 1]} : vector<64x32xf32> to vector<64x8xf32>
    %15 = vector.shape_cast %14 : vector<64x8xf32> to vector<8x8x8xf32>
    %16 = vector.extract_strided_slice %11 {offsets = [0, 0], sizes = [64, 8], strides = [1, 1]} : vector<64x32xf32> to vector<64x8xf32>
    %17 = vector.shape_cast %16 : vector<64x8xf32> to vector<8x8x8xf32>
    "tpu.trace_start"() <{level = 10 : i32, message = "bqd,bkd->bqk"}> : () -> ()
    %cst_16 = arith.constant dense<0.000000e+00> : vector<8x8x8xf32>
    %18 = tpu.matmul %13, %15, %cst_16 {dimension_numbers = #tpu.dot_dimension_numbers<[2], [2], [1], [1], [0, 0, 0, 1, 1, 1], [0], [0]>} : vector<8x8x8xf32>, vector<8x8x8xf32>, vector<8x8x8xf32> -> vector<8x8x8xf32>
    "tpu.trace_stop"() : () -> ()
    %cst_17 = arith.constant dense<0xFF800000> : vector<8x8xf32>
    %19 = vector.multi_reduction <maximumf>, %18, %cst_17 [2] : vector<8x8x8xf32> to vector<8x8xf32>
    %20 = vector.shape_cast %19 : vector<8x8xf32> to vector<8x8x1xf32>
    %21 = vector.broadcast %20 : vector<8x8x1xf32> to vector<8x8x8xf32>
    %22 = arith.subf %18, %21 : vector<8x8x8xf32>
    %23 = math.exp %22 : vector<8x8x8xf32>
    %cst_18 = arith.constant dense<0.000000e+00> : vector<8x8xf32>
    %24 = vector.multi_reduction <add>, %23, %cst_18 [2] : vector<8x8x8xf32> to vector<8x8xf32>
    %25 = vector.shape_cast %24 : vector<8x8xf32> to vector<8x8x1xf32>
    %26 = tpu.reciprocal %25 {approx = true} : vector<8x8x1xf32> -> vector<8x8x1xf32>
    %27 = vector.broadcast %26 : vector<8x8x1xf32> to vector<8x8x8xf32>
    %28 = arith.mulf %23, %27 : vector<8x8x8xf32>
    "tpu.trace_start"() <{level = 10 : i32, message = "bqk,bkd->bqd"}> : () -> ()
    %cst_19 = arith.constant dense<0.000000e+00> : vector<8x8x8xf32>
    %29 = tpu.matmul %28, %17, %cst_19 {dimension_numbers = #tpu.dot_dimension_numbers<[2], [1], [1], [2], [0, 0, 0, 1, 1, 2], [0], [0]>} : vector<8x8x8xf32>, vector<8x8x8xf32>, vector<8x8x8xf32> -> vector<8x8x8xf32>
    "tpu.trace_stop"() : () -> ()
    %30 = vector.shape_cast %29 : vector<8x8x8xf32> to vector<64x8xf32>
    %c0_20 = arith.constant 0 : index
    %c0_21 = arith.constant 0 : index
    %31 = vector.load %arg10[%c0_20, %c0_21] : memref<64x32xf32, #tpu.memory_space<vmem>>, vector<64x8xf32>
    tpu.vector_store %arg10[%c0_20, %c0_21], %30 {strides = array<i32>} : memref<64x32xf32, #tpu.memory_space<vmem>>, vector<64x8xf32>,
    %32 = vector.extract_strided_slice %7 {offsets = [0, 8], sizes = [64, 8], strides = [1, 1]} : vector<64x32xf32> to vector<64x8xf32>
    %33 = vector.shape_cast %32 : vector<64x8xf32> to vector<8x8x8xf32>
    %34 = vector.extract_strided_slice %9 {offsets = [0, 8], sizes = [64, 8], strides = [1, 1]} : vector<64x32xf32> to vector<64x8xf32>
    %35 = vector.shape_cast %34 : vector<64x8xf32> to vector<8x8x8xf32>
    %36 = vector.extract_strided_slice %11 {offsets = [0, 8], sizes = [64, 8], strides = [1, 1]} : vector<64x32xf32> to vector<64x8xf32>
    %37 = vector.shape_cast %36 : vector<64x8xf32> to vector<8x8x8xf32>
    "tpu.trace_start"() <{level = 10 : i32, message = "bqd,bkd->bqk"}> : () -> ()
    %cst_22 = arith.constant dense<0.000000e+00> : vector<8x8x8xf32>
    %38 = tpu.matmul %33, %35, %cst_22 {dimension_numbers = #tpu.dot_dimension_numbers<[2], [2], [1], [1], [0, 0, 0, 1, 1, 1], [0], [0]>} : vector<8x8x8xf32>, vector<8x8x8xf32>, vector<8x8x8xf32> -> vector<8x8x8xf32>
    "tpu.trace_stop"() : () -> ()
    %cst_23 = arith.constant dense<0xFF800000> : vector<8x8xf32>
    %39 = vector.multi_reduction <maximumf>, %38, %cst_23 [2] : vector<8x8x8xf32> to vector<8x8xf32>
    %40 = vector.shape_cast %39 : vector<8x8xf32> to vector<8x8x1xf32>
    %41 = vector.broadcast %40 : vector<8x8x1xf32> to vector<8x8x8xf32>
    %42 = arith.subf %38, %41 : vector<8x8x8xf32>
    %43 = math.exp %42 : vector<8x8x8xf32>
    %cst_24 = arith.constant dense<0.000000e+00> : vector<8x8xf32>
    %44 = vector.multi_reduction <add>, %43, %cst_24 [2] : vector<8x8x8xf32> to vector<8x8xf32>
    %45 = vector.shape_cast %44 : vector<8x8xf32> to vector<8x8x1xf32>
    %46 = tpu.reciprocal %45 {approx = true} : vector<8x8x1xf32> -> vector<8x8x1xf32>
    %47 = vector.broadcast %46 : vector<8x8x1xf32> to vector<8x8x8xf32>
    %48 = arith.mulf %43, %47 : vector<8x8x8xf32>
    "tpu.trace_start"() <{level = 10 : i32, message = "bqk,bkd->bqd"}> : () -> ()
    %cst_25 = arith.constant dense<0.000000e+00> : vector<8x8x8xf32>
    %49 = tpu.matmul %48, %37, %cst_25 {dimension_numbers = #tpu.dot_dimension_numbers<[2], [1], [1], [2], [0, 0, 0, 1, 1, 2], [0], [0]>} : vector<8x8x8xf32>, vector<8x8x8xf32>, vector<8x8x8xf32> -> vector<8x8x8xf32>
    "tpu.trace_stop"() : () -> ()
    %50 = vector.shape_cast %49 : vector<8x8x8xf32> to vector<64x8xf32>
    %c0_26 = arith.constant 0 : index
    %c8 = arith.constant 8 : index
    %51 = vector.load %arg10[%c0_26, %c8] : memref<64x32xf32, #tpu.memory_space<vmem>>, vector<64x8xf32>
    tpu.vector_store %arg10[%c0_26, %c8], %50 {strides = array<i32>} : memref<64x32xf32, #tpu.memory_space<vmem>>, vector<64x8xf32>,
    %52 = vector.extract_strided_slice %7 {offsets = [0, 16], sizes = [64, 8], strides = [1, 1]} : vector<64x32xf32> to vector<64x8xf32>
    %53 = vector.shape_cast %52 : vector<64x8xf32> to vector<8x8x8xf32>
    %54 = vector.extract_strided_slice %9 {offsets = [0, 16], sizes = [64, 8], strides = [1, 1]} : vector<64x32xf32> to vector<64x8xf32>
    %55 = vector.shape_cast %54 : vector<64x8xf32> to vector<8x8x8xf32>
    %56 = vector.extract_strided_slice %11 {offsets = [0, 16], sizes = [64, 8], strides = [1, 1]} : vector<64x32xf32> to vector<64x8xf32>
    %57 = vector.shape_cast %56 : vector<64x8xf32> to vector<8x8x8xf32>
    "tpu.trace_start"() <{level = 10 : i32, message = "bqd,bkd->bqk"}> : () -> ()
    %cst_27 = arith.constant dense<0.000000e+00> : vector<8x8x8xf32>
    %58 = tpu.matmul %53, %55, %cst_27 {dimension_numbers = #tpu.dot_dimension_numbers<[2], [2], [1], [1], [0, 0, 0, 1, 1, 1], [0], [0]>} : vector<8x8x8xf32>, vector<8x8x8xf32>, vector<8x8x8xf32> -> vector<8x8x8xf32>
    "tpu.trace_stop"() : () -> ()
    %cst_28 = arith.constant dense<0xFF800000> : vector<8x8xf32>
    %59 = vector.multi_reduction <maximumf>, %58, %cst_28 [2] : vector<8x8x8xf32> to vector<8x8xf32>
    %60 = vector.shape_cast %59 : vector<8x8xf32> to vector<8x8x1xf32>
    %61 = vector.broadcast %60 : vector<8x8x1xf32> to vector<8x8x8xf32>
    %62 = arith.subf %58, %61 : vector<8x8x8xf32>
    %63 = math.exp %62 : vector<8x8x8xf32>
    %cst_29 = arith.constant dense<0.000000e+00> : vector<8x8xf32>
    %64 = vector.multi_reduction <add>, %63, %cst_29 [2] : vector<8x8x8xf32> to vector<8x8xf32>
    %65 = vector.shape_cast %64 : vector<8x8xf32> to vector<8x8x1xf32>
    %66 = tpu.reciprocal %65 {approx = true} : vector<8x8x1xf32> -> vector<8x8x1xf32>
    %67 = vector.broadcast %66 : vector<8x8x1xf32> to vector<8x8x8xf32>
    %68 = arith.mulf %63, %67 : vector<8x8x8xf32>
    "tpu.trace_start"() <{level = 10 : i32, message = "bqk,bkd->bqd"}> : () -> ()
    %cst_30 = arith.constant dense<0.000000e+00> : vector<8x8x8xf32>
    %69 = tpu.matmul %68, %57, %cst_30 {dimension_numbers = #tpu.dot_dimension_numbers<[2], [1], [1], [2], [0, 0, 0, 1, 1, 2], [0], [0]>} : vector<8x8x8xf32>, vector<8x8x8xf32>, vector<8x8x8xf32> -> vector<8x8x8xf32>
    "tpu.trace_stop"() : () -> ()
    %70 = vector.shape_cast %69 : vector<8x8x8xf32> to vector<64x8xf32>
    %c0_31 = arith.constant 0 : index
    %c16 = arith.constant 16 : index
    %71 = vector.load %arg10[%c0_31, %c16] : memref<64x32xf32, #tpu.memory_space<vmem>>, vector<64x8xf32>
    tpu.vector_store %arg10[%c0_31, %c16], %70 {strides = array<i32>} : memref<64x32xf32, #tpu.memory_space<vmem>>, vector<64x8xf32>,
    %72 = vector.extract_strided_slice %7 {offsets = [0, 24], sizes = [64, 8], strides = [1, 1]} : vector<64x32xf32> to vector<64x8xf32>
    %73 = vector.shape_cast %72 : vector<64x8xf32> to vector<8x8x8xf32>
    %74 = vector.extract_strided_slice %9 {offsets = [0, 24], sizes = [64, 8], strides = [1, 1]} : vector<64x32xf32> to vector<64x8xf32>
    %75 = vector.shape_cast %74 : vector<64x8xf32> to vector<8x8x8xf32>
    %76 = vector.extract_strided_slice %11 {offsets = [0, 24], sizes = [64, 8], strides = [1, 1]} : vector<64x32xf32> to vector<64x8xf32>
    %77 = vector.shape_cast %76 : vector<64x8xf32> to vector<8x8x8xf32>
    "tpu.trace_start"() <{level = 10 : i32, message = "bqd,bkd->bqk"}> : () -> ()
    %cst_32 = arith.constant dense<0.000000e+00> : vector<8x8x8xf32>
    %78 = tpu.matmul %73, %75, %cst_32 {dimension_numbers = #tpu.dot_dimension_numbers<[2], [2], [1], [1], [0, 0, 0, 1, 1, 1], [0], [0]>} : vector<8x8x8xf32>, vector<8x8x8xf32>, vector<8x8x8xf32> -> vector<8x8x8xf32>
    "tpu.trace_stop"() : () -> ()
    %cst_33 = arith.constant dense<0xFF800000> : vector<8x8xf32>
    %79 = vector.multi_reduction <maximumf>, %78, %cst_33 [2] : vector<8x8x8xf32> to vector<8x8xf32>
    %80 = vector.shape_cast %79 : vector<8x8xf32> to vector<8x8x1xf32>
    %81 = vector.broadcast %80 : vector<8x8x1xf32> to vector<8x8x8xf32>
    %82 = arith.subf %78, %81 : vector<8x8x8xf32>
    %83 = math.exp %82 : vector<8x8x8xf32>
    %cst_34 = arith.constant dense<0.000000e+00> : vector<8x8xf32>
    %84 = vector.multi_reduction <add>, %83, %cst_34 [2] : vector<8x8x8xf32> to vector<8x8xf32>
    %85 = vector.shape_cast %84 : vector<8x8xf32> to vector<8x8x1xf32>
    %86 = tpu.reciprocal %85 {approx = true} : vector<8x8x1xf32> -> vector<8x8x1xf32>
    %87 = vector.broadcast %86 : vector<8x8x1xf32> to vector<8x8x8xf32>
    %88 = arith.mulf %83, %87 : vector<8x8x8xf32>
    "tpu.trace_start"() <{level = 10 : i32, message = "bqk,bkd->bqd"}> : () -> ()
    %cst_35 = arith.constant dense<0.000000e+00> : vector<8x8x8xf32>
    %89 = tpu.matmul %88, %77, %cst_35 {dimension_numbers = #tpu.dot_dimension_numbers<[2], [1], [1], [2], [0, 0, 0, 1, 1, 2], [0], [0]>} : vector<8x8x8xf32>, vector<8x8x8xf32>, vector<8x8x8xf32> -> vector<8x8x8xf32>
    "tpu.trace_stop"() : () -> ()
    %90 = vector.shape_cast %89 : vector<8x8x8xf32> to vector<64x8xf32>
    %c0_36 = arith.constant 0 : index
    %c24 = arith.constant 24 : index
    %91 = vector.load %arg10[%c0_36, %c24] : memref<64x32xf32, #tpu.memory_space<vmem>>, vector<64x8xf32>
    tpu.vector_store %arg10[%c0_36, %c24], %90 {strides = array<i32>} : memref<64x32xf32, #tpu.memory_space<vmem>>, vector<64x8xf32>,
    %c0_37 = arith.constant 0 : index
    %c0_38 = arith.constant 0 : index
    %92 = vector.load %arg10[%c0_37, %c0_38] : memref<64x32xf32, #tpu.memory_space<vmem>>, vector<64x32xf32>
    %c0_39 = arith.constant 0 : index
    %c0_40 = arith.constant 0 : index
    %93 = vector.load %arg7[%c0_39, %c0_40] : memref<32x32xf32, #tpu.memory_space<vmem>>, vector<32x32xf32>
    %cst_41 = arith.constant dense<0.000000e+00> : vector<64x32xf32>
    %94 = tpu.matmul %92, %93, %cst_41 {dimension_numbers = #tpu.dot_dimension_numbers<[1], [0], [0], [1], [0, 0, 1, 1], [], []>} : vector<64x32xf32>, vector<32x32xf32>, vector<64x32xf32> -> vector<64x32xf32>
    %c0_42 = arith.constant 0 : index
    %c0_43 = arith.constant 0 : index
    %95 = vector.load %arg8[%c0_42, %c0_43] : memref<1x32xf32, #tpu.memory_space<vmem>>, vector<1x32xf32>
    %96 = vector.broadcast %95 : vector<1x32xf32> to vector<64x32xf32>
    %97 = arith.addf %94, %96 : vector<64x32xf32>
    %c0_44 = arith.constant 0 : index
    %c0_45 = arith.constant 0 : index
    %c0_46 = arith.constant 0 : index
    %98 = vector.load %arg9[%c0_44, %c0_45, %c0_46] : memref<1x64x32xf32, #tpu.memory_space<vmem>>, vector<1x64x32xf32>
    %99 = vector.shape_cast %98 : vector<1x64x32xf32> to vector<64x32xf32>
    %100 = vector.shape_cast %97 : vector<64x32xf32> to vector<1x64x32xf32>
    tpu.vector_store %arg9[%c0_44, %c0_45, %c0_46], %100 {strides = array<i32>} : memref<1x64x32xf32, #tpu.memory_space<vmem>>, vector<1x64x32xf32>,
    return
  }
  func.func @transform_0(%arg0: i32) -> (i32, i32, i32) {
    %c0_i32 = arith.constant 0 : i32
    %c0_i32_0 = arith.constant 0 : i32
    %c0_i32_1 = arith.constant 0 : i32
    return %arg0, %c0_i32, %c0_i32_0 : i32, i32, i32
  }
  func.func @transform_1(%arg0: i32) -> (i32, i32, i32) {
    %c0_i32 = arith.constant 0 : i32
    %c0_i32_0 = arith.constant 0 : i32
    %c0_i32_1 = arith.constant 0 : i32
    return %arg0, %c0_i32, %c0_i32_0 : i32, i32, i32
  }
  func.func @transform_2(%arg0: i32) -> (i32, i32, i32) {
    %c0_i32 = arith.constant 0 : i32
    %c0_i32_0 = arith.constant 0 : i32
    %c0_i32_1 = arith.constant 0 : i32
    return %arg0, %c0_i32, %c0_i32_0 : i32, i32, i32
  }
  func.func @transform_3(%arg0: i32) -> (i32, i32) {
    %c0_i32 = arith.constant 0 : i32
    %c0_i32_0 = arith.constant 0 : i32
    %c0_i32_1 = arith.constant 0 : i32
    return %c0_i32, %c0_i32_0 : i32, i32
  }
  func.func @transform_4(%arg0: i32) -> (i32, i32) {
    %c0_i32 = arith.constant 0 : i32
    %c0_i32_0 = arith.constant 0 : i32
    %c0_i32_1 = arith.constant 0 : i32
    return %c0_i32, %c0_i32_0 : i32, i32
  }
  func.func @transform_5(%arg0: i32) -> (i32, i32) {
    %c0_i32 = arith.constant 0 : i32
    %c0_i32_0 = arith.constant 0 : i32
    %c0_i32_1 = arith.constant 0 : i32
    return %c0_i32, %c0_i32_0 : i32, i32
  }
  func.func @transform_6(%arg0: i32) -> (i32, i32) {
    %c0_i32 = arith.constant 0 : i32
    %c0_i32_0 = arith.constant 0 : i32
    %c0_i32_1 = arith.constant 0 : i32
    return %c0_i32, %c0_i32_0 : i32, i32
  }
  func.func @transform_7(%arg0: i32) -> (i32, i32) {
    %c0_i32 = arith.constant 0 : i32
    %c0_i32_0 = arith.constant 0 : i32
    %c0_i32_1 = arith.constant 0 : i32
    return %c0_i32, %c0_i32_0 : i32, i32
  }
  func.func @transform_8(%arg0: i32) -> (i32, i32, i32) {
    %c0_i32 = arith.constant 0 : i32
    %c0_i32_0 = arith.constant 0 : i32
    %c0_i32_1 = arith.constant 0 : i32
    return %arg0, %c0_i32, %c0_i32_0 : i32, i32, i32
  }
}

</mosaic_0001>

<llo_original>
// kernel: multi_head_attention_forward.1
$region0: #{multi_head_attention_forward.1}
  #allocation0 [shape = 'u32[]', space=smem, size = 0x4, offset = 0x4, fixed_abs, tag = 'smem constant byte address 0x4 - core index']
  #allocation1 [shape = 'u32[144,128]{1,0:T(1,128)}', space=vmem, size = 0x12000, scoped, tag = 'internal scratch']
  #allocation2 [shape = 'f32[64,32]{1,0:T(8,128)}', space=vmem, size = 0x8000, scoped, tag = 'scratch operand']
  %s0 = inlined_call_operand.hbm [shape: f32[2,64,32], index: 0, kind: input, shape index: {}]
  %s1 = inlined_call_operand.hbm [shape: f32[2,64,32], index: 1, kind: input, shape index: {}]
  %s2 = inlined_call_operand.hbm [shape: f32[2,64,32], index: 2, kind: input, shape index: {}]
  %s3 = inlined_call_operand.hbm [shape: f32[32,32], index: 3, kind: input, shape index: {}]
  %s4 = inlined_call_operand.hbm [shape: f32[32,32], index: 4, kind: input, shape index: {}]
  %s5 = inlined_call_operand.hbm [shape: f32[32,32], index: 5, kind: input, shape index: {}]
  %s6 = inlined_call_operand.hbm [shape: f32[32,32], index: 6, kind: input, shape index: {}]
  %s7 = inlined_call_operand.vmem [shape: f32[1,32], index: 7, kind: input, shape index: {}]
  %s8 = inlined_call_operand.hbm [shape: f32[2,64,32], index: 8, kind: output, shape index: {}]
  %s9 = sld [smem:[#allocation0]]
  $region93: #{multi_head_attention_forward.1} parent=0
    _
  %s11 = ssub.s32 1, %s9
  %s12 = scalar_select 0, %s11, %s9
  $region1: #{multi_head_attention_forward.1} parent=0
    #allocation3 [shape = 'u8[65536]{0}', space=vmem, size = 0x10000, scoped, tag = 'input window, operand 0']
    #allocation4 [shape = 's32[2]{0}', space=sflag, size = 0x8, scoped, tag = 'scoped memory for multi_head_attention_forward.1']
    #allocation5 [shape = 's32[2]{0}', space=sflag, size = 0x8, scoped, tag = 'scoped memory for multi_head_attention_forward.1']
    #allocation6 [shape = 'u8[65536]{0}', space=vmem, size = 0x10000, scoped, tag = 'input window, operand 1']
    #allocation7 [shape = 's32[2]{0}', space=sflag, size = 0x8, scoped, tag = 'scoped memory for multi_head_attention_forward.1']
    #allocation8 [shape = 'u8[65536]{0}', space=vmem, size = 0x10000, scoped, tag = 'input window, operand 2']
    #allocation9 [shape = 'u8[16384]{0}', space=vmem, size = 0x4000, scoped, tag = 'input window, operand 3, single buffered']
    #allocation10 [shape = 's32[1]{0}', space=sflag, size = 0x4, scoped, tag = 'scoped memory for multi_head_attention_forward.1']
    #allocation11 [shape = 'u8[16384]{0}', space=vmem, size = 0x4000, scoped, tag = 'input window, operand 4, single buffered']
    #allocation12 [shape = 'u8[16384]{0}', space=vmem, size = 0x4000, scoped, tag = 'input window, operand 5, single buffered']
    #allocation13 [shape = 's32[1]{0}', space=sflag, size = 0x4, scoped, tag = 'scoped memory for multi_head_attention_forward.1']
    #allocation14 [shape = 'u8[16384]{0}', space=vmem, size = 0x4000, scoped, tag = 'input window, operand 6, single buffered']
    #allocation15 [shape = 'u8[65536]{0}', space=vmem, size = 0x10000, scoped, tag = 'output window, operand 0']
    %13 = vsyncpa [#allocation4], 0
    %s14 = scalar_lea.sflag [#allocation4], 1
    %15 = vsyncpa %s14, 0
    %16 = vsyncpa [#allocation7], 0
    %s17 = scalar_lea.sflag [#allocation7], 1
    %18 = vsyncpa %s17, 0
    %19 = vsyncpa [#allocation10], 0
    %20 = vsyncpa [#allocation13], 0
    %21 = vsyncpa [#allocation5], 0
    %s22 = scalar_lea.sflag [#allocation5], 1
    %23 = vsyncpa %s22, 0
    loop: start=0, step=1, limit=4
    $region2: #{multi_head_attention_forward.1} parent=1 // loop_pre_header
      _
    $region3: #{multi_head_attention_forward.1} parent=1 // loop_header
      %s25 = sphi 0, %s29
      %p26 = scmp.ge.s32.totalorder %s25, 4
      %s35 = sphi 0, %s37
      %s38 = sphi 0, %s35
      %s39 = sphi 0, %s38
      %s55 = sphi 0, %s39
      %s61 = sphi 0, %s63
      %s64 = sphi 0, %s61
      %s65 = sphi 0, %s64
      %s81 = sphi 0, %s65
      %s87 = sphi 0, %s89
      %s90 = sphi 0, %s87
      %s91 = sphi 0, %s90
      %s107 = sphi 0, %s91
      %s111 = sphi 0, %s111
      %s113 = sphi 0, %s111
      %s114 = sphi 0, %s113
      %s128 = sphi 0, %s114
      %s132 = sphi 0, %s132
      %s134 = sphi 0, %s132
      %s135 = sphi 0, %s134
      %s149 = sphi 0, %s135
      %s153 = sphi 0, %s153
      %s155 = sphi 0, %s153
      %s156 = sphi 0, %s155
      %s170 = sphi 0, %s156
      %s174 = sphi 0, %s174
      %s176 = sphi 0, %s174
      %s177 = sphi 0, %s176
      %s191 = sphi 0, %s177
      %s195 = sphi 0, %s195
      %s197 = sphi 0, %s195
      %s198 = sphi 0, %s197
      %s212 = sphi 0, %s198
      %s218 = sphi 0, %s220
      %s221 = sphi 0, %s218
      %s222 = sphi 0, %s221
      %s238 = sphi 0, %s222
    $region4: #{multi_head_attention_forward.1} parent=1 // loop_header_branch
      %28 = sbr.rel (%p26) target = $region8
    $region5: #{multi_head_attention_forward.1} parent=1 // loop_body
      %s30 = ssub.s32 %s25, 1
      %s31 = ssub.s32 %s25, 2
      %s32 = sadd.s32 %s25, 1
      %s33 = ssub.s32 %s25, %s32
      %p34 = scmp.eq.s32.totalorder %s33, 0
      %s36 = sadd.s32 %s35, 1
      %s37 = scalar_select %p34, %s35, %s36
      %p40 = pneg %p34
      %p41 = scmp.eq.s32.totalorder %s25, 1
      %p42 = por %p40, %p41
      %p43 = scmp.ne.s32.totalorder %s35, %s38
      %p44 = scmp.eq.s32.totalorder %s25, 0
      %p45 = por %p43, %p44
      %p46 = scmp.ne.s32.totalorder %s35, %s38
      %p47 = scmp.eq.s32.totalorder %s30, 1
      %p48 = por %p46, %p47
      %p49 = scmp.ne.s32.totalorder %s38, %s39
      %p50 = scmp.eq.s32.totalorder %s30, 0
      %p51 = por %p49, %p50
      %p52 = scmp.ne.s32.totalorder %s38, %s39
      %p53 = scmp.eq.s32.totalorder %s31, 1
      %p54 = por %p52, %p53
      %p56 = scmp.ne.s32.totalorder %s39, %s55
      %p57 = scmp.eq.s32.totalorder %s31, 0
      %p58 = por %p56, %p57
      %s59 = ssub.s32 %s25, %s32
      %p60 = scmp.eq.s32.totalorder %s59, 0
      %s62 = sadd.s32 %s61, 1
      %s63 = scalar_select %p60, %s61, %s62
      %p66 = pneg %p60
      %p67 = scmp.eq.s32.totalorder %s25, 1
      %p68 = por %p66, %p67
      %p69 = scmp.ne.s32.totalorder %s61, %s64
      %p70 = scmp.eq.s32.totalorder %s25, 0
      %p71 = por %p69, %p70
      %p72 = scmp.ne.s32.totalorder %s61, %s64
      %p73 = scmp.eq.s32.totalorder %s30, 1
      %p74 = por %p72, %p73
      %p75 = scmp.ne.s32.totalorder %s64, %s65
      %p76 = scmp.eq.s32.totalorder %s30, 0
      %p77 = por %p75, %p76
      %p78 = scmp.ne.s32.totalorder %s64, %s65
      %p79 = scmp.eq.s32.totalorder %s31, 1
      %p80 = por %p78, %p79
      %p82 = scmp.ne.s32.totalorder %s65, %s81
      %p83 = scmp.eq.s32.totalorder %s31, 0
      %p84 = por %p82, %p83
      %s85 = ssub.s32 %s25, %s32
      %p86 = scmp.eq.s32.totalorder %s85, 0
      %s88 = sadd.s32 %s87, 1
      %s89 = scalar_select %p86, %s87, %s88
      %p92 = pneg %p86
      %p93 = scmp.eq.s32.totalorder %s25, 1
      %p94 = por %p92, %p93
      %p95 = scmp.ne.s32.totalorder %s87, %s90
      %p96 = scmp.eq.s32.totalorder %s25, 0
      %p97 = por %p95, %p96
      %p98 = scmp.ne.s32.totalorder %s87, %s90
      %p99 = scmp.eq.s32.totalorder %s30, 1
      %p100 = por %p98, %p99
      %p101 = scmp.ne.s32.totalorder %s90, %s91
      %p102 = scmp.eq.s32.totalorder %s30, 0
      %p103 = por %p101, %p102
      %p104 = scmp.ne.s32.totalorder %s90, %s91
      %p105 = scmp.eq.s32.totalorder %s31, 1
      %p106 = por %p104, %p105
      %p108 = scmp.ne.s32.totalorder %s91, %s107
      %p109 = scmp.eq.s32.totalorder %s31, 0
      %p110 = por %p108, %p109
      %s112 = sadd.s32 %s111, 1
      %p115 = scmp.eq.s32.totalorder %s25, 1
      %p116 = scmp.ne.s32.totalorder %s111, %s113
      %p117 = scmp.eq.s32.totalorder %s25, 0
      %p118 = por %p116, %p117
      %p119 = scmp.ne.s32.totalorder %s111, %s113
      %p120 = scmp.eq.s32.totalorder %s30, 1
      %p121 = por %p119, %p120
      %p122 = scmp.ne.s32.totalorder %s113, %s114
      %p123 = scmp.eq.s32.totalorder %s30, 0
      %p124 = por %p122, %p123
      %p125 = scmp.ne.s32.totalorder %s113, %s114
      %p126 = scmp.eq.s32.totalorder %s31, 1
      %p127 = por %p125, %p126
      %p129 = scmp.ne.s32.totalorder %s114, %s128
      %p130 = scmp.eq.s32.totalorder %s31, 0
      %p131 = por %p129, %p130
      %s133 = sadd.s32 %s132, 1
      %p136 = scmp.eq.s32.totalorder %s25, 1
      %p137 = scmp.ne.s32.totalorder %s132, %s134
      %p138 = scmp.eq.s32.totalorder %s25, 0
      %p139 = por %p137, %p138
      %p140 = scmp.ne.s32.totalorder %s132, %s134
      %p141 = scmp.eq.s32.totalorder %s30, 1
      %p142 = por %p140, %p141
      %p143 = scmp.ne.s32.totalorder %s134, %s135
      %p144 = scmp.eq.s32.totalorder %s30, 0
      %p145 = por %p143, %p144
      %p146 = scmp.ne.s32.totalorder %s134, %s135
      %p147 = scmp.eq.s32.totalorder %s31, 1
      %p148 = por %p146, %p147
      %p150 = scmp.ne.s32.totalorder %s135, %s149
      %p151 = scmp.eq.s32.totalorder %s31, 0
      %p152 = por %p150, %p151
      %s154 = sadd.s32 %s153, 1
      %p157 = scmp.eq.s32.totalorder %s25, 1
      %p158 = scmp.ne.s32.totalorder %s153, %s155
      %p159 = scmp.eq.s32.totalorder %s25, 0
      %p160 = por %p158, %p159
      %p161 = scmp.ne.s32.totalorder %s153, %s155
      %p162 = scmp.eq.s32.totalorder %s30, 1
      %p163 = por %p161, %p162
      %p164 = scmp.ne.s32.totalorder %s155, %s156
      %p165 = scmp.eq.s32.totalorder %s30, 0
      %p166 = por %p164, %p165
      %p167 = scmp.ne.s32.totalorder %s155, %s156
      %p168 = scmp.eq.s32.totalorder %s31, 1
      %p169 = por %p167, %p168
      %p171 = scmp.ne.s32.totalorder %s156, %s170
      %p172 = scmp.eq.s32.totalorder %s31, 0
      %p173 = por %p171, %p172
      %s175 = sadd.s32 %s174, 1
      %p178 = scmp.eq.s32.totalorder %s25, 1
      %p179 = scmp.ne.s32.totalorder %s174, %s176
      %p180 = scmp.eq.s32.totalorder %s25, 0
      %p181 = por %p179, %p180
      %p182 = scmp.ne.s32.totalorder %s174, %s176
      %p183 = scmp.eq.s32.totalorder %s30, 1
      %p184 = por %p182, %p183
      %p185 = scmp.ne.s32.totalorder %s176, %s177
      %p186 = scmp.eq.s32.totalorder %s30, 0
      %p187 = por %p185, %p186
      %p188 = scmp.ne.s32.totalorder %s176, %s177
      %p189 = scmp.eq.s32.totalorder %s31, 1
      %p190 = por %p188, %p189
      %p192 = scmp.ne.s32.totalorder %s177, %s191
      %p193 = scmp.eq.s32.totalorder %s31, 0
      %p194 = por %p192, %p193
      %s196 = sadd.s32 %s195, 1
      %p199 = scmp.eq.s32.totalorder %s25, 1
      %p200 = scmp.ne.s32.totalorder %s195, %s197
      %p201 = scmp.eq.s32.totalorder %s25, 0
      %p202 = por %p200, %p201
      %p203 = scmp.ne.s32.totalorder %s195, %s197
      %p204 = scmp.eq.s32.totalorder %s30, 1
      %p205 = por %p203, %p204
      %p206 = scmp.ne.s32.totalorder %s197, %s198
      %p207 = scmp.eq.s32.totalorder %s30, 0
      %p208 = por %p206, %p207
      %p209 = scmp.ne.s32.totalorder %s197, %s198
      %p210 = scmp.eq.s32.totalorder %s31, 1
      %p211 = por %p209, %p210
      %p213 = scmp.ne.s32.totalorder %s198, %s212
      %p214 = scmp.eq.s32.totalorder %s31, 0
      %p215 = por %p213, %p214
      %s216 = ssub.s32 %s25, %s32
      %p217 = scmp.eq.s32.totalorder %s216, 0
      %s219 = sadd.s32 %s218, 1
      %s220 = scalar_select %p217, %s218, %s219
      %p223 = pneg %p217
      %p224 = scmp.eq.s32.totalorder %s25, 1
      %p225 = por %p223, %p224
      %p226 = scmp.ne.s32.totalorder %s218, %s221
      %p227 = scmp.eq.s32.totalorder %s25, 0
      %p228 = por %p226, %p227
      %p229 = scmp.ne.s32.totalorder %s218, %s221
      %p230 = scmp.eq.s32.totalorder %s30, 1
      %p231 = por %p229, %p230
      %p232 = scmp.ne.s32.totalorder %s221, %s222
      %p233 = scmp.eq.s32.totalorder %s30, 0
      %p234 = por %p232, %p233
      %p235 = scmp.ne.s32.totalorder %s221, %s222
      %p236 = scmp.eq.s32.totalorder %s31, 1
      %p237 = por %p235, %p236
      %p239 = scmp.ne.s32.totalorder %s222, %s238
      %p240 = scmp.eq.s32.totalorder %s31, 0
      %p241 = por %p239, %p240
      %p242 = scmp.le.s32.totalorder 1, %s25
      %p243 = scmp.lt.s32.totalorder %s25, 3
      %p244 = pnand %p242, %p243
      %p245 = pneg %p244
      // Predicated region
      $region9: #{multi_head_attention_forward.1} parent=5 // pred_check
        _
      $region10: #{multi_head_attention_forward.1} parent=5 // pred_check_branch
        %247 = sbr.rel (%p244) target = $region12
      $region11: #{multi_head_attention_forward.1} parent=5 // pred_region
        %s248 = ssub.s32 %s25, 1
        // Predicated region
        $region13: #{multi_head_attention_forward.1} parent=11 // pred_check
          %p249 = pneg %p124
        $region14: #{multi_head_attention_forward.1} parent=11 // pred_check_branch
          %251 = sbr.rel (%p249) target = $region16
        $region15: #{multi_head_attention_forward.1} parent=11 // pred_region
          %s253 = ssub.s32 512, 512
          %254 = vsyncadd [#allocation10], %s253
          %s255 = sshll.u32 [#allocation9], 4
          %s256 = int_to_ptr.vmem [resolvable:$true] %s255
          %261 = dma.hbm_to_vmem [thread:$0]  %s3, 512, %s256, [#allocation10], 128, 128, 8
        $region16: #{multi_head_attention_forward.1} parent=11 // pred_fallthru
          _
        // Predicated region
        $region17: #{multi_head_attention_forward.1} parent=11 // pred_check
          %p262 = pneg %p145
        $region18: #{multi_head_attention_forward.1} parent=11 // pred_check_branch
          %264 = sbr.rel (%p262) target = $region20
        $region19: #{multi_head_attention_forward.1} parent=11 // pred_region
          %s266 = ssub.s32 512, 512
          %267 = vsyncadd [#allocation10], %s266
          %s268 = sshll.u32 [#allocation11], 4
          %s269 = int_to_ptr.vmem [resolvable:$true] %s268
          %274 = dma.hbm_to_vmem [thread:$0]  %s4, 512, %s269, [#allocation10], 128, 128, 8
        $region20: #{multi_head_attention_forward.1} parent=11 // pred_fallthru
          _
        // Predicated region
        $region21: #{multi_head_attention_forward.1} parent=11 // pred_check
          %p275 = pneg %p166
        $region22: #{multi_head_attention_forward.1} parent=11 // pred_check_branch
          %277 = sbr.rel (%p275) target = $region24
        $region23: #{multi_head_attention_forward.1} parent=11 // pred_region
          %s279 = ssub.s32 512, 512
          %280 = vsyncadd [#allocation13], %s279
          %s281 = sshll.u32 [#allocation12], 4
          %s282 = int_to_ptr.vmem [resolvable:$true] %s281
          %287 = dma.hbm_to_vmem [thread:$0]  %s5, 512, %s282, [#allocation13], 128, 128, 8
        $region24: #{multi_head_attention_forward.1} parent=11 // pred_fallthru
          _
        // Predicated region
        $region25: #{multi_head_attention_forward.1} parent=11 // pred_check
          %p288 = pneg %p187
        $region26: #{multi_head_attention_forward.1} parent=11 // pred_check_branch
          %290 = sbr.rel (%p288) target = $region28
        $region27: #{multi_head_attention_forward.1} parent=11 // pred_region
          %s292 = ssub.s32 512, 512
          %293 = vsyncadd [#allocation13], %s292
          %s294 = sshll.u32 [#allocation14], 4
          %s295 = int_to_ptr.vmem [resolvable:$true] %s294
          %300 = dma.hbm_to_vmem [thread:$0]  %s6, 512, %s295, [#allocation13], 128, 128, 8
        $region28: #{multi_head_attention_forward.1} parent=11 // pred_fallthru
          _
        // Predicated region
        $region29: #{multi_head_attention_forward.1} parent=11 // pred_check
          %p301 = pneg %p208
        $region30: #{multi_head_attention_forward.1} parent=11 // pred_check_branch
          %303 = sbr.rel (%p301) target = $region32
        $region31: #{multi_head_attention_forward.1} parent=11 // pred_region
          _
        $region32: #{multi_head_attention_forward.1} parent=11 // pred_fallthru
          _
      $region12: #{multi_head_attention_forward.1} parent=5 // pred_fallthru
        _
      %p304 = scmp.lt.s32.totalorder %s25, 2
      // Predicated region
      $region33: #{multi_head_attention_forward.1} parent=5 // pred_check
        %p305 = pneg %p304
      $region34: #{multi_head_attention_forward.1} parent=5 // pred_check_branch
        %307 = sbr.rel (%p305) target = $region36
      $region35: #{multi_head_attention_forward.1} parent=5 // pred_region
        // Predicated region
        $region37: #{multi_head_attention_forward.1} parent=35 // pred_check
          %p308 = pneg %p45
        $region38: #{multi_head_attention_forward.1} parent=35 // pred_check_branch
          %310 = sbr.rel (%p308) target = $region40
        $region39: #{multi_head_attention_forward.1} parent=35 // pred_region
          %s311 = sand.u32 %s35, 1
          %s312 = scalar_lea.sflag [#allocation4], %s311
          %s313 = sand.u32 %s35, 1
          %s314 = smul.addr %s313, 64
          %s315 = scalar_lea.vmem [#allocation3], %s314
          %s317 = ssub.s32 1024, 1024
          %318 = vsyncadd %s312, %s317
          %s319 = smul.addr %s25, 8
          %s320 = smul.addr %s319, 128
          %s321 = scalar_lea.hbm %s0, %s320
          %s322 = sshll.u32 %s315, 4
          %s323 = int_to_ptr.vmem [resolvable:$true] %s322
          %328 = dma.hbm_to_vmem [thread:$0]  %s321, 1024, %s323, %s312, 128, 128, 8
        $region40: #{multi_head_attention_forward.1} parent=35 // pred_fallthru
          _
        // Predicated region
        $region41: #{multi_head_attention_forward.1} parent=35 // pred_check
          %p329 = pneg %p71
        $region42: #{multi_head_attention_forward.1} parent=35 // pred_check_branch
          %331 = sbr.rel (%p329) target = $region44
        $region43: #{multi_head_attention_forward.1} parent=35 // pred_region
          %s332 = sand.u32 %s25, 1
          %s333 = scalar_lea.sflag [#allocation7], %s332
          %s334 = sand.u32 %s61, 1
          %s335 = smul.addr %s334, 64
          %s336 = scalar_lea.vmem [#allocation6], %s335
          %s338 = ssub.s32 1024, 1024
          %339 = vsyncadd %s333, %s338
          %s340 = smul.addr %s25, 8
          %s341 = smul.addr %s340, 128
          %s342 = scalar_lea.hbm %s1, %s341
          %s343 = sshll.u32 %s336, 4
          %s344 = int_to_ptr.vmem [resolvable:$true] %s343
          %349 = dma.hbm_to_vmem [thread:$0]  %s342, 1024, %s344, %s333, 128, 128, 8
        $region44: #{multi_head_attention_forward.1} parent=35 // pred_fallthru
          _
        // Predicated region
        $region45: #{multi_head_attention_forward.1} parent=35 // pred_check
          %p350 = pneg %p97
        $region46: #{multi_head_attention_forward.1} parent=35 // pred_check_branch
          %352 = sbr.rel (%p350) target = $region48
        $region47: #{multi_head_attention_forward.1} parent=35 // pred_region
          %s353 = sand.u32 %s25, 1
          %s354 = scalar_lea.sflag [#allocation7], %s353
          %s355 = sand.u32 %s87, 1
          %s356 = smul.addr %s355, 64
          %s357 = scalar_lea.vmem [#allocation8], %s356
          %s359 = ssub.s32 1024, 1024
          %360 = vsyncadd %s354, %s359
          %s361 = smul.addr %s25, 8
          %s362 = smul.addr %s361, 128
          %s363 = scalar_lea.hbm %s2, %s362
          %s364 = sshll.u32 %s357, 4
          %s365 = int_to_ptr.vmem [resolvable:$true] %s364
          %370 = dma.hbm_to_vmem [thread:$0]  %s363, 1024, %s365, %s354, 128, 128, 8
        $region48: #{multi_head_attention_forward.1} parent=35 // pred_fallthru
          _
      $region36: #{multi_head_attention_forward.1} parent=5 // pred_fallthru
        _
      %p371 = scmp.le.s32.totalorder 1, %s25
      %p372 = scmp.lt.s32.totalorder %s25, 3
      %p373 = pnand %p371, %p372
      %p374 = pneg %p373
      // Predicated region
      $region49: #{multi_head_attention_forward.1} parent=5 // pred_check
        _
      $region50: #{multi_head_attention_forward.1} parent=5 // pred_check_branch
        %376 = sbr.rel (%p373) target = $region52
      $region51: #{multi_head_attention_forward.1} parent=5 // pred_region
        %s377 = ssub.s32 %s25, 1
        %s378 = sand.u32 %s38, 1
        %s379 = scalar_lea.sflag [#allocation4], %s378
        %s380 = sand.u32 %s38, 1
        %s381 = smul.addr %s380, 64
        %s382 = scalar_lea.vmem [#allocation3], %s381
        // Predicated region
        $region53: #{multi_head_attention_forward.1} parent=51 // pred_check
          %p383 = pneg %p51
        $region54: #{multi_head_attention_forward.1} parent=51 // pred_check_branch
          %385 = sbr.rel (%p383) target = $region56
        $region55: #{multi_head_attention_forward.1} parent=51 // pred_region
          %386 = dma.done %s379, 1024
        $region56: #{multi_head_attention_forward.1} parent=51 // pred_fallthru
          _
        %s387 = sand.u32 %s30, 1
        %s388 = scalar_lea.sflag [#allocation7], %s387
        %s389 = sand.u32 %s64, 1
        %s390 = smul.addr %s389, 64
        %s391 = scalar_lea.vmem [#allocation6], %s390
        // Predicated region
        $region57: #{multi_head_attention_forward.1} parent=51 // pred_check
          %p392 = pneg %p77
        $region58: #{multi_head_attention_forward.1} parent=51 // pred_check_branch
          %394 = sbr.rel (%p392) target = $region60
        $region59: #{multi_head_attention_forward.1} parent=51 // pred_region
          %395 = dma.done %s388, 1024
        $region60: #{multi_head_attention_forward.1} parent=51 // pred_fallthru
          _
        %s396 = sand.u32 %s30, 1
        %s397 = scalar_lea.sflag [#allocation7], %s396
        %s398 = sand.u32 %s90, 1
        %s399 = smul.addr %s398, 64
        %s400 = scalar_lea.vmem [#allocation8], %s399
        // Predicated region
        $region61: #{multi_head_attention_forward.1} parent=51 // pred_check
          %p401 = pneg %p103
        $region62: #{multi_head_attention_forward.1} parent=51 // pred_check_branch
          %403 = sbr.rel (%p401) target = $region64
        $region63: #{multi_head_attention_forward.1} parent=51 // pred_region
          %404 = dma.done %s397, 1024
        $region64: #{multi_head_attention_forward.1} parent=51 // pred_fallthru
          _
        // Predicated region
        $region65: #{multi_head_attention_forward.1} parent=51 // pred_check
          %p405 = pneg %p124
        $region66: #{multi_head_attention_forward.1} parent=51 // pred_check_branch
          %407 = sbr.rel (%p405) target = $region68
        $region67: #{multi_head_attention_forward.1} parent=51 // pred_region
          %408 = dma.done [#allocation10], 512
        $region68: #{multi_head_attention_forward.1} parent=51 // pred_fallthru
          _
        // Predicated region
        $region69: #{multi_head_attention_forward.1} parent=51 // pred_check
          %p409 = pneg %p145
        $region70: #{multi_head_attention_forward.1} parent=51 // pred_check_branch
          %411 = sbr.rel (%p409) target = $region72
        $region71: #{multi_head_attention_forward.1} parent=51 // pred_region
          %412 = dma.done [#allocation10], 512
        $region72: #{multi_head_attention_forward.1} parent=51 // pred_fallthru
          _
        // Predicated region
        $region73: #{multi_head_attention_forward.1} parent=51 // pred_check
          %p413 = pneg %p166
        $region74: #{multi_head_attention_forward.1} parent=51 // pred_check_branch
          %415 = sbr.rel (%p413) target = $region76
        $region75: #{multi_head_attention_forward.1} parent=51 // pred_region
          %416 = dma.done [#allocation13], 512
        $region76: #{multi_head_attention_forward.1} parent=51 // pred_fallthru
          _
        // Predicated region
        $region77: #{multi_head_attention_forward.1} parent=51 // pred_check
          %p417 = pneg %p187
        $region78: #{multi_head_attention_forward.1} parent=51 // pred_check_branch
          %419 = sbr.rel (%p417) target = $region80
        $region79: #{multi_head_attention_forward.1} parent=51 // pred_region
          %420 = dma.done [#allocation13], 512
        $region80: #{multi_head_attention_forward.1} parent=51 // pred_fallthru
          _
        %s421 = sand.u32 %s38, 1
        %s422 = scalar_lea.sflag [#allocation4], %s421
        %s423 = sand.u32 %s38, 1
        %s424 = smul.addr %s423, 64
        %s425 = scalar_lea.vmem [#allocation3], %s424
        %p426 = pneg %p51
        %p427 = pneg %p48
        %s428 = sand.u32 %s30, 1
        %s429 = scalar_lea.sflag [#allocation7], %s428
        %s430 = sand.u32 %s64, 1
        %s431 = smul.addr %s430, 64
        %s432 = scalar_lea.vmem [#allocation6], %s431
        %p433 = pneg %p77
        %p434 = pneg %p74
        %s435 = sand.u32 %s30, 1
        %s436 = scalar_lea.sflag [#allocation7], %s435
        %s437 = sand.u32 %s90, 1
        %s438 = smul.addr %s437, 64
        %s439 = scalar_lea.vmem [#allocation8], %s438
        %p440 = pneg %p103
        %p441 = pneg %p100
        %p442 = pneg %p124
        %p443 = pneg %p121
        %p444 = pneg %p145
        %p445 = pneg %p142
        %p446 = pneg %p166
        %p447 = pneg %p163
        %p448 = pneg %p187
        %p449 = pneg %p184
        %p450 = pneg %p208
        %p451 = pneg %p205
        %p452 = pneg %p234
        %p453 = pneg %p231
        %s454 = sand.u32 %s221, 1
        %s455 = scalar_lea.sflag [#allocation5], %s454
        %s456 = sand.u32 %s221, 1
        %s457 = smul.addr %s456, 64
        %s458 = scalar_lea.vmem [#allocation15], %s457
        %v459 = vld [vmem:[%s382] sm:$0xff]
        %v460 = vld [vmem:[%s382 + $0x8] sm:$0xff]
        %v461 = vld [vmem:[%s382 + $0x10] sm:$0xff]
        %v462 = vld [vmem:[%s382 + $0x18] sm:$0xff]
        %v463 = vld [vmem:[%s382 + $0x20] sm:$0xff]
        %v464 = vld [vmem:[%s382 + $0x28] sm:$0xff]
        %v465 = vld [vmem:[%s382 + $0x30] sm:$0xff]
        %v466 = vld [vmem:[%s382 + $0x38] sm:$0xff]
        %v467 = vld [vmem:[%s391] sm:$0xff]
        %v468 = vld [vmem:[%s391 + $0x8] sm:$0xff]
        %v469 = vld [vmem:[%s391 + $0x10] sm:$0xff]
        %v470 = vld [vmem:[%s391 + $0x18] sm:$0xff]
        %v471 = vld [vmem:[%s391 + $0x20] sm:$0xff]
        %v472 = vld [vmem:[%s391 + $0x28] sm:$0xff]
        %v473 = vld [vmem:[%s391 + $0x30] sm:$0xff]
        %v474 = vld [vmem:[%s391 + $0x38] sm:$0xff]
        %v475 = vld [vmem:[%s400] sm:$0xff]
        %v476 = vld [vmem:[%s400 + $0x8] sm:$0xff]
        %v477 = vld [vmem:[%s400 + $0x10] sm:$0xff]
        %v478 = vld [vmem:[%s400 + $0x18] sm:$0xff]
        %v479 = vld [vmem:[%s400 + $0x20] sm:$0xff]
        %v480 = vld [vmem:[%s400 + $0x28] sm:$0xff]
        %v481 = vld [vmem:[%s400 + $0x30] sm:$0xff]
        %v482 = vld [vmem:[%s400 + $0x38] sm:$0xff]
        %v483 = vld [vmem:[#allocation9] sm:$0xff]
        %v484 = vld [vmem:[#allocation9 + $0x8] sm:$0xff]
        %v485 = vld [vmem:[#allocation9 + $0x10] sm:$0xff]
        %v486 = vld [vmem:[#allocation9 + $0x18] sm:$0xff]
        %vm487 = vcmask 261120
        %v489 = vsel %vm487, %v459, 0
        %v492 = vsel %vm487, %v460, 0
        %v495 = vsel %vm487, %v461, 0
        %v498 = vsel %vm487, %v462, 0
        %v501 = vsel %vm487, %v463, 0
        %v504 = vsel %vm487, %v464, 0
        %v507 = vsel %vm487, %v465, 0
        %v510 = vsel %vm487, %v466, 0
        %512 = vmatprep.subr.mxu0 0.0
        %513 = vmatpush1.msra.mxu0 0.0
        %514 = vmatprep.subr.mxu0 0.0
        %515 = vmatpush1.msra.mxu0 0.0
        %516 = vmatprep.subr.mxu0 0.0
        %517 = vmatpush1.msra.mxu0 0.0
        %518 = vmatprep.subr.mxu0 0.0
        %519 = vmatpush1.msra.mxu0 0.0
        %520 = vmatprep.subr.mxu0 0.0
        %521 = vmatpush1.msra.mxu0 0.0
        %522 = vmatprep.subr.mxu0 0.0
        %523 = vmatpush1.msra.mxu0 0.0
        %524 = vmatprep.subr.mxu0 0.0
        %525 = vmatpush1.msra.mxu0 0.0
        %526 = vmatprep.subr.mxu0 0.0
        %527 = vmatpush1.msra.mxu0 0.0
        %528 = vmatprep.subr.mxu0 0.0
        %529 = vmatpush1.msra.mxu0 0.0
        %530 = vmatprep.subr.mxu0 0.0
        %531 = vmatpush1.msra.mxu0 0.0
        %532 = vmatprep.subr.mxu0 0.0
        %533 = vmatpush1.msra.mxu0 0.0
        %534 = vmatprep.subr.mxu0 0.0
        %535 = vmatpush1.msra.mxu0 0.0
        %536 = vmatprep.subr.mxu0 0.0
        %537 = vmatpush1.msra.mxu0 %v486
        %538 = vmatprep.subr.mxu0 0.0
        %539 = vmatpush1.msra.mxu0 %v485
        %540 = vmatprep.subr.mxu0 0.0
        %541 = vmatpush1.msra.mxu0 %v484
        %542 = vmatprep.subr.mxu0 0.0
        %543 = vmatpush1.msra.mxu0 %v483
        %544 = vmatprep.subr.mxu0 0.0
        %545 = vmatpush2.msra.mxu0 0.0
        %546 = vmatprep.subr.mxu0 0.0
        %547 = vmatpush2.msra.mxu0 0.0
        %548 = vmatprep.subr.mxu0 0.0
        %549 = vmatpush2.msra.mxu0 0.0
        %550 = vmatprep.subr.mxu0 0.0
        %551 = vmatpush2.msra.mxu0 0.0
        %552 = vmatprep.subr.mxu0 0.0
        %553 = vmatpush2.msra.mxu0 0.0
        %554 = vmatprep.subr.mxu0 0.0
        %555 = vmatpush2.msra.mxu0 0.0
        %556 = vmatprep.subr.mxu0 0.0
        %557 = vmatpush2.msra.mxu0 0.0
        %558 = vmatprep.subr.mxu0 0.0
        %559 = vmatpush2.msra.mxu0 0.0
        %560 = vmatprep.subr.mxu0 0.0
        %561 = vmatpush2.msra.mxu0 0.0
        %562 = vmatprep.subr.mxu0 0.0
        %563 = vmatpush2.msra.mxu0 0.0
        %564 = vmatprep.subr.mxu0 0.0
        %565 = vmatpush2.msra.mxu0 0.0
        %566 = vmatprep.subr.mxu0 0.0
        %567 = vmatpush2.msra.mxu0 0.0
        %568 = vmatprep.subr.mxu0 0.0
        %569 = vmatpush2.msra.mxu0 0.0
        %570 = vmatprep.subr.mxu0 0.0
        %571 = vmatpush2.msra.mxu0 0.0
        %572 = vmatprep.subr.mxu0 0.0
        %573 = vmatpush2.msra.mxu0 0.0
        %574 = vmatprep.subr.mxu0 0.0
        %575 = vmatpush2.msra.mxu0 0.0
        %576 = vmatprep.mubr.f32.mxu0 0.0
        %577 = vmatmul.mubr.f32.gmra.mxu0 %v489
        %v578 = vpop.f32.mrf.mxu0
        %v579 = vadd.f32 0.0, %v578
        %v580 = vpop.f32.mrf.mxu0
        %581 = vmatprep.mubr.f32.mxu0 0.0
        %582 = vmatmul.mubr.f32.gmra.mxu0 %v492
        %v583 = vpop.f32.mrf.mxu0
        %v584 = vadd.f32 0.0, %v583
        %v585 = vpop.f32.mrf.mxu0
        %586 = vmatprep.mubr.f32.mxu0 0.0
        %587 = vmatmul.mubr.f32.gmra.mxu0 %v495
        %v588 = vpop.f32.mrf.mxu0
        %v589 = vadd.f32 0.0, %v588
        %v590 = vpop.f32.mrf.mxu0
        %591 = vmatprep.mubr.f32.mxu0 0.0
        %592 = vmatmul.mubr.f32.gmra.mxu0 %v498
        %v593 = vpop.f32.mrf.mxu0
        %v594 = vadd.f32 0.0, %v593
        %v595 = vpop.f32.mrf.mxu0
        %596 = vmatprep.mubr.f32.mxu0 0.0
        %597 = vmatmul.mubr.f32.gmra.mxu0 %v501
        %v598 = vpop.f32.mrf.mxu0
        %v599 = vadd.f32 0.0, %v598
        %v600 = vpop.f32.mrf.mxu0
        %601 = vmatprep.mubr.f32.mxu0 0.0
        %602 = vmatmul.mubr.f32.gmra.mxu0 %v504
        %v603 = vpop.f32.mrf.mxu0
        %v604 = vadd.f32 0.0, %v603
        %v605 = vpop.f32.mrf.mxu0
        %606 = vmatprep.mubr.f32.mxu0 0.0
        %607 = vmatmul.mubr.f32.gmra.mxu0 %v507
        %v608 = vpop.f32.mrf.mxu0
        %v609 = vadd.f32 0.0, %v608
        %v610 = vpop.f32.mrf.mxu0
        %611 = vmatprep.mubr.f32.mxu0 0.0
        %612 = vmatmul.mubr.f32.gmra.mxu0 %v510
        %v613 = vpop.f32.mrf.mxu0
        %v614 = vadd.f32 0.0, %v613
        %v615 = vpop.f32.mrf.mxu0
        %616 = vdwg.mxu0
        %v617 = vld [vmem:[#allocation11] sm:$0xff]
        %v618 = vld [vmem:[#allocation11 + $0x8] sm:$0xff]
        %v619 = vld [vmem:[#allocation11 + $0x10] sm:$0xff]
        %v620 = vld [vmem:[#allocation11 + $0x18] sm:$0xff]
        %v622 = vsel %vm487, %v467, 0
        %v625 = vsel %vm487, %v468, 0
        %v628 = vsel %vm487, %v469, 0
        %v631 = vsel %vm487, %v470, 0
        %v634 = vsel %vm487, %v471, 0
        %v637 = vsel %vm487, %v472, 0
        %v640 = vsel %vm487, %v473, 0
        %v643 = vsel %vm487, %v474, 0
        %645 = vmatprep.subr.mxu0 0.0
        %646 = vmatpush1.msra.mxu0 0.0
        %647 = vmatprep.subr.mxu0 0.0
        %648 = vmatpush1.msra.mxu0 0.0
        %649 = vmatprep.subr.mxu0 0.0
        %650 = vmatpush1.msra.mxu0 0.0
        %651 = vmatprep.subr.mxu0 0.0
        %652 = vmatpush1.msra.mxu0 0.0
        %653 = vmatprep.subr.mxu0 0.0
        %654 = vmatpush1.msra.mxu0 0.0
        %655 = vmatprep.subr.mxu0 0.0
        %656 = vmatpush1.msra.mxu0 0.0
        %657 = vmatprep.subr.mxu0 0.0
        %658 = vmatpush1.msra.mxu0 0.0
        %659 = vmatprep.subr.mxu0 0.0
        %660 = vmatpush1.msra.mxu0 0.0
        %661 = vmatprep.subr.mxu0 0.0
        %662 = vmatpush1.msra.mxu0 0.0
        %663 = vmatprep.subr.mxu0 0.0
        %664 = vmatpush1.msra.mxu0 0.0
        %665 = vmatprep.subr.mxu0 0.0
        %666 = vmatpush1.msra.mxu0 0.0
        %667 = vmatprep.subr.mxu0 0.0
        %668 = vmatpush1.msra.mxu0 0.0
        %669 = vmatprep.subr.mxu0 0.0
        %670 = vmatpush1.msra.mxu0 %v620
        %671 = vmatprep.subr.mxu0 0.0
        %672 = vmatpush1.msra.mxu0 %v619
        %673 = vmatprep.subr.mxu0 0.0
        %674 = vmatpush1.msra.mxu0 %v618
        %675 = vmatprep.subr.mxu0 0.0
        %676 = vmatpush1.msra.mxu0 %v617
        %677 = vmatprep.subr.mxu0 0.0
        %678 = vmatpush2.msra.mxu0 0.0
        %679 = vmatprep.subr.mxu0 0.0
        %680 = vmatpush2.msra.mxu0 0.0
        %681 = vmatprep.subr.mxu0 0.0
        %682 = vmatpush2.msra.mxu0 0.0
        %683 = vmatprep.subr.mxu0 0.0
        %684 = vmatpush2.msra.mxu0 0.0
        %685 = vmatprep.subr.mxu0 0.0
        %686 = vmatpush2.msra.mxu0 0.0
        %687 = vmatprep.subr.mxu0 0.0
        %688 = vmatpush2.msra.mxu0 0.0
        %689 = vmatprep.subr.mxu0 0.0
        %690 = vmatpush2.msra.mxu0 0.0
        %691 = vmatprep.subr.mxu0 0.0
        %692 = vmatpush2.msra.mxu0 0.0
        %693 = vmatprep.subr.mxu0 0.0
        %694 = vmatpush2.msra.mxu0 0.0
        %695 = vmatprep.subr.mxu0 0.0
        %696 = vmatpush2.msra.mxu0 0.0
        %697 = vmatprep.subr.mxu0 0.0
        %698 = vmatpush2.msra.mxu0 0.0
        %699 = vmatprep.subr.mxu0 0.0
        %700 = vmatpush2.msra.mxu0 0.0
        %701 = vmatprep.subr.mxu0 0.0
        %702 = vmatpush2.msra.mxu0 0.0
        %703 = vmatprep.subr.mxu0 0.0
        %704 = vmatpush2.msra.mxu0 0.0
        %705 = vmatprep.subr.mxu0 0.0
        %706 = vmatpush2.msra.mxu0 0.0
        %707 = vmatprep.subr.mxu0 0.0
        %708 = vmatpush2.msra.mxu0 0.0
        %709 = vmatprep.mubr.f32.mxu0 0.0
        %710 = vmatmul.mubr.f32.gmra.mxu0 %v622
        %v711 = vpop.f32.mrf.mxu0
        %v712 = vadd.f32 0.0, %v711
        %v713 = vpop.f32.mrf.mxu0
        %714 = vmatprep.mubr.f32.mxu0 0.0
        %715 = vmatmul.mubr.f32.gmra.mxu0 %v625
        %v716 = vpop.f32.mrf.mxu0
        %v717 = vadd.f32 0.0, %v716
        %v718 = vpop.f32.mrf.mxu0
        %719 = vmatprep.mubr.f32.mxu0 0.0
        %720 = vmatmul.mubr.f32.gmra.mxu0 %v628
        %v721 = vpop.f32.mrf.mxu0
        %v722 = vadd.f32 0.0, %v721
        %v723 = vpop.f32.mrf.mxu0
        %724 = vmatprep.mubr.f32.mxu0 0.0
        %725 = vmatmul.mubr.f32.gmra.mxu0 %v631
        %v726 = vpop.f32.mrf.mxu0
        %v727 = vadd.f32 0.0, %v726
        %v728 = vpop.f32.mrf.mxu0
        %729 = vmatprep.mubr.f32.mxu0 0.0
        %730 = vmatmul.mubr.f32.gmra.mxu0 %v634
        %v731 = vpop.f32.mrf.mxu0
        %v732 = vadd.f32 0.0, %v731
        %v733 = vpop.f32.mrf.mxu0
        %734 = vmatprep.mubr.f32.mxu0 0.0
        %735 = vmatmul.mubr.f32.gmra.mxu0 %v637
        %v736 = vpop.f32.mrf.mxu0
        %v737 = vadd.f32 0.0, %v736
        %v738 = vpop.f32.mrf.mxu0
        %739 = vmatprep.mubr.f32.mxu0 0.0
        %740 = vmatmul.mubr.f32.gmra.mxu0 %v640
        %v741 = vpop.f32.mrf.mxu0
        %v742 = vadd.f32 0.0, %v741
        %v743 = vpop.f32.mrf.mxu0
        %744 = vmatprep.mubr.f32.mxu0 0.0
        %745 = vmatmul.mubr.f32.gmra.mxu0 %v643
        %v746 = vpop.f32.mrf.mxu0
        %v747 = vadd.f32 0.0, %v746
        %v748 = vpop.f32.mrf.mxu0
        %749 = vdwg.mxu0
        %v750 = vld [vmem:[#allocation12] sm:$0xff]
        %v751 = vld [vmem:[#allocation12 + $0x8] sm:$0xff]
        %v752 = vld [vmem:[#allocation12 + $0x10] sm:$0xff]
        %v753 = vld [vmem:[#allocation12 + $0x18] sm:$0xff]
        %v755 = vsel %vm487, %v475, 0
        %v758 = vsel %vm487, %v476, 0
        %v761 = vsel %vm487, %v477, 0
        %v764 = vsel %vm487, %v478, 0
        %v767 = vsel %vm487, %v479, 0
        %v770 = vsel %vm487, %v480, 0
        %v773 = vsel %vm487, %v481, 0
        %v776 = vsel %vm487, %v482, 0
        %778 = vmatprep.subr.mxu0 0.0
        %779 = vmatpush1.msra.mxu0 0.0
        %780 = vmatprep.subr.mxu0 0.0
        %781 = vmatpush1.msra.mxu0 0.0
        %782 = vmatprep.subr.mxu0 0.0
        %783 = vmatpush1.msra.mxu0 0.0
        %784 = vmatprep.subr.mxu0 0.0
        %785 = vmatpush1.msra.mxu0 0.0
        %786 = vmatprep.subr.mxu0 0.0
        %787 = vmatpush1.msra.mxu0 0.0
        %788 = vmatprep.subr.mxu0 0.0
        %789 = vmatpush1.msra.mxu0 0.0
        %790 = vmatprep.subr.mxu0 0.0
        %791 = vmatpush1.msra.mxu0 0.0
        %792 = vmatprep.subr.mxu0 0.0
        %793 = vmatpush1.msra.mxu0 0.0
        %794 = vmatprep.subr.mxu0 0.0
        %795 = vmatpush1.msra.mxu0 0.0
        %796 = vmatprep.subr.mxu0 0.0
        %797 = vmatpush1.msra.mxu0 0.0
        %798 = vmatprep.subr.mxu0 0.0
        %799 = vmatpush1.msra.mxu0 0.0
        %800 = vmatprep.subr.mxu0 0.0
        %801 = vmatpush1.msra.mxu0 0.0
        %802 = vmatprep.subr.mxu0 0.0
        %803 = vmatpush1.msra.mxu0 %v753
        %804 = vmatprep.subr.mxu0 0.0
        %805 = vmatpush1.msra.mxu0 %v752
        %806 = vmatprep.subr.mxu0 0.0
        %807 = vmatpush1.msra.mxu0 %v751
        %808 = vmatprep.subr.mxu0 0.0
        %809 = vmatpush1.msra.mxu0 %v750
        %810 = vmatprep.subr.mxu0 0.0
        %811 = vmatpush2.msra.mxu0 0.0
        %812 = vmatprep.subr.mxu0 0.0
        %813 = vmatpush2.msra.mxu0 0.0
        %814 = vmatprep.subr.mxu0 0.0
        %815 = vmatpush2.msra.mxu0 0.0
        %816 = vmatprep.subr.mxu0 0.0
        %817 = vmatpush2.msra.mxu0 0.0
        %818 = vmatprep.subr.mxu0 0.0
        %819 = vmatpush2.msra.mxu0 0.0
        %820 = vmatprep.subr.mxu0 0.0
        %821 = vmatpush2.msra.mxu0 0.0
        %822 = vmatprep.subr.mxu0 0.0
        %823 = vmatpush2.msra.mxu0 0.0
        %824 = vmatprep.subr.mxu0 0.0
        %825 = vmatpush2.msra.mxu0 0.0
        %826 = vmatprep.subr.mxu0 0.0
        %827 = vmatpush2.msra.mxu0 0.0
        %828 = vmatprep.subr.mxu0 0.0
        %829 = vmatpush2.msra.mxu0 0.0
        %830 = vmatprep.subr.mxu0 0.0
        %831 = vmatpush2.msra.mxu0 0.0
        %832 = vmatprep.subr.mxu0 0.0
        %833 = vmatpush2.msra.mxu0 0.0
        %834 = vmatprep.subr.mxu0 0.0
        %835 = vmatpush2.msra.mxu0 0.0
        %836 = vmatprep.subr.mxu0 0.0
        %837 = vmatpush2.msra.mxu0 0.0
        %838 = vmatprep.subr.mxu0 0.0
        %839 = vmatpush2.msra.mxu0 0.0
        %840 = vmatprep.subr.mxu0 0.0
        %841 = vmatpush2.msra.mxu0 0.0
        %842 = vmatprep.mubr.f32.mxu0 0.0
        %843 = vmatmul.mubr.f32.gmra.mxu0 %v755
        %v844 = vpop.f32.mrf.mxu0
        %v845 = vadd.f32 0.0, %v844
        %v846 = vpop.f32.mrf.mxu0
        %847 = vmatprep.mubr.f32.mxu0 0.0
        %848 = vmatmul.mubr.f32.gmra.mxu0 %v758
        %v849 = vpop.f32.mrf.mxu0
        %v850 = vadd.f32 0.0, %v849
        %v851 = vpop.f32.mrf.mxu0
        %852 = vmatprep.mubr.f32.mxu0 0.0
        %853 = vmatmul.mubr.f32.gmra.mxu0 %v761
        %v854 = vpop.f32.mrf.mxu0
        %v855 = vadd.f32 0.0, %v854
        %v856 = vpop.f32.mrf.mxu0
        %857 = vmatprep.mubr.f32.mxu0 0.0
        %858 = vmatmul.mubr.f32.gmra.mxu0 %v764
        %v859 = vpop.f32.mrf.mxu0
        %v860 = vadd.f32 0.0, %v859
        %v861 = vpop.f32.mrf.mxu0
        %862 = vmatprep.mubr.f32.mxu0 0.0
        %863 = vmatmul.mubr.f32.gmra.mxu0 %v767
        %v864 = vpop.f32.mrf.mxu0
        %v865 = vadd.f32 0.0, %v864
        %v866 = vpop.f32.mrf.mxu0
        %867 = vmatprep.mubr.f32.mxu0 0.0
        %868 = vmatmul.mubr.f32.gmra.mxu0 %v770
        %v869 = vpop.f32.mrf.mxu0
        %v870 = vadd.f32 0.0, %v869
        %v871 = vpop.f32.mrf.mxu0
        %872 = vmatprep.mubr.f32.mxu0 0.0
        %873 = vmatmul.mubr.f32.gmra.mxu0 %v773
        %v874 = vpop.f32.mrf.mxu0
        %v875 = vadd.f32 0.0, %v874
        %v876 = vpop.f32.mrf.mxu0
        %877 = vmatprep.mubr.f32.mxu0 0.0
        %878 = vmatmul.mubr.f32.gmra.mxu0 %v776
        %v879 = vpop.f32.mrf.mxu0
        %v880 = vadd.f32 0.0, %v879
        %v881 = vpop.f32.mrf.mxu0
        %882 = vdwg.mxu0
        %vm883 = vcmask 64512
        %v885 = vsel %vm883, %v579, 0
        %v888 = vsel %vm883, %v712, 0
        %890 = vmatprep.subr.mxu0 0.0
        %891 = vmatpush1.xpose.msra.mxu0 0.0
        %892 = vmatprep.subr.mxu0 0.0
        %893 = vmatpush1.xpose.msra.mxu0 0.0
        %894 = vmatprep.subr.mxu0 0.0
        %895 = vmatpush1.xpose.msra.mxu0 0.0
        %896 = vmatprep.subr.mxu0 0.0
        %897 = vmatpush1.xpose.msra.mxu0 0.0
        %898 = vmatprep.subr.mxu0 0.0
        %899 = vmatpush1.xpose.msra.mxu0 0.0
        %900 = vmatprep.subr.mxu0 0.0
        %901 = vmatpush1.xpose.msra.mxu0 0.0
        %902 = vmatprep.subr.mxu0 0.0
        %903 = vmatpush1.xpose.msra.mxu0 0.0
        %904 = vmatprep.subr.mxu0 0.0
        %905 = vmatpush1.xpose.msra.mxu0 0.0
        %906 = vmatprep.subr.mxu0 0.0
        %907 = vmatpush1.xpose.msra.mxu0 0.0
        %908 = vmatprep.subr.mxu0 0.0
        %909 = vmatpush1.xpose.msra.mxu0 0.0
        %910 = vmatprep.subr.mxu0 0.0
        %911 = vmatpush1.xpose.msra.mxu0 0.0
        %912 = vmatprep.subr.mxu0 0.0
        %913 = vmatpush1.xpose.msra.mxu0 0.0
        %914 = vmatprep.subr.mxu0 0.0
        %915 = vmatpush1.xpose.msra.mxu0 0.0
        %916 = vmatprep.subr.mxu0 0.0
        %917 = vmatpush1.xpose.msra.mxu0 0.0
        %918 = vmatprep.subr.mxu0 0.0
        %919 = vmatpush1.xpose.msra.mxu0 0.0
        %920 = vmatprep.subr.mxu0 0.0
        %921 = vmatpush1.xpose.msra.mxu0 %v888
        %922 = vmatprep.subr.mxu0 0.0
        %923 = vmatpush2.xpose.msra.mxu0 0.0
        %924 = vmatprep.subr.mxu0 0.0
        %925 = vmatpush2.xpose.msra.mxu0 0.0
        %926 = vmatprep.subr.mxu0 0.0
        %927 = vmatpush2.xpose.msra.mxu0 0.0
        %928 = vmatprep.subr.mxu0 0.0
        %929 = vmatpush2.xpose.msra.mxu0 0.0
        %930 = vmatprep.subr.mxu0 0.0
        %931 = vmatpush2.xpose.msra.mxu0 0.0
        %932 = vmatprep.subr.mxu0 0.0
        %933 = vmatpush2.xpose.msra.mxu0 0.0
        %934 = vmatprep.subr.mxu0 0.0
        %935 = vmatpush2.xpose.msra.mxu0 0.0
        %936 = vmatprep.subr.mxu0 0.0
        %937 = vmatpush2.xpose.msra.mxu0 0.0
        %938 = vmatprep.subr.mxu0 0.0
        %939 = vmatpush2.xpose.msra.mxu0 0.0
        %940 = vmatprep.subr.mxu0 0.0
        %941 = vmatpush2.xpose.msra.mxu0 0.0
        %942 = vmatprep.subr.mxu0 0.0
        %943 = vmatpush2.xpose.msra.mxu0 0.0
        %944 = vmatprep.subr.mxu0 0.0
        %945 = vmatpush2.xpose.msra.mxu0 0.0
        %946 = vmatprep.subr.mxu0 0.0
        %947 = vmatpush2.xpose.msra.mxu0 0.0
        %948 = vmatprep.subr.mxu0 0.0
        %949 = vmatpush2.xpose.msra.mxu0 0.0
        %950 = vmatprep.subr.mxu0 0.0
        %951 = vmatpush2.xpose.msra.mxu0 0.0
        %952 = vmatprep.subr.mxu0 0.0
        %953 = vmatpush2.xpose.msra.mxu0 0.0
        %954 = vmatprep.mubr.f32.mxu0 0.0
        %955 = vmatmul.mubr.f32.gmra.mxu0 %v885
        %v956 = vpop.f32.mrf.mxu0
        %v957 = vadd.f32 0.0, %v956
        %v958 = vpop.f32.mrf.mxu0
        %959 = vdwg.mxu0
        %v961 = vsel %vm883, %v584, 0
        %v964 = vsel %vm883, %v717, 0
        %966 = vmatprep.subr.mxu0 0.0
        %967 = vmatpush1.xpose.msra.mxu0 0.0
        %968 = vmatprep.subr.mxu0 0.0
        %969 = vmatpush1.xpose.msra.mxu0 0.0
        %970 = vmatprep.subr.mxu0 0.0
        %971 = vmatpush1.xpose.msra.mxu0 0.0
        %972 = vmatprep.subr.mxu0 0.0
        %973 = vmatpush1.xpose.msra.mxu0 0.0
        %974 = vmatprep.subr.mxu0 0.0
        %975 = vmatpush1.xpose.msra.mxu0 0.0
        %976 = vmatprep.subr.mxu0 0.0
        %977 = vmatpush1.xpose.msra.mxu0 0.0
        %978 = vmatprep.subr.mxu0 0.0
        %979 = vmatpush1.xpose.msra.mxu0 0.0
        %980 = vmatprep.subr.mxu0 0.0
        %981 = vmatpush1.xpose.msra.mxu0 0.0
        %982 = vmatprep.subr.mxu0 0.0
        %983 = vmatpush1.xpose.msra.mxu0 0.0
        %984 = vmatprep.subr.mxu0 0.0
        %985 = vmatpush1.xpose.msra.mxu0 0.0
        %986 = vmatprep.subr.mxu0 0.0
        %987 = vmatpush1.xpose.msra.mxu0 0.0
        %988 = vmatprep.subr.mxu0 0.0
        %989 = vmatpush1.xpose.msra.mxu0 0.0
        %990 = vmatprep.subr.mxu0 0.0
        %991 = vmatpush1.xpose.msra.mxu0 0.0
        %992 = vmatprep.subr.mxu0 0.0
        %993 = vmatpush1.xpose.msra.mxu0 0.0
        %994 = vmatprep.subr.mxu0 0.0
        %995 = vmatpush1.xpose.msra.mxu0 0.0
        %996 = vmatprep.subr.mxu0 0.0
        %997 = vmatpush1.xpose.msra.mxu0 %v964
        %998 = vmatprep.subr.mxu0 0.0
        %999 = vmatpush2.xpose.msra.mxu0 0.0
        %1000 = vmatprep.subr.mxu0 0.0
        %1001 = vmatpush2.xpose.msra.mxu0 0.0
        %1002 = vmatprep.subr.mxu0 0.0
        %1003 = vmatpush2.xpose.msra.mxu0 0.0
        %1004 = vmatprep.subr.mxu0 0.0
        %1005 = vmatpush2.xpose.msra.mxu0 0.0
        %1006 = vmatprep.subr.mxu0 0.0
        %1007 = vmatpush2.xpose.msra.mxu0 0.0
        %1008 = vmatprep.subr.mxu0 0.0
        %1009 = vmatpush2.xpose.msra.mxu0 0.0
        %1010 = vmatprep.subr.mxu0 0.0
        %1011 = vmatpush2.xpose.msra.mxu0 0.0
        %1012 = vmatprep.subr.mxu0 0.0
        %1013 = vmatpush2.xpose.msra.mxu0 0.0
        %1014 = vmatprep.subr.mxu0 0.0
        %1015 = vmatpush2.xpose.msra.mxu0 0.0
        %1016 = vmatprep.subr.mxu0 0.0
        %1017 = vmatpush2.xpose.msra.mxu0 0.0
        %1018 = vmatprep.subr.mxu0 0.0
        %1019 = vmatpush2.xpose.msra.mxu0 0.0
        %1020 = vmatprep.subr.mxu0 0.0
        %1021 = vmatpush2.xpose.msra.mxu0 0.0
        %1022 = vmatprep.subr.mxu0 0.0
        %1023 = vmatpush2.xpose.msra.mxu0 0.0
        %1024 = vmatprep.subr.mxu0 0.0
        %1025 = vmatpush2.xpose.msra.mxu0 0.0
        %1026 = vmatprep.subr.mxu0 0.0
        %1027 = vmatpush2.xpose.msra.mxu0 0.0
        %1028 = vmatprep.subr.mxu0 0.0
        %1029 = vmatpush2.xpose.msra.mxu0 0.0
        %1030 = vmatprep.mubr.f32.mxu0 0.0
        %1031 = vmatmul.mubr.f32.gmra.mxu0 %v961
        %v1032 = vpop.f32.mrf.mxu0
        %v1033 = vadd.f32 0.0, %v1032
        %v1034 = vpop.f32.mrf.mxu0
        %1035 = vdwg.mxu0
        %v1037 = vsel %vm883, %v589, 0
        %v1040 = vsel %vm883, %v722, 0
        %1042 = vmatprep.subr.mxu0 0.0
        %1043 = vmatpush1.xpose.msra.mxu0 0.0
        %1044 = vmatprep.subr.mxu0 0.0
        %1045 = vmatpush1.xpose.msra.mxu0 0.0
        %1046 = vmatprep.subr.mxu0 0.0
        %1047 = vmatpush1.xpose.msra.mxu0 0.0
        %1048 = vmatprep.subr.mxu0 0.0
        %1049 = vmatpush1.xpose.msra.mxu0 0.0
        %1050 = vmatprep.subr.mxu0 0.0
        %1051 = vmatpush1.xpose.msra.mxu0 0.0
        %1052 = vmatprep.subr.mxu0 0.0
        %1053 = vmatpush1.xpose.msra.mxu0 0.0
        %1054 = vmatprep.subr.mxu0 0.0
        %1055 = vmatpush1.xpose.msra.mxu0 0.0
        %1056 = vmatprep.subr.mxu0 0.0
        %1057 = vmatpush1.xpose.msra.mxu0 0.0
        %1058 = vmatprep.subr.mxu0 0.0
        %1059 = vmatpush1.xpose.msra.mxu0 0.0
        %1060 = vmatprep.subr.mxu0 0.0
        %1061 = vmatpush1.xpose.msra.mxu0 0.0
        %1062 = vmatprep.subr.mxu0 0.0
        %1063 = vmatpush1.xpose.msra.mxu0 0.0
        %1064 = vmatprep.subr.mxu0 0.0
        %1065 = vmatpush1.xpose.msra.mxu0 0.0
        %1066 = vmatprep.subr.mxu0 0.0
        %1067 = vmatpush1.xpose.msra.mxu0 0.0
        %1068 = vmatprep.subr.mxu0 0.0
        %1069 = vmatpush1.xpose.msra.mxu0 0.0
        %1070 = vmatprep.subr.mxu0 0.0
        %1071 = vmatpush1.xpose.msra.mxu0 0.0
        %1072 = vmatprep.subr.mxu0 0.0
        %1073 = vmatpush1.xpose.msra.mxu0 %v1040
        %1074 = vmatprep.subr.mxu0 0.0
        %1075 = vmatpush2.xpose.msra.mxu0 0.0
        %1076 = vmatprep.subr.mxu0 0.0
        %1077 = vmatpush2.xpose.msra.mxu0 0.0
        %1078 = vmatprep.subr.mxu0 0.0
        %1079 = vmatpush2.xpose.msra.mxu0 0.0
        %1080 = vmatprep.subr.mxu0 0.0
        %1081 = vmatpush2.xpose.msra.mxu0 0.0
        %1082 = vmatprep.subr.mxu0 0.0
        %1083 = vmatpush2.xpose.msra.mxu0 0.0
        %1084 = vmatprep.subr.mxu0 0.0
        %1085 = vmatpush2.xpose.msra.mxu0 0.0
        %1086 = vmatprep.subr.mxu0 0.0
        %1087 = vmatpush2.xpose.msra.mxu0 0.0
        %1088 = vmatprep.subr.mxu0 0.0
        %1089 = vmatpush2.xpose.msra.mxu0 0.0
        %1090 = vmatprep.subr.mxu0 0.0
        %1091 = vmatpush2.xpose.msra.mxu0 0.0
        %1092 = vmatprep.subr.mxu0 0.0
        %1093 = vmatpush2.xpose.msra.mxu0 0.0
        %1094 = vmatprep.subr.mxu0 0.0
        %1095 = vmatpush2.xpose.msra.mxu0 0.0
        %1096 = vmatprep.subr.mxu0 0.0
        %1097 = vmatpush2.xpose.msra.mxu0 0.0
        %1098 = vmatprep.subr.mxu0 0.0
        %1099 = vmatpush2.xpose.msra.mxu0 0.0
        %1100 = vmatprep.subr.mxu0 0.0
        %1101 = vmatpush2.xpose.msra.mxu0 0.0
        %1102 = vmatprep.subr.mxu0 0.0
        %1103 = vmatpush2.xpose.msra.mxu0 0.0
        %1104 = vmatprep.subr.mxu0 0.0
        %1105 = vmatpush2.xpose.msra.mxu0 0.0
        %1106 = vmatprep.mubr.f32.mxu0 0.0
        %1107 = vmatmul.mubr.f32.gmra.mxu0 %v1037
        %v1108 = vpop.f32.mrf.mxu0
        %v1109 = vadd.f32 0.0, %v1108
        %v1110 = vpop.f32.mrf.mxu0
        %1111 = vdwg.mxu0
        %v1113 = vsel %vm883, %v594, 0
        %v1116 = vsel %vm883, %v727, 0
        %1118 = vmatprep.subr.mxu0 0.0
        %1119 = vmatpush1.xpose.msra.mxu0 0.0
        %1120 = vmatprep.subr.mxu0 0.0
        %1121 = vmatpush1.xpose.msra.mxu0 0.0
        %1122 = vmatprep.subr.mxu0 0.0
        %1123 = vmatpush1.xpose.msra.mxu0 0.0
        %1124 = vmatprep.subr.mxu0 0.0
        %1125 = vmatpush1.xpose.msra.mxu0 0.0
        %1126 = vmatprep.subr.mxu0 0.0
        %1127 = vmatpush1.xpose.msra.mxu0 0.0
        %1128 = vmatprep.subr.mxu0 0.0
        %1129 = vmatpush1.xpose.msra.mxu0 0.0
        %1130 = vmatprep.subr.mxu0 0.0
        %1131 = vmatpush1.xpose.msra.mxu0 0.0
        %1132 = vmatprep.subr.mxu0 0.0
        %1133 = vmatpush1.xpose.msra.mxu0 0.0
        %1134 = vmatprep.subr.mxu0 0.0
        %1135 = vmatpush1.xpose.msra.mxu0 0.0
        %1136 = vmatprep.subr.mxu0 0.0
        %1137 = vmatpush1.xpose.msra.mxu0 0.0
        %1138 = vmatprep.subr.mxu0 0.0
        %1139 = vmatpush1.xpose.msra.mxu0 0.0
        %1140 = vmatprep.subr.mxu0 0.0
        %1141 = vmatpush1.xpose.msra.mxu0 0.0
        %1142 = vmatprep.subr.mxu0 0.0
        %1143 = vmatpush1.xpose.msra.mxu0 0.0
        %1144 = vmatprep.subr.mxu0 0.0
        %1145 = vmatpush1.xpose.msra.mxu0 0.0
        %1146 = vmatprep.subr.mxu0 0.0
        %1147 = vmatpush1.xpose.msra.mxu0 0.0
        %1148 = vmatprep.subr.mxu0 0.0
        %1149 = vmatpush1.xpose.msra.mxu0 %v1116
        %1150 = vmatprep.subr.mxu0 0.0
        %1151 = vmatpush2.xpose.msra.mxu0 0.0
        %1152 = vmatprep.subr.mxu0 0.0
        %1153 = vmatpush2.xpose.msra.mxu0 0.0
        %1154 = vmatprep.subr.mxu0 0.0
        %1155 = vmatpush2.xpose.msra.mxu0 0.0
        %1156 = vmatprep.subr.mxu0 0.0
        %1157 = vmatpush2.xpose.msra.mxu0 0.0
        %1158 = vmatprep.subr.mxu0 0.0
        %1159 = vmatpush2.xpose.msra.mxu0 0.0
        %1160 = vmatprep.subr.mxu0 0.0
        %1161 = vmatpush2.xpose.msra.mxu0 0.0
        %1162 = vmatprep.subr.mxu0 0.0
        %1163 = vmatpush2.xpose.msra.mxu0 0.0
        %1164 = vmatprep.subr.mxu0 0.0
        %1165 = vmatpush2.xpose.msra.mxu0 0.0
        %1166 = vmatprep.subr.mxu0 0.0
        %1167 = vmatpush2.xpose.msra.mxu0 0.0
        %1168 = vmatprep.subr.mxu0 0.0
        %1169 = vmatpush2.xpose.msra.mxu0 0.0
        %1170 = vmatprep.subr.mxu0 0.0
        %1171 = vmatpush2.xpose.msra.mxu0 0.0
        %1172 = vmatprep.subr.mxu0 0.0
        %1173 = vmatpush2.xpose.msra.mxu0 0.0
        %1174 = vmatprep.subr.mxu0 0.0
        %1175 = vmatpush2.xpose.msra.mxu0 0.0
        %1176 = vmatprep.subr.mxu0 0.0
        %1177 = vmatpush2.xpose.msra.mxu0 0.0
        %1178 = vmatprep.subr.mxu0 0.0
        %1179 = vmatpush2.xpose.msra.mxu0 0.0
        %1180 = vmatprep.subr.mxu0 0.0
        %1181 = vmatpush2.xpose.msra.mxu0 0.0
        %1182 = vmatprep.mubr.f32.mxu0 0.0
        %1183 = vmatmul.mubr.f32.gmra.mxu0 %v1113
        %v1184 = vpop.f32.mrf.mxu0
        %v1185 = vadd.f32 0.0, %v1184
        %v1186 = vpop.f32.mrf.mxu0
        %1187 = vdwg.mxu0
        %v1189 = vsel %vm883, %v599, 0
        %v1192 = vsel %vm883, %v732, 0
        %1194 = vmatprep.subr.mxu0 0.0
        %1195 = vmatpush1.xpose.msra.mxu0 0.0
        %1196 = vmatprep.subr.mxu0 0.0
        %1197 = vmatpush1.xpose.msra.mxu0 0.0
        %1198 = vmatprep.subr.mxu0 0.0
        %1199 = vmatpush1.xpose.msra.mxu0 0.0
        %1200 = vmatprep.subr.mxu0 0.0
        %1201 = vmatpush1.xpose.msra.mxu0 0.0
        %1202 = vmatprep.subr.mxu0 0.0
        %1203 = vmatpush1.xpose.msra.mxu0 0.0
        %1204 = vmatprep.subr.mxu0 0.0
        %1205 = vmatpush1.xpose.msra.mxu0 0.0
        %1206 = vmatprep.subr.mxu0 0.0
        %1207 = vmatpush1.xpose.msra.mxu0 0.0
        %1208 = vmatprep.subr.mxu0 0.0
        %1209 = vmatpush1.xpose.msra.mxu0 0.0
        %1210 = vmatprep.subr.mxu0 0.0
        %1211 = vmatpush1.xpose.msra.mxu0 0.0
        %1212 = vmatprep.subr.mxu0 0.0
        %1213 = vmatpush1.xpose.msra.mxu0 0.0
        %1214 = vmatprep.subr.mxu0 0.0
        %1215 = vmatpush1.xpose.msra.mxu0 0.0
        %1216 = vmatprep.subr.mxu0 0.0
        %1217 = vmatpush1.xpose.msra.mxu0 0.0
        %1218 = vmatprep.subr.mxu0 0.0
        %1219 = vmatpush1.xpose.msra.mxu0 0.0
        %1220 = vmatprep.subr.mxu0 0.0
        %1221 = vmatpush1.xpose.msra.mxu0 0.0
        %1222 = vmatprep.subr.mxu0 0.0
        %1223 = vmatpush1.xpose.msra.mxu0 0.0
        %1224 = vmatprep.subr.mxu0 0.0
        %1225 = vmatpush1.xpose.msra.mxu0 %v1192
        %1226 = vmatprep.subr.mxu0 0.0
        %1227 = vmatpush2.xpose.msra.mxu0 0.0
        %1228 = vmatprep.subr.mxu0 0.0
        %1229 = vmatpush2.xpose.msra.mxu0 0.0
        %1230 = vmatprep.subr.mxu0 0.0
        %1231 = vmatpush2.xpose.msra.mxu0 0.0
        %1232 = vmatprep.subr.mxu0 0.0
        %1233 = vmatpush2.xpose.msra.mxu0 0.0
        %1234 = vmatprep.subr.mxu0 0.0
        %1235 = vmatpush2.xpose.msra.mxu0 0.0
        %1236 = vmatprep.subr.mxu0 0.0
        %1237 = vmatpush2.xpose.msra.mxu0 0.0
        %1238 = vmatprep.subr.mxu0 0.0
        %1239 = vmatpush2.xpose.msra.mxu0 0.0
        %1240 = vmatprep.subr.mxu0 0.0
        %1241 = vmatpush2.xpose.msra.mxu0 0.0
        %1242 = vmatprep.subr.mxu0 0.0
        %1243 = vmatpush2.xpose.msra.mxu0 0.0
        %1244 = vmatprep.subr.mxu0 0.0
        %1245 = vmatpush2.xpose.msra.mxu0 0.0
        %1246 = vmatprep.subr.mxu0 0.0
        %1247 = vmatpush2.xpose.msra.mxu0 0.0
        %1248 = vmatprep.subr.mxu0 0.0
        %1249 = vmatpush2.xpose.msra.mxu0 0.0
        %1250 = vmatprep.subr.mxu0 0.0
        %1251 = vmatpush2.xpose.msra.mxu0 0.0
        %1252 = vmatprep.subr.mxu0 0.0
        %1253 = vmatpush2.xpose.msra.mxu0 0.0
        %1254 = vmatprep.subr.mxu0 0.0
        %1255 = vmatpush2.xpose.msra.mxu0 0.0
        %1256 = vmatprep.subr.mxu0 0.0
        %1257 = vmatpush2.xpose.msra.mxu0 0.0
        %1258 = vmatprep.mubr.f32.mxu0 0.0
        %1259 = vmatmul.mubr.f32.gmra.mxu0 %v1189
        %v1260 = vpop.f32.mrf.mxu0
        %v1261 = vadd.f32 0.0, %v1260
        %v1262 = vpop.f32.mrf.mxu0
        %1263 = vdwg.mxu0
        %v1265 = vsel %vm883, %v604, 0
        %v1268 = vsel %vm883, %v737, 0
        %1270 = vmatprep.subr.mxu0 0.0
        %1271 = vmatpush1.xpose.msra.mxu0 0.0
        %1272 = vmatprep.subr.mxu0 0.0
        %1273 = vmatpush1.xpose.msra.mxu0 0.0
        %1274 = vmatprep.subr.mxu0 0.0
        %1275 = vmatpush1.xpose.msra.mxu0 0.0
        %1276 = vmatprep.subr.mxu0 0.0
        %1277 = vmatpush1.xpose.msra.mxu0 0.0
        %1278 = vmatprep.subr.mxu0 0.0
        %1279 = vmatpush1.xpose.msra.mxu0 0.0
        %1280 = vmatprep.subr.mxu0 0.0
        %1281 = vmatpush1.xpose.msra.mxu0 0.0
        %1282 = vmatprep.subr.mxu0 0.0
        %1283 = vmatpush1.xpose.msra.mxu0 0.0
        %1284 = vmatprep.subr.mxu0 0.0
        %1285 = vmatpush1.xpose.msra.mxu0 0.0
        %1286 = vmatprep.subr.mxu0 0.0
        %1287 = vmatpush1.xpose.msra.mxu0 0.0
        %1288 = vmatprep.subr.mxu0 0.0
        %1289 = vmatpush1.xpose.msra.mxu0 0.0
        %1290 = vmatprep.subr.mxu0 0.0
        %1291 = vmatpush1.xpose.msra.mxu0 0.0
        %1292 = vmatprep.subr.mxu0 0.0
        %1293 = vmatpush1.xpose.msra.mxu0 0.0
        %1294 = vmatprep.subr.mxu0 0.0
        %1295 = vmatpush1.xpose.msra.mxu0 0.0
        %1296 = vmatprep.subr.mxu0 0.0
        %1297 = vmatpush1.xpose.msra.mxu0 0.0
        %1298 = vmatprep.subr.mxu0 0.0
        %1299 = vmatpush1.xpose.msra.mxu0 0.0
        %1300 = vmatprep.subr.mxu0 0.0
        %1301 = vmatpush1.xpose.msra.mxu0 %v1268
        %1302 = vmatprep.subr.mxu0 0.0
        %1303 = vmatpush2.xpose.msra.mxu0 0.0
        %1304 = vmatprep.subr.mxu0 0.0
        %1305 = vmatpush2.xpose.msra.mxu0 0.0
        %1306 = vmatprep.subr.mxu0 0.0
        %1307 = vmatpush2.xpose.msra.mxu0 0.0
        %1308 = vmatprep.subr.mxu0 0.0
        %1309 = vmatpush2.xpose.msra.mxu0 0.0
        %1310 = vmatprep.subr.mxu0 0.0
        %1311 = vmatpush2.xpose.msra.mxu0 0.0
        %1312 = vmatprep.subr.mxu0 0.0
        %1313 = vmatpush2.xpose.msra.mxu0 0.0
        %1314 = vmatprep.subr.mxu0 0.0
        %1315 = vmatpush2.xpose.msra.mxu0 0.0
        %1316 = vmatprep.subr.mxu0 0.0
        %1317 = vmatpush2.xpose.msra.mxu0 0.0
        %1318 = vmatprep.subr.mxu0 0.0
        %1319 = vmatpush2.xpose.msra.mxu0 0.0
        %1320 = vmatprep.subr.mxu0 0.0
        %1321 = vmatpush2.xpose.msra.mxu0 0.0
        %1322 = vmatprep.subr.mxu0 0.0
        %1323 = vmatpush2.xpose.msra.mxu0 0.0
        %1324 = vmatprep.subr.mxu0 0.0
        %1325 = vmatpush2.xpose.msra.mxu0 0.0
        %1326 = vmatprep.subr.mxu0 0.0
        %1327 = vmatpush2.xpose.msra.mxu0 0.0
        %1328 = vmatprep.subr.mxu0 0.0
        %1329 = vmatpush2.xpose.msra.mxu0 0.0
        %1330 = vmatprep.subr.mxu0 0.0
        %1331 = vmatpush2.xpose.msra.mxu0 0.0
        %1332 = vmatprep.subr.mxu0 0.0
        %1333 = vmatpush2.xpose.msra.mxu0 0.0
        %1334 = vmatprep.mubr.f32.mxu0 0.0
        %1335 = vmatmul.mubr.f32.gmra.mxu0 %v1265
        %v1336 = vpop.f32.mrf.mxu0
        %v1337 = vadd.f32 0.0, %v1336
        %v1338 = vpop.f32.mrf.mxu0
        %1339 = vdwg.mxu0
        %v1341 = vsel %vm883, %v609, 0
        %v1344 = vsel %vm883, %v742, 0
        %1346 = vmatprep.subr.mxu0 0.0
        %1347 = vmatpush1.xpose.msra.mxu0 0.0
        %1348 = vmatprep.subr.mxu0 0.0
        %1349 = vmatpush1.xpose.msra.mxu0 0.0
        %1350 = vmatprep.subr.mxu0 0.0
        %1351 = vmatpush1.xpose.msra.mxu0 0.0
        %1352 = vmatprep.subr.mxu0 0.0
        %1353 = vmatpush1.xpose.msra.mxu0 0.0
        %1354 = vmatprep.subr.mxu0 0.0
        %1355 = vmatpush1.xpose.msra.mxu0 0.0
        %1356 = vmatprep.subr.mxu0 0.0
        %1357 = vmatpush1.xpose.msra.mxu0 0.0
        %1358 = vmatprep.subr.mxu0 0.0
        %1359 = vmatpush1.xpose.msra.mxu0 0.0
        %1360 = vmatprep.subr.mxu0 0.0
        %1361 = vmatpush1.xpose.msra.mxu0 0.0
        %1362 = vmatprep.subr.mxu0 0.0
        %1363 = vmatpush1.xpose.msra.mxu0 0.0
        %1364 = vmatprep.subr.mxu0 0.0
        %1365 = vmatpush1.xpose.msra.mxu0 0.0
        %1366 = vmatprep.subr.mxu0 0.0
        %1367 = vmatpush1.xpose.msra.mxu0 0.0
        %1368 = vmatprep.subr.mxu0 0.0
        %1369 = vmatpush1.xpose.msra.mxu0 0.0
        %1370 = vmatprep.subr.mxu0 0.0
        %1371 = vmatpush1.xpose.msra.mxu0 0.0
        %1372 = vmatprep.subr.mxu0 0.0
        %1373 = vmatpush1.xpose.msra.mxu0 0.0
        %1374 = vmatprep.subr.mxu0 0.0
        %1375 = vmatpush1.xpose.msra.mxu0 0.0
        %1376 = vmatprep.subr.mxu0 0.0
        %1377 = vmatpush1.xpose.msra.mxu0 %v1344
        %1378 = vmatprep.subr.mxu0 0.0
        %1379 = vmatpush2.xpose.msra.mxu0 0.0
        %1380 = vmatprep.subr.mxu0 0.0
        %1381 = vmatpush2.xpose.msra.mxu0 0.0
        %1382 = vmatprep.subr.mxu0 0.0
        %1383 = vmatpush2.xpose.msra.mxu0 0.0
        %1384 = vmatprep.subr.mxu0 0.0
        %1385 = vmatpush2.xpose.msra.mxu0 0.0
        %1386 = vmatprep.subr.mxu0 0.0
        %1387 = vmatpush2.xpose.msra.mxu0 0.0
        %1388 = vmatprep.subr.mxu0 0.0
        %1389 = vmatpush2.xpose.msra.mxu0 0.0
        %1390 = vmatprep.subr.mxu0 0.0
        %1391 = vmatpush2.xpose.msra.mxu0 0.0
        %1392 = vmatprep.subr.mxu0 0.0
        %1393 = vmatpush2.xpose.msra.mxu0 0.0
        %1394 = vmatprep.subr.mxu0 0.0
        %1395 = vmatpush2.xpose.msra.mxu0 0.0
        %1396 = vmatprep.subr.mxu0 0.0
        %1397 = vmatpush2.xpose.msra.mxu0 0.0
        %1398 = vmatprep.subr.mxu0 0.0
        %1399 = vmatpush2.xpose.msra.mxu0 0.0
        %1400 = vmatprep.subr.mxu0 0.0
        %1401 = vmatpush2.xpose.msra.mxu0 0.0
        %1402 = vmatprep.subr.mxu0 0.0
        %1403 = vmatpush2.xpose.msra.mxu0 0.0
        %1404 = vmatprep.subr.mxu0 0.0
        %1405 = vmatpush2.xpose.msra.mxu0 0.0
        %1406 = vmatprep.subr.mxu0 0.0
        %1407 = vmatpush2.xpose.msra.mxu0 0.0
        %1408 = vmatprep.subr.mxu0 0.0
        %1409 = vmatpush2.xpose.msra.mxu0 0.0
        %1410 = vmatprep.mubr.f32.mxu0 0.0
        %1411 = vmatmul.mubr.f32.gmra.mxu0 %v1341
        %v1412 = vpop.f32.mrf.mxu0
        %v1413 = vadd.f32 0.0, %v1412
        %v1414 = vpop.f32.mrf.mxu0
        %1415 = vdwg.mxu0
        %v1417 = vsel %vm883, %v614, 0
        %v1420 = vsel %vm883, %v747, 0
        %1422 = vmatprep.subr.mxu0 0.0
        %1423 = vmatpush1.xpose.msra.mxu0 0.0
        %1424 = vmatprep.subr.mxu0 0.0
        %1425 = vmatpush1.xpose.msra.mxu0 0.0
        %1426 = vmatprep.subr.mxu0 0.0
        %1427 = vmatpush1.xpose.msra.mxu0 0.0
        %1428 = vmatprep.subr.mxu0 0.0
        %1429 = vmatpush1.xpose.msra.mxu0 0.0
        %1430 = vmatprep.subr.mxu0 0.0
        %1431 = vmatpush1.xpose.msra.mxu0 0.0
        %1432 = vmatprep.subr.mxu0 0.0
        %1433 = vmatpush1.xpose.msra.mxu0 0.0
        %1434 = vmatprep.subr.mxu0 0.0
        %1435 = vmatpush1.xpose.msra.mxu0 0.0
        %1436 = vmatprep.subr.mxu0 0.0
        %1437 = vmatpush1.xpose.msra.mxu0 0.0
        %1438 = vmatprep.subr.mxu0 0.0
        %1439 = vmatpush1.xpose.msra.mxu0 0.0
        %1440 = vmatprep.subr.mxu0 0.0
        %1441 = vmatpush1.xpose.msra.mxu0 0.0
        %1442 = vmatprep.subr.mxu0 0.0
        %1443 = vmatpush1.xpose.msra.mxu0 0.0
        %1444 = vmatprep.subr.mxu0 0.0
        %1445 = vmatpush1.xpose.msra.mxu0 0.0
        %1446 = vmatprep.subr.mxu0 0.0
        %1447 = vmatpush1.xpose.msra.mxu0 0.0
        %1448 = vmatprep.subr.mxu0 0.0
        %1449 = vmatpush1.xpose.msra.mxu0 0.0
        %1450 = vmatprep.subr.mxu0 0.0
        %1451 = vmatpush1.xpose.msra.mxu0 0.0
        %1452 = vmatprep.subr.mxu0 0.0
        %1453 = vmatpush1.xpose.msra.mxu0 %v1420
        %1454 = vmatprep.subr.mxu0 0.0
        %1455 = vmatpush2.xpose.msra.mxu0 0.0
        %1456 = vmatprep.subr.mxu0 0.0
        %1457 = vmatpush2.xpose.msra.mxu0 0.0
        %1458 = vmatprep.subr.mxu0 0.0
        %1459 = vmatpush2.xpose.msra.mxu0 0.0
        %1460 = vmatprep.subr.mxu0 0.0
        %1461 = vmatpush2.xpose.msra.mxu0 0.0
        %1462 = vmatprep.subr.mxu0 0.0
        %1463 = vmatpush2.xpose.msra.mxu0 0.0
        %1464 = vmatprep.subr.mxu0 0.0
        %1465 = vmatpush2.xpose.msra.mxu0 0.0
        %1466 = vmatprep.subr.mxu0 0.0
        %1467 = vmatpush2.xpose.msra.mxu0 0.0
        %1468 = vmatprep.subr.mxu0 0.0
        %1469 = vmatpush2.xpose.msra.mxu0 0.0
        %1470 = vmatprep.subr.mxu0 0.0
        %1471 = vmatpush2.xpose.msra.mxu0 0.0
        %1472 = vmatprep.subr.mxu0 0.0
        %1473 = vmatpush2.xpose.msra.mxu0 0.0
        %1474 = vmatprep.subr.mxu0 0.0
        %1475 = vmatpush2.xpose.msra.mxu0 0.0
        %1476 = vmatprep.subr.mxu0 0.0
        %1477 = vmatpush2.xpose.msra.mxu0 0.0
        %1478 = vmatprep.subr.mxu0 0.0
        %1479 = vmatpush2.xpose.msra.mxu0 0.0
        %1480 = vmatprep.subr.mxu0 0.0
        %1481 = vmatpush2.xpose.msra.mxu0 0.0
        %1482 = vmatprep.subr.mxu0 0.0
        %1483 = vmatpush2.xpose.msra.mxu0 0.0
        %1484 = vmatprep.subr.mxu0 0.0
        %1485 = vmatpush2.xpose.msra.mxu0 0.0
        %1486 = vmatprep.mubr.f32.mxu0 0.0
        %1487 = vmatmul.mubr.f32.gmra.mxu0 %v1417
        %v1488 = vpop.f32.mrf.mxu0
        %v1489 = vadd.f32 0.0, %v1488
        %v1490 = vpop.f32.mrf.mxu0
        %1491 = vdwg.mxu0
        %v1492 = vsel %vm883, %v957, -inf
        %1493 = vmax.xlane.f32.xlu0 %v1492
        %v1494 = vpop.xlane.xlu0 %1493
        %v1495 = vsel %vm883, %v1033, -inf
        %1496 = vmax.xlane.f32.xlu0 %v1495
        %v1497 = vpop.xlane.xlu0 %1496
        %v1498 = vsel %vm883, %v1109, -inf
        %1499 = vmax.xlane.f32.xlu0 %v1498
        %v1500 = vpop.xlane.xlu0 %1499
        %v1501 = vsel %vm883, %v1185, -inf
        %1502 = vmax.xlane.f32.xlu0 %v1501
        %v1503 = vpop.xlane.xlu0 %1502
        %v1504 = vsel %vm883, %v1261, -inf
        %1505 = vmax.xlane.f32.xlu0 %v1504
        %v1506 = vpop.xlane.xlu0 %1505
        %v1507 = vsel %vm883, %v1337, -inf
        %1508 = vmax.xlane.f32.xlu0 %v1507
        %v1509 = vpop.xlane.xlu0 %1508
        %v1510 = vsel %vm883, %v1413, -inf
        %1511 = vmax.xlane.f32.xlu0 %v1510
        %v1512 = vpop.xlane.xlu0 %1511
        %v1513 = vsel %vm883, %v1489, -inf
        %1514 = vmax.xlane.f32.xlu0 %v1513
        %v1515 = vpop.xlane.xlu0 %1514
        %v1516 = vsub.f32 %v957, %v1494
        %v1517 = vsub.f32 %v1033, %v1497
        %v1518 = vsub.f32 %v1109, %v1500
        %v1519 = vsub.f32 %v1185, %v1503
        %v1520 = vsub.f32 %v1261, %v1506
        %v1521 = vsub.f32 %v1337, %v1509
        %v1522 = vsub.f32 %v1413, %v1512
        %v1523 = vsub.f32 %v1489, %v1515
        %v1524 = vmul.f32 %v1516, 1.442695
        %v1525 = vpow.pop %v1524
        %v1526 = vmul.f32 %v1517, 1.442695
        %v1527 = vpow.pop %v1526
        %v1528 = vmul.f32 %v1518, 1.442695
        %v1529 = vpow.pop %v1528
        %v1530 = vmul.f32 %v1519, 1.442695
        %v1531 = vpow.pop %v1530
        %v1532 = vmul.f32 %v1520, 1.442695
        %v1533 = vpow.pop %v1532
        %v1534 = vmul.f32 %v1521, 1.442695
        %v1535 = vpow.pop %v1534
        %v1536 = vmul.f32 %v1522, 1.442695
        %v1537 = vpow.pop %v1536
        %v1538 = vmul.f32 %v1523, 1.442695
        %v1539 = vpow.pop %v1538
        %v1540 = vsel %vm883, %v1525, 0.0
        %1541 = vadd.xlane.f32.xlu0 %v1540
        %v1542 = vpop.xlane.xlu0 %1541
        %v1543 = vsel %vm883, %v1527, 0.0
        %1544 = vadd.xlane.f32.xlu0 %v1543
        %v1545 = vpop.xlane.xlu0 %1544
        %v1546 = vsel %vm883, %v1529, 0.0
        %1547 = vadd.xlane.f32.xlu0 %v1546
        %v1548 = vpop.xlane.xlu0 %1547
        %v1549 = vsel %vm883, %v1531, 0.0
        %1550 = vadd.xlane.f32.xlu0 %v1549
        %v1551 = vpop.xlane.xlu0 %1550
        %v1552 = vsel %vm883, %v1533, 0.0
        %1553 = vadd.xlane.f32.xlu0 %v1552
        %v1554 = vpop.xlane.xlu0 %1553
        %v1555 = vsel %vm883, %v1535, 0.0
        %1556 = vadd.xlane.f32.xlu0 %v1555
        %v1557 = vpop.xlane.xlu0 %1556
        %v1558 = vsel %vm883, %v1537, 0.0
        %1559 = vadd.xlane.f32.xlu0 %v1558
        %v1560 = vpop.xlane.xlu0 %1559
        %v1561 = vsel %vm883, %v1539, 0.0
        %1562 = vadd.xlane.f32.xlu0 %v1561
        %v1563 = vpop.xlane.xlu0 %1562
        %v1564 = vrcp.pop %v1542
        %v1565 = vrcp.pop %v1545
        %v1566 = vrcp.pop %v1548
        %v1567 = vrcp.pop %v1551
        %v1568 = vrcp.pop %v1554
        %v1569 = vrcp.pop %v1557
        %v1570 = vrcp.pop %v1560
        %v1571 = vrcp.pop %v1563
        %v1572 = vmul.f32 %v1525, %v1564
        %v1573 = vmul.f32 %v1527, %v1565
        %v1574 = vmul.f32 %v1529, %v1566
        %v1575 = vmul.f32 %v1531, %v1567
        %v1576 = vmul.f32 %v1533, %v1568
        %v1577 = vmul.f32 %v1535, %v1569
        %v1578 = vmul.f32 %v1537, %v1570
        %v1579 = vmul.f32 %v1539, %v1571
        %v1581 = vsel %vm883, %v1572, 0
        %1583 = vmatprep.subr.mxu0 0.0
        %1584 = vmatpush1.msra.mxu0 0.0
        %1585 = vmatprep.subr.mxu0 0.0
        %1586 = vmatpush1.msra.mxu0 0.0
        %1587 = vmatprep.subr.mxu0 0.0
        %1588 = vmatpush1.msra.mxu0 0.0
        %1589 = vmatprep.subr.mxu0 0.0
        %1590 = vmatpush1.msra.mxu0 0.0
        %1591 = vmatprep.subr.mxu0 0.0
        %1592 = vmatpush1.msra.mxu0 0.0
        %1593 = vmatprep.subr.mxu0 0.0
        %1594 = vmatpush1.msra.mxu0 0.0
        %1595 = vmatprep.subr.mxu0 0.0
        %1596 = vmatpush1.msra.mxu0 0.0
        %1597 = vmatprep.subr.mxu0 0.0
        %1598 = vmatpush1.msra.mxu0 0.0
        %1599 = vmatprep.subr.mxu0 0.0
        %1600 = vmatpush1.msra.mxu0 0.0
        %1601 = vmatprep.subr.mxu0 0.0
        %1602 = vmatpush1.msra.mxu0 0.0
        %1603 = vmatprep.subr.mxu0 0.0
        %1604 = vmatpush1.msra.mxu0 0.0
        %1605 = vmatprep.subr.mxu0 0.0
        %1606 = vmatpush1.msra.mxu0 0.0
        %1607 = vmatprep.subr.mxu0 0.0
        %1608 = vmatpush1.msra.mxu0 0.0
        %1609 = vmatprep.subr.mxu0 0.0
        %1610 = vmatpush1.msra.mxu0 0.0
        %1611 = vmatprep.subr.mxu0 0.0
        %1612 = vmatpush1.msra.mxu0 0.0
        %1613 = vmatprep.subr.mxu0 0.0
        %1614 = vmatpush1.msra.mxu0 %v845
        %1615 = vmatprep.subr.mxu0 0.0
        %1616 = vmatpush2.msra.mxu0 0.0
        %1617 = vmatprep.subr.mxu0 0.0
        %1618 = vmatpush2.msra.mxu0 0.0
        %1619 = vmatprep.subr.mxu0 0.0
        %1620 = vmatpush2.msra.mxu0 0.0
        %1621 = vmatprep.subr.mxu0 0.0
        %1622 = vmatpush2.msra.mxu0 0.0
        %1623 = vmatprep.subr.mxu0 0.0
        %1624 = vmatpush2.msra.mxu0 0.0
        %1625 = vmatprep.subr.mxu0 0.0
        %1626 = vmatpush2.msra.mxu0 0.0
        %1627 = vmatprep.subr.mxu0 0.0
        %1628 = vmatpush2.msra.mxu0 0.0
        %1629 = vmatprep.subr.mxu0 0.0
        %1630 = vmatpush2.msra.mxu0 0.0
        %1631 = vmatprep.subr.mxu0 0.0
        %1632 = vmatpush2.msra.mxu0 0.0
        %1633 = vmatprep.subr.mxu0 0.0
        %1634 = vmatpush2.msra.mxu0 0.0
        %1635 = vmatprep.subr.mxu0 0.0
        %1636 = vmatpush2.msra.mxu0 0.0
        %1637 = vmatprep.subr.mxu0 0.0
        %1638 = vmatpush2.msra.mxu0 0.0
        %1639 = vmatprep.subr.mxu0 0.0
        %1640 = vmatpush2.msra.mxu0 0.0
        %1641 = vmatprep.subr.mxu0 0.0
        %1642 = vmatpush2.msra.mxu0 0.0
        %1643 = vmatprep.subr.mxu0 0.0
        %1644 = vmatpush2.msra.mxu0 0.0
        %1645 = vmatprep.subr.mxu0 0.0
        %1646 = vmatpush2.msra.mxu0 0.0
        %1647 = vmatprep.mubr.f32.mxu0 0.0
        %1648 = vmatmul.mubr.f32.gmra.mxu0 %v1581
        %v1649 = vpop.f32.mrf.mxu0
        %v1650 = vadd.f32 0.0, %v1649
        %v1651 = vpop.f32.mrf.mxu0
        %1652 = vdwg.mxu0
        %v1654 = vsel %vm883, %v1573, 0
        %1656 = vmatprep.subr.mxu0 0.0
        %1657 = vmatpush1.msra.mxu0 0.0
        %1658 = vmatprep.subr.mxu0 0.0
        %1659 = vmatpush1.msra.mxu0 0.0
        %1660 = vmatprep.subr.mxu0 0.0
        %1661 = vmatpush1.msra.mxu0 0.0
        %1662 = vmatprep.subr.mxu0 0.0
        %1663 = vmatpush1.msra.mxu0 0.0
        %1664 = vmatprep.subr.mxu0 0.0
        %1665 = vmatpush1.msra.mxu0 0.0
        %1666 = vmatprep.subr.mxu0 0.0
        %1667 = vmatpush1.msra.mxu0 0.0
        %1668 = vmatprep.subr.mxu0 0.0
        %1669 = vmatpush1.msra.mxu0 0.0
        %1670 = vmatprep.subr.mxu0 0.0
        %1671 = vmatpush1.msra.mxu0 0.0
        %1672 = vmatprep.subr.mxu0 0.0
        %1673 = vmatpush1.msra.mxu0 0.0
        %1674 = vmatprep.subr.mxu0 0.0
        %1675 = vmatpush1.msra.mxu0 0.0
        %1676 = vmatprep.subr.mxu0 0.0
        %1677 = vmatpush1.msra.mxu0 0.0
        %1678 = vmatprep.subr.mxu0 0.0
        %1679 = vmatpush1.msra.mxu0 0.0
        %1680 = vmatprep.subr.mxu0 0.0
        %1681 = vmatpush1.msra.mxu0 0.0
        %1682 = vmatprep.subr.mxu0 0.0
        %1683 = vmatpush1.msra.mxu0 0.0
        %1684 = vmatprep.subr.mxu0 0.0
        %1685 = vmatpush1.msra.mxu0 0.0
        %1686 = vmatprep.subr.mxu0 0.0
        %1687 = vmatpush1.msra.mxu0 %v850
        %1688 = vmatprep.subr.mxu0 0.0
        %1689 = vmatpush2.msra.mxu0 0.0
        %1690 = vmatprep.subr.mxu0 0.0
        %1691 = vmatpush2.msra.mxu0 0.0
        %1692 = vmatprep.subr.mxu0 0.0
        %1693 = vmatpush2.msra.mxu0 0.0
        %1694 = vmatprep.subr.mxu0 0.0
        %1695 = vmatpush2.msra.mxu0 0.0
        %1696 = vmatprep.subr.mxu0 0.0
        %1697 = vmatpush2.msra.mxu0 0.0
        %1698 = vmatprep.subr.mxu0 0.0
        %1699 = vmatpush2.msra.mxu0 0.0
        %1700 = vmatprep.subr.mxu0 0.0
        %1701 = vmatpush2.msra.mxu0 0.0
        %1702 = vmatprep.subr.mxu0 0.0
        %1703 = vmatpush2.msra.mxu0 0.0
        %1704 = vmatprep.subr.mxu0 0.0
        %1705 = vmatpush2.msra.mxu0 0.0
        %1706 = vmatprep.subr.mxu0 0.0
        %1707 = vmatpush2.msra.mxu0 0.0
        %1708 = vmatprep.subr.mxu0 0.0
        %1709 = vmatpush2.msra.mxu0 0.0
        %1710 = vmatprep.subr.mxu0 0.0
        %1711 = vmatpush2.msra.mxu0 0.0
        %1712 = vmatprep.subr.mxu0 0.0
        %1713 = vmatpush2.msra.mxu0 0.0
        %1714 = vmatprep.subr.mxu0 0.0
        %1715 = vmatpush2.msra.mxu0 0.0
        %1716 = vmatprep.subr.mxu0 0.0
        %1717 = vmatpush2.msra.mxu0 0.0
        %1718 = vmatprep.subr.mxu0 0.0
        %1719 = vmatpush2.msra.mxu0 0.0
        %1720 = vmatprep.mubr.f32.mxu0 0.0
        %1721 = vmatmul.mubr.f32.gmra.mxu0 %v1654
        %v1722 = vpop.f32.mrf.mxu0
        %v1723 = vadd.f32 0.0, %v1722
        %v1724 = vpop.f32.mrf.mxu0
        %1725 = vdwg.mxu0
        %v1727 = vsel %vm883, %v1574, 0
        %1729 = vmatprep.subr.mxu0 0.0
        %1730 = vmatpush1.msra.mxu0 0.0
        %1731 = vmatprep.subr.mxu0 0.0
        %1732 = vmatpush1.msra.mxu0 0.0
        %1733 = vmatprep.subr.mxu0 0.0
        %1734 = vmatpush1.msra.mxu0 0.0
        %1735 = vmatprep.subr.mxu0 0.0
        %1736 = vmatpush1.msra.mxu0 0.0
        %1737 = vmatprep.subr.mxu0 0.0
        %1738 = vmatpush1.msra.mxu0 0.0
        %1739 = vmatprep.subr.mxu0 0.0
        %1740 = vmatpush1.msra.mxu0 0.0
        %1741 = vmatprep.subr.mxu0 0.0
        %1742 = vmatpush1.msra.mxu0 0.0
        %1743 = vmatprep.subr.mxu0 0.0
        %1744 = vmatpush1.msra.mxu0 0.0
        %1745 = vmatprep.subr.mxu0 0.0
        %1746 = vmatpush1.msra.mxu0 0.0
        %1747 = vmatprep.subr.mxu0 0.0
        %1748 = vmatpush1.msra.mxu0 0.0
        %1749 = vmatprep.subr.mxu0 0.0
        %1750 = vmatpush1.msra.mxu0 0.0
        %1751 = vmatprep.subr.mxu0 0.0
        %1752 = vmatpush1.msra.mxu0 0.0
        %1753 = vmatprep.subr.mxu0 0.0
        %1754 = vmatpush1.msra.mxu0 0.0
        %1755 = vmatprep.subr.mxu0 0.0
        %1756 = vmatpush1.msra.mxu0 0.0
        %1757 = vmatprep.subr.mxu0 0.0
        %1758 = vmatpush1.msra.mxu0 0.0
        %1759 = vmatprep.subr.mxu0 0.0
        %1760 = vmatpush1.msra.mxu0 %v855
        %1761 = vmatprep.subr.mxu0 0.0
        %1762 = vmatpush2.msra.mxu0 0.0
        %1763 = vmatprep.subr.mxu0 0.0
        %1764 = vmatpush2.msra.mxu0 0.0
        %1765 = vmatprep.subr.mxu0 0.0
        %1766 = vmatpush2.msra.mxu0 0.0
        %1767 = vmatprep.subr.mxu0 0.0
        %1768 = vmatpush2.msra.mxu0 0.0
        %1769 = vmatprep.subr.mxu0 0.0
        %1770 = vmatpush2.msra.mxu0 0.0
        %1771 = vmatprep.subr.mxu0 0.0
        %1772 = vmatpush2.msra.mxu0 0.0
        %1773 = vmatprep.subr.mxu0 0.0
        %1774 = vmatpush2.msra.mxu0 0.0
        %1775 = vmatprep.subr.mxu0 0.0
        %1776 = vmatpush2.msra.mxu0 0.0
        %1777 = vmatprep.subr.mxu0 0.0
        %1778 = vmatpush2.msra.mxu0 0.0
        %1779 = vmatprep.subr.mxu0 0.0
        %1780 = vmatpush2.msra.mxu0 0.0
        %1781 = vmatprep.subr.mxu0 0.0
        %1782 = vmatpush2.msra.mxu0 0.0
        %1783 = vmatprep.subr.mxu0 0.0
        %1784 = vmatpush2.msra.mxu0 0.0
        %1785 = vmatprep.subr.mxu0 0.0
        %1786 = vmatpush2.msra.mxu0 0.0
        %1787 = vmatprep.subr.mxu0 0.0
        %1788 = vmatpush2.msra.mxu0 0.0
        %1789 = vmatprep.subr.mxu0 0.0
        %1790 = vmatpush2.msra.mxu0 0.0
        %1791 = vmatprep.subr.mxu0 0.0
        %1792 = vmatpush2.msra.mxu0 0.0
        %1793 = vmatprep.mubr.f32.mxu0 0.0
        %1794 = vmatmul.mubr.f32.gmra.mxu0 %v1727
        %v1795 = vpop.f32.mrf.mxu0
        %v1796 = vadd.f32 0.0, %v1795
        %v1797 = vpop.f32.mrf.mxu0
        %1798 = vdwg.mxu0
        %v1800 = vsel %vm883, %v1575, 0
        %1802 = vmatprep.subr.mxu0 0.0
        %1803 = vmatpush1.msra.mxu0 0.0
        %1804 = vmatprep.subr.mxu0 0.0
        %1805 = vmatpush1.msra.mxu0 0.0
        %1806 = vmatprep.subr.mxu0 0.0
        %1807 = vmatpush1.msra.mxu0 0.0
        %1808 = vmatprep.subr.mxu0 0.0
        %1809 = vmatpush1.msra.mxu0 0.0
        %1810 = vmatprep.subr.mxu0 0.0
        %1811 = vmatpush1.msra.mxu0 0.0
        %1812 = vmatprep.subr.mxu0 0.0
        %1813 = vmatpush1.msra.mxu0 0.0
        %1814 = vmatprep.subr.mxu0 0.0
        %1815 = vmatpush1.msra.mxu0 0.0
        %1816 = vmatprep.subr.mxu0 0.0
        %1817 = vmatpush1.msra.mxu0 0.0
        %1818 = vmatprep.subr.mxu0 0.0
        %1819 = vmatpush1.msra.mxu0 0.0
        %1820 = vmatprep.subr.mxu0 0.0
        %1821 = vmatpush1.msra.mxu0 0.0
        %1822 = vmatprep.subr.mxu0 0.0
        %1823 = vmatpush1.msra.mxu0 0.0
        %1824 = vmatprep.subr.mxu0 0.0
        %1825 = vmatpush1.msra.mxu0 0.0
        %1826 = vmatprep.subr.mxu0 0.0
        %1827 = vmatpush1.msra.mxu0 0.0
        %1828 = vmatprep.subr.mxu0 0.0
        %1829 = vmatpush1.msra.mxu0 0.0
        %1830 = vmatprep.subr.mxu0 0.0
        %1831 = vmatpush1.msra.mxu0 0.0
        %1832 = vmatprep.subr.mxu0 0.0
        %1833 = vmatpush1.msra.mxu0 %v860
        %1834 = vmatprep.subr.mxu0 0.0
        %1835 = vmatpush2.msra.mxu0 0.0
        %1836 = vmatprep.subr.mxu0 0.0
        %1837 = vmatpush2.msra.mxu0 0.0
        %1838 = vmatprep.subr.mxu0 0.0
        %1839 = vmatpush2.msra.mxu0 0.0
        %1840 = vmatprep.subr.mxu0 0.0
        %1841 = vmatpush2.msra.mxu0 0.0
        %1842 = vmatprep.subr.mxu0 0.0
        %1843 = vmatpush2.msra.mxu0 0.0
        %1844 = vmatprep.subr.mxu0 0.0
        %1845 = vmatpush2.msra.mxu0 0.0
        %1846 = vmatprep.subr.mxu0 0.0
        %1847 = vmatpush2.msra.mxu0 0.0
        %1848 = vmatprep.subr.mxu0 0.0
        %1849 = vmatpush2.msra.mxu0 0.0
        %1850 = vmatprep.subr.mxu0 0.0
        %1851 = vmatpush2.msra.mxu0 0.0
        %1852 = vmatprep.subr.mxu0 0.0
        %1853 = vmatpush2.msra.mxu0 0.0
        %1854 = vmatprep.subr.mxu0 0.0
        %1855 = vmatpush2.msra.mxu0 0.0
        %1856 = vmatprep.subr.mxu0 0.0
        %1857 = vmatpush2.msra.mxu0 0.0
        %1858 = vmatprep.subr.mxu0 0.0
        %1859 = vmatpush2.msra.mxu0 0.0
        %1860 = vmatprep.subr.mxu0 0.0
        %1861 = vmatpush2.msra.mxu0 0.0
        %1862 = vmatprep.subr.mxu0 0.0
        %1863 = vmatpush2.msra.mxu0 0.0
        %1864 = vmatprep.subr.mxu0 0.0
        %1865 = vmatpush2.msra.mxu0 0.0
        %1866 = vmatprep.mubr.f32.mxu0 0.0
        %1867 = vmatmul.mubr.f32.gmra.mxu0 %v1800
        %v1868 = vpop.f32.mrf.mxu0
        %v1869 = vadd.f32 0.0, %v1868
        %v1870 = vpop.f32.mrf.mxu0
        %1871 = vdwg.mxu0
        %v1873 = vsel %vm883, %v1576, 0
        %1875 = vmatprep.subr.mxu0 0.0
        %1876 = vmatpush1.msra.mxu0 0.0
        %1877 = vmatprep.subr.mxu0 0.0
        %1878 = vmatpush1.msra.mxu0 0.0
        %1879 = vmatprep.subr.mxu0 0.0
        %1880 = vmatpush1.msra.mxu0 0.0
        %1881 = vmatprep.subr.mxu0 0.0
        %1882 = vmatpush1.msra.mxu0 0.0
        %1883 = vmatprep.subr.mxu0 0.0
        %1884 = vmatpush1.msra.mxu0 0.0
        %1885 = vmatprep.subr.mxu0 0.0
        %1886 = vmatpush1.msra.mxu0 0.0
        %1887 = vmatprep.subr.mxu0 0.0
        %1888 = vmatpush1.msra.mxu0 0.0
        %1889 = vmatprep.subr.mxu0 0.0
        %1890 = vmatpush1.msra.mxu0 0.0
        %1891 = vmatprep.subr.mxu0 0.0
        %1892 = vmatpush1.msra.mxu0 0.0
        %1893 = vmatprep.subr.mxu0 0.0
        %1894 = vmatpush1.msra.mxu0 0.0
        %1895 = vmatprep.subr.mxu0 0.0
        %1896 = vmatpush1.msra.mxu0 0.0
        %1897 = vmatprep.subr.mxu0 0.0
        %1898 = vmatpush1.msra.mxu0 0.0
        %1899 = vmatprep.subr.mxu0 0.0
        %1900 = vmatpush1.msra.mxu0 0.0
        %1901 = vmatprep.subr.mxu0 0.0
        %1902 = vmatpush1.msra.mxu0 0.0
        %1903 = vmatprep.subr.mxu0 0.0
        %1904 = vmatpush1.msra.mxu0 0.0
        %1905 = vmatprep.subr.mxu0 0.0
        %1906 = vmatpush1.msra.mxu0 %v865
        %1907 = vmatprep.subr.mxu0 0.0
        %1908 = vmatpush2.msra.mxu0 0.0
        %1909 = vmatprep.subr.mxu0 0.0
        %1910 = vmatpush2.msra.mxu0 0.0
        %1911 = vmatprep.subr.mxu0 0.0
        %1912 = vmatpush2.msra.mxu0 0.0
        %1913 = vmatprep.subr.mxu0 0.0
        %1914 = vmatpush2.msra.mxu0 0.0
        %1915 = vmatprep.subr.mxu0 0.0
        %1916 = vmatpush2.msra.mxu0 0.0
        %1917 = vmatprep.subr.mxu0 0.0
        %1918 = vmatpush2.msra.mxu0 0.0
        %1919 = vmatprep.subr.mxu0 0.0
        %1920 = vmatpush2.msra.mxu0 0.0
        %1921 = vmatprep.subr.mxu0 0.0
        %1922 = vmatpush2.msra.mxu0 0.0
        %1923 = vmatprep.subr.mxu0 0.0
        %1924 = vmatpush2.msra.mxu0 0.0
        %1925 = vmatprep.subr.mxu0 0.0
        %1926 = vmatpush2.msra.mxu0 0.0
        %1927 = vmatprep.subr.mxu0 0.0
        %1928 = vmatpush2.msra.mxu0 0.0
        %1929 = vmatprep.subr.mxu0 0.0
        %1930 = vmatpush2.msra.mxu0 0.0
        %1931 = vmatprep.subr.mxu0 0.0
        %1932 = vmatpush2.msra.mxu0 0.0
        %1933 = vmatprep.subr.mxu0 0.0
        %1934 = vmatpush2.msra.mxu0 0.0
        %1935 = vmatprep.subr.mxu0 0.0
        %1936 = vmatpush2.msra.mxu0 0.0
        %1937 = vmatprep.subr.mxu0 0.0
        %1938 = vmatpush2.msra.mxu0 0.0
        %1939 = vmatprep.mubr.f32.mxu0 0.0
        %1940 = vmatmul.mubr.f32.gmra.mxu0 %v1873
        %v1941 = vpop.f32.mrf.mxu0
        %v1942 = vadd.f32 0.0, %v1941
        %v1943 = vpop.f32.mrf.mxu0
        %1944 = vdwg.mxu0
        %v1946 = vsel %vm883, %v1577, 0
        %1948 = vmatprep.subr.mxu0 0.0
        %1949 = vmatpush1.msra.mxu0 0.0
        %1950 = vmatprep.subr.mxu0 0.0
        %1951 = vmatpush1.msra.mxu0 0.0
        %1952 = vmatprep.subr.mxu0 0.0
        %1953 = vmatpush1.msra.mxu0 0.0
        %1954 = vmatprep.subr.mxu0 0.0
        %1955 = vmatpush1.msra.mxu0 0.0
        %1956 = vmatprep.subr.mxu0 0.0
        %1957 = vmatpush1.msra.mxu0 0.0
        %1958 = vmatprep.subr.mxu0 0.0
        %1959 = vmatpush1.msra.mxu0 0.0
        %1960 = vmatprep.subr.mxu0 0.0
        %1961 = vmatpush1.msra.mxu0 0.0
        %1962 = vmatprep.subr.mxu0 0.0
        %1963 = vmatpush1.msra.mxu0 0.0
        %1964 = vmatprep.subr.mxu0 0.0
        %1965 = vmatpush1.msra.mxu0 0.0
        %1966 = vmatprep.subr.mxu0 0.0
        %1967 = vmatpush1.msra.mxu0 0.0
        %1968 = vmatprep.subr.mxu0 0.0
        %1969 = vmatpush1.msra.mxu0 0.0
        %1970 = vmatprep.subr.mxu0 0.0
        %1971 = vmatpush1.msra.mxu0 0.0
        %1972 = vmatprep.subr.mxu0 0.0
        %1973 = vmatpush1.msra.mxu0 0.0
        %1974 = vmatprep.subr.mxu0 0.0
        %1975 = vmatpush1.msra.mxu0 0.0
        %1976 = vmatprep.subr.mxu0 0.0
        %1977 = vmatpush1.msra.mxu0 0.0
        %1978 = vmatprep.subr.mxu0 0.0
        %1979 = vmatpush1.msra.mxu0 %v870
        %1980 = vmatprep.subr.mxu0 0.0
        %1981 = vmatpush2.msra.mxu0 0.0
        %1982 = vmatprep.subr.mxu0 0.0
        %1983 = vmatpush2.msra.mxu0 0.0
        %1984 = vmatprep.subr.mxu0 0.0
        %1985 = vmatpush2.msra.mxu0 0.0
        %1986 = vmatprep.subr.mxu0 0.0
        %1987 = vmatpush2.msra.mxu0 0.0
        %1988 = vmatprep.subr.mxu0 0.0
        %1989 = vmatpush2.msra.mxu0 0.0
        %1990 = vmatprep.subr.mxu0 0.0
        %1991 = vmatpush2.msra.mxu0 0.0
        %1992 = vmatprep.subr.mxu0 0.0
        %1993 = vmatpush2.msra.mxu0 0.0
        %1994 = vmatprep.subr.mxu0 0.0
        %1995 = vmatpush2.msra.mxu0 0.0
        %1996 = vmatprep.subr.mxu0 0.0
        %1997 = vmatpush2.msra.mxu0 0.0
        %1998 = vmatprep.subr.mxu0 0.0
        %1999 = vmatpush2.msra.mxu0 0.0
        %2000 = vmatprep.subr.mxu0 0.0
        %2001 = vmatpush2.msra.mxu0 0.0
        %2002 = vmatprep.subr.mxu0 0.0
        %2003 = vmatpush2.msra.mxu0 0.0
        %2004 = vmatprep.subr.mxu0 0.0
        %2005 = vmatpush2.msra.mxu0 0.0
        %2006 = vmatprep.subr.mxu0 0.0
        %2007 = vmatpush2.msra.mxu0 0.0
        %2008 = vmatprep.subr.mxu0 0.0
        %2009 = vmatpush2.msra.mxu0 0.0
        %2010 = vmatprep.subr.mxu0 0.0
        %2011 = vmatpush2.msra.mxu0 0.0
        %2012 = vmatprep.mubr.f32.mxu0 0.0
        %2013 = vmatmul.mubr.f32.gmra.mxu0 %v1946
        %v2014 = vpop.f32.mrf.mxu0
        %v2015 = vadd.f32 0.0, %v2014
        %v2016 = vpop.f32.mrf.mxu0
        %2017 = vdwg.mxu0
        %v2019 = vsel %vm883, %v1578, 0
        %2021 = vmatprep.subr.mxu0 0.0
        %2022 = vmatpush1.msra.mxu0 0.0
        %2023 = vmatprep.subr.mxu0 0.0
        %2024 = vmatpush1.msra.mxu0 0.0
        %2025 = vmatprep.subr.mxu0 0.0
        %2026 = vmatpush1.msra.mxu0 0.0
        %2027 = vmatprep.subr.mxu0 0.0
        %2028 = vmatpush1.msra.mxu0 0.0
        %2029 = vmatprep.subr.mxu0 0.0
        %2030 = vmatpush1.msra.mxu0 0.0
        %2031 = vmatprep.subr.mxu0 0.0
        %2032 = vmatpush1.msra.mxu0 0.0
        %2033 = vmatprep.subr.mxu0 0.0
        %2034 = vmatpush1.msra.mxu0 0.0
        %2035 = vmatprep.subr.mxu0 0.0
        %2036 = vmatpush1.msra.mxu0 0.0
        %2037 = vmatprep.subr.mxu0 0.0
        %2038 = vmatpush1.msra.mxu0 0.0
        %2039 = vmatprep.subr.mxu0 0.0
        %2040 = vmatpush1.msra.mxu0 0.0
        %2041 = vmatprep.subr.mxu0 0.0
        %2042 = vmatpush1.msra.mxu0 0.0
        %2043 = vmatprep.subr.mxu0 0.0
        %2044 = vmatpush1.msra.mxu0 0.0
        %2045 = vmatprep.subr.mxu0 0.0
        %2046 = vmatpush1.msra.mxu0 0.0
        %2047 = vmatprep.subr.mxu0 0.0
        %2048 = vmatpush1.msra.mxu0 0.0
        %2049 = vmatprep.subr.mxu0 0.0
        %2050 = vmatpush1.msra.mxu0 0.0
        %2051 = vmatprep.subr.mxu0 0.0
        %2052 = vmatpush1.msra.mxu0 %v875
        %2053 = vmatprep.subr.mxu0 0.0
        %2054 = vmatpush2.msra.mxu0 0.0
        %2055 = vmatprep.subr.mxu0 0.0
        %2056 = vmatpush2.msra.mxu0 0.0
        %2057 = vmatprep.subr.mxu0 0.0
        %2058 = vmatpush2.msra.mxu0 0.0
        %2059 = vmatprep.subr.mxu0 0.0
        %2060 = vmatpush2.msra.mxu0 0.0
        %2061 = vmatprep.subr.mxu0 0.0
        %2062 = vmatpush2.msra.mxu0 0.0
        %2063 = vmatprep.subr.mxu0 0.0
        %2064 = vmatpush2.msra.mxu0 0.0
        %2065 = vmatprep.subr.mxu0 0.0
        %2066 = vmatpush2.msra.mxu0 0.0
        %2067 = vmatprep.subr.mxu0 0.0
        %2068 = vmatpush2.msra.mxu0 0.0
        %2069 = vmatprep.subr.mxu0 0.0
        %2070 = vmatpush2.msra.mxu0 0.0
        %2071 = vmatprep.subr.mxu0 0.0
        %2072 = vmatpush2.msra.mxu0 0.0
        %2073 = vmatprep.subr.mxu0 0.0
        %2074 = vmatpush2.msra.mxu0 0.0
        %2075 = vmatprep.subr.mxu0 0.0
        %2076 = vmatpush2.msra.mxu0 0.0
        %2077 = vmatprep.subr.mxu0 0.0
        %2078 = vmatpush2.msra.mxu0 0.0
        %2079 = vmatprep.subr.mxu0 0.0
        %2080 = vmatpush2.msra.mxu0 0.0
        %2081 = vmatprep.subr.mxu0 0.0
        %2082 = vmatpush2.msra.mxu0 0.0
        %2083 = vmatprep.subr.mxu0 0.0
        %2084 = vmatpush2.msra.mxu0 0.0
        %2085 = vmatprep.mubr.f32.mxu0 0.0
        %2086 = vmatmul.mubr.f32.gmra.mxu0 %v2019
        %v2087 = vpop.f32.mrf.mxu0
        %v2088 = vadd.f32 0.0, %v2087
        %v2089 = vpop.f32.mrf.mxu0
        %2090 = vdwg.mxu0
        %v2092 = vsel %vm883, %v1579, 0
        %2094 = vmatprep.subr.mxu0 0.0
        %2095 = vmatpush1.msra.mxu0 0.0
        %2096 = vmatprep.subr.mxu0 0.0
        %2097 = vmatpush1.msra.mxu0 0.0
        %2098 = vmatprep.subr.mxu0 0.0
        %2099 = vmatpush1.msra.mxu0 0.0
        %2100 = vmatprep.subr.mxu0 0.0
        %2101 = vmatpush1.msra.mxu0 0.0
        %2102 = vmatprep.subr.mxu0 0.0
        %2103 = vmatpush1.msra.mxu0 0.0
        %2104 = vmatprep.subr.mxu0 0.0
        %2105 = vmatpush1.msra.mxu0 0.0
        %2106 = vmatprep.subr.mxu0 0.0
        %2107 = vmatpush1.msra.mxu0 0.0
        %2108 = vmatprep.subr.mxu0 0.0
        %2109 = vmatpush1.msra.mxu0 0.0
        %2110 = vmatprep.subr.mxu0 0.0
        %2111 = vmatpush1.msra.mxu0 0.0
        %2112 = vmatprep.subr.mxu0 0.0
        %2113 = vmatpush1.msra.mxu0 0.0
        %2114 = vmatprep.subr.mxu0 0.0
        %2115 = vmatpush1.msra.mxu0 0.0
        %2116 = vmatprep.subr.mxu0 0.0
        %2117 = vmatpush1.msra.mxu0 0.0
        %2118 = vmatprep.subr.mxu0 0.0
        %2119 = vmatpush1.msra.mxu0 0.0
        %2120 = vmatprep.subr.mxu0 0.0
        %2121 = vmatpush1.msra.mxu0 0.0
        %2122 = vmatprep.subr.mxu0 0.0
        %2123 = vmatpush1.msra.mxu0 0.0
        %2124 = vmatprep.subr.mxu0 0.0
        %2125 = vmatpush1.msra.mxu0 %v880
        %2126 = vmatprep.subr.mxu0 0.0
        %2127 = vmatpush2.msra.mxu0 0.0
        %2128 = vmatprep.subr.mxu0 0.0
        %2129 = vmatpush2.msra.mxu0 0.0
        %2130 = vmatprep.subr.mxu0 0.0
        %2131 = vmatpush2.msra.mxu0 0.0
        %2132 = vmatprep.subr.mxu0 0.0
        %2133 = vmatpush2.msra.mxu0 0.0
        %2134 = vmatprep.subr.mxu0 0.0
        %2135 = vmatpush2.msra.mxu0 0.0
        %2136 = vmatprep.subr.mxu0 0.0
        %2137 = vmatpush2.msra.mxu0 0.0
        %2138 = vmatprep.subr.mxu0 0.0
        %2139 = vmatpush2.msra.mxu0 0.0
        %2140 = vmatprep.subr.mxu0 0.0
        %2141 = vmatpush2.msra.mxu0 0.0
        %2142 = vmatprep.subr.mxu0 0.0
        %2143 = vmatpush2.msra.mxu0 0.0
        %2144 = vmatprep.subr.mxu0 0.0
        %2145 = vmatpush2.msra.mxu0 0.0
        %2146 = vmatprep.subr.mxu0 0.0
        %2147 = vmatpush2.msra.mxu0 0.0
        %2148 = vmatprep.subr.mxu0 0.0
        %2149 = vmatpush2.msra.mxu0 0.0
        %2150 = vmatprep.subr.mxu0 0.0
        %2151 = vmatpush2.msra.mxu0 0.0
        %2152 = vmatprep.subr.mxu0 0.0
        %2153 = vmatpush2.msra.mxu0 0.0
        %2154 = vmatprep.subr.mxu0 0.0
        %2155 = vmatpush2.msra.mxu0 0.0
        %2156 = vmatprep.subr.mxu0 0.0
        %2157 = vmatpush2.msra.mxu0 0.0
        %2158 = vmatprep.mubr.f32.mxu0 0.0
        %2159 = vmatmul.mubr.f32.gmra.mxu0 %v2092
        %v2160 = vpop.f32.mrf.mxu0
        %v2161 = vadd.f32 0.0, %v2160
        %v2162 = vpop.f32.mrf.mxu0
        %2163 = vdwg.mxu0
        %2164 = vst.msk [vmem:[#allocation2] sm:$0xff] %vm883, %v1650
        %2165 = vst.msk [vmem:[#allocation2 + $0x8] sm:$0xff] %vm883, %v1723
        %2166 = vst.msk [vmem:[#allocation2 + $0x10] sm:$0xff] %vm883, %v1796
        %2167 = vst.msk [vmem:[#allocation2 + $0x18] sm:$0xff] %vm883, %v1869
        %2168 = vst.msk [vmem:[#allocation2 + $0x20] sm:$0xff] %vm883, %v1942
        %2169 = vst.msk [vmem:[#allocation2 + $0x28] sm:$0xff] %vm883, %v2015
        %2170 = vst.msk [vmem:[#allocation2 + $0x30] sm:$0xff] %vm883, %v2088
        %2171 = vst.msk [vmem:[#allocation2 + $0x38] sm:$0xff] %vm883, %v2161
        %2172 = vrot.lane.b32.xlu0 %v579, 120
        %v2173 = vpop.permute.xlu0 %2172
        %2174 = vrot.lane.b32.xlu0 %v712, 120
        %v2175 = vpop.permute.xlu0 %2174
        %v2176 = vsel %vm883, %v2173, 0
        %v2178 = vsel %vm883, %v2175, 0
        %2180 = vmatprep.subr.mxu0 0.0
        %2181 = vmatpush1.xpose.msra.mxu0 0.0
        %2182 = vmatprep.subr.mxu0 0.0
        %2183 = vmatpush1.xpose.msra.mxu0 0.0
        %2184 = vmatprep.subr.mxu0 0.0
        %2185 = vmatpush1.xpose.msra.mxu0 0.0
        %2186 = vmatprep.subr.mxu0 0.0
        %2187 = vmatpush1.xpose.msra.mxu0 0.0
        %2188 = vmatprep.subr.mxu0 0.0
        %2189 = vmatpush1.xpose.msra.mxu0 0.0
        %2190 = vmatprep.subr.mxu0 0.0
        %2191 = vmatpush1.xpose.msra.mxu0 0.0
        %2192 = vmatprep.subr.mxu0 0.0
        %2193 = vmatpush1.xpose.msra.mxu0 0.0
        %2194 = vmatprep.subr.mxu0 0.0
        %2195 = vmatpush1.xpose.msra.mxu0 0.0
        %2196 = vmatprep.subr.mxu0 0.0
        %2197 = vmatpush1.xpose.msra.mxu0 0.0
        %2198 = vmatprep.subr.mxu0 0.0
        %2199 = vmatpush1.xpose.msra.mxu0 0.0
        %2200 = vmatprep.subr.mxu0 0.0
        %2201 = vmatpush1.xpose.msra.mxu0 0.0
        %2202 = vmatprep.subr.mxu0 0.0
        %2203 = vmatpush1.xpose.msra.mxu0 0.0
        %2204 = vmatprep.subr.mxu0 0.0
        %2205 = vmatpush1.xpose.msra.mxu0 0.0
        %2206 = vmatprep.subr.mxu0 0.0
        %2207 = vmatpush1.xpose.msra.mxu0 0.0
        %2208 = vmatprep.subr.mxu0 0.0
        %2209 = vmatpush1.xpose.msra.mxu0 0.0
        %2210 = vmatprep.subr.mxu0 0.0
        %2211 = vmatpush1.xpose.msra.mxu0 %v2178
        %2212 = vmatprep.subr.mxu0 0.0
        %2213 = vmatpush2.xpose.msra.mxu0 0.0
        %2214 = vmatprep.subr.mxu0 0.0
        %2215 = vmatpush2.xpose.msra.mxu0 0.0
        %2216 = vmatprep.subr.mxu0 0.0
        %2217 = vmatpush2.xpose.msra.mxu0 0.0
        %2218 = vmatprep.subr.mxu0 0.0
        %2219 = vmatpush2.xpose.msra.mxu0 0.0
        %2220 = vmatprep.subr.mxu0 0.0
        %2221 = vmatpush2.xpose.msra.mxu0 0.0
        %2222 = vmatprep.subr.mxu0 0.0
        %2223 = vmatpush2.xpose.msra.mxu0 0.0
        %2224 = vmatprep.subr.mxu0 0.0
        %2225 = vmatpush2.xpose.msra.mxu0 0.0
        %2226 = vmatprep.subr.mxu0 0.0
        %2227 = vmatpush2.xpose.msra.mxu0 0.0
        %2228 = vmatprep.subr.mxu0 0.0
        %2229 = vmatpush2.xpose.msra.mxu0 0.0
        %2230 = vmatprep.subr.mxu0 0.0
        %2231 = vmatpush2.xpose.msra.mxu0 0.0
        %2232 = vmatprep.subr.mxu0 0.0
        %2233 = vmatpush2.xpose.msra.mxu0 0.0
        %2234 = vmatprep.subr.mxu0 0.0
        %2235 = vmatpush2.xpose.msra.mxu0 0.0
        %2236 = vmatprep.subr.mxu0 0.0
        %2237 = vmatpush2.xpose.msra.mxu0 0.0
        %2238 = vmatprep.subr.mxu0 0.0
        %2239 = vmatpush2.xpose.msra.mxu0 0.0
        %2240 = vmatprep.subr.mxu0 0.0
        %2241 = vmatpush2.xpose.msra.mxu0 0.0
        %2242 = vmatprep.subr.mxu0 0.0
        %2243 = vmatpush2.xpose.msra.mxu0 0.0
        %2244 = vmatprep.mubr.f32.mxu0 0.0
        %2245 = vmatmul.mubr.f32.gmra.mxu0 %v2176
        %v2246 = vpop.f32.mrf.mxu0
        %v2247 = vadd.f32 0.0, %v2246
        %v2248 = vpop.f32.mrf.mxu0
        %2249 = vdwg.mxu0
        %2250 = vrot.lane.b32.xlu0 %v584, 120
        %v2251 = vpop.permute.xlu0 %2250
        %2252 = vrot.lane.b32.xlu0 %v717, 120
        %v2253 = vpop.permute.xlu0 %2252
        %v2254 = vsel %vm883, %v2251, 0
        %v2256 = vsel %vm883, %v2253, 0
        %2258 = vmatprep.subr.mxu0 0.0
        %2259 = vmatpush1.xpose.msra.mxu0 0.0
        %2260 = vmatprep.subr.mxu0 0.0
        %2261 = vmatpush1.xpose.msra.mxu0 0.0
        %2262 = vmatprep.subr.mxu0 0.0
        %2263 = vmatpush1.xpose.msra.mxu0 0.0
        %2264 = vmatprep.subr.mxu0 0.0
        %2265 = vmatpush1.xpose.msra.mxu0 0.0
        %2266 = vmatprep.subr.mxu0 0.0
        %2267 = vmatpush1.xpose.msra.mxu0 0.0
        %2268 = vmatprep.subr.mxu0 0.0
        %2269 = vmatpush1.xpose.msra.mxu0 0.0
        %2270 = vmatprep.subr.mxu0 0.0
        %2271 = vmatpush1.xpose.msra.mxu0 0.0
        %2272 = vmatprep.subr.mxu0 0.0
        %2273 = vmatpush1.xpose.msra.mxu0 0.0
        %2274 = vmatprep.subr.mxu0 0.0
        %2275 = vmatpush1.xpose.msra.mxu0 0.0
        %2276 = vmatprep.subr.mxu0 0.0
        %2277 = vmatpush1.xpose.msra.mxu0 0.0
        %2278 = vmatprep.subr.mxu0 0.0
        %2279 = vmatpush1.xpose.msra.mxu0 0.0
        %2280 = vmatprep.subr.mxu0 0.0
        %2281 = vmatpush1.xpose.msra.mxu0 0.0
        %2282 = vmatprep.subr.mxu0 0.0
        %2283 = vmatpush1.xpose.msra.mxu0 0.0
        %2284 = vmatprep.subr.mxu0 0.0
        %2285 = vmatpush1.xpose.msra.mxu0 0.0
        %2286 = vmatprep.subr.mxu0 0.0
        %2287 = vmatpush1.xpose.msra.mxu0 0.0
        %2288 = vmatprep.subr.mxu0 0.0
        %2289 = vmatpush1.xpose.msra.mxu0 %v2256
        %2290 = vmatprep.subr.mxu0 0.0
        %2291 = vmatpush2.xpose.msra.mxu0 0.0
        %2292 = vmatprep.subr.mxu0 0.0
        %2293 = vmatpush2.xpose.msra.mxu0 0.0
        %2294 = vmatprep.subr.mxu0 0.0
        %2295 = vmatpush2.xpose.msra.mxu0 0.0
        %2296 = vmatprep.subr.mxu0 0.0
        %2297 = vmatpush2.xpose.msra.mxu0 0.0
        %2298 = vmatprep.subr.mxu0 0.0
        %2299 = vmatpush2.xpose.msra.mxu0 0.0
        %2300 = vmatprep.subr.mxu0 0.0
        %2301 = vmatpush2.xpose.msra.mxu0 0.0
        %2302 = vmatprep.subr.mxu0 0.0
        %2303 = vmatpush2.xpose.msra.mxu0 0.0
        %2304 = vmatprep.subr.mxu0 0.0
        %2305 = vmatpush2.xpose.msra.mxu0 0.0
        %2306 = vmatprep.subr.mxu0 0.0
        %2307 = vmatpush2.xpose.msra.mxu0 0.0
        %2308 = vmatprep.subr.mxu0 0.0
        %2309 = vmatpush2.xpose.msra.mxu0 0.0
        %2310 = vmatprep.subr.mxu0 0.0
        %2311 = vmatpush2.xpose.msra.mxu0 0.0
        %2312 = vmatprep.subr.mxu0 0.0
        %2313 = vmatpush2.xpose.msra.mxu0 0.0
        %2314 = vmatprep.subr.mxu0 0.0
        %2315 = vmatpush2.xpose.msra.mxu0 0.0
        %2316 = vmatprep.subr.mxu0 0.0
        %2317 = vmatpush2.xpose.msra.mxu0 0.0
        %2318 = vmatprep.subr.mxu0 0.0
        %2319 = vmatpush2.xpose.msra.mxu0 0.0
        %2320 = vmatprep.subr.mxu0 0.0
        %2321 = vmatpush2.xpose.msra.mxu0 0.0
        %2322 = vmatprep.mubr.f32.mxu0 0.0
        %2323 = vmatmul.mubr.f32.gmra.mxu0 %v2254
        %v2324 = vpop.f32.mrf.mxu0
        %v2325 = vadd.f32 0.0, %v2324
        %v2326 = vpop.f32.mrf.mxu0
        %2327 = vdwg.mxu0
        %2328 = vrot.lane.b32.xlu0 %v589, 120
        %v2329 = vpop.permute.xlu0 %2328
        %2330 = vrot.lane.b32.xlu0 %v722, 120
        %v2331 = vpop.permute.xlu0 %2330
        %v2332 = vsel %vm883, %v2329, 0
        %v2334 = vsel %vm883, %v2331, 0
        %2336 = vmatprep.subr.mxu0 0.0
        %2337 = vmatpush1.xpose.msra.mxu0 0.0
        %2338 = vmatprep.subr.mxu0 0.0
        %2339 = vmatpush1.xpose.msra.mxu0 0.0
        %2340 = vmatprep.subr.mxu0 0.0
        %2341 = vmatpush1.xpose.msra.mxu0 0.0
        %2342 = vmatprep.subr.mxu0 0.0
        %2343 = vmatpush1.xpose.msra.mxu0 0.0
        %2344 = vmatprep.subr.mxu0 0.0
        %2345 = vmatpush1.xpose.msra.mxu0 0.0
        %2346 = vmatprep.subr.mxu0 0.0
        %2347 = vmatpush1.xpose.msra.mxu0 0.0
        %2348 = vmatprep.subr.mxu0 0.0
        %2349 = vmatpush1.xpose.msra.mxu0 0.0
        %2350 = vmatprep.subr.mxu0 0.0
        %2351 = vmatpush1.xpose.msra.mxu0 0.0
        %2352 = vmatprep.subr.mxu0 0.0
        %2353 = vmatpush1.xpose.msra.mxu0 0.0
        %2354 = vmatprep.subr.mxu0 0.0
        %2355 = vmatpush1.xpose.msra.mxu0 0.0
        %2356 = vmatprep.subr.mxu0 0.0
        %2357 = vmatpush1.xpose.msra.mxu0 0.0
        %2358 = vmatprep.subr.mxu0 0.0
        %2359 = vmatpush1.xpose.msra.mxu0 0.0
        %2360 = vmatprep.subr.mxu0 0.0
        %2361 = vmatpush1.xpose.msra.mxu0 0.0
        %2362 = vmatprep.subr.mxu0 0.0
        %2363 = vmatpush1.xpose.msra.mxu0 0.0
        %2364 = vmatprep.subr.mxu0 0.0
        %2365 = vmatpush1.xpose.msra.mxu0 0.0
        %2366 = vmatprep.subr.mxu0 0.0
        %2367 = vmatpush1.xpose.msra.mxu0 %v2334
        %2368 = vmatprep.subr.mxu0 0.0
        %2369 = vmatpush2.xpose.msra.mxu0 0.0
        %2370 = vmatprep.subr.mxu0 0.0
        %2371 = vmatpush2.xpose.msra.mxu0 0.0
        %2372 = vmatprep.subr.mxu0 0.0
        %2373 = vmatpush2.xpose.msra.mxu0 0.0
        %2374 = vmatprep.subr.mxu0 0.0
        %2375 = vmatpush2.xpose.msra.mxu0 0.0
        %2376 = vmatprep.subr.mxu0 0.0
        %2377 = vmatpush2.xpose.msra.mxu0 0.0
        %2378 = vmatprep.subr.mxu0 0.0
        %2379 = vmatpush2.xpose.msra.mxu0 0.0
        %2380 = vmatprep.subr.mxu0 0.0
        %2381 = vmatpush2.xpose.msra.mxu0 0.0
        %2382 = vmatprep.subr.mxu0 0.0
        %2383 = vmatpush2.xpose.msra.mxu0 0.0
        %2384 = vmatprep.subr.mxu0 0.0
        %2385 = vmatpush2.xpose.msra.mxu0 0.0
        %2386 = vmatprep.subr.mxu0 0.0
        %2387 = vmatpush2.xpose.msra.mxu0 0.0
        %2388 = vmatprep.subr.mxu0 0.0
        %2389 = vmatpush2.xpose.msra.mxu0 0.0
        %2390 = vmatprep.subr.mxu0 0.0
        %2391 = vmatpush2.xpose.msra.mxu0 0.0
        %2392 = vmatprep.subr.mxu0 0.0
        %2393 = vmatpush2.xpose.msra.mxu0 0.0
        %2394 = vmatprep.subr.mxu0 0.0
        %2395 = vmatpush2.xpose.msra.mxu0 0.0
        %2396 = vmatprep.subr.mxu0 0.0
        %2397 = vmatpush2.xpose.msra.mxu0 0.0
        %2398 = vmatprep.subr.mxu0 0.0
        %2399 = vmatpush2.xpose.msra.mxu0 0.0
        %2400 = vmatprep.mubr.f32.mxu0 0.0
        %2401 = vmatmul.mubr.f32.gmra.mxu0 %v2332
        %v2402 = vpop.f32.mrf.mxu0
        %v2403 = vadd.f32 0.0, %v2402
        %v2404 = vpop.f32.mrf.mxu0
        %2405 = vdwg.mxu0
        %2406 = vrot.lane.b32.xlu0 %v594, 120
        %v2407 = vpop.permute.xlu0 %2406
        %2408 = vrot.lane.b32.xlu0 %v727, 120
        %v2409 = vpop.permute.xlu0 %2408
        %v2410 = vsel %vm883, %v2407, 0
        %v2412 = vsel %vm883, %v2409, 0
        %2414 = vmatprep.subr.mxu0 0.0
        %2415 = vmatpush1.xpose.msra.mxu0 0.0
        %2416 = vmatprep.subr.mxu0 0.0
        %2417 = vmatpush1.xpose.msra.mxu0 0.0
        %2418 = vmatprep.subr.mxu0 0.0
        %2419 = vmatpush1.xpose.msra.mxu0 0.0
        %2420 = vmatprep.subr.mxu0 0.0
        %2421 = vmatpush1.xpose.msra.mxu0 0.0
        %2422 = vmatprep.subr.mxu0 0.0
        %2423 = vmatpush1.xpose.msra.mxu0 0.0
        %2424 = vmatprep.subr.mxu0 0.0
        %2425 = vmatpush1.xpose.msra.mxu0 0.0
        %2426 = vmatprep.subr.mxu0 0.0
        %2427 = vmatpush1.xpose.msra.mxu0 0.0
        %2428 = vmatprep.subr.mxu0 0.0
        %2429 = vmatpush1.xpose.msra.mxu0 0.0
        %2430 = vmatprep.subr.mxu0 0.0
        %2431 = vmatpush1.xpose.msra.mxu0 0.0
        %2432 = vmatprep.subr.mxu0 0.0
        %2433 = vmatpush1.xpose.msra.mxu0 0.0
        %2434 = vmatprep.subr.mxu0 0.0
        %2435 = vmatpush1.xpose.msra.mxu0 0.0
        %2436 = vmatprep.subr.mxu0 0.0
        %2437 = vmatpush1.xpose.msra.mxu0 0.0
        %2438 = vmatprep.subr.mxu0 0.0
        %2439 = vmatpush1.xpose.msra.mxu0 0.0
        %2440 = vmatprep.subr.mxu0 0.0
        %2441 = vmatpush1.xpose.msra.mxu0 0.0
        %2442 = vmatprep.subr.mxu0 0.0
        %2443 = vmatpush1.xpose.msra.mxu0 0.0
        %2444 = vmatprep.subr.mxu0 0.0
        %2445 = vmatpush1.xpose.msra.mxu0 %v2412
        %2446 = vmatprep.subr.mxu0 0.0
        %2447 = vmatpush2.xpose.msra.mxu0 0.0
        %2448 = vmatprep.subr.mxu0 0.0
        %2449 = vmatpush2.xpose.msra.mxu0 0.0
        %2450 = vmatprep.subr.mxu0 0.0
        %2451 = vmatpush2.xpose.msra.mxu0 0.0
        %2452 = vmatprep.subr.mxu0 0.0
        %2453 = vmatpush2.xpose.msra.mxu0 0.0
        %2454 = vmatprep.subr.mxu0 0.0
        %2455 = vmatpush2.xpose.msra.mxu0 0.0
        %2456 = vmatprep.subr.mxu0 0.0
        %2457 = vmatpush2.xpose.msra.mxu0 0.0
        %2458 = vmatprep.subr.mxu0 0.0
        %2459 = vmatpush2.xpose.msra.mxu0 0.0
        %2460 = vmatprep.subr.mxu0 0.0
        %2461 = vmatpush2.xpose.msra.mxu0 0.0
        %2462 = vmatprep.subr.mxu0 0.0
        %2463 = vmatpush2.xpose.msra.mxu0 0.0
        %2464 = vmatprep.subr.mxu0 0.0
        %2465 = vmatpush2.xpose.msra.mxu0 0.0
        %2466 = vmatprep.subr.mxu0 0.0
        %2467 = vmatpush2.xpose.msra.mxu0 0.0
        %2468 = vmatprep.subr.mxu0 0.0
        %2469 = vmatpush2.xpose.msra.mxu0 0.0
        %2470 = vmatprep.subr.mxu0 0.0
        %2471 = vmatpush2.xpose.msra.mxu0 0.0
        %2472 = vmatprep.subr.mxu0 0.0
        %2473 = vmatpush2.xpose.msra.mxu0 0.0
        %2474 = vmatprep.subr.mxu0 0.0
        %2475 = vmatpush2.xpose.msra.mxu0 0.0
        %2476 = vmatprep.subr.mxu0 0.0
        %2477 = vmatpush2.xpose.msra.mxu0 0.0
        %2478 = vmatprep.mubr.f32.mxu0 0.0
        %2479 = vmatmul.mubr.f32.gmra.mxu0 %v2410
        %v2480 = vpop.f32.mrf.mxu0
        %v2481 = vadd.f32 0.0, %v2480
        %v2482 = vpop.f32.mrf.mxu0
        %2483 = vdwg.mxu0
        %2484 = vrot.lane.b32.xlu0 %v599, 120
        %v2485 = vpop.permute.xlu0 %2484
        %2486 = vrot.lane.b32.xlu0 %v732, 120
        %v2487 = vpop.permute.xlu0 %2486
        %v2488 = vsel %vm883, %v2485, 0
        %v2490 = vsel %vm883, %v2487, 0
        %2492 = vmatprep.subr.mxu0 0.0
        %2493 = vmatpush1.xpose.msra.mxu0 0.0
        %2494 = vmatprep.subr.mxu0 0.0
        %2495 = vmatpush1.xpose.msra.mxu0 0.0
        %2496 = vmatprep.subr.mxu0 0.0
        %2497 = vmatpush1.xpose.msra.mxu0 0.0
        %2498 = vmatprep.subr.mxu0 0.0
        %2499 = vmatpush1.xpose.msra.mxu0 0.0
        %2500 = vmatprep.subr.mxu0 0.0
        %2501 = vmatpush1.xpose.msra.mxu0 0.0
        %2502 = vmatprep.subr.mxu0 0.0
        %2503 = vmatpush1.xpose.msra.mxu0 0.0
        %2504 = vmatprep.subr.mxu0 0.0
        %2505 = vmatpush1.xpose.msra.mxu0 0.0
        %2506 = vmatprep.subr.mxu0 0.0
        %2507 = vmatpush1.xpose.msra.mxu0 0.0
        %2508 = vmatprep.subr.mxu0 0.0
        %2509 = vmatpush1.xpose.msra.mxu0 0.0
        %2510 = vmatprep.subr.mxu0 0.0
        %2511 = vmatpush1.xpose.msra.mxu0 0.0
        %2512 = vmatprep.subr.mxu0 0.0
        %2513 = vmatpush1.xpose.msra.mxu0 0.0
        %2514 = vmatprep.subr.mxu0 0.0
        %2515 = vmatpush1.xpose.msra.mxu0 0.0
        %2516 = vmatprep.subr.mxu0 0.0
        %2517 = vmatpush1.xpose.msra.mxu0 0.0
        %2518 = vmatprep.subr.mxu0 0.0
        %2519 = vmatpush1.xpose.msra.mxu0 0.0
        %2520 = vmatprep.subr.mxu0 0.0
        %2521 = vmatpush1.xpose.msra.mxu0 0.0
        %2522 = vmatprep.subr.mxu0 0.0
        %2523 = vmatpush1.xpose.msra.mxu0 %v2490
        %2524 = vmatprep.subr.mxu0 0.0
        %2525 = vmatpush2.xpose.msra.mxu0 0.0
        %2526 = vmatprep.subr.mxu0 0.0
        %2527 = vmatpush2.xpose.msra.mxu0 0.0
        %2528 = vmatprep.subr.mxu0 0.0
        %2529 = vmatpush2.xpose.msra.mxu0 0.0
        %2530 = vmatprep.subr.mxu0 0.0
        %2531 = vmatpush2.xpose.msra.mxu0 0.0
        %2532 = vmatprep.subr.mxu0 0.0
        %2533 = vmatpush2.xpose.msra.mxu0 0.0
        %2534 = vmatprep.subr.mxu0 0.0
        %2535 = vmatpush2.xpose.msra.mxu0 0.0
        %2536 = vmatprep.subr.mxu0 0.0
        %2537 = vmatpush2.xpose.msra.mxu0 0.0
        %2538 = vmatprep.subr.mxu0 0.0
        %2539 = vmatpush2.xpose.msra.mxu0 0.0
        %2540 = vmatprep.subr.mxu0 0.0
        %2541 = vmatpush2.xpose.msra.mxu0 0.0
        %2542 = vmatprep.subr.mxu0 0.0
        %2543 = vmatpush2.xpose.msra.mxu0 0.0
        %2544 = vmatprep.subr.mxu0 0.0
        %2545 = vmatpush2.xpose.msra.mxu0 0.0
        %2546 = vmatprep.subr.mxu0 0.0
        %2547 = vmatpush2.xpose.msra.mxu0 0.0
        %2548 = vmatprep.subr.mxu0 0.0
        %2549 = vmatpush2.xpose.msra.mxu0 0.0
        %2550 = vmatprep.subr.mxu0 0.0
        %2551 = vmatpush2.xpose.msra.mxu0 0.0
        %2552 = vmatprep.subr.mxu0 0.0
        %2553 = vmatpush2.xpose.msra.mxu0 0.0
        %2554 = vmatprep.subr.mxu0 0.0
        %2555 = vmatpush2.xpose.msra.mxu0 0.0
        %2556 = vmatprep.mubr.f32.mxu0 0.0
        %2557 = vmatmul.mubr.f32.gmra.mxu0 %v2488
        %v2558 = vpop.f32.mrf.mxu0
        %v2559 = vadd.f32 0.0, %v2558
        %v2560 = vpop.f32.mrf.mxu0
        %2561 = vdwg.mxu0
        %2562 = vrot.lane.b32.xlu0 %v604, 120
        %v2563 = vpop.permute.xlu0 %2562
        %2564 = vrot.lane.b32.xlu0 %v737, 120
        %v2565 = vpop.permute.xlu0 %2564
        %v2566 = vsel %vm883, %v2563, 0
        %v2568 = vsel %vm883, %v2565, 0
        %2570 = vmatprep.subr.mxu0 0.0
        %2571 = vmatpush1.xpose.msra.mxu0 0.0
        %2572 = vmatprep.subr.mxu0 0.0
        %2573 = vmatpush1.xpose.msra.mxu0 0.0
        %2574 = vmatprep.subr.mxu0 0.0
        %2575 = vmatpush1.xpose.msra.mxu0 0.0
        %2576 = vmatprep.subr.mxu0 0.0
        %2577 = vmatpush1.xpose.msra.mxu0 0.0
        %2578 = vmatprep.subr.mxu0 0.0
        %2579 = vmatpush1.xpose.msra.mxu0 0.0
        %2580 = vmatprep.subr.mxu0 0.0
        %2581 = vmatpush1.xpose.msra.mxu0 0.0
        %2582 = vmatprep.subr.mxu0 0.0
        %2583 = vmatpush1.xpose.msra.mxu0 0.0
        %2584 = vmatprep.subr.mxu0 0.0
        %2585 = vmatpush1.xpose.msra.mxu0 0.0
        %2586 = vmatprep.subr.mxu0 0.0
        %2587 = vmatpush1.xpose.msra.mxu0 0.0
        %2588 = vmatprep.subr.mxu0 0.0
        %2589 = vmatpush1.xpose.msra.mxu0 0.0
        %2590 = vmatprep.subr.mxu0 0.0
        %2591 = vmatpush1.xpose.msra.mxu0 0.0
        %2592 = vmatprep.subr.mxu0 0.0
        %2593 = vmatpush1.xpose.msra.mxu0 0.0
        %2594 = vmatprep.subr.mxu0 0.0
        %2595 = vmatpush1.xpose.msra.mxu0 0.0
        %2596 = vmatprep.subr.mxu0 0.0
        %2597 = vmatpush1.xpose.msra.mxu0 0.0
        %2598 = vmatprep.subr.mxu0 0.0
        %2599 = vmatpush1.xpose.msra.mxu0 0.0
        %2600 = vmatprep.subr.mxu0 0.0
        %2601 = vmatpush1.xpose.msra.mxu0 %v2568
        %2602 = vmatprep.subr.mxu0 0.0
        %2603 = vmatpush2.xpose.msra.mxu0 0.0
        %2604 = vmatprep.subr.mxu0 0.0
        %2605 = vmatpush2.xpose.msra.mxu0 0.0
        %2606 = vmatprep.subr.mxu0 0.0
        %2607 = vmatpush2.xpose.msra.mxu0 0.0
        %2608 = vmatprep.subr.mxu0 0.0
        %2609 = vmatpush2.xpose.msra.mxu0 0.0
        %2610 = vmatprep.subr.mxu0 0.0
        %2611 = vmatpush2.xpose.msra.mxu0 0.0
        %2612 = vmatprep.subr.mxu0 0.0
        %2613 = vmatpush2.xpose.msra.mxu0 0.0
        %2614 = vmatprep.subr.mxu0 0.0
        %2615 = vmatpush2.xpose.msra.mxu0 0.0
        %2616 = vmatprep.subr.mxu0 0.0
        %2617 = vmatpush2.xpose.msra.mxu0 0.0
        %2618 = vmatprep.subr.mxu0 0.0
        %2619 = vmatpush2.xpose.msra.mxu0 0.0
        %2620 = vmatprep.subr.mxu0 0.0
        %2621 = vmatpush2.xpose.msra.mxu0 0.0
        %2622 = vmatprep.subr.mxu0 0.0
        %2623 = vmatpush2.xpose.msra.mxu0 0.0
        %2624 = vmatprep.subr.mxu0 0.0
        %2625 = vmatpush2.xpose.msra.mxu0 0.0
        %2626 = vmatprep.subr.mxu0 0.0
        %2627 = vmatpush2.xpose.msra.mxu0 0.0
        %2628 = vmatprep.subr.mxu0 0.0
        %2629 = vmatpush2.xpose.msra.mxu0 0.0
        %2630 = vmatprep.subr.mxu0 0.0
        %2631 = vmatpush2.xpose.msra.mxu0 0.0
        %2632 = vmatprep.subr.mxu0 0.0
        %2633 = vmatpush2.xpose.msra.mxu0 0.0
        %2634 = vmatprep.mubr.f32.mxu0 0.0
        %2635 = vmatmul.mubr.f32.gmra.mxu0 %v2566
        %v2636 = vpop.f32.mrf.mxu0
        %v2637 = vadd.f32 0.0, %v2636
        %v2638 = vpop.f32.mrf.mxu0
        %2639 = vdwg.mxu0
        %2640 = vrot.lane.b32.xlu0 %v609, 120
        %v2641 = vpop.permute.xlu0 %2640
        %2642 = vrot.lane.b32.xlu0 %v742, 120
        %v2643 = vpop.permute.xlu0 %2642
        %v2644 = vsel %vm883, %v2641, 0
        %v2646 = vsel %vm883, %v2643, 0
        %2648 = vmatprep.subr.mxu0 0.0
        %2649 = vmatpush1.xpose.msra.mxu0 0.0
        %2650 = vmatprep.subr.mxu0 0.0
        %2651 = vmatpush1.xpose.msra.mxu0 0.0
        %2652 = vmatprep.subr.mxu0 0.0
        %2653 = vmatpush1.xpose.msra.mxu0 0.0
        %2654 = vmatprep.subr.mxu0 0.0
        %2655 = vmatpush1.xpose.msra.mxu0 0.0
        %2656 = vmatprep.subr.mxu0 0.0
        %2657 = vmatpush1.xpose.msra.mxu0 0.0
        %2658 = vmatprep.subr.mxu0 0.0
        %2659 = vmatpush1.xpose.msra.mxu0 0.0
        %2660 = vmatprep.subr.mxu0 0.0
        %2661 = vmatpush1.xpose.msra.mxu0 0.0
        %2662 = vmatprep.subr.mxu0 0.0
        %2663 = vmatpush1.xpose.msra.mxu0 0.0
        %2664 = vmatprep.subr.mxu0 0.0
        %2665 = vmatpush1.xpose.msra.mxu0 0.0
        %2666 = vmatprep.subr.mxu0 0.0
        %2667 = vmatpush1.xpose.msra.mxu0 0.0
        %2668 = vmatprep.subr.mxu0 0.0
        %2669 = vmatpush1.xpose.msra.mxu0 0.0
        %2670 = vmatprep.subr.mxu0 0.0
        %2671 = vmatpush1.xpose.msra.mxu0 0.0
        %2672 = vmatprep.subr.mxu0 0.0
        %2673 = vmatpush1.xpose.msra.mxu0 0.0
        %2674 = vmatprep.subr.mxu0 0.0
        %2675 = vmatpush1.xpose.msra.mxu0 0.0
        %2676 = vmatprep.subr.mxu0 0.0
        %2677 = vmatpush1.xpose.msra.mxu0 0.0
        %2678 = vmatprep.subr.mxu0 0.0
        %2679 = vmatpush1.xpose.msra.mxu0 %v2646
        %2680 = vmatprep.subr.mxu0 0.0
        %2681 = vmatpush2.xpose.msra.mxu0 0.0
        %2682 = vmatprep.subr.mxu0 0.0
        %2683 = vmatpush2.xpose.msra.mxu0 0.0
        %2684 = vmatprep.subr.mxu0 0.0
        %2685 = vmatpush2.xpose.msra.mxu0 0.0
        %2686 = vmatprep.subr.mxu0 0.0
        %2687 = vmatpush2.xpose.msra.mxu0 0.0
        %2688 = vmatprep.subr.mxu0 0.0
        %2689 = vmatpush2.xpose.msra.mxu0 0.0
        %2690 = vmatprep.subr.mxu0 0.0
        %2691 = vmatpush2.xpose.msra.mxu0 0.0
        %2692 = vmatprep.subr.mxu0 0.0
        %2693 = vmatpush2.xpose.msra.mxu0 0.0
        %2694 = vmatprep.subr.mxu0 0.0
        %2695 = vmatpush2.xpose.msra.mxu0 0.0
        %2696 = vmatprep.subr.mxu0 0.0
        %2697 = vmatpush2.xpose.msra.mxu0 0.0
        %2698 = vmatprep.subr.mxu0 0.0
        %2699 = vmatpush2.xpose.msra.mxu0 0.0
        %2700 = vmatprep.subr.mxu0 0.0
        %2701 = vmatpush2.xpose.msra.mxu0 0.0
        %2702 = vmatprep.subr.mxu0 0.0
        %2703 = vmatpush2.xpose.msra.mxu0 0.0
        %2704 = vmatprep.subr.mxu0 0.0
        %2705 = vmatpush2.xpose.msra.mxu0 0.0
        %2706 = vmatprep.subr.mxu0 0.0
        %2707 = vmatpush2.xpose.msra.mxu0 0.0
        %2708 = vmatprep.subr.mxu0 0.0
        %2709 = vmatpush2.xpose.msra.mxu0 0.0
        %2710 = vmatprep.subr.mxu0 0.0
        %2711 = vmatpush2.xpose.msra.mxu0 0.0
        %2712 = vmatprep.mubr.f32.mxu0 0.0
        %2713 = vmatmul.mubr.f32.gmra.mxu0 %v2644
        %v2714 = vpop.f32.mrf.mxu0
        %v2715 = vadd.f32 0.0, %v2714
        %v2716 = vpop.f32.mrf.mxu0
        %2717 = vdwg.mxu0
        %2718 = vrot.lane.b32.xlu0 %v614, 120
        %v2719 = vpop.permute.xlu0 %2718
        %2720 = vrot.lane.b32.xlu0 %v747, 120
        %v2721 = vpop.permute.xlu0 %2720
        %v2722 = vsel %vm883, %v2719, 0
        %v2724 = vsel %vm883, %v2721, 0
        %2726 = vmatprep.subr.mxu0 0.0
        %2727 = vmatpush1.xpose.msra.mxu0 0.0
        %2728 = vmatprep.subr.mxu0 0.0
        %2729 = vmatpush1.xpose.msra.mxu0 0.0
        %2730 = vmatprep.subr.mxu0 0.0
        %2731 = vmatpush1.xpose.msra.mxu0 0.0
        %2732 = vmatprep.subr.mxu0 0.0
        %2733 = vmatpush1.xpose.msra.mxu0 0.0
        %2734 = vmatprep.subr.mxu0 0.0
        %2735 = vmatpush1.xpose.msra.mxu0 0.0
        %2736 = vmatprep.subr.mxu0 0.0
        %2737 = vmatpush1.xpose.msra.mxu0 0.0
        %2738 = vmatprep.subr.mxu0 0.0
        %2739 = vmatpush1.xpose.msra.mxu0 0.0
        %2740 = vmatprep.subr.mxu0 0.0
        %2741 = vmatpush1.xpose.msra.mxu0 0.0
        %2742 = vmatprep.subr.mxu0 0.0
        %2743 = vmatpush1.xpose.msra.mxu0 0.0
        %2744 = vmatprep.subr.mxu0 0.0
        %2745 = vmatpush1.xpose.msra.mxu0 0.0
        %2746 = vmatprep.subr.mxu0 0.0
        %2747 = vmatpush1.xpose.msra.mxu0 0.0
        %2748 = vmatprep.subr.mxu0 0.0
        %2749 = vmatpush1.xpose.msra.mxu0 0.0
        %2750 = vmatprep.subr.mxu0 0.0
        %2751 = vmatpush1.xpose.msra.mxu0 0.0
        %2752 = vmatprep.subr.mxu0 0.0
        %2753 = vmatpush1.xpose.msra.mxu0 0.0
        %2754 = vmatprep.subr.mxu0 0.0
        %2755 = vmatpush1.xpose.msra.mxu0 0.0
        %2756 = vmatprep.subr.mxu0 0.0
        %2757 = vmatpush1.xpose.msra.mxu0 %v2724
        %2758 = vmatprep.subr.mxu0 0.0
        %2759 = vmatpush2.xpose.msra.mxu0 0.0
        %2760 = vmatprep.subr.mxu0 0.0
        %2761 = vmatpush2.xpose.msra.mxu0 0.0
        %2762 = vmatprep.subr.mxu0 0.0
        %2763 = vmatpush2.xpose.msra.mxu0 0.0
        %2764 = vmatprep.subr.mxu0 0.0
        %2765 = vmatpush2.xpose.msra.mxu0 0.0
        %2766 = vmatprep.subr.mxu0 0.0
        %2767 = vmatpush2.xpose.msra.mxu0 0.0
        %2768 = vmatprep.subr.mxu0 0.0
        %2769 = vmatpush2.xpose.msra.mxu0 0.0
        %2770 = vmatprep.subr.mxu0 0.0
        %2771 = vmatpush2.xpose.msra.mxu0 0.0
        %2772 = vmatprep.subr.mxu0 0.0
        %2773 = vmatpush2.xpose.msra.mxu0 0.0
        %2774 = vmatprep.subr.mxu0 0.0
        %2775 = vmatpush2.xpose.msra.mxu0 0.0
        %2776 = vmatprep.subr.mxu0 0.0
        %2777 = vmatpush2.xpose.msra.mxu0 0.0
        %2778 = vmatprep.subr.mxu0 0.0
        %2779 = vmatpush2.xpose.msra.mxu0 0.0
        %2780 = vmatprep.subr.mxu0 0.0
        %2781 = vmatpush2.xpose.msra.mxu0 0.0
        %2782 = vmatprep.subr.mxu0 0.0
        %2783 = vmatpush2.xpose.msra.mxu0 0.0
        %2784 = vmatprep.subr.mxu0 0.0
        %2785 = vmatpush2.xpose.msra.mxu0 0.0
        %2786 = vmatprep.subr.mxu0 0.0
        %2787 = vmatpush2.xpose.msra.mxu0 0.0
        %2788 = vmatprep.subr.mxu0 0.0
        %2789 = vmatpush2.xpose.msra.mxu0 0.0
        %2790 = vmatprep.mubr.f32.mxu0 0.0
        %2791 = vmatmul.mubr.f32.gmra.mxu0 %v2722
        %v2792 = vpop.f32.mrf.mxu0
        %v2793 = vadd.f32 0.0, %v2792
        %v2794 = vpop.f32.mrf.mxu0
        %2795 = vdwg.mxu0
        %v2796 = vsel %vm883, %v2247, -inf
        %2797 = vmax.xlane.f32.xlu0 %v2796
        %v2798 = vpop.xlane.xlu0 %2797
        %v2799 = vsel %vm883, %v2325, -inf
        %2800 = vmax.xlane.f32.xlu0 %v2799
        %v2801 = vpop.xlane.xlu0 %2800
        %v2802 = vsel %vm883, %v2403, -inf
        %2803 = vmax.xlane.f32.xlu0 %v2802
        %v2804 = vpop.xlane.xlu0 %2803
        %v2805 = vsel %vm883, %v2481, -inf
        %2806 = vmax.xlane.f32.xlu0 %v2805
        %v2807 = vpop.xlane.xlu0 %2806
        %v2808 = vsel %vm883, %v2559, -inf
        %2809 = vmax.xlane.f32.xlu0 %v2808
        %v2810 = vpop.xlane.xlu0 %2809
        %v2811 = vsel %vm883, %v2637, -inf
        %2812 = vmax.xlane.f32.xlu0 %v2811
        %v2813 = vpop.xlane.xlu0 %2812
        %v2814 = vsel %vm883, %v2715, -inf
        %2815 = vmax.xlane.f32.xlu0 %v2814
        %v2816 = vpop.xlane.xlu0 %2815
        %v2817 = vsel %vm883, %v2793, -inf
        %2818 = vmax.xlane.f32.xlu0 %v2817
        %v2819 = vpop.xlane.xlu0 %2818
        %v2820 = vsub.f32 %v2247, %v2798
        %v2821 = vsub.f32 %v2325, %v2801
        %v2822 = vsub.f32 %v2403, %v2804
        %v2823 = vsub.f32 %v2481, %v2807
        %v2824 = vsub.f32 %v2559, %v2810
        %v2825 = vsub.f32 %v2637, %v2813
        %v2826 = vsub.f32 %v2715, %v2816
        %v2827 = vsub.f32 %v2793, %v2819
        %v2828 = vmul.f32 %v2820, 1.442695
        %v2829 = vpow.pop %v2828
        %v2830 = vmul.f32 %v2821, 1.442695
        %v2831 = vpow.pop %v2830
        %v2832 = vmul.f32 %v2822, 1.442695
        %v2833 = vpow.pop %v2832
        %v2834 = vmul.f32 %v2823, 1.442695
        %v2835 = vpow.pop %v2834
        %v2836 = vmul.f32 %v2824, 1.442695
        %v2837 = vpow.pop %v2836
        %v2838 = vmul.f32 %v2825, 1.442695
        %v2839 = vpow.pop %v2838
        %v2840 = vmul.f32 %v2826, 1.442695
        %v2841 = vpow.pop %v2840
        %v2842 = vmul.f32 %v2827, 1.442695
        %v2843 = vpow.pop %v2842
        %v2844 = vsel %vm883, %v2829, 0.0
        %2845 = vadd.xlane.f32.xlu0 %v2844
        %v2846 = vpop.xlane.xlu0 %2845
        %v2847 = vsel %vm883, %v2831, 0.0
        %2848 = vadd.xlane.f32.xlu0 %v2847
        %v2849 = vpop.xlane.xlu0 %2848
        %v2850 = vsel %vm883, %v2833, 0.0
        %2851 = vadd.xlane.f32.xlu0 %v2850
        %v2852 = vpop.xlane.xlu0 %2851
        %v2853 = vsel %vm883, %v2835, 0.0
        %2854 = vadd.xlane.f32.xlu0 %v2853
        %v2855 = vpop.xlane.xlu0 %2854
        %v2856 = vsel %vm883, %v2837, 0.0
        %2857 = vadd.xlane.f32.xlu0 %v2856
        %v2858 = vpop.xlane.xlu0 %2857
        %v2859 = vsel %vm883, %v2839, 0.0
        %2860 = vadd.xlane.f32.xlu0 %v2859
        %v2861 = vpop.xlane.xlu0 %2860
        %v2862 = vsel %vm883, %v2841, 0.0
        %2863 = vadd.xlane.f32.xlu0 %v2862
        %v2864 = vpop.xlane.xlu0 %2863
        %v2865 = vsel %vm883, %v2843, 0.0
        %2866 = vadd.xlane.f32.xlu0 %v2865
        %v2867 = vpop.xlane.xlu0 %2866
        %v2868 = vrcp.pop %v2846
        %v2869 = vrcp.pop %v2849
        %v2870 = vrcp.pop %v2852
        %v2871 = vrcp.pop %v2855
        %v2872 = vrcp.pop %v2858
        %v2873 = vrcp.pop %v2861
        %v2874 = vrcp.pop %v2864
        %v2875 = vrcp.pop %v2867
        %v2876 = vmul.f32 %v2829, %v2868
        %v2877 = vmul.f32 %v2831, %v2869
        %v2878 = vmul.f32 %v2833, %v2870
        %v2879 = vmul.f32 %v2835, %v2871
        %v2880 = vmul.f32 %v2837, %v2872
        %v2881 = vmul.f32 %v2839, %v2873
        %v2882 = vmul.f32 %v2841, %v2874
        %v2883 = vmul.f32 %v2843, %v2875
        %2885 = vrot.lane.b32.xlu0 %v845, 120
        %v2886 = vpop.permute.xlu0 %2885
        %v2889 = vsel %vm883, %v2876, 0
        %2891 = vmatprep.subr.mxu0 0.0
        %2892 = vmatpush1.msra.mxu0 0.0
        %2893 = vmatprep.subr.mxu0 0.0
        %2894 = vmatpush1.msra.mxu0 0.0
        %2895 = vmatprep.subr.mxu0 0.0
        %2896 = vmatpush1.msra.mxu0 0.0
        %2897 = vmatprep.subr.mxu0 0.0
        %2898 = vmatpush1.msra.mxu0 0.0
        %2899 = vmatprep.subr.mxu0 0.0
        %2900 = vmatpush1.msra.mxu0 0.0
        %2901 = vmatprep.subr.mxu0 0.0
        %2902 = vmatpush1.msra.mxu0 0.0
        %2903 = vmatprep.subr.mxu0 0.0
        %2904 = vmatpush1.msra.mxu0 0.0
        %2905 = vmatprep.subr.mxu0 0.0
        %2906 = vmatpush1.msra.mxu0 0.0
        %2907 = vmatprep.subr.mxu0 0.0
        %2908 = vmatpush1.msra.mxu0 0.0
        %2909 = vmatprep.subr.mxu0 0.0
        %2910 = vmatpush1.msra.mxu0 0.0
        %2911 = vmatprep.subr.mxu0 0.0
        %2912 = vmatpush1.msra.mxu0 0.0
        %2913 = vmatprep.subr.mxu0 0.0
        %2914 = vmatpush1.msra.mxu0 0.0
        %2915 = vmatprep.subr.mxu0 0.0
        %2916 = vmatpush1.msra.mxu0 0.0
        %2917 = vmatprep.subr.mxu0 0.0
        %2918 = vmatpush1.msra.mxu0 0.0
        %2919 = vmatprep.subr.mxu0 0.0
        %2920 = vmatpush1.msra.mxu0 0.0
        %2921 = vmatprep.subr.mxu0 0.0
        %2922 = vmatpush1.msra.mxu0 %v2886
        %2923 = vmatprep.subr.mxu0 0.0
        %2924 = vmatpush2.msra.mxu0 0.0
        %2925 = vmatprep.subr.mxu0 0.0
        %2926 = vmatpush2.msra.mxu0 0.0
        %2927 = vmatprep.subr.mxu0 0.0
        %2928 = vmatpush2.msra.mxu0 0.0
        %2929 = vmatprep.subr.mxu0 0.0
        %2930 = vmatpush2.msra.mxu0 0.0
        %2931 = vmatprep.subr.mxu0 0.0
        %2932 = vmatpush2.msra.mxu0 0.0
        %2933 = vmatprep.subr.mxu0 0.0
        %2934 = vmatpush2.msra.mxu0 0.0
        %2935 = vmatprep.subr.mxu0 0.0
        %2936 = vmatpush2.msra.mxu0 0.0
        %2937 = vmatprep.subr.mxu0 0.0
        %2938 = vmatpush2.msra.mxu0 0.0
        %2939 = vmatprep.subr.mxu0 0.0
        %2940 = vmatpush2.msra.mxu0 0.0
        %2941 = vmatprep.subr.mxu0 0.0
        %2942 = vmatpush2.msra.mxu0 0.0
        %2943 = vmatprep.subr.mxu0 0.0
        %2944 = vmatpush2.msra.mxu0 0.0
        %2945 = vmatprep.subr.mxu0 0.0
        %2946 = vmatpush2.msra.mxu0 0.0
        %2947 = vmatprep.subr.mxu0 0.0
        %2948 = vmatpush2.msra.mxu0 0.0
        %2949 = vmatprep.subr.mxu0 0.0
        %2950 = vmatpush2.msra.mxu0 0.0
        %2951 = vmatprep.subr.mxu0 0.0
        %2952 = vmatpush2.msra.mxu0 0.0
        %2953 = vmatprep.subr.mxu0 0.0
        %2954 = vmatpush2.msra.mxu0 0.0
        %2955 = vmatprep.mubr.f32.mxu0 0.0
        %2956 = vmatmul.mubr.f32.gmra.mxu0 %v2889
        %v2957 = vpop.f32.mrf.mxu0
        %v2958 = vadd.f32 0.0, %v2957
        %v2959 = vpop.f32.mrf.mxu0
        %2960 = vdwg.mxu0
        %2962 = vrot.lane.b32.xlu0 %v850, 120
        %v2963 = vpop.permute.xlu0 %2962
        %v2966 = vsel %vm883, %v2877, 0
        %2968 = vmatprep.subr.mxu0 0.0
        %2969 = vmatpush1.msra.mxu0 0.0
        %2970 = vmatprep.subr.mxu0 0.0
        %2971 = vmatpush1.msra.mxu0 0.0
        %2972 = vmatprep.subr.mxu0 0.0
        %2973 = vmatpush1.msra.mxu0 0.0
        %2974 = vmatprep.subr.mxu0 0.0
        %2975 = vmatpush1.msra.mxu0 0.0
        %2976 = vmatprep.subr.mxu0 0.0
        %2977 = vmatpush1.msra.mxu0 0.0
        %2978 = vmatprep.subr.mxu0 0.0
        %2979 = vmatpush1.msra.mxu0 0.0
        %2980 = vmatprep.subr.mxu0 0.0
        %2981 = vmatpush1.msra.mxu0 0.0
        %2982 = vmatprep.subr.mxu0 0.0
        %2983 = vmatpush1.msra.mxu0 0.0
        %2984 = vmatprep.subr.mxu0 0.0
        %2985 = vmatpush1.msra.mxu0 0.0
        %2986 = vmatprep.subr.mxu0 0.0
        %2987 = vmatpush1.msra.mxu0 0.0
        %2988 = vmatprep.subr.mxu0 0.0
        %2989 = vmatpush1.msra.mxu0 0.0
        %2990 = vmatprep.subr.mxu0 0.0
        %2991 = vmatpush1.msra.mxu0 0.0
        %2992 = vmatprep.subr.mxu0 0.0
        %2993 = vmatpush1.msra.mxu0 0.0
        %2994 = vmatprep.subr.mxu0 0.0
        %2995 = vmatpush1.msra.mxu0 0.0
        %2996 = vmatprep.subr.mxu0 0.0
        %2997 = vmatpush1.msra.mxu0 0.0
        %2998 = vmatprep.subr.mxu0 0.0
        %2999 = vmatpush1.msra.mxu0 %v2963
        %3000 = vmatprep.subr.mxu0 0.0
        %3001 = vmatpush2.msra.mxu0 0.0
        %3002 = vmatprep.subr.mxu0 0.0
        %3003 = vmatpush2.msra.mxu0 0.0
        %3004 = vmatprep.subr.mxu0 0.0
        %3005 = vmatpush2.msra.mxu0 0.0
        %3006 = vmatprep.subr.mxu0 0.0
        %3007 = vmatpush2.msra.mxu0 0.0
        %3008 = vmatprep.subr.mxu0 0.0
        %3009 = vmatpush2.msra.mxu0 0.0
        %3010 = vmatprep.subr.mxu0 0.0
        %3011 = vmatpush2.msra.mxu0 0.0
        %3012 = vmatprep.subr.mxu0 0.0
        %3013 = vmatpush2.msra.mxu0 0.0
        %3014 = vmatprep.subr.mxu0 0.0
        %3015 = vmatpush2.msra.mxu0 0.0
        %3016 = vmatprep.subr.mxu0 0.0
        %3017 = vmatpush2.msra.mxu0 0.0
        %3018 = vmatprep.subr.mxu0 0.0
        %3019 = vmatpush2.msra.mxu0 0.0
        %3020 = vmatprep.subr.mxu0 0.0
        %3021 = vmatpush2.msra.mxu0 0.0
        %3022 = vmatprep.subr.mxu0 0.0
        %3023 = vmatpush2.msra.mxu0 0.0
        %3024 = vmatprep.subr.mxu0 0.0
        %3025 = vmatpush2.msra.mxu0 0.0
        %3026 = vmatprep.subr.mxu0 0.0
        %3027 = vmatpush2.msra.mxu0 0.0
        %3028 = vmatprep.subr.mxu0 0.0
        %3029 = vmatpush2.msra.mxu0 0.0
        %3030 = vmatprep.subr.mxu0 0.0
        %3031 = vmatpush2.msra.mxu0 0.0
        %3032 = vmatprep.mubr.f32.mxu0 0.0
        %3033 = vmatmul.mubr.f32.gmra.mxu0 %v2966
        %v3034 = vpop.f32.mrf.mxu0
        %v3035 = vadd.f32 0.0, %v3034
        %v3036 = vpop.f32.mrf.mxu0
        %3037 = vdwg.mxu0
        %3039 = vrot.lane.b32.xlu0 %v855, 120
        %v3040 = vpop.permute.xlu0 %3039
        %v3043 = vsel %vm883, %v2878, 0
        %3045 = vmatprep.subr.mxu0 0.0
        %3046 = vmatpush1.msra.mxu0 0.0
        %3047 = vmatprep.subr.mxu0 0.0
        %3048 = vmatpush1.msra.mxu0 0.0
        %3049 = vmatprep.subr.mxu0 0.0
        %3050 = vmatpush1.msra.mxu0 0.0
        %3051 = vmatprep.subr.mxu0 0.0
        %3052 = vmatpush1.msra.mxu0 0.0
        %3053 = vmatprep.subr.mxu0 0.0
        %3054 = vmatpush1.msra.mxu0 0.0
        %3055 = vmatprep.subr.mxu0 0.0
        %3056 = vmatpush1.msra.mxu0 0.0
        %3057 = vmatprep.subr.mxu0 0.0
        %3058 = vmatpush1.msra.mxu0 0.0
        %3059 = vmatprep.subr.mxu0 0.0
        %3060 = vmatpush1.msra.mxu0 0.0
        %3061 = vmatprep.subr.mxu0 0.0
        %3062 = vmatpush1.msra.mxu0 0.0
        %3063 = vmatprep.subr.mxu0 0.0
        %3064 = vmatpush1.msra.mxu0 0.0
        %3065 = vmatprep.subr.mxu0 0.0
        %3066 = vmatpush1.msra.mxu0 0.0
        %3067 = vmatprep.subr.mxu0 0.0
        %3068 = vmatpush1.msra.mxu0 0.0
        %3069 = vmatprep.subr.mxu0 0.0
        %3070 = vmatpush1.msra.mxu0 0.0
        %3071 = vmatprep.subr.mxu0 0.0
        %3072 = vmatpush1.msra.mxu0 0.0
        %3073 = vmatprep.subr.mxu0 0.0
        %3074 = vmatpush1.msra.mxu0 0.0
        %3075 = vmatprep.subr.mxu0 0.0
        %3076 = vmatpush1.msra.mxu0 %v3040
        %3077 = vmatprep.subr.mxu0 0.0
        %3078 = vmatpush2.msra.mxu0 0.0
        %3079 = vmatprep.subr.mxu0 0.0
        %3080 = vmatpush2.msra.mxu0 0.0
        %3081 = vmatprep.subr.mxu0 0.0
        %3082 = vmatpush2.msra.mxu0 0.0
        %3083 = vmatprep.subr.mxu0 0.0
        %3084 = vmatpush2.msra.mxu0 0.0
        %3085 = vmatprep.subr.mxu0 0.0
        %3086 = vmatpush2.msra.mxu0 0.0
        %3087 = vmatprep.subr.mxu0 0.0
        %3088 = vmatpush2.msra.mxu0 0.0
        %3089 = vmatprep.subr.mxu0 0.0
        %3090 = vmatpush2.msra.mxu0 0.0
        %3091 = vmatprep.subr.mxu0 0.0
        %3092 = vmatpush2.msra.mxu0 0.0
        %3093 = vmatprep.subr.mxu0 0.0
        %3094 = vmatpush2.msra.mxu0 0.0
        %3095 = vmatprep.subr.mxu0 0.0
        %3096 = vmatpush2.msra.mxu0 0.0
        %3097 = vmatprep.subr.mxu0 0.0
        %3098 = vmatpush2.msra.mxu0 0.0
        %3099 = vmatprep.subr.mxu0 0.0
        %3100 = vmatpush2.msra.mxu0 0.0
        %3101 = vmatprep.subr.mxu0 0.0
        %3102 = vmatpush2.msra.mxu0 0.0
        %3103 = vmatprep.subr.mxu0 0.0
        %3104 = vmatpush2.msra.mxu0 0.0
        %3105 = vmatprep.subr.mxu0 0.0
        %3106 = vmatpush2.msra.mxu0 0.0
        %3107 = vmatprep.subr.mxu0 0.0
        %3108 = vmatpush2.msra.mxu0 0.0
        %3109 = vmatprep.mubr.f32.mxu0 0.0
        %3110 = vmatmul.mubr.f32.gmra.mxu0 %v3043
        %v3111 = vpop.f32.mrf.mxu0
        %v3112 = vadd.f32 0.0, %v3111
        %v3113 = vpop.f32.mrf.mxu0
        %3114 = vdwg.mxu0
        %3116 = vrot.lane.b32.xlu0 %v860, 120
        %v3117 = vpop.permute.xlu0 %3116
        %v3120 = vsel %vm883, %v2879, 0
        %3122 = vmatprep.subr.mxu0 0.0
        %3123 = vmatpush1.msra.mxu0 0.0
        %3124 = vmatprep.subr.mxu0 0.0
        %3125 = vmatpush1.msra.mxu0 0.0
        %3126 = vmatprep.subr.mxu0 0.0
        %3127 = vmatpush1.msra.mxu0 0.0
        %3128 = vmatprep.subr.mxu0 0.0
        %3129 = vmatpush1.msra.mxu0 0.0
        %3130 = vmatprep.subr.mxu0 0.0
        %3131 = vmatpush1.msra.mxu0 0.0
        %3132 = vmatprep.subr.mxu0 0.0
        %3133 = vmatpush1.msra.mxu0 0.0
        %3134 = vmatprep.subr.mxu0 0.0
        %3135 = vmatpush1.msra.mxu0 0.0
        %3136 = vmatprep.subr.mxu0 0.0
        %3137 = vmatpush1.msra.mxu0 0.0
        %3138 = vmatprep.subr.mxu0 0.0
        %3139 = vmatpush1.msra.mxu0 0.0
        %3140 = vmatprep.subr.mxu0 0.0
        %3141 = vmatpush1.msra.mxu0 0.0
        %3142 = vmatprep.subr.mxu0 0.0
        %3143 = vmatpush1.msra.mxu0 0.0
        %3144 = vmatprep.subr.mxu0 0.0
        %3145 = vmatpush1.msra.mxu0 0.0
        %3146 = vmatprep.subr.mxu0 0.0
        %3147 = vmatpush1.msra.mxu0 0.0
        %3148 = vmatprep.subr.mxu0 0.0
        %3149 = vmatpush1.msra.mxu0 0.0
        %3150 = vmatprep.subr.mxu0 0.0
        %3151 = vmatpush1.msra.mxu0 0.0
        %3152 = vmatprep.subr.mxu0 0.0
        %3153 = vmatpush1.msra.mxu0 %v3117
        %3154 = vmatprep.subr.mxu0 0.0
        %3155 = vmatpush2.msra.mxu0 0.0
        %3156 = vmatprep.subr.mxu0 0.0
        %3157 = vmatpush2.msra.mxu0 0.0
        %3158 = vmatprep.subr.mxu0 0.0
        %3159 = vmatpush2.msra.mxu0 0.0
        %3160 = vmatprep.subr.mxu0 0.0
        %3161 = vmatpush2.msra.mxu0 0.0
        %3162 = vmatprep.subr.mxu0 0.0
        %3163 = vmatpush2.msra.mxu0 0.0
        %3164 = vmatprep.subr.mxu0 0.0
        %3165 = vmatpush2.msra.mxu0 0.0
        %3166 = vmatprep.subr.mxu0 0.0
        %3167 = vmatpush2.msra.mxu0 0.0
        %3168 = vmatprep.subr.mxu0 0.0
        %3169 = vmatpush2.msra.mxu0 0.0
        %3170 = vmatprep.subr.mxu0 0.0
        %3171 = vmatpush2.msra.mxu0 0.0
        %3172 = vmatprep.subr.mxu0 0.0
        %3173 = vmatpush2.msra.mxu0 0.0
        %3174 = vmatprep.subr.mxu0 0.0
        %3175 = vmatpush2.msra.mxu0 0.0
        %3176 = vmatprep.subr.mxu0 0.0
        %3177 = vmatpush2.msra.mxu0 0.0
        %3178 = vmatprep.subr.mxu0 0.0
        %3179 = vmatpush2.msra.mxu0 0.0
        %3180 = vmatprep.subr.mxu0 0.0
        %3181 = vmatpush2.msra.mxu0 0.0
        %3182 = vmatprep.subr.mxu0 0.0
        %3183 = vmatpush2.msra.mxu0 0.0
        %3184 = vmatprep.subr.mxu0 0.0
        %3185 = vmatpush2.msra.mxu0 0.0
        %3186 = vmatprep.mubr.f32.mxu0 0.0
        %3187 = vmatmul.mubr.f32.gmra.mxu0 %v3120
        %v3188 = vpop.f32.mrf.mxu0
        %v3189 = vadd.f32 0.0, %v3188
        %v3190 = vpop.f32.mrf.mxu0
        %3191 = vdwg.mxu0
        %3193 = vrot.lane.b32.xlu0 %v865, 120
        %v3194 = vpop.permute.xlu0 %3193
        %v3197 = vsel %vm883, %v2880, 0
        %3199 = vmatprep.subr.mxu0 0.0
        %3200 = vmatpush1.msra.mxu0 0.0
        %3201 = vmatprep.subr.mxu0 0.0
        %3202 = vmatpush1.msra.mxu0 0.0
        %3203 = vmatprep.subr.mxu0 0.0
        %3204 = vmatpush1.msra.mxu0 0.0
        %3205 = vmatprep.subr.mxu0 0.0
        %3206 = vmatpush1.msra.mxu0 0.0
        %3207 = vmatprep.subr.mxu0 0.0
        %3208 = vmatpush1.msra.mxu0 0.0
        %3209 = vmatprep.subr.mxu0 0.0
        %3210 = vmatpush1.msra.mxu0 0.0
        %3211 = vmatprep.subr.mxu0 0.0
        %3212 = vmatpush1.msra.mxu0 0.0
        %3213 = vmatprep.subr.mxu0 0.0
        %3214 = vmatpush1.msra.mxu0 0.0
        %3215 = vmatprep.subr.mxu0 0.0
        %3216 = vmatpush1.msra.mxu0 0.0
        %3217 = vmatprep.subr.mxu0 0.0
        %3218 = vmatpush1.msra.mxu0 0.0
        %3219 = vmatprep.subr.mxu0 0.0
        %3220 = vmatpush1.msra.mxu0 0.0
        %3221 = vmatprep.subr.mxu0 0.0
        %3222 = vmatpush1.msra.mxu0 0.0
        %3223 = vmatprep.subr.mxu0 0.0
        %3224 = vmatpush1.msra.mxu0 0.0
        %3225 = vmatprep.subr.mxu0 0.0
        %3226 = vmatpush1.msra.mxu0 0.0
        %3227 = vmatprep.subr.mxu0 0.0
        %3228 = vmatpush1.msra.mxu0 0.0
        %3229 = vmatprep.subr.mxu0 0.0
        %3230 = vmatpush1.msra.mxu0 %v3194
        %3231 = vmatprep.subr.mxu0 0.0
        %3232 = vmatpush2.msra.mxu0 0.0
        %3233 = vmatprep.subr.mxu0 0.0
        %3234 = vmatpush2.msra.mxu0 0.0
        %3235 = vmatprep.subr.mxu0 0.0
        %3236 = vmatpush2.msra.mxu0 0.0
        %3237 = vmatprep.subr.mxu0 0.0
        %3238 = vmatpush2.msra.mxu0 0.0
        %3239 = vmatprep.subr.mxu0 0.0
        %3240 = vmatpush2.msra.mxu0 0.0
        %3241 = vmatprep.subr.mxu0 0.0
        %3242 = vmatpush2.msra.mxu0 0.0
        %3243 = vmatprep.subr.mxu0 0.0
        %3244 = vmatpush2.msra.mxu0 0.0
        %3245 = vmatprep.subr.mxu0 0.0
        %3246 = vmatpush2.msra.mxu0 0.0
        %3247 = vmatprep.subr.mxu0 0.0
        %3248 = vmatpush2.msra.mxu0 0.0
        %3249 = vmatprep.subr.mxu0 0.0
        %3250 = vmatpush2.msra.mxu0 0.0
        %3251 = vmatprep.subr.mxu0 0.0
        %3252 = vmatpush2.msra.mxu0 0.0
        %3253 = vmatprep.subr.mxu0 0.0
        %3254 = vmatpush2.msra.mxu0 0.0
        %3255 = vmatprep.subr.mxu0 0.0
        %3256 = vmatpush2.msra.mxu0 0.0
        %3257 = vmatprep.subr.mxu0 0.0
        %3258 = vmatpush2.msra.mxu0 0.0
        %3259 = vmatprep.subr.mxu0 0.0
        %3260 = vmatpush2.msra.mxu0 0.0
        %3261 = vmatprep.subr.mxu0 0.0
        %3262 = vmatpush2.msra.mxu0 0.0
        %3263 = vmatprep.mubr.f32.mxu0 0.0
        %3264 = vmatmul.mubr.f32.gmra.mxu0 %v3197
        %v3265 = vpop.f32.mrf.mxu0
        %v3266 = vadd.f32 0.0, %v3265
        %v3267 = vpop.f32.mrf.mxu0
        %3268 = vdwg.mxu0
        %3270 = vrot.lane.b32.xlu0 %v870, 120
        %v3271 = vpop.permute.xlu0 %3270
        %v3274 = vsel %vm883, %v2881, 0
        %3276 = vmatprep.subr.mxu0 0.0
        %3277 = vmatpush1.msra.mxu0 0.0
        %3278 = vmatprep.subr.mxu0 0.0
        %3279 = vmatpush1.msra.mxu0 0.0
        %3280 = vmatprep.subr.mxu0 0.0
        %3281 = vmatpush1.msra.mxu0 0.0
        %3282 = vmatprep.subr.mxu0 0.0
        %3283 = vmatpush1.msra.mxu0 0.0
        %3284 = vmatprep.subr.mxu0 0.0
        %3285 = vmatpush1.msra.mxu0 0.0
        %3286 = vmatprep.subr.mxu0 0.0
        %3287 = vmatpush1.msra.mxu0 0.0
        %3288 = vmatprep.subr.mxu0 0.0
        %3289 = vmatpush1.msra.mxu0 0.0
        %3290 = vmatprep.subr.mxu0 0.0
        %3291 = vmatpush1.msra.mxu0 0.0
        %3292 = vmatprep.subr.mxu0 0.0
        %3293 = vmatpush1.msra.mxu0 0.0
        %3294 = vmatprep.subr.mxu0 0.0
        %3295 = vmatpush1.msra.mxu0 0.0
        %3296 = vmatprep.subr.mxu0 0.0
        %3297 = vmatpush1.msra.mxu0 0.0
        %3298 = vmatprep.subr.mxu0 0.0
        %3299 = vmatpush1.msra.mxu0 0.0
        %3300 = vmatprep.subr.mxu0 0.0
        %3301 = vmatpush1.msra.mxu0 0.0
        %3302 = vmatprep.subr.mxu0 0.0
        %3303 = vmatpush1.msra.mxu0 0.0
        %3304 = vmatprep.subr.mxu0 0.0
        %3305 = vmatpush1.msra.mxu0 0.0
        %3306 = vmatprep.subr.mxu0 0.0
        %3307 = vmatpush1.msra.mxu0 %v3271
        %3308 = vmatprep.subr.mxu0 0.0
        %3309 = vmatpush2.msra.mxu0 0.0
        %3310 = vmatprep.subr.mxu0 0.0
        %3311 = vmatpush2.msra.mxu0 0.0
        %3312 = vmatprep.subr.mxu0 0.0
        %3313 = vmatpush2.msra.mxu0 0.0
        %3314 = vmatprep.subr.mxu0 0.0
        %3315 = vmatpush2.msra.mxu0 0.0
        %3316 = vmatprep.subr.mxu0 0.0
        %3317 = vmatpush2.msra.mxu0 0.0
        %3318 = vmatprep.subr.mxu0 0.0
        %3319 = vmatpush2.msra.mxu0 0.0
        %3320 = vmatprep.subr.mxu0 0.0
        %3321 = vmatpush2.msra.mxu0 0.0
        %3322 = vmatprep.subr.mxu0 0.0
        %3323 = vmatpush2.msra.mxu0 0.0
        %3324 = vmatprep.subr.mxu0 0.0
        %3325 = vmatpush2.msra.mxu0 0.0
        %3326 = vmatprep.subr.mxu0 0.0
        %3327 = vmatpush2.msra.mxu0 0.0
        %3328 = vmatprep.subr.mxu0 0.0
        %3329 = vmatpush2.msra.mxu0 0.0
        %3330 = vmatprep.subr.mxu0 0.0
        %3331 = vmatpush2.msra.mxu0 0.0
        %3332 = vmatprep.subr.mxu0 0.0
        %3333 = vmatpush2.msra.mxu0 0.0
        %3334 = vmatprep.subr.mxu0 0.0
        %3335 = vmatpush2.msra.mxu0 0.0
        %3336 = vmatprep.subr.mxu0 0.0
        %3337 = vmatpush2.msra.mxu0 0.0
        %3338 = vmatprep.subr.mxu0 0.0
        %3339 = vmatpush2.msra.mxu0 0.0
        %3340 = vmatprep.mubr.f32.mxu0 0.0
        %3341 = vmatmul.mubr.f32.gmra.mxu0 %v3274
        %v3342 = vpop.f32.mrf.mxu0
        %v3343 = vadd.f32 0.0, %v3342
        %v3344 = vpop.f32.mrf.mxu0
        %3345 = vdwg.mxu0
        %3347 = vrot.lane.b32.xlu0 %v875, 120
        %v3348 = vpop.permute.xlu0 %3347
        %v3351 = vsel %vm883, %v2882, 0
        %3353 = vmatprep.subr.mxu0 0.0
        %3354 = vmatpush1.msra.mxu0 0.0
        %3355 = vmatprep.subr.mxu0 0.0
        %3356 = vmatpush1.msra.mxu0 0.0
        %3357 = vmatprep.subr.mxu0 0.0
        %3358 = vmatpush1.msra.mxu0 0.0
        %3359 = vmatprep.subr.mxu0 0.0
        %3360 = vmatpush1.msra.mxu0 0.0
        %3361 = vmatprep.subr.mxu0 0.0
        %3362 = vmatpush1.msra.mxu0 0.0
        %3363 = vmatprep.subr.mxu0 0.0
        %3364 = vmatpush1.msra.mxu0 0.0
        %3365 = vmatprep.subr.mxu0 0.0
        %3366 = vmatpush1.msra.mxu0 0.0
        %3367 = vmatprep.subr.mxu0 0.0
        %3368 = vmatpush1.msra.mxu0 0.0
        %3369 = vmatprep.subr.mxu0 0.0
        %3370 = vmatpush1.msra.mxu0 0.0
        %3371 = vmatprep.subr.mxu0 0.0
        %3372 = vmatpush1.msra.mxu0 0.0
        %3373 = vmatprep.subr.mxu0 0.0
        %3374 = vmatpush1.msra.mxu0 0.0
        %3375 = vmatprep.subr.mxu0 0.0
        %3376 = vmatpush1.msra.mxu0 0.0
        %3377 = vmatprep.subr.mxu0 0.0
        %3378 = vmatpush1.msra.mxu0 0.0
        %3379 = vmatprep.subr.mxu0 0.0
        %3380 = vmatpush1.msra.mxu0 0.0
        %3381 = vmatprep.subr.mxu0 0.0
        %3382 = vmatpush1.msra.mxu0 0.0
        %3383 = vmatprep.subr.mxu0 0.0
        %3384 = vmatpush1.msra.mxu0 %v3348
        %3385 = vmatprep.subr.mxu0 0.0
        %3386 = vmatpush2.msra.mxu0 0.0
        %3387 = vmatprep.subr.mxu0 0.0
        %3388 = vmatpush2.msra.mxu0 0.0
        %3389 = vmatprep.subr.mxu0 0.0
        %3390 = vmatpush2.msra.mxu0 0.0
        %3391 = vmatprep.subr.mxu0 0.0
        %3392 = vmatpush2.msra.mxu0 0.0
        %3393 = vmatprep.subr.mxu0 0.0
        %3394 = vmatpush2.msra.mxu0 0.0
        %3395 = vmatprep.subr.mxu0 0.0
        %3396 = vmatpush2.msra.mxu0 0.0
        %3397 = vmatprep.subr.mxu0 0.0
        %3398 = vmatpush2.msra.mxu0 0.0
        %3399 = vmatprep.subr.mxu0 0.0
        %3400 = vmatpush2.msra.mxu0 0.0
        %3401 = vmatprep.subr.mxu0 0.0
        %3402 = vmatpush2.msra.mxu0 0.0
        %3403 = vmatprep.subr.mxu0 0.0
        %3404 = vmatpush2.msra.mxu0 0.0
        %3405 = vmatprep.subr.mxu0 0.0
        %3406 = vmatpush2.msra.mxu0 0.0
        %3407 = vmatprep.subr.mxu0 0.0
        %3408 = vmatpush2.msra.mxu0 0.0
        %3409 = vmatprep.subr.mxu0 0.0
        %3410 = vmatpush2.msra.mxu0 0.0
        %3411 = vmatprep.subr.mxu0 0.0
        %3412 = vmatpush2.msra.mxu0 0.0
        %3413 = vmatprep.subr.mxu0 0.0
        %3414 = vmatpush2.msra.mxu0 0.0
        %3415 = vmatprep.subr.mxu0 0.0
        %3416 = vmatpush2.msra.mxu0 0.0
        %3417 = vmatprep.mubr.f32.mxu0 0.0
        %3418 = vmatmul.mubr.f32.gmra.mxu0 %v3351
        %v3419 = vpop.f32.mrf.mxu0
        %v3420 = vadd.f32 0.0, %v3419
        %v3421 = vpop.f32.mrf.mxu0
        %3422 = vdwg.mxu0
        %3424 = vrot.lane.b32.xlu0 %v880, 120
        %v3425 = vpop.permute.xlu0 %3424
        %v3428 = vsel %vm883, %v2883, 0
        %3430 = vmatprep.subr.mxu0 0.0
        %3431 = vmatpush1.msra.mxu0 0.0
        %3432 = vmatprep.subr.mxu0 0.0
        %3433 = vmatpush1.msra.mxu0 0.0
        %3434 = vmatprep.subr.mxu0 0.0
        %3435 = vmatpush1.msra.mxu0 0.0
        %3436 = vmatprep.subr.mxu0 0.0
        %3437 = vmatpush1.msra.mxu0 0.0
        %3438 = vmatprep.subr.mxu0 0.0
        %3439 = vmatpush1.msra.mxu0 0.0
        %3440 = vmatprep.subr.mxu0 0.0
        %3441 = vmatpush1.msra.mxu0 0.0
        %3442 = vmatprep.subr.mxu0 0.0
        %3443 = vmatpush1.msra.mxu0 0.0
        %3444 = vmatprep.subr.mxu0 0.0
        %3445 = vmatpush1.msra.mxu0 0.0
        %3446 = vmatprep.subr.mxu0 0.0
        %3447 = vmatpush1.msra.mxu0 0.0
        %3448 = vmatprep.subr.mxu0 0.0
        %3449 = vmatpush1.msra.mxu0 0.0
        %3450 = vmatprep.subr.mxu0 0.0
        %3451 = vmatpush1.msra.mxu0 0.0
        %3452 = vmatprep.subr.mxu0 0.0
        %3453 = vmatpush1.msra.mxu0 0.0
        %3454 = vmatprep.subr.mxu0 0.0
        %3455 = vmatpush1.msra.mxu0 0.0
        %3456 = vmatprep.subr.mxu0 0.0
        %3457 = vmatpush1.msra.mxu0 0.0
        %3458 = vmatprep.subr.mxu0 0.0
        %3459 = vmatpush1.msra.mxu0 0.0
        %3460 = vmatprep.subr.mxu0 0.0
        %3461 = vmatpush1.msra.mxu0 %v3425
        %3462 = vmatprep.subr.mxu0 0.0
        %3463 = vmatpush2.msra.mxu0 0.0
        %3464 = vmatprep.subr.mxu0 0.0
        %3465 = vmatpush2.msra.mxu0 0.0
        %3466 = vmatprep.subr.mxu0 0.0
        %3467 = vmatpush2.msra.mxu0 0.0
        %3468 = vmatprep.subr.mxu0 0.0
        %3469 = vmatpush2.msra.mxu0 0.0
        %3470 = vmatprep.subr.mxu0 0.0
        %3471 = vmatpush2.msra.mxu0 0.0
        %3472 = vmatprep.subr.mxu0 0.0
        %3473 = vmatpush2.msra.mxu0 0.0
        %3474 = vmatprep.subr.mxu0 0.0
        %3475 = vmatpush2.msra.mxu0 0.0
        %3476 = vmatprep.subr.mxu0 0.0
        %3477 = vmatpush2.msra.mxu0 0.0
        %3478 = vmatprep.subr.mxu0 0.0
        %3479 = vmatpush2.msra.mxu0 0.0
        %3480 = vmatprep.subr.mxu0 0.0
        %3481 = vmatpush2.msra.mxu0 0.0
        %3482 = vmatprep.subr.mxu0 0.0
        %3483 = vmatpush2.msra.mxu0 0.0
        %3484 = vmatprep.subr.mxu0 0.0
        %3485 = vmatpush2.msra.mxu0 0.0
        %3486 = vmatprep.subr.mxu0 0.0
        %3487 = vmatpush2.msra.mxu0 0.0
        %3488 = vmatprep.subr.mxu0 0.0
        %3489 = vmatpush2.msra.mxu0 0.0
        %3490 = vmatprep.subr.mxu0 0.0
        %3491 = vmatpush2.msra.mxu0 0.0
        %3492 = vmatprep.subr.mxu0 0.0
        %3493 = vmatpush2.msra.mxu0 0.0
        %3494 = vmatprep.mubr.f32.mxu0 0.0
        %3495 = vmatmul.mubr.f32.gmra.mxu0 %v3428
        %v3496 = vpop.f32.mrf.mxu0
        %v3497 = vadd.f32 0.0, %v3496
        %v3498 = vpop.f32.mrf.mxu0
        %3499 = vdwg.mxu0
        %3508 = vrot.lane.b32.xlu0 %v2958, 8
        %v3509 = vpop.permute.xlu0 %3508
        %3510 = vrot.lane.b32.xlu0 %v3035, 8
        %v3511 = vpop.permute.xlu0 %3510
        %3512 = vrot.lane.b32.xlu0 %v3112, 8
        %v3513 = vpop.permute.xlu0 %3512
        %3514 = vrot.lane.b32.xlu0 %v3189, 8
        %v3515 = vpop.permute.xlu0 %3514
        %3516 = vrot.lane.b32.xlu0 %v3266, 8
        %v3517 = vpop.permute.xlu0 %3516
        %3518 = vrot.lane.b32.xlu0 %v3343, 8
        %v3519 = vpop.permute.xlu0 %3518
        %3520 = vrot.lane.b32.xlu0 %v3420, 8
        %v3521 = vpop.permute.xlu0 %3520
        %3522 = vrot.lane.b32.xlu0 %v3497, 8
        %v3523 = vpop.permute.xlu0 %3522
        %vm3532 = vcmask 130112
        %3533 = vst.msk [vmem:[#allocation2] sm:$0xff] %vm3532, %v3509
        %3534 = vst.msk [vmem:[#allocation2 + $0x8] sm:$0xff] %vm3532, %v3511
        %3535 = vst.msk [vmem:[#allocation2 + $0x10] sm:$0xff] %vm3532, %v3513
        %3536 = vst.msk [vmem:[#allocation2 + $0x18] sm:$0xff] %vm3532, %v3515
        %3537 = vst.msk [vmem:[#allocation2 + $0x20] sm:$0xff] %vm3532, %v3517
        %3538 = vst.msk [vmem:[#allocation2 + $0x28] sm:$0xff] %vm3532, %v3519
        %3539 = vst.msk [vmem:[#allocation2 + $0x30] sm:$0xff] %vm3532, %v3521
        %3540 = vst.msk [vmem:[#allocation2 + $0x38] sm:$0xff] %vm3532, %v3523
        %3541 = vrot.lane.b32.xlu0 %v579, 112
        %v3542 = vpop.permute.xlu0 %3541
        %3543 = vrot.lane.b32.xlu0 %v712, 112
        %v3544 = vpop.permute.xlu0 %3543
        %v3545 = vsel %vm883, %v3542, 0
        %v3547 = vsel %vm883, %v3544, 0
        %3549 = vmatprep.subr.mxu0 0.0
        %3550 = vmatpush1.xpose.msra.mxu0 0.0
        %3551 = vmatprep.subr.mxu0 0.0
        %3552 = vmatpush1.xpose.msra.mxu0 0.0
        %3553 = vmatprep.subr.mxu0 0.0
        %3554 = vmatpush1.xpose.msra.mxu0 0.0
        %3555 = vmatprep.subr.mxu0 0.0
        %3556 = vmatpush1.xpose.msra.mxu0 0.0
        %3557 = vmatprep.subr.mxu0 0.0
        %3558 = vmatpush1.xpose.msra.mxu0 0.0
        %3559 = vmatprep.subr.mxu0 0.0
        %3560 = vmatpush1.xpose.msra.mxu0 0.0
        %3561 = vmatprep.subr.mxu0 0.0
        %3562 = vmatpush1.xpose.msra.mxu0 0.0
        %3563 = vmatprep.subr.mxu0 0.0
        %3564 = vmatpush1.xpose.msra.mxu0 0.0
        %3565 = vmatprep.subr.mxu0 0.0
        %3566 = vmatpush1.xpose.msra.mxu0 0.0
        %3567 = vmatprep.subr.mxu0 0.0
        %3568 = vmatpush1.xpose.msra.mxu0 0.0
        %3569 = vmatprep.subr.mxu0 0.0
        %3570 = vmatpush1.xpose.msra.mxu0 0.0
        %3571 = vmatprep.subr.mxu0 0.0
        %3572 = vmatpush1.xpose.msra.mxu0 0.0
        %3573 = vmatprep.subr.mxu0 0.0
        %3574 = vmatpush1.xpose.msra.mxu0 0.0
        %3575 = vmatprep.subr.mxu0 0.0
        %3576 = vmatpush1.xpose.msra.mxu0 0.0
        %3577 = vmatprep.subr.mxu0 0.0
        %3578 = vmatpush1.xpose.msra.mxu0 0.0
        %3579 = vmatprep.subr.mxu0 0.0
        %3580 = vmatpush1.xpose.msra.mxu0 %v3547
        %3581 = vmatprep.subr.mxu0 0.0
        %3582 = vmatpush2.xpose.msra.mxu0 0.0
        %3583 = vmatprep.subr.mxu0 0.0
        %3584 = vmatpush2.xpose.msra.mxu0 0.0
        %3585 = vmatprep.subr.mxu0 0.0
        %3586 = vmatpush2.xpose.msra.mxu0 0.0
        %3587 = vmatprep.subr.mxu0 0.0
        %3588 = vmatpush2.xpose.msra.mxu0 0.0
        %3589 = vmatprep.subr.mxu0 0.0
        %3590 = vmatpush2.xpose.msra.mxu0 0.0
        %3591 = vmatprep.subr.mxu0 0.0
        %3592 = vmatpush2.xpose.msra.mxu0 0.0
        %3593 = vmatprep.subr.mxu0 0.0
        %3594 = vmatpush2.xpose.msra.mxu0 0.0
        %3595 = vmatprep.subr.mxu0 0.0
        %3596 = vmatpush2.xpose.msra.mxu0 0.0
        %3597 = vmatprep.subr.mxu0 0.0
        %3598 = vmatpush2.xpose.msra.mxu0 0.0
        %3599 = vmatprep.subr.mxu0 0.0
        %3600 = vmatpush2.xpose.msra.mxu0 0.0
        %3601 = vmatprep.subr.mxu0 0.0
        %3602 = vmatpush2.xpose.msra.mxu0 0.0
        %3603 = vmatprep.subr.mxu0 0.0
        %3604 = vmatpush2.xpose.msra.mxu0 0.0
        %3605 = vmatprep.subr.mxu0 0.0
        %3606 = vmatpush2.xpose.msra.mxu0 0.0
        %3607 = vmatprep.subr.mxu0 0.0
        %3608 = vmatpush2.xpose.msra.mxu0 0.0
        %3609 = vmatprep.subr.mxu0 0.0
        %3610 = vmatpush2.xpose.msra.mxu0 0.0
        %3611 = vmatprep.subr.mxu0 0.0
        %3612 = vmatpush2.xpose.msra.mxu0 0.0
        %3613 = vmatprep.mubr.f32.mxu0 0.0
        %3614 = vmatmul.mubr.f32.gmra.mxu0 %v3545
        %v3615 = vpop.f32.mrf.mxu0
        %v3616 = vadd.f32 0.0, %v3615
        %v3617 = vpop.f32.mrf.mxu0
        %3618 = vdwg.mxu0
        %3619 = vrot.lane.b32.xlu0 %v584, 112
        %v3620 = vpop.permute.xlu0 %3619
        %3621 = vrot.lane.b32.xlu0 %v717, 112
        %v3622 = vpop.permute.xlu0 %3621
        %v3623 = vsel %vm883, %v3620, 0
        %v3625 = vsel %vm883, %v3622, 0
        %3627 = vmatprep.subr.mxu0 0.0
        %3628 = vmatpush1.xpose.msra.mxu0 0.0
        %3629 = vmatprep.subr.mxu0 0.0
        %3630 = vmatpush1.xpose.msra.mxu0 0.0
        %3631 = vmatprep.subr.mxu0 0.0
        %3632 = vmatpush1.xpose.msra.mxu0 0.0
        %3633 = vmatprep.subr.mxu0 0.0
        %3634 = vmatpush1.xpose.msra.mxu0 0.0
        %3635 = vmatprep.subr.mxu0 0.0
        %3636 = vmatpush1.xpose.msra.mxu0 0.0
        %3637 = vmatprep.subr.mxu0 0.0
        %3638 = vmatpush1.xpose.msra.mxu0 0.0
        %3639 = vmatprep.subr.mxu0 0.0
        %3640 = vmatpush1.xpose.msra.mxu0 0.0
        %3641 = vmatprep.subr.mxu0 0.0
        %3642 = vmatpush1.xpose.msra.mxu0 0.0
        %3643 = vmatprep.subr.mxu0 0.0
        %3644 = vmatpush1.xpose.msra.mxu0 0.0
        %3645 = vmatprep.subr.mxu0 0.0
        %3646 = vmatpush1.xpose.msra.mxu0 0.0
        %3647 = vmatprep.subr.mxu0 0.0
        %3648 = vmatpush1.xpose.msra.mxu0 0.0
        %3649 = vmatprep.subr.mxu0 0.0
        %3650 = vmatpush1.xpose.msra.mxu0 0.0
        %3651 = vmatprep.subr.mxu0 0.0
        %3652 = vmatpush1.xpose.msra.mxu0 0.0
        %3653 = vmatprep.subr.mxu0 0.0
        %3654 = vmatpush1.xpose.msra.mxu0 0.0
        %3655 = vmatprep.subr.mxu0 0.0
        %3656 = vmatpush1.xpose.msra.mxu0 0.0
        %3657 = vmatprep.subr.mxu0 0.0
        %3658 = vmatpush1.xpose.msra.mxu0 %v3625
        %3659 = vmatprep.subr.mxu0 0.0
        %3660 = vmatpush2.xpose.msra.mxu0 0.0
        %3661 = vmatprep.subr.mxu0 0.0
        %3662 = vmatpush2.xpose.msra.mxu0 0.0
        %3663 = vmatprep.subr.mxu0 0.0
        %3664 = vmatpush2.xpose.msra.mxu0 0.0
        %3665 = vmatprep.subr.mxu0 0.0
        %3666 = vmatpush2.xpose.msra.mxu0 0.0
        %3667 = vmatprep.subr.mxu0 0.0
        %3668 = vmatpush2.xpose.msra.mxu0 0.0
        %3669 = vmatprep.subr.mxu0 0.0
        %3670 = vmatpush2.xpose.msra.mxu0 0.0
        %3671 = vmatprep.subr.mxu0 0.0
        %3672 = vmatpush2.xpose.msra.mxu0 0.0
        %3673 = vmatprep.subr.mxu0 0.0
        %3674 = vmatpush2.xpose.msra.mxu0 0.0
        %3675 = vmatprep.subr.mxu0 0.0
        %3676 = vmatpush2.xpose.msra.mxu0 0.0
        %3677 = vmatprep.subr.mxu0 0.0
        %3678 = vmatpush2.xpose.msra.mxu0 0.0
        %3679 = vmatprep.subr.mxu0 0.0
        %3680 = vmatpush2.xpose.msra.mxu0 0.0
        %3681 = vmatprep.subr.mxu0 0.0
        %3682 = vmatpush2.xpose.msra.mxu0 0.0
        %3683 = vmatprep.subr.mxu0 0.0
        %3684 = vmatpush2.xpose.msra.mxu0 0.0
        %3685 = vmatprep.subr.mxu0 0.0
        %3686 = vmatpush2.xpose.msra.mxu0 0.0
        %3687 = vmatprep.subr.mxu0 0.0
        %3688 = vmatpush2.xpose.msra.mxu0 0.0
        %3689 = vmatprep.subr.mxu0 0.0
        %3690 = vmatpush2.xpose.msra.mxu0 0.0
        %3691 = vmatprep.mubr.f32.mxu0 0.0
        %3692 = vmatmul.mubr.f32.gmra.mxu0 %v3623
        %v3693 = vpop.f32.mrf.mxu0
        %v3694 = vadd.f32 0.0, %v3693
        %v3695 = vpop.f32.mrf.mxu0
        %3696 = vdwg.mxu0
        %3697 = vrot.lane.b32.xlu0 %v589, 112
        %v3698 = vpop.permute.xlu0 %3697
        %3699 = vrot.lane.b32.xlu0 %v722, 112
        %v3700 = vpop.permute.xlu0 %3699
        %v3701 = vsel %vm883, %v3698, 0
        %v3703 = vsel %vm883, %v3700, 0
        %3705 = vmatprep.subr.mxu0 0.0
        %3706 = vmatpush1.xpose.msra.mxu0 0.0
        %3707 = vmatprep.subr.mxu0 0.0
        %3708 = vmatpush1.xpose.msra.mxu0 0.0
        %3709 = vmatprep.subr.mxu0 0.0
        %3710 = vmatpush1.xpose.msra.mxu0 0.0
        %3711 = vmatprep.subr.mxu0 0.0
        %3712 = vmatpush1.xpose.msra.mxu0 0.0
        %3713 = vmatprep.subr.mxu0 0.0
        %3714 = vmatpush1.xpose.msra.mxu0 0.0
        %3715 = vmatprep.subr.mxu0 0.0
        %3716 = vmatpush1.xpose.msra.mxu0 0.0
        %3717 = vmatprep.subr.mxu0 0.0
        %3718 = vmatpush1.xpose.msra.mxu0 0.0
        %3719 = vmatprep.subr.mxu0 0.0
        %3720 = vmatpush1.xpose.msra.mxu0 0.0
        %3721 = vmatprep.subr.mxu0 0.0
        %3722 = vmatpush1.xpose.msra.mxu0 0.0
        %3723 = vmatprep.subr.mxu0 0.0
        %3724 = vmatpush1.xpose.msra.mxu0 0.0
        %3725 = vmatprep.subr.mxu0 0.0
        %3726 = vmatpush1.xpose.msra.mxu0 0.0
        %3727 = vmatprep.subr.mxu0 0.0
        %3728 = vmatpush1.xpose.msra.mxu0 0.0
        %3729 = vmatprep.subr.mxu0 0.0
        %3730 = vmatpush1.xpose.msra.mxu0 0.0
        %3731 = vmatprep.subr.mxu0 0.0
        %3732 = vmatpush1.xpose.msra.mxu0 0.0
        %3733 = vmatprep.subr.mxu0 0.0
        %3734 = vmatpush1.xpose.msra.mxu0 0.0
        %3735 = vmatprep.subr.mxu0 0.0
        %3736 = vmatpush1.xpose.msra.mxu0 %v3703
        %3737 = vmatprep.subr.mxu0 0.0
        %3738 = vmatpush2.xpose.msra.mxu0 0.0
        %3739 = vmatprep.subr.mxu0 0.0
        %3740 = vmatpush2.xpose.msra.mxu0 0.0
        %3741 = vmatprep.subr.mxu0 0.0
        %3742 = vmatpush2.xpose.msra.mxu0 0.0
        %3743 = vmatprep.subr.mxu0 0.0
        %3744 = vmatpush2.xpose.msra.mxu0 0.0
        %3745 = vmatprep.subr.mxu0 0.0
        %3746 = vmatpush2.xpose.msra.mxu0 0.0
        %3747 = vmatprep.subr.mxu0 0.0
        %3748 = vmatpush2.xpose.msra.mxu0 0.0
        %3749 = vmatprep.subr.mxu0 0.0
        %3750 = vmatpush2.xpose.msra.mxu0 0.0
        %3751 = vmatprep.subr.mxu0 0.0
        %3752 = vmatpush2.xpose.msra.mxu0 0.0
        %3753 = vmatprep.subr.mxu0 0.0
        %3754 = vmatpush2.xpose.msra.mxu0 0.0
        %3755 = vmatprep.subr.mxu0 0.0
        %3756 = vmatpush2.xpose.msra.mxu0 0.0
        %3757 = vmatprep.subr.mxu0 0.0
        %3758 = vmatpush2.xpose.msra.mxu0 0.0
        %3759 = vmatprep.subr.mxu0 0.0
        %3760 = vmatpush2.xpose.msra.mxu0 0.0
        %3761 = vmatprep.subr.mxu0 0.0
        %3762 = vmatpush2.xpose.msra.mxu0 0.0
        %3763 = vmatprep.subr.mxu0 0.0
        %3764 = vmatpush2.xpose.msra.mxu0 0.0
        %3765 = vmatprep.subr.mxu0 0.0
        %3766 = vmatpush2.xpose.msra.mxu0 0.0
        %3767 = vmatprep.subr.mxu0 0.0
        %3768 = vmatpush2.xpose.msra.mxu0 0.0
        %3769 = vmatprep.mubr.f32.mxu0 0.0
        %3770 = vmatmul.mubr.f32.gmra.mxu0 %v3701
        %v3771 = vpop.f32.mrf.mxu0
        %v3772 = vadd.f32 0.0, %v3771
        %v3773 = vpop.f32.mrf.mxu0
        %3774 = vdwg.mxu0
        %3775 = vrot.lane.b32.xlu0 %v594, 112
        %v3776 = vpop.permute.xlu0 %3775
        %3777 = vrot.lane.b32.xlu0 %v727, 112
        %v3778 = vpop.permute.xlu0 %3777
        %v3779 = vsel %vm883, %v3776, 0
        %v3781 = vsel %vm883, %v3778, 0
        %3783 = vmatprep.subr.mxu0 0.0
        %3784 = vmatpush1.xpose.msra.mxu0 0.0
        %3785 = vmatprep.subr.mxu0 0.0
        %3786 = vmatpush1.xpose.msra.mxu0 0.0
        %3787 = vmatprep.subr.mxu0 0.0
        %3788 = vmatpush1.xpose.msra.mxu0 0.0
        %3789 = vmatprep.subr.mxu0 0.0
        %3790 = vmatpush1.xpose.msra.mxu0 0.0
        %3791 = vmatprep.subr.mxu0 0.0
        %3792 = vmatpush1.xpose.msra.mxu0 0.0
        %3793 = vmatprep.subr.mxu0 0.0
        %3794 = vmatpush1.xpose.msra.mxu0 0.0
        %3795 = vmatprep.subr.mxu0 0.0
        %3796 = vmatpush1.xpose.msra.mxu0 0.0
        %3797 = vmatprep.subr.mxu0 0.0
        %3798 = vmatpush1.xpose.msra.mxu0 0.0
        %3799 = vmatprep.subr.mxu0 0.0
        %3800 = vmatpush1.xpose.msra.mxu0 0.0
        %3801 = vmatprep.subr.mxu0 0.0
        %3802 = vmatpush1.xpose.msra.mxu0 0.0
        %3803 = vmatprep.subr.mxu0 0.0
        %3804 = vmatpush1.xpose.msra.mxu0 0.0
        %3805 = vmatprep.subr.mxu0 0.0
        %3806 = vmatpush1.xpose.msra.mxu0 0.0
        %3807 = vmatprep.subr.mxu0 0.0
        %3808 = vmatpush1.xpose.msra.mxu0 0.0
        %3809 = vmatprep.subr.mxu0 0.0
        %3810 = vmatpush1.xpose.msra.mxu0 0.0
        %3811 = vmatprep.subr.mxu0 0.0
        %3812 = vmatpush1.xpose.msra.mxu0 0.0
        %3813 = vmatprep.subr.mxu0 0.0
        %3814 = vmatpush1.xpose.msra.mxu0 %v3781
        %3815 = vmatprep.subr.mxu0 0.0
        %3816 = vmatpush2.xpose.msra.mxu0 0.0
        %3817 = vmatprep.subr.mxu0 0.0
        %3818 = vmatpush2.xpose.msra.mxu0 0.0
        %3819 = vmatprep.subr.mxu0 0.0
        %3820 = vmatpush2.xpose.msra.mxu0 0.0
        %3821 = vmatprep.subr.mxu0 0.0
        %3822 = vmatpush2.xpose.msra.mxu0 0.0
        %3823 = vmatprep.subr.mxu0 0.0
        %3824 = vmatpush2.xpose.msra.mxu0 0.0
        %3825 = vmatprep.subr.mxu0 0.0
        %3826 = vmatpush2.xpose.msra.mxu0 0.0
        %3827 = vmatprep.subr.mxu0 0.0
        %3828 = vmatpush2.xpose.msra.mxu0 0.0
        %3829 = vmatprep.subr.mxu0 0.0
        %3830 = vmatpush2.xpose.msra.mxu0 0.0
        %3831 = vmatprep.subr.mxu0 0.0
        %3832 = vmatpush2.xpose.msra.mxu0 0.0
        %3833 = vmatprep.subr.mxu0 0.0
        %3834 = vmatpush2.xpose.msra.mxu0 0.0
        %3835 = vmatprep.subr.mxu0 0.0
        %3836 = vmatpush2.xpose.msra.mxu0 0.0
        %3837 = vmatprep.subr.mxu0 0.0
        %3838 = vmatpush2.xpose.msra.mxu0 0.0
        %3839 = vmatprep.subr.mxu0 0.0
        %3840 = vmatpush2.xpose.msra.mxu0 0.0
        %3841 = vmatprep.subr.mxu0 0.0
        %3842 = vmatpush2.xpose.msra.mxu0 0.0
        %3843 = vmatprep.subr.mxu0 0.0
        %3844 = vmatpush2.xpose.msra.mxu0 0.0
        %3845 = vmatprep.subr.mxu0 0.0
        %3846 = vmatpush2.xpose.msra.mxu0 0.0
        %3847 = vmatprep.mubr.f32.mxu0 0.0
        %3848 = vmatmul.mubr.f32.gmra.mxu0 %v3779
        %v3849 = vpop.f32.mrf.mxu0
        %v3850 = vadd.f32 0.0, %v3849
        %v3851 = vpop.f32.mrf.mxu0
        %3852 = vdwg.mxu0
        %3853 = vrot.lane.b32.xlu0 %v599, 112
        %v3854 = vpop.permute.xlu0 %3853
        %3855 = vrot.lane.b32.xlu0 %v732, 112
        %v3856 = vpop.permute.xlu0 %3855
        %v3857 = vsel %vm883, %v3854, 0
        %v3859 = vsel %vm883, %v3856, 0
        %3861 = vmatprep.subr.mxu0 0.0
        %3862 = vmatpush1.xpose.msra.mxu0 0.0
        %3863 = vmatprep.subr.mxu0 0.0
        %3864 = vmatpush1.xpose.msra.mxu0 0.0
        %3865 = vmatprep.subr.mxu0 0.0
        %3866 = vmatpush1.xpose.msra.mxu0 0.0
        %3867 = vmatprep.subr.mxu0 0.0
        %3868 = vmatpush1.xpose.msra.mxu0 0.0
        %3869 = vmatprep.subr.mxu0 0.0
        %3870 = vmatpush1.xpose.msra.mxu0 0.0
        %3871 = vmatprep.subr.mxu0 0.0
        %3872 = vmatpush1.xpose.msra.mxu0 0.0
        %3873 = vmatprep.subr.mxu0 0.0
        %3874 = vmatpush1.xpose.msra.mxu0 0.0
        %3875 = vmatprep.subr.mxu0 0.0
        %3876 = vmatpush1.xpose.msra.mxu0 0.0
        %3877 = vmatprep.subr.mxu0 0.0
        %3878 = vmatpush1.xpose.msra.mxu0 0.0
        %3879 = vmatprep.subr.mxu0 0.0
        %3880 = vmatpush1.xpose.msra.mxu0 0.0
        %3881 = vmatprep.subr.mxu0 0.0
        %3882 = vmatpush1.xpose.msra.mxu0 0.0
        %3883 = vmatprep.subr.mxu0 0.0
        %3884 = vmatpush1.xpose.msra.mxu0 0.0
        %3885 = vmatprep.subr.mxu0 0.0
        %3886 = vmatpush1.xpose.msra.mxu0 0.0
        %3887 = vmatprep.subr.mxu0 0.0
        %3888 = vmatpush1.xpose.msra.mxu0 0.0
        %3889 = vmatprep.subr.mxu0 0.0
        %3890 = vmatpush1.xpose.msra.mxu0 0.0
        %3891 = vmatprep.subr.mxu0 0.0
        %3892 = vmatpush1.xpose.msra.mxu0 %v3859
        %3893 = vmatprep.subr.mxu0 0.0
        %3894 = vmatpush2.xpose.msra.mxu0 0.0
        %3895 = vmatprep.subr.mxu0 0.0
        %3896 = vmatpush2.xpose.msra.mxu0 0.0
        %3897 = vmatprep.subr.mxu0 0.0
        %3898 = vmatpush2.xpose.msra.mxu0 0.0
        %3899 = vmatprep.subr.mxu0 0.0
        %3900 = vmatpush2.xpose.msra.mxu0 0.0
        %3901 = vmatprep.subr.mxu0 0.0
        %3902 = vmatpush2.xpose.msra.mxu0 0.0
        %3903 = vmatprep.subr.mxu0 0.0
        %3904 = vmatpush2.xpose.msra.mxu0 0.0
        %3905 = vmatprep.subr.mxu0 0.0
        %3906 = vmatpush2.xpose.msra.mxu0 0.0
        %3907 = vmatprep.subr.mxu0 0.0
        %3908 = vmatpush2.xpose.msra.mxu0 0.0
        %3909 = vmatprep.subr.mxu0 0.0
        %3910 = vmatpush2.xpose.msra.mxu0 0.0
        %3911 = vmatprep.subr.mxu0 0.0
        %3912 = vmatpush2.xpose.msra.mxu0 0.0
        %3913 = vmatprep.subr.mxu0 0.0
        %3914 = vmatpush2.xpose.msra.mxu0 0.0
        %3915 = vmatprep.subr.mxu0 0.0
        %3916 = vmatpush2.xpose.msra.mxu0 0.0
        %3917 = vmatprep.subr.mxu0 0.0
        %3918 = vmatpush2.xpose.msra.mxu0 0.0
        %3919 = vmatprep.subr.mxu0 0.0
        %3920 = vmatpush2.xpose.msra.mxu0 0.0
        %3921 = vmatprep.subr.mxu0 0.0
        %3922 = vmatpush2.xpose.msra.mxu0 0.0
        %3923 = vmatprep.subr.mxu0 0.0
        %3924 = vmatpush2.xpose.msra.mxu0 0.0
        %3925 = vmatprep.mubr.f32.mxu0 0.0
        %3926 = vmatmul.mubr.f32.gmra.mxu0 %v3857
        %v3927 = vpop.f32.mrf.mxu0
        %v3928 = vadd.f32 0.0, %v3927
        %v3929 = vpop.f32.mrf.mxu0
        %3930 = vdwg.mxu0
        %3931 = vrot.lane.b32.xlu0 %v604, 112
        %v3932 = vpop.permute.xlu0 %3931
        %3933 = vrot.lane.b32.xlu0 %v737, 112
        %v3934 = vpop.permute.xlu0 %3933
        %v3935 = vsel %vm883, %v3932, 0
        %v3937 = vsel %vm883, %v3934, 0
        %3939 = vmatprep.subr.mxu0 0.0
        %3940 = vmatpush1.xpose.msra.mxu0 0.0
        %3941 = vmatprep.subr.mxu0 0.0
        %3942 = vmatpush1.xpose.msra.mxu0 0.0
        %3943 = vmatprep.subr.mxu0 0.0
        %3944 = vmatpush1.xpose.msra.mxu0 0.0
        %3945 = vmatprep.subr.mxu0 0.0
        %3946 = vmatpush1.xpose.msra.mxu0 0.0
        %3947 = vmatprep.subr.mxu0 0.0
        %3948 = vmatpush1.xpose.msra.mxu0 0.0
        %3949 = vmatprep.subr.mxu0 0.0
        %3950 = vmatpush1.xpose.msra.mxu0 0.0
        %3951 = vmatprep.subr.mxu0 0.0
        %3952 = vmatpush1.xpose.msra.mxu0 0.0
        %3953 = vmatprep.subr.mxu0 0.0
        %3954 = vmatpush1.xpose.msra.mxu0 0.0
        %3955 = vmatprep.subr.mxu0 0.0
        %3956 = vmatpush1.xpose.msra.mxu0 0.0
        %3957 = vmatprep.subr.mxu0 0.0
        %3958 = vmatpush1.xpose.msra.mxu0 0.0
        %3959 = vmatprep.subr.mxu0 0.0
        %3960 = vmatpush1.xpose.msra.mxu0 0.0
        %3961 = vmatprep.subr.mxu0 0.0
        %3962 = vmatpush1.xpose.msra.mxu0 0.0
        %3963 = vmatprep.subr.mxu0 0.0
        %3964 = vmatpush1.xpose.msra.mxu0 0.0
        %3965 = vmatprep.subr.mxu0 0.0
        %3966 = vmatpush1.xpose.msra.mxu0 0.0
        %3967 = vmatprep.subr.mxu0 0.0
        %3968 = vmatpush1.xpose.msra.mxu0 0.0
        %3969 = vmatprep.subr.mxu0 0.0
        %3970 = vmatpush1.xpose.msra.mxu0 %v3937
        %3971 = vmatprep.subr.mxu0 0.0
        %3972 = vmatpush2.xpose.msra.mxu0 0.0
        %3973 = vmatprep.subr.mxu0 0.0
        %3974 = vmatpush2.xpose.msra.mxu0 0.0
        %3975 = vmatprep.subr.mxu0 0.0
        %3976 = vmatpush2.xpose.msra.mxu0 0.0
        %3977 = vmatprep.subr.mxu0 0.0
        %3978 = vmatpush2.xpose.msra.mxu0 0.0
        %3979 = vmatprep.subr.mxu0 0.0
        %3980 = vmatpush2.xpose.msra.mxu0 0.0
        %3981 = vmatprep.subr.mxu0 0.0
        %3982 = vmatpush2.xpose.msra.mxu0 0.0
        %3983 = vmatprep.subr.mxu0 0.0
        %3984 = vmatpush2.xpose.msra.mxu0 0.0
        %3985 = vmatprep.subr.mxu0 0.0
        %3986 = vmatpush2.xpose.msra.mxu0 0.0
        %3987 = vmatprep.subr.mxu0 0.0
        %3988 = vmatpush2.xpose.msra.mxu0 0.0
        %3989 = vmatprep.subr.mxu0 0.0
        %3990 = vmatpush2.xpose.msra.mxu0 0.0
        %3991 = vmatprep.subr.mxu0 0.0
        %3992 = vmatpush2.xpose.msra.mxu0 0.0
        %3993 = vmatprep.subr.mxu0 0.0
        %3994 = vmatpush2.xpose.msra.mxu0 0.0
        %3995 = vmatprep.subr.mxu0 0.0
        %3996 = vmatpush2.xpose.msra.mxu0 0.0
        %3997 = vmatprep.subr.mxu0 0.0
        %3998 = vmatpush2.xpose.msra.mxu0 0.0
        %3999 = vmatprep.subr.mxu0 0.0
        %4000 = vmatpush2.xpose.msra.mxu0 0.0
        %4001 = vmatprep.subr.mxu0 0.0
        %4002 = vmatpush2.xpose.msra.mxu0 0.0
        %4003 = vmatprep.mubr.f32.mxu0 0.0
        %4004 = vmatmul.mubr.f32.gmra.mxu0 %v3935
        %v4005 = vpop.f32.mrf.mxu0
        %v4006 = vadd.f32 0.0, %v4005
        %v4007 = vpop.f32.mrf.mxu0
        %4008 = vdwg.mxu0
        %4009 = vrot.lane.b32.xlu0 %v609, 112
        %v4010 = vpop.permute.xlu0 %4009
        %4011 = vrot.lane.b32.xlu0 %v742, 112
        %v4012 = vpop.permute.xlu0 %4011
        %v4013 = vsel %vm883, %v4010, 0
        %v4015 = vsel %vm883, %v4012, 0
        %4017 = vmatprep.subr.mxu0 0.0
        %4018 = vmatpush1.xpose.msra.mxu0 0.0
        %4019 = vmatprep.subr.mxu0 0.0
        %4020 = vmatpush1.xpose.msra.mxu0 0.0
        %4021 = vmatprep.subr.mxu0 0.0
        %4022 = vmatpush1.xpose.msra.mxu0 0.0
        %4023 = vmatprep.subr.mxu0 0.0
        %4024 = vmatpush1.xpose.msra.mxu0 0.0
        %4025 = vmatprep.subr.mxu0 0.0
        %4026 = vmatpush1.xpose.msra.mxu0 0.0
        %4027 = vmatprep.subr.mxu0 0.0
        %4028 = vmatpush1.xpose.msra.mxu0 0.0
        %4029 = vmatprep.subr.mxu0 0.0
        %4030 = vmatpush1.xpose.msra.mxu0 0.0
        %4031 = vmatprep.subr.mxu0 0.0
        %4032 = vmatpush1.xpose.msra.mxu0 0.0
        %4033 = vmatprep.subr.mxu0 0.0
        %4034 = vmatpush1.xpose.msra.mxu0 0.0
        %4035 = vmatprep.subr.mxu0 0.0
        %4036 = vmatpush1.xpose.msra.mxu0 0.0
        %4037 = vmatprep.subr.mxu0 0.0
        %4038 = vmatpush1.xpose.msra.mxu0 0.0
        %4039 = vmatprep.subr.mxu0 0.0
        %4040 = vmatpush1.xpose.msra.mxu0 0.0
        %4041 = vmatprep.subr.mxu0 0.0
        %4042 = vmatpush1.xpose.msra.mxu0 0.0
        %4043 = vmatprep.subr.mxu0 0.0
        %4044 = vmatpush1.xpose.msra.mxu0 0.0
        %4045 = vmatprep.subr.mxu0 0.0
        %4046 = vmatpush1.xpose.msra.mxu0 0.0
        %4047 = vmatprep.subr.mxu0 0.0
        %4048 = vmatpush1.xpose.msra.mxu0 %v4015
        %4049 = vmatprep.subr.mxu0 0.0
        %4050 = vmatpush2.xpose.msra.mxu0 0.0
        %4051 = vmatprep.subr.mxu0 0.0
        %4052 = vmatpush2.xpose.msra.mxu0 0.0
        %4053 = vmatprep.subr.mxu0 0.0
        %4054 = vmatpush2.xpose.msra.mxu0 0.0
        %4055 = vmatprep.subr.mxu0 0.0
        %4056 = vmatpush2.xpose.msra.mxu0 0.0
        %4057 = vmatprep.subr.mxu0 0.0
        %4058 = vmatpush2.xpose.msra.mxu0 0.0
        %4059 = vmatprep.subr.mxu0 0.0
        %4060 = vmatpush2.xpose.msra.mxu0 0.0
        %4061 = vmatprep.subr.mxu0 0.0
        %4062 = vmatpush2.xpose.msra.mxu0 0.0
        %4063 = vmatprep.subr.mxu0 0.0
        %4064 = vmatpush2.xpose.msra.mxu0 0.0
        %4065 = vmatprep.subr.mxu0 0.0
        %4066 = vmatpush2.xpose.msra.mxu0 0.0
        %4067 = vmatprep.subr.mxu0 0.0
        %4068 = vmatpush2.xpose.msra.mxu0 0.0
        %4069 = vmatprep.subr.mxu0 0.0
        %4070 = vmatpush2.xpose.msra.mxu0 0.0
        %4071 = vmatprep.subr.mxu0 0.0
        %4072 = vmatpush2.xpose.msra.mxu0 0.0
        %4073 = vmatprep.subr.mxu0 0.0
        %4074 = vmatpush2.xpose.msra.mxu0 0.0
        %4075 = vmatprep.subr.mxu0 0.0
        %4076 = vmatpush2.xpose.msra.mxu0 0.0
        %4077 = vmatprep.subr.mxu0 0.0
        %4078 = vmatpush2.xpose.msra.mxu0 0.0
        %4079 = vmatprep.subr.mxu0 0.0
        %4080 = vmatpush2.xpose.msra.mxu0 0.0
        %4081 = vmatprep.mubr.f32.mxu0 0.0
        %4082 = vmatmul.mubr.f32.gmra.mxu0 %v4013
        %v4083 = vpop.f32.mrf.mxu0
        %v4084 = vadd.f32 0.0, %v4083
        %v4085 = vpop.f32.mrf.mxu0
        %4086 = vdwg.mxu0
        %4087 = vrot.lane.b32.xlu0 %v614, 112
        %v4088 = vpop.permute.xlu0 %4087
        %4089 = vrot.lane.b32.xlu0 %v747, 112
        %v4090 = vpop.permute.xlu0 %4089
        %v4091 = vsel %vm883, %v4088, 0
        %v4093 = vsel %vm883, %v4090, 0
        %4095 = vmatprep.subr.mxu0 0.0
        %4096 = vmatpush1.xpose.msra.mxu0 0.0
        %4097 = vmatprep.subr.mxu0 0.0
        %4098 = vmatpush1.xpose.msra.mxu0 0.0
        %4099 = vmatprep.subr.mxu0 0.0
        %4100 = vmatpush1.xpose.msra.mxu0 0.0
        %4101 = vmatprep.subr.mxu0 0.0
        %4102 = vmatpush1.xpose.msra.mxu0 0.0
        %4103 = vmatprep.subr.mxu0 0.0
        %4104 = vmatpush1.xpose.msra.mxu0 0.0
        %4105 = vmatprep.subr.mxu0 0.0
        %4106 = vmatpush1.xpose.msra.mxu0 0.0
        %4107 = vmatprep.subr.mxu0 0.0
        %4108 = vmatpush1.xpose.msra.mxu0 0.0
        %4109 = vmatprep.subr.mxu0 0.0
        %4110 = vmatpush1.xpose.msra.mxu0 0.0
        %4111 = vmatprep.subr.mxu0 0.0
        %4112 = vmatpush1.xpose.msra.mxu0 0.0
        %4113 = vmatprep.subr.mxu0 0.0
        %4114 = vmatpush1.xpose.msra.mxu0 0.0
        %4115 = vmatprep.subr.mxu0 0.0
        %4116 = vmatpush1.xpose.msra.mxu0 0.0
        %4117 = vmatprep.subr.mxu0 0.0
        %4118 = vmatpush1.xpose.msra.mxu0 0.0
        %4119 = vmatprep.subr.mxu0 0.0
        %4120 = vmatpush1.xpose.msra.mxu0 0.0
        %4121 = vmatprep.subr.mxu0 0.0
        %4122 = vmatpush1.xpose.msra.mxu0 0.0
        %4123 = vmatprep.subr.mxu0 0.0
        %4124 = vmatpush1.xpose.msra.mxu0 0.0
        %4125 = vmatprep.subr.mxu0 0.0
        %4126 = vmatpush1.xpose.msra.mxu0 %v4093
        %4127 = vmatprep.subr.mxu0 0.0
        %4128 = vmatpush2.xpose.msra.mxu0 0.0
        %4129 = vmatprep.subr.mxu0 0.0
        %4130 = vmatpush2.xpose.msra.mxu0 0.0
        %4131 = vmatprep.subr.mxu0 0.0
        %4132 = vmatpush2.xpose.msra.mxu0 0.0
        %4133 = vmatprep.subr.mxu0 0.0
        %4134 = vmatpush2.xpose.msra.mxu0 0.0
        %4135 = vmatprep.subr.mxu0 0.0
        %4136 = vmatpush2.xpose.msra.mxu0 0.0
        %4137 = vmatprep.subr.mxu0 0.0
        %4138 = vmatpush2.xpose.msra.mxu0 0.0
        %4139 = vmatprep.subr.mxu0 0.0
        %4140 = vmatpush2.xpose.msra.mxu0 0.0
        %4141 = vmatprep.subr.mxu0 0.0
        %4142 = vmatpush2.xpose.msra.mxu0 0.0
        %4143 = vmatprep.subr.mxu0 0.0
        %4144 = vmatpush2.xpose.msra.mxu0 0.0
        %4145 = vmatprep.subr.mxu0 0.0
        %4146 = vmatpush2.xpose.msra.mxu0 0.0
        %4147 = vmatprep.subr.mxu0 0.0
        %4148 = vmatpush2.xpose.msra.mxu0 0.0
        %4149 = vmatprep.subr.mxu0 0.0
        %4150 = vmatpush2.xpose.msra.mxu0 0.0
        %4151 = vmatprep.subr.mxu0 0.0
        %4152 = vmatpush2.xpose.msra.mxu0 0.0
        %4153 = vmatprep.subr.mxu0 0.0
        %4154 = vmatpush2.xpose.msra.mxu0 0.0
        %4155 = vmatprep.subr.mxu0 0.0
        %4156 = vmatpush2.xpose.msra.mxu0 0.0
        %4157 = vmatprep.subr.mxu0 0.0
        %4158 = vmatpush2.xpose.msra.mxu0 0.0
        %4159 = vmatprep.mubr.f32.mxu0 0.0
        %4160 = vmatmul.mubr.f32.gmra.mxu0 %v4091
        %v4161 = vpop.f32.mrf.mxu0
        %v4162 = vadd.f32 0.0, %v4161
        %v4163 = vpop.f32.mrf.mxu0
        %4164 = vdwg.mxu0
        %v4165 = vsel %vm883, %v3616, -inf
        %4166 = vmax.xlane.f32.xlu0 %v4165
        %v4167 = vpop.xlane.xlu0 %4166
        %v4168 = vsel %vm883, %v3694, -inf
        %4169 = vmax.xlane.f32.xlu0 %v4168
        %v4170 = vpop.xlane.xlu0 %4169
        %v4171 = vsel %vm883, %v3772, -inf
        %4172 = vmax.xlane.f32.xlu0 %v4171
        %v4173 = vpop.xlane.xlu0 %4172
        %v4174 = vsel %vm883, %v3850, -inf
        %4175 = vmax.xlane.f32.xlu0 %v4174
        %v4176 = vpop.xlane.xlu0 %4175
        %v4177 = vsel %vm883, %v3928, -inf
        %4178 = vmax.xlane.f32.xlu0 %v4177
        %v4179 = vpop.xlane.xlu0 %4178
        %v4180 = vsel %vm883, %v4006, -inf
        %4181 = vmax.xlane.f32.xlu0 %v4180
        %v4182 = vpop.xlane.xlu0 %4181
        %v4183 = vsel %vm883, %v4084, -inf
        %4184 = vmax.xlane.f32.xlu0 %v4183
        %v4185 = vpop.xlane.xlu0 %4184
        %v4186 = vsel %vm883, %v4162, -inf
        %4187 = vmax.xlane.f32.xlu0 %v4186
        %v4188 = vpop.xlane.xlu0 %4187
        %v4189 = vsub.f32 %v3616, %v4167
        %v4190 = vsub.f32 %v3694, %v4170
        %v4191 = vsub.f32 %v3772, %v4173
        %v4192 = vsub.f32 %v3850, %v4176
        %v4193 = vsub.f32 %v3928, %v4179
        %v4194 = vsub.f32 %v4006, %v4182
        %v4195 = vsub.f32 %v4084, %v4185
        %v4196 = vsub.f32 %v4162, %v4188
        %v4197 = vmul.f32 %v4189, 1.442695
        %v4198 = vpow.pop %v4197
        %v4199 = vmul.f32 %v4190, 1.442695
        %v4200 = vpow.pop %v4199
        %v4201 = vmul.f32 %v4191, 1.442695
        %v4202 = vpow.pop %v4201
        %v4203 = vmul.f32 %v4192, 1.442695
        %v4204 = vpow.pop %v4203
        %v4205 = vmul.f32 %v4193, 1.442695
        %v4206 = vpow.pop %v4205
        %v4207 = vmul.f32 %v4194, 1.442695
        %v4208 = vpow.pop %v4207
        %v4209 = vmul.f32 %v4195, 1.442695
        %v4210 = vpow.pop %v4209
        %v4211 = vmul.f32 %v4196, 1.442695
        %v4212 = vpow.pop %v4211
        %v4213 = vsel %vm883, %v4198, 0.0
        %4214 = vadd.xlane.f32.xlu0 %v4213
        %v4215 = vpop.xlane.xlu0 %4214
        %v4216 = vsel %vm883, %v4200, 0.0
        %4217 = vadd.xlane.f32.xlu0 %v4216
        %v4218 = vpop.xlane.xlu0 %4217
        %v4219 = vsel %vm883, %v4202, 0.0
        %4220 = vadd.xlane.f32.xlu0 %v4219
        %v4221 = vpop.xlane.xlu0 %4220
        %v4222 = vsel %vm883, %v4204, 0.0
        %4223 = vadd.xlane.f32.xlu0 %v4222
        %v4224 = vpop.xlane.xlu0 %4223
        %v4225 = vsel %vm883, %v4206, 0.0
        %4226 = vadd.xlane.f32.xlu0 %v4225
        %v4227 = vpop.xlane.xlu0 %4226
        %v4228 = vsel %vm883, %v4208, 0.0
        %4229 = vadd.xlane.f32.xlu0 %v4228
        %v4230 = vpop.xlane.xlu0 %4229
        %v4231 = vsel %vm883, %v4210, 0.0
        %4232 = vadd.xlane.f32.xlu0 %v4231
        %v4233 = vpop.xlane.xlu0 %4232
        %v4234 = vsel %vm883, %v4212, 0.0
        %4235 = vadd.xlane.f32.xlu0 %v4234
        %v4236 = vpop.xlane.xlu0 %4235
        %v4237 = vrcp.pop %v4215
        %v4238 = vrcp.pop %v4218
        %v4239 = vrcp.pop %v4221
        %v4240 = vrcp.pop %v4224
        %v4241 = vrcp.pop %v4227
        %v4242 = vrcp.pop %v4230
        %v4243 = vrcp.pop %v4233
        %v4244 = vrcp.pop %v4236
        %v4245 = vmul.f32 %v4198, %v4237
        %v4246 = vmul.f32 %v4200, %v4238
        %v4247 = vmul.f32 %v4202, %v4239
        %v4248 = vmul.f32 %v4204, %v4240
        %v4249 = vmul.f32 %v4206, %v4241
        %v4250 = vmul.f32 %v4208, %v4242
        %v4251 = vmul.f32 %v4210, %v4243
        %v4252 = vmul.f32 %v4212, %v4244
        %4253 = vrot.lane.b32.xlu0 %v845, 112
        %v4254 = vpop.permute.xlu0 %4253
        %v4257 = vsel %vm883, %v4245, 0
        %4259 = vmatprep.subr.mxu0 0.0
        %4260 = vmatpush1.msra.mxu0 0.0
        %4261 = vmatprep.subr.mxu0 0.0
        %4262 = vmatpush1.msra.mxu0 0.0
        %4263 = vmatprep.subr.mxu0 0.0
        %4264 = vmatpush1.msra.mxu0 0.0
        %4265 = vmatprep.subr.mxu0 0.0
        %4266 = vmatpush1.msra.mxu0 0.0
        %4267 = vmatprep.subr.mxu0 0.0
        %4268 = vmatpush1.msra.mxu0 0.0
        %4269 = vmatprep.subr.mxu0 0.0
        %4270 = vmatpush1.msra.mxu0 0.0
        %4271 = vmatprep.subr.mxu0 0.0
        %4272 = vmatpush1.msra.mxu0 0.0
        %4273 = vmatprep.subr.mxu0 0.0
        %4274 = vmatpush1.msra.mxu0 0.0
        %4275 = vmatprep.subr.mxu0 0.0
        %4276 = vmatpush1.msra.mxu0 0.0
        %4277 = vmatprep.subr.mxu0 0.0
        %4278 = vmatpush1.msra.mxu0 0.0
        %4279 = vmatprep.subr.mxu0 0.0
        %4280 = vmatpush1.msra.mxu0 0.0
        %4281 = vmatprep.subr.mxu0 0.0
        %4282 = vmatpush1.msra.mxu0 0.0
        %4283 = vmatprep.subr.mxu0 0.0
        %4284 = vmatpush1.msra.mxu0 0.0
        %4285 = vmatprep.subr.mxu0 0.0
        %4286 = vmatpush1.msra.mxu0 0.0
        %4287 = vmatprep.subr.mxu0 0.0
        %4288 = vmatpush1.msra.mxu0 0.0
        %4289 = vmatprep.subr.mxu0 0.0
        %4290 = vmatpush1.msra.mxu0 %v4254
        %4291 = vmatprep.subr.mxu0 0.0
        %4292 = vmatpush2.msra.mxu0 0.0
        %4293 = vmatprep.subr.mxu0 0.0
        %4294 = vmatpush2.msra.mxu0 0.0
        %4295 = vmatprep.subr.mxu0 0.0
        %4296 = vmatpush2.msra.mxu0 0.0
        %4297 = vmatprep.subr.mxu0 0.0
        %4298 = vmatpush2.msra.mxu0 0.0
        %4299 = vmatprep.subr.mxu0 0.0
        %4300 = vmatpush2.msra.mxu0 0.0
        %4301 = vmatprep.subr.mxu0 0.0
        %4302 = vmatpush2.msra.mxu0 0.0
        %4303 = vmatprep.subr.mxu0 0.0
        %4304 = vmatpush2.msra.mxu0 0.0
        %4305 = vmatprep.subr.mxu0 0.0
        %4306 = vmatpush2.msra.mxu0 0.0
        %4307 = vmatprep.subr.mxu0 0.0
        %4308 = vmatpush2.msra.mxu0 0.0
        %4309 = vmatprep.subr.mxu0 0.0
        %4310 = vmatpush2.msra.mxu0 0.0
        %4311 = vmatprep.subr.mxu0 0.0
        %4312 = vmatpush2.msra.mxu0 0.0
        %4313 = vmatprep.subr.mxu0 0.0
        %4314 = vmatpush2.msra.mxu0 0.0
        %4315 = vmatprep.subr.mxu0 0.0
        %4316 = vmatpush2.msra.mxu0 0.0
        %4317 = vmatprep.subr.mxu0 0.0
        %4318 = vmatpush2.msra.mxu0 0.0
        %4319 = vmatprep.subr.mxu0 0.0
        %4320 = vmatpush2.msra.mxu0 0.0
        %4321 = vmatprep.subr.mxu0 0.0
        %4322 = vmatpush2.msra.mxu0 0.0
        %4323 = vmatprep.mubr.f32.mxu0 0.0
        %4324 = vmatmul.mubr.f32.gmra.mxu0 %v4257
        %v4325 = vpop.f32.mrf.mxu0
        %v4326 = vadd.f32 0.0, %v4325
        %v4327 = vpop.f32.mrf.mxu0
        %4328 = vdwg.mxu0
        %4329 = vrot.lane.b32.xlu0 %v850, 112
        %v4330 = vpop.permute.xlu0 %4329
        %v4333 = vsel %vm883, %v4246, 0
        %4335 = vmatprep.subr.mxu0 0.0
        %4336 = vmatpush1.msra.mxu0 0.0
        %4337 = vmatprep.subr.mxu0 0.0
        %4338 = vmatpush1.msra.mxu0 0.0
        %4339 = vmatprep.subr.mxu0 0.0
        %4340 = vmatpush1.msra.mxu0 0.0
        %4341 = vmatprep.subr.mxu0 0.0
        %4342 = vmatpush1.msra.mxu0 0.0
        %4343 = vmatprep.subr.mxu0 0.0
        %4344 = vmatpush1.msra.mxu0 0.0
        %4345 = vmatprep.subr.mxu0 0.0
        %4346 = vmatpush1.msra.mxu0 0.0
        %4347 = vmatprep.subr.mxu0 0.0
        %4348 = vmatpush1.msra.mxu0 0.0
        %4349 = vmatprep.subr.mxu0 0.0
        %4350 = vmatpush1.msra.mxu0 0.0
        %4351 = vmatprep.subr.mxu0 0.0
        %4352 = vmatpush1.msra.mxu0 0.0
        %4353 = vmatprep.subr.mxu0 0.0
        %4354 = vmatpush1.msra.mxu0 0.0
        %4355 = vmatprep.subr.mxu0 0.0
        %4356 = vmatpush1.msra.mxu0 0.0
        %4357 = vmatprep.subr.mxu0 0.0
        %4358 = vmatpush1.msra.mxu0 0.0
        %4359 = vmatprep.subr.mxu0 0.0
        %4360 = vmatpush1.msra.mxu0 0.0
        %4361 = vmatprep.subr.mxu0 0.0
        %4362 = vmatpush1.msra.mxu0 0.0
        %4363 = vmatprep.subr.mxu0 0.0
        %4364 = vmatpush1.msra.mxu0 0.0
        %4365 = vmatprep.subr.mxu0 0.0
        %4366 = vmatpush1.msra.mxu0 %v4330
        %4367 = vmatprep.subr.mxu0 0.0
        %4368 = vmatpush2.msra.mxu0 0.0
        %4369 = vmatprep.subr.mxu0 0.0
        %4370 = vmatpush2.msra.mxu0 0.0
        %4371 = vmatprep.subr.mxu0 0.0
        %4372 = vmatpush2.msra.mxu0 0.0
        %4373 = vmatprep.subr.mxu0 0.0
        %4374 = vmatpush2.msra.mxu0 0.0
        %4375 = vmatprep.subr.mxu0 0.0
        %4376 = vmatpush2.msra.mxu0 0.0
        %4377 = vmatprep.subr.mxu0 0.0
        %4378 = vmatpush2.msra.mxu0 0.0
        %4379 = vmatprep.subr.mxu0 0.0
        %4380 = vmatpush2.msra.mxu0 0.0
        %4381 = vmatprep.subr.mxu0 0.0
        %4382 = vmatpush2.msra.mxu0 0.0
        %4383 = vmatprep.subr.mxu0 0.0
        %4384 = vmatpush2.msra.mxu0 0.0
        %4385 = vmatprep.subr.mxu0 0.0
        %4386 = vmatpush2.msra.mxu0 0.0
        %4387 = vmatprep.subr.mxu0 0.0
        %4388 = vmatpush2.msra.mxu0 0.0
        %4389 = vmatprep.subr.mxu0 0.0
        %4390 = vmatpush2.msra.mxu0 0.0
        %4391 = vmatprep.subr.mxu0 0.0
        %4392 = vmatpush2.msra.mxu0 0.0
        %4393 = vmatprep.subr.mxu0 0.0
        %4394 = vmatpush2.msra.mxu0 0.0
        %4395 = vmatprep.subr.mxu0 0.0
        %4396 = vmatpush2.msra.mxu0 0.0
        %4397 = vmatprep.subr.mxu0 0.0
        %4398 = vmatpush2.msra.mxu0 0.0
        %4399 = vmatprep.mubr.f32.mxu0 0.0
        %4400 = vmatmul.mubr.f32.gmra.mxu0 %v4333
        %v4401 = vpop.f32.mrf.mxu0
        %v4402 = vadd.f32 0.0, %v4401
        %v4403 = vpop.f32.mrf.mxu0
        %4404 = vdwg.mxu0
        %4405 = vrot.lane.b32.xlu0 %v855, 112
        %v4406 = vpop.permute.xlu0 %4405
        %v4409 = vsel %vm883, %v4247, 0
        %4411 = vmatprep.subr.mxu0 0.0
        %4412 = vmatpush1.msra.mxu0 0.0
        %4413 = vmatprep.subr.mxu0 0.0
        %4414 = vmatpush1.msra.mxu0 0.0
        %4415 = vmatprep.subr.mxu0 0.0
        %4416 = vmatpush1.msra.mxu0 0.0
        %4417 = vmatprep.subr.mxu0 0.0
        %4418 = vmatpush1.msra.mxu0 0.0
        %4419 = vmatprep.subr.mxu0 0.0
        %4420 = vmatpush1.msra.mxu0 0.0
        %4421 = vmatprep.subr.mxu0 0.0
        %4422 = vmatpush1.msra.mxu0 0.0
        %4423 = vmatprep.subr.mxu0 0.0
        %4424 = vmatpush1.msra.mxu0 0.0
        %4425 = vmatprep.subr.mxu0 0.0
        %4426 = vmatpush1.msra.mxu0 0.0
        %4427 = vmatprep.subr.mxu0 0.0
        %4428 = vmatpush1.msra.mxu0 0.0
        %4429 = vmatprep.subr.mxu0 0.0
        %4430 = vmatpush1.msra.mxu0 0.0
        %4431 = vmatprep.subr.mxu0 0.0
        %4432 = vmatpush1.msra.mxu0 0.0
        %4433 = vmatprep.subr.mxu0 0.0
        %4434 = vmatpush1.msra.mxu0 0.0
        %4435 = vmatprep.subr.mxu0 0.0
        %4436 = vmatpush1.msra.mxu0 0.0
        %4437 = vmatprep.subr.mxu0 0.0
        %4438 = vmatpush1.msra.mxu0 0.0
        %4439 = vmatprep.subr.mxu0 0.0
        %4440 = vmatpush1.msra.mxu0 0.0
        %4441 = vmatprep.subr.mxu0 0.0
        %4442 = vmatpush1.msra.mxu0 %v4406
        %4443 = vmatprep.subr.mxu0 0.0
        %4444 = vmatpush2.msra.mxu0 0.0
        %4445 = vmatprep.subr.mxu0 0.0
        %4446 = vmatpush2.msra.mxu0 0.0
        %4447 = vmatprep.subr.mxu0 0.0
        %4448 = vmatpush2.msra.mxu0 0.0
        %4449 = vmatprep.subr.mxu0 0.0
        %4450 = vmatpush2.msra.mxu0 0.0
        %4451 = vmatprep.subr.mxu0 0.0
        %4452 = vmatpush2.msra.mxu0 0.0
        %4453 = vmatprep.subr.mxu0 0.0
        %4454 = vmatpush2.msra.mxu0 0.0
        %4455 = vmatprep.subr.mxu0 0.0
        %4456 = vmatpush2.msra.mxu0 0.0
        %4457 = vmatprep.subr.mxu0 0.0
        %4458 = vmatpush2.msra.mxu0 0.0
        %4459 = vmatprep.subr.mxu0 0.0
        %4460 = vmatpush2.msra.mxu0 0.0
        %4461 = vmatprep.subr.mxu0 0.0
        %4462 = vmatpush2.msra.mxu0 0.0
        %4463 = vmatprep.subr.mxu0 0.0
        %4464 = vmatpush2.msra.mxu0 0.0
        %4465 = vmatprep.subr.mxu0 0.0
        %4466 = vmatpush2.msra.mxu0 0.0
        %4467 = vmatprep.subr.mxu0 0.0
        %4468 = vmatpush2.msra.mxu0 0.0
        %4469 = vmatprep.subr.mxu0 0.0
        %4470 = vmatpush2.msra.mxu0 0.0
        %4471 = vmatprep.subr.mxu0 0.0
        %4472 = vmatpush2.msra.mxu0 0.0
        %4473 = vmatprep.subr.mxu0 0.0
        %4474 = vmatpush2.msra.mxu0 0.0
        %4475 = vmatprep.mubr.f32.mxu0 0.0
        %4476 = vmatmul.mubr.f32.gmra.mxu0 %v4409
        %v4477 = vpop.f32.mrf.mxu0
        %v4478 = vadd.f32 0.0, %v4477
        %v4479 = vpop.f32.mrf.mxu0
        %4480 = vdwg.mxu0
        %4481 = vrot.lane.b32.xlu0 %v860, 112
        %v4482 = vpop.permute.xlu0 %4481
        %v4485 = vsel %vm883, %v4248, 0
        %4487 = vmatprep.subr.mxu0 0.0
        %4488 = vmatpush1.msra.mxu0 0.0
        %4489 = vmatprep.subr.mxu0 0.0
        %4490 = vmatpush1.msra.mxu0 0.0
        %4491 = vmatprep.subr.mxu0 0.0
        %4492 = vmatpush1.msra.mxu0 0.0
        %4493 = vmatprep.subr.mxu0 0.0
        %4494 = vmatpush1.msra.mxu0 0.0
        %4495 = vmatprep.subr.mxu0 0.0
        %4496 = vmatpush1.msra.mxu0 0.0
        %4497 = vmatprep.subr.mxu0 0.0
        %4498 = vmatpush1.msra.mxu0 0.0
        %4499 = vmatprep.subr.mxu0 0.0
        %4500 = vmatpush1.msra.mxu0 0.0
        %4501 = vmatprep.subr.mxu0 0.0
        %4502 = vmatpush1.msra.mxu0 0.0
        %4503 = vmatprep.subr.mxu0 0.0
        %4504 = vmatpush1.msra.mxu0 0.0
        %4505 = vmatprep.subr.mxu0 0.0
        %4506 = vmatpush1.msra.mxu0 0.0
        %4507 = vmatprep.subr.mxu0 0.0
        %4508 = vmatpush1.msra.mxu0 0.0
        %4509 = vmatprep.subr.mxu0 0.0
        %4510 = vmatpush1.msra.mxu0 0.0
        %4511 = vmatprep.subr.mxu0 0.0
        %4512 = vmatpush1.msra.mxu0 0.0
        %4513 = vmatprep.subr.mxu0 0.0
        %4514 = vmatpush1.msra.mxu0 0.0
        %4515 = vmatprep.subr.mxu0 0.0
        %4516 = vmatpush1.msra.mxu0 0.0
        %4517 = vmatprep.subr.mxu0 0.0
        %4518 = vmatpush1.msra.mxu0 %v4482
        %4519 = vmatprep.subr.mxu0 0.0
        %4520 = vmatpush2.msra.mxu0 0.0
        %4521 = vmatprep.subr.mxu0 0.0
        %4522 = vmatpush2.msra.mxu0 0.0
        %4523 = vmatprep.subr.mxu0 0.0
        %4524 = vmatpush2.msra.mxu0 0.0
        %4525 = vmatprep.subr.mxu0 0.0
        %4526 = vmatpush2.msra.mxu0 0.0
        %4527 = vmatprep.subr.mxu0 0.0
        %4528 = vmatpush2.msra.mxu0 0.0
        %4529 = vmatprep.subr.mxu0 0.0
        %4530 = vmatpush2.msra.mxu0 0.0
        %4531 = vmatprep.subr.mxu0 0.0
        %4532 = vmatpush2.msra.mxu0 0.0
        %4533 = vmatprep.subr.mxu0 0.0
        %4534 = vmatpush2.msra.mxu0 0.0
        %4535 = vmatprep.subr.mxu0 0.0
        %4536 = vmatpush2.msra.mxu0 0.0
        %4537 = vmatprep.subr.mxu0 0.0
        %4538 = vmatpush2.msra.mxu0 0.0
        %4539 = vmatprep.subr.mxu0 0.0
        %4540 = vmatpush2.msra.mxu0 0.0
        %4541 = vmatprep.subr.mxu0 0.0
        %4542 = vmatpush2.msra.mxu0 0.0
        %4543 = vmatprep.subr.mxu0 0.0
        %4544 = vmatpush2.msra.mxu0 0.0
        %4545 = vmatprep.subr.mxu0 0.0
        %4546 = vmatpush2.msra.mxu0 0.0
        %4547 = vmatprep.subr.mxu0 0.0
        %4548 = vmatpush2.msra.mxu0 0.0
        %4549 = vmatprep.subr.mxu0 0.0
        %4550 = vmatpush2.msra.mxu0 0.0
        %4551 = vmatprep.mubr.f32.mxu0 0.0
        %4552 = vmatmul.mubr.f32.gmra.mxu0 %v4485
        %v4553 = vpop.f32.mrf.mxu0
        %v4554 = vadd.f32 0.0, %v4553
        %v4555 = vpop.f32.mrf.mxu0
        %4556 = vdwg.mxu0
        %4557 = vrot.lane.b32.xlu0 %v865, 112
        %v4558 = vpop.permute.xlu0 %4557
        %v4561 = vsel %vm883, %v4249, 0
        %4563 = vmatprep.subr.mxu0 0.0
        %4564 = vmatpush1.msra.mxu0 0.0
        %4565 = vmatprep.subr.mxu0 0.0
        %4566 = vmatpush1.msra.mxu0 0.0
        %4567 = vmatprep.subr.mxu0 0.0
        %4568 = vmatpush1.msra.mxu0 0.0
        %4569 = vmatprep.subr.mxu0 0.0
        %4570 = vmatpush1.msra.mxu0 0.0
        %4571 = vmatprep.subr.mxu0 0.0
        %4572 = vmatpush1.msra.mxu0 0.0
        %4573 = vmatprep.subr.mxu0 0.0
        %4574 = vmatpush1.msra.mxu0 0.0
        %4575 = vmatprep.subr.mxu0 0.0
        %4576 = vmatpush1.msra.mxu0 0.0
        %4577 = vmatprep.subr.mxu0 0.0
        %4578 = vmatpush1.msra.mxu0 0.0
        %4579 = vmatprep.subr.mxu0 0.0
        %4580 = vmatpush1.msra.mxu0 0.0
        %4581 = vmatprep.subr.mxu0 0.0
        %4582 = vmatpush1.msra.mxu0 0.0
        %4583 = vmatprep.subr.mxu0 0.0
        %4584 = vmatpush1.msra.mxu0 0.0
        %4585 = vmatprep.subr.mxu0 0.0
        %4586 = vmatpush1.msra.mxu0 0.0
        %4587 = vmatprep.subr.mxu0 0.0
        %4588 = vmatpush1.msra.mxu0 0.0
        %4589 = vmatprep.subr.mxu0 0.0
        %4590 = vmatpush1.msra.mxu0 0.0
        %4591 = vmatprep.subr.mxu0 0.0
        %4592 = vmatpush1.msra.mxu0 0.0
        %4593 = vmatprep.subr.mxu0 0.0
        %4594 = vmatpush1.msra.mxu0 %v4558
        %4595 = vmatprep.subr.mxu0 0.0
        %4596 = vmatpush2.msra.mxu0 0.0
        %4597 = vmatprep.subr.mxu0 0.0
        %4598 = vmatpush2.msra.mxu0 0.0
        %4599 = vmatprep.subr.mxu0 0.0
        %4600 = vmatpush2.msra.mxu0 0.0
        %4601 = vmatprep.subr.mxu0 0.0
        %4602 = vmatpush2.msra.mxu0 0.0
        %4603 = vmatprep.subr.mxu0 0.0
        %4604 = vmatpush2.msra.mxu0 0.0
        %4605 = vmatprep.subr.mxu0 0.0
        %4606 = vmatpush2.msra.mxu0 0.0
        %4607 = vmatprep.subr.mxu0 0.0
        %4608 = vmatpush2.msra.mxu0 0.0
        %4609 = vmatprep.subr.mxu0 0.0
        %4610 = vmatpush2.msra.mxu0 0.0
        %4611 = vmatprep.subr.mxu0 0.0
        %4612 = vmatpush2.msra.mxu0 0.0
        %4613 = vmatprep.subr.mxu0 0.0
        %4614 = vmatpush2.msra.mxu0 0.0
        %4615 = vmatprep.subr.mxu0 0.0
        %4616 = vmatpush2.msra.mxu0 0.0
        %4617 = vmatprep.subr.mxu0 0.0
        %4618 = vmatpush2.msra.mxu0 0.0
        %4619 = vmatprep.subr.mxu0 0.0
        %4620 = vmatpush2.msra.mxu0 0.0
        %4621 = vmatprep.subr.mxu0 0.0
        %4622 = vmatpush2.msra.mxu0 0.0
        %4623 = vmatprep.subr.mxu0 0.0
        %4624 = vmatpush2.msra.mxu0 0.0
        %4625 = vmatprep.subr.mxu0 0.0
        %4626 = vmatpush2.msra.mxu0 0.0
        %4627 = vmatprep.mubr.f32.mxu0 0.0
        %4628 = vmatmul.mubr.f32.gmra.mxu0 %v4561
        %v4629 = vpop.f32.mrf.mxu0
        %v4630 = vadd.f32 0.0, %v4629
        %v4631 = vpop.f32.mrf.mxu0
        %4632 = vdwg.mxu0
        %4633 = vrot.lane.b32.xlu0 %v870, 112
        %v4634 = vpop.permute.xlu0 %4633
        %v4637 = vsel %vm883, %v4250, 0
        %4639 = vmatprep.subr.mxu0 0.0
        %4640 = vmatpush1.msra.mxu0 0.0
        %4641 = vmatprep.subr.mxu0 0.0
        %4642 = vmatpush1.msra.mxu0 0.0
        %4643 = vmatprep.subr.mxu0 0.0
        %4644 = vmatpush1.msra.mxu0 0.0
        %4645 = vmatprep.subr.mxu0 0.0
        %4646 = vmatpush1.msra.mxu0 0.0
        %4647 = vmatprep.subr.mxu0 0.0
        %4648 = vmatpush1.msra.mxu0 0.0
        %4649 = vmatprep.subr.mxu0 0.0
        %4650 = vmatpush1.msra.mxu0 0.0
        %4651 = vmatprep.subr.mxu0 0.0
        %4652 = vmatpush1.msra.mxu0 0.0
        %4653 = vmatprep.subr.mxu0 0.0
        %4654 = vmatpush1.msra.mxu0 0.0
        %4655 = vmatprep.subr.mxu0 0.0
        %4656 = vmatpush1.msra.mxu0 0.0
        %4657 = vmatprep.subr.mxu0 0.0
        %4658 = vmatpush1.msra.mxu0 0.0
        %4659 = vmatprep.subr.mxu0 0.0
        %4660 = vmatpush1.msra.mxu0 0.0
        %4661 = vmatprep.subr.mxu0 0.0
        %4662 = vmatpush1.msra.mxu0 0.0
        %4663 = vmatprep.subr.mxu0 0.0
        %4664 = vmatpush1.msra.mxu0 0.0
        %4665 = vmatprep.subr.mxu0 0.0
        %4666 = vmatpush1.msra.mxu0 0.0
        %4667 = vmatprep.subr.mxu0 0.0
        %4668 = vmatpush1.msra.mxu0 0.0
        %4669 = vmatprep.subr.mxu0 0.0
        %4670 = vmatpush1.msra.mxu0 %v4634
        %4671 = vmatprep.subr.mxu0 0.0
        %4672 = vmatpush2.msra.mxu0 0.0
        %4673 = vmatprep.subr.mxu0 0.0
        %4674 = vmatpush2.msra.mxu0 0.0
        %4675 = vmatprep.subr.mxu0 0.0
        %4676 = vmatpush2.msra.mxu0 0.0
        %4677 = vmatprep.subr.mxu0 0.0
        %4678 = vmatpush2.msra.mxu0 0.0
        %4679 = vmatprep.subr.mxu0 0.0
        %4680 = vmatpush2.msra.mxu0 0.0
        %4681 = vmatprep.subr.mxu0 0.0
        %4682 = vmatpush2.msra.mxu0 0.0
        %4683 = vmatprep.subr.mxu0 0.0
        %4684 = vmatpush2.msra.mxu0 0.0
        %4685 = vmatprep.subr.mxu0 0.0
        %4686 = vmatpush2.msra.mxu0 0.0
        %4687 = vmatprep.subr.mxu0 0.0
        %4688 = vmatpush2.msra.mxu0 0.0
        %4689 = vmatprep.subr.mxu0 0.0
        %4690 = vmatpush2.msra.mxu0 0.0
        %4691 = vmatprep.subr.mxu0 0.0
        %4692 = vmatpush2.msra.mxu0 0.0
        %4693 = vmatprep.subr.mxu0 0.0
        %4694 = vmatpush2.msra.mxu0 0.0
        %4695 = vmatprep.subr.mxu0 0.0
        %4696 = vmatpush2.msra.mxu0 0.0
        %4697 = vmatprep.subr.mxu0 0.0
        %4698 = vmatpush2.msra.mxu0 0.0
        %4699 = vmatprep.subr.mxu0 0.0
        %4700 = vmatpush2.msra.mxu0 0.0
        %4701 = vmatprep.subr.mxu0 0.0
        %4702 = vmatpush2.msra.mxu0 0.0
        %4703 = vmatprep.mubr.f32.mxu0 0.0
        %4704 = vmatmul.mubr.f32.gmra.mxu0 %v4637
        %v4705 = vpop.f32.mrf.mxu0
        %v4706 = vadd.f32 0.0, %v4705
        %v4707 = vpop.f32.mrf.mxu0
        %4708 = vdwg.mxu0
        %4709 = vrot.lane.b32.xlu0 %v875, 112
        %v4710 = vpop.permute.xlu0 %4709
        %v4713 = vsel %vm883, %v4251, 0
        %4715 = vmatprep.subr.mxu0 0.0
        %4716 = vmatpush1.msra.mxu0 0.0
        %4717 = vmatprep.subr.mxu0 0.0
        %4718 = vmatpush1.msra.mxu0 0.0
        %4719 = vmatprep.subr.mxu0 0.0
        %4720 = vmatpush1.msra.mxu0 0.0
        %4721 = vmatprep.subr.mxu0 0.0
        %4722 = vmatpush1.msra.mxu0 0.0
        %4723 = vmatprep.subr.mxu0 0.0
        %4724 = vmatpush1.msra.mxu0 0.0
        %4725 = vmatprep.subr.mxu0 0.0
        %4726 = vmatpush1.msra.mxu0 0.0
        %4727 = vmatprep.subr.mxu0 0.0
        %4728 = vmatpush1.msra.mxu0 0.0
        %4729 = vmatprep.subr.mxu0 0.0
        %4730 = vmatpush1.msra.mxu0 0.0
        %4731 = vmatprep.subr.mxu0 0.0
        %4732 = vmatpush1.msra.mxu0 0.0
        %4733 = vmatprep.subr.mxu0 0.0
        %4734 = vmatpush1.msra.mxu0 0.0
        %4735 = vmatprep.subr.mxu0 0.0
        %4736 = vmatpush1.msra.mxu0 0.0
        %4737 = vmatprep.subr.mxu0 0.0
        %4738 = vmatpush1.msra.mxu0 0.0
        %4739 = vmatprep.subr.mxu0 0.0
        %4740 = vmatpush1.msra.mxu0 0.0
        %4741 = vmatprep.subr.mxu0 0.0
        %4742 = vmatpush1.msra.mxu0 0.0
        %4743 = vmatprep.subr.mxu0 0.0
        %4744 = vmatpush1.msra.mxu0 0.0
        %4745 = vmatprep.subr.mxu0 0.0
        %4746 = vmatpush1.msra.mxu0 %v4710
        %4747 = vmatprep.subr.mxu0 0.0
        %4748 = vmatpush2.msra.mxu0 0.0
        %4749 = vmatprep.subr.mxu0 0.0
        %4750 = vmatpush2.msra.mxu0 0.0
        %4751 = vmatprep.subr.mxu0 0.0
        %4752 = vmatpush2.msra.mxu0 0.0
        %4753 = vmatprep.subr.mxu0 0.0
        %4754 = vmatpush2.msra.mxu0 0.0
        %4755 = vmatprep.subr.mxu0 0.0
        %4756 = vmatpush2.msra.mxu0 0.0
        %4757 = vmatprep.subr.mxu0 0.0
        %4758 = vmatpush2.msra.mxu0 0.0
        %4759 = vmatprep.subr.mxu0 0.0
        %4760 = vmatpush2.msra.mxu0 0.0
        %4761 = vmatprep.subr.mxu0 0.0
        %4762 = vmatpush2.msra.mxu0 0.0
        %4763 = vmatprep.subr.mxu0 0.0
        %4764 = vmatpush2.msra.mxu0 0.0
        %4765 = vmatprep.subr.mxu0 0.0
        %4766 = vmatpush2.msra.mxu0 0.0
        %4767 = vmatprep.subr.mxu0 0.0
        %4768 = vmatpush2.msra.mxu0 0.0
        %4769 = vmatprep.subr.mxu0 0.0
        %4770 = vmatpush2.msra.mxu0 0.0
        %4771 = vmatprep.subr.mxu0 0.0
        %4772 = vmatpush2.msra.mxu0 0.0
        %4773 = vmatprep.subr.mxu0 0.0
        %4774 = vmatpush2.msra.mxu0 0.0
        %4775 = vmatprep.subr.mxu0 0.0
        %4776 = vmatpush2.msra.mxu0 0.0
        %4777 = vmatprep.subr.mxu0 0.0
        %4778 = vmatpush2.msra.mxu0 0.0
        %4779 = vmatprep.mubr.f32.mxu0 0.0
        %4780 = vmatmul.mubr.f32.gmra.mxu0 %v4713
        %v4781 = vpop.f32.mrf.mxu0
        %v4782 = vadd.f32 0.0, %v4781
        %v4783 = vpop.f32.mrf.mxu0
        %4784 = vdwg.mxu0
        %4785 = vrot.lane.b32.xlu0 %v880, 112
        %v4786 = vpop.permute.xlu0 %4785
        %v4789 = vsel %vm883, %v4252, 0
        %4791 = vmatprep.subr.mxu0 0.0
        %4792 = vmatpush1.msra.mxu0 0.0
        %4793 = vmatprep.subr.mxu0 0.0
        %4794 = vmatpush1.msra.mxu0 0.0
        %4795 = vmatprep.subr.mxu0 0.0
        %4796 = vmatpush1.msra.mxu0 0.0
        %4797 = vmatprep.subr.mxu0 0.0
        %4798 = vmatpush1.msra.mxu0 0.0
        %4799 = vmatprep.subr.mxu0 0.0
        %4800 = vmatpush1.msra.mxu0 0.0
        %4801 = vmatprep.subr.mxu0 0.0
        %4802 = vmatpush1.msra.mxu0 0.0
        %4803 = vmatprep.subr.mxu0 0.0
        %4804 = vmatpush1.msra.mxu0 0.0
        %4805 = vmatprep.subr.mxu0 0.0
        %4806 = vmatpush1.msra.mxu0 0.0
        %4807 = vmatprep.subr.mxu0 0.0
        %4808 = vmatpush1.msra.mxu0 0.0
        %4809 = vmatprep.subr.mxu0 0.0
        %4810 = vmatpush1.msra.mxu0 0.0
        %4811 = vmatprep.subr.mxu0 0.0
        %4812 = vmatpush1.msra.mxu0 0.0
        %4813 = vmatprep.subr.mxu0 0.0
        %4814 = vmatpush1.msra.mxu0 0.0
        %4815 = vmatprep.subr.mxu0 0.0
        %4816 = vmatpush1.msra.mxu0 0.0
        %4817 = vmatprep.subr.mxu0 0.0
        %4818 = vmatpush1.msra.mxu0 0.0
        %4819 = vmatprep.subr.mxu0 0.0
        %4820 = vmatpush1.msra.mxu0 0.0
        %4821 = vmatprep.subr.mxu0 0.0
        %4822 = vmatpush1.msra.mxu0 %v4786
        %4823 = vmatprep.subr.mxu0 0.0
        %4824 = vmatpush2.msra.mxu0 0.0
        %4825 = vmatprep.subr.mxu0 0.0
        %4826 = vmatpush2.msra.mxu0 0.0
        %4827 = vmatprep.subr.mxu0 0.0
        %4828 = vmatpush2.msra.mxu0 0.0
        %4829 = vmatprep.subr.mxu0 0.0
        %4830 = vmatpush2.msra.mxu0 0.0
        %4831 = vmatprep.subr.mxu0 0.0
        %4832 = vmatpush2.msra.mxu0 0.0
        %4833 = vmatprep.subr.mxu0 0.0
        %4834 = vmatpush2.msra.mxu0 0.0
        %4835 = vmatprep.subr.mxu0 0.0
        %4836 = vmatpush2.msra.mxu0 0.0
        %4837 = vmatprep.subr.mxu0 0.0
        %4838 = vmatpush2.msra.mxu0 0.0
        %4839 = vmatprep.subr.mxu0 0.0
        %4840 = vmatpush2.msra.mxu0 0.0
        %4841 = vmatprep.subr.mxu0 0.0
        %4842 = vmatpush2.msra.mxu0 0.0
        %4843 = vmatprep.subr.mxu0 0.0
        %4844 = vmatpush2.msra.mxu0 0.0
        %4845 = vmatprep.subr.mxu0 0.0
        %4846 = vmatpush2.msra.mxu0 0.0
        %4847 = vmatprep.subr.mxu0 0.0
        %4848 = vmatpush2.msra.mxu0 0.0
        %4849 = vmatprep.subr.mxu0 0.0
        %4850 = vmatpush2.msra.mxu0 0.0
        %4851 = vmatprep.subr.mxu0 0.0
        %4852 = vmatpush2.msra.mxu0 0.0
        %4853 = vmatprep.subr.mxu0 0.0
        %4854 = vmatpush2.msra.mxu0 0.0
        %4855 = vmatprep.mubr.f32.mxu0 0.0
        %4856 = vmatmul.mubr.f32.gmra.mxu0 %v4789
        %v4857 = vpop.f32.mrf.mxu0
        %v4858 = vadd.f32 0.0, %v4857
        %v4859 = vpop.f32.mrf.mxu0
        %4860 = vdwg.mxu0
        %4869 = vrot.lane.b32.xlu0 %v4326, 16
        %v4870 = vpop.permute.xlu0 %4869
        %4871 = vrot.lane.b32.xlu0 %v4402, 16
        %v4872 = vpop.permute.xlu0 %4871
        %4873 = vrot.lane.b32.xlu0 %v4478, 16
        %v4874 = vpop.permute.xlu0 %4873
        %4875 = vrot.lane.b32.xlu0 %v4554, 16
        %v4876 = vpop.permute.xlu0 %4875
        %4877 = vrot.lane.b32.xlu0 %v4630, 16
        %v4878 = vpop.permute.xlu0 %4877
        %4879 = vrot.lane.b32.xlu0 %v4706, 16
        %v4880 = vpop.permute.xlu0 %4879
        %4881 = vrot.lane.b32.xlu0 %v4782, 16
        %v4882 = vpop.permute.xlu0 %4881
        %4883 = vrot.lane.b32.xlu0 %v4858, 16
        %v4884 = vpop.permute.xlu0 %4883
        %vm4893 = vcmask 195712
        %4894 = vst.msk [vmem:[#allocation2] sm:$0xff] %vm4893, %v4870
        %4895 = vst.msk [vmem:[#allocation2 + $0x8] sm:$0xff] %vm4893, %v4872
        %4896 = vst.msk [vmem:[#allocation2 + $0x10] sm:$0xff] %vm4893, %v4874
        %4897 = vst.msk [vmem:[#allocation2 + $0x18] sm:$0xff] %vm4893, %v4876
        %4898 = vst.msk [vmem:[#allocation2 + $0x20] sm:$0xff] %vm4893, %v4878
        %4899 = vst.msk [vmem:[#allocation2 + $0x28] sm:$0xff] %vm4893, %v4880
        %4900 = vst.msk [vmem:[#allocation2 + $0x30] sm:$0xff] %vm4893, %v4882
        %4901 = vst.msk [vmem:[#allocation2 + $0x38] sm:$0xff] %vm4893, %v4884
        %4902 = vrot.lane.b32.xlu0 %v579, 104
        %v4903 = vpop.permute.xlu0 %4902
        %4904 = vrot.lane.b32.xlu0 %v712, 104
        %v4905 = vpop.permute.xlu0 %4904
        %v4906 = vsel %vm883, %v4903, 0
        %v4908 = vsel %vm883, %v4905, 0
        %4910 = vmatprep.subr.mxu0 0.0
        %4911 = vmatpush1.xpose.msra.mxu0 0.0
        %4912 = vmatprep.subr.mxu0 0.0
        %4913 = vmatpush1.xpose.msra.mxu0 0.0
        %4914 = vmatprep.subr.mxu0 0.0
        %4915 = vmatpush1.xpose.msra.mxu0 0.0
        %4916 = vmatprep.subr.mxu0 0.0
        %4917 = vmatpush1.xpose.msra.mxu0 0.0
        %4918 = vmatprep.subr.mxu0 0.0
        %4919 = vmatpush1.xpose.msra.mxu0 0.0
        %4920 = vmatprep.subr.mxu0 0.0
        %4921 = vmatpush1.xpose.msra.mxu0 0.0
        %4922 = vmatprep.subr.mxu0 0.0
        %4923 = vmatpush1.xpose.msra.mxu0 0.0
        %4924 = vmatprep.subr.mxu0 0.0
        %4925 = vmatpush1.xpose.msra.mxu0 0.0
        %4926 = vmatprep.subr.mxu0 0.0
        %4927 = vmatpush1.xpose.msra.mxu0 0.0
        %4928 = vmatprep.subr.mxu0 0.0
        %4929 = vmatpush1.xpose.msra.mxu0 0.0
        %4930 = vmatprep.subr.mxu0 0.0
        %4931 = vmatpush1.xpose.msra.mxu0 0.0
        %4932 = vmatprep.subr.mxu0 0.0
        %4933 = vmatpush1.xpose.msra.mxu0 0.0
        %4934 = vmatprep.subr.mxu0 0.0
        %4935 = vmatpush1.xpose.msra.mxu0 0.0
        %4936 = vmatprep.subr.mxu0 0.0
        %4937 = vmatpush1.xpose.msra.mxu0 0.0
        %4938 = vmatprep.subr.mxu0 0.0
        %4939 = vmatpush1.xpose.msra.mxu0 0.0
        %4940 = vmatprep.subr.mxu0 0.0
        %4941 = vmatpush1.xpose.msra.mxu0 %v4908
        %4942 = vmatprep.subr.mxu0 0.0
        %4943 = vmatpush2.xpose.msra.mxu0 0.0
        %4944 = vmatprep.subr.mxu0 0.0
        %4945 = vmatpush2.xpose.msra.mxu0 0.0
        %4946 = vmatprep.subr.mxu0 0.0
        %4947 = vmatpush2.xpose.msra.mxu0 0.0
        %4948 = vmatprep.subr.mxu0 0.0
        %4949 = vmatpush2.xpose.msra.mxu0 0.0
        %4950 = vmatprep.subr.mxu0 0.0
        %4951 = vmatpush2.xpose.msra.mxu0 0.0
        %4952 = vmatprep.subr.mxu0 0.0
        %4953 = vmatpush2.xpose.msra.mxu0 0.0
        %4954 = vmatprep.subr.mxu0 0.0
        %4955 = vmatpush2.xpose.msra.mxu0 0.0
        %4956 = vmatprep.subr.mxu0 0.0
        %4957 = vmatpush2.xpose.msra.mxu0 0.0
        %4958 = vmatprep.subr.mxu0 0.0
        %4959 = vmatpush2.xpose.msra.mxu0 0.0
        %4960 = vmatprep.subr.mxu0 0.0
        %4961 = vmatpush2.xpose.msra.mxu0 0.0
        %4962 = vmatprep.subr.mxu0 0.0
        %4963 = vmatpush2.xpose.msra.mxu0 0.0
        %4964 = vmatprep.subr.mxu0 0.0
        %4965 = vmatpush2.xpose.msra.mxu0 0.0
        %4966 = vmatprep.subr.mxu0 0.0
        %4967 = vmatpush2.xpose.msra.mxu0 0.0
        %4968 = vmatprep.subr.mxu0 0.0
        %4969 = vmatpush2.xpose.msra.mxu0 0.0
        %4970 = vmatprep.subr.mxu0 0.0
        %4971 = vmatpush2.xpose.msra.mxu0 0.0
        %4972 = vmatprep.subr.mxu0 0.0
        %4973 = vmatpush2.xpose.msra.mxu0 0.0
        %4974 = vmatprep.mubr.f32.mxu0 0.0
        %4975 = vmatmul.mubr.f32.gmra.mxu0 %v4906
        %v4976 = vpop.f32.mrf.mxu0
        %v4977 = vadd.f32 0.0, %v4976
        %v4978 = vpop.f32.mrf.mxu0
        %4979 = vdwg.mxu0
        %4980 = vrot.lane.b32.xlu0 %v584, 104
        %v4981 = vpop.permute.xlu0 %4980
        %4982 = vrot.lane.b32.xlu0 %v717, 104
        %v4983 = vpop.permute.xlu0 %4982
        %v4984 = vsel %vm883, %v4981, 0
        %v4986 = vsel %vm883, %v4983, 0
        %4988 = vmatprep.subr.mxu0 0.0
        %4989 = vmatpush1.xpose.msra.mxu0 0.0
        %4990 = vmatprep.subr.mxu0 0.0
        %4991 = vmatpush1.xpose.msra.mxu0 0.0
        %4992 = vmatprep.subr.mxu0 0.0
        %4993 = vmatpush1.xpose.msra.mxu0 0.0
        %4994 = vmatprep.subr.mxu0 0.0
        %4995 = vmatpush1.xpose.msra.mxu0 0.0
        %4996 = vmatprep.subr.mxu0 0.0
        %4997 = vmatpush1.xpose.msra.mxu0 0.0
        %4998 = vmatprep.subr.mxu0 0.0
        %4999 = vmatpush1.xpose.msra.mxu0 0.0
        %5000 = vmatprep.subr.mxu0 0.0
        %5001 = vmatpush1.xpose.msra.mxu0 0.0
        %5002 = vmatprep.subr.mxu0 0.0
        %5003 = vmatpush1.xpose.msra.mxu0 0.0
        %5004 = vmatprep.subr.mxu0 0.0
        %5005 = vmatpush1.xpose.msra.mxu0 0.0
        %5006 = vmatprep.subr.mxu0 0.0
        %5007 = vmatpush1.xpose.msra.mxu0 0.0
        %5008 = vmatprep.subr.mxu0 0.0
        %5009 = vmatpush1.xpose.msra.mxu0 0.0
        %5010 = vmatprep.subr.mxu0 0.0
        %5011 = vmatpush1.xpose.msra.mxu0 0.0
        %5012 = vmatprep.subr.mxu0 0.0
        %5013 = vmatpush1.xpose.msra.mxu0 0.0
        %5014 = vmatprep.subr.mxu0 0.0
        %5015 = vmatpush1.xpose.msra.mxu0 0.0
        %5016 = vmatprep.subr.mxu0 0.0
        %5017 = vmatpush1.xpose.msra.mxu0 0.0
        %5018 = vmatprep.subr.mxu0 0.0
        %5019 = vmatpush1.xpose.msra.mxu0 %v4986
        %5020 = vmatprep.subr.mxu0 0.0
        %5021 = vmatpush2.xpose.msra.mxu0 0.0
        %5022 = vmatprep.subr.mxu0 0.0
        %5023 = vmatpush2.xpose.msra.mxu0 0.0
        %5024 = vmatprep.subr.mxu0 0.0
        %5025 = vmatpush2.xpose.msra.mxu0 0.0
        %5026 = vmatprep.subr.mxu0 0.0
        %5027 = vmatpush2.xpose.msra.mxu0 0.0
        %5028 = vmatprep.subr.mxu0 0.0
        %5029 = vmatpush2.xpose.msra.mxu0 0.0
        %5030 = vmatprep.subr.mxu0 0.0
        %5031 = vmatpush2.xpose.msra.mxu0 0.0
        %5032 = vmatprep.subr.mxu0 0.0
        %5033 = vmatpush2.xpose.msra.mxu0 0.0
        %5034 = vmatprep.subr.mxu0 0.0
        %5035 = vmatpush2.xpose.msra.mxu0 0.0
        %5036 = vmatprep.subr.mxu0 0.0
        %5037 = vmatpush2.xpose.msra.mxu0 0.0
        %5038 = vmatprep.subr.mxu0 0.0
        %5039 = vmatpush2.xpose.msra.mxu0 0.0
        %5040 = vmatprep.subr.mxu0 0.0
        %5041 = vmatpush2.xpose.msra.mxu0 0.0
        %5042 = vmatprep.subr.mxu0 0.0
        %5043 = vmatpush2.xpose.msra.mxu0 0.0
        %5044 = vmatprep.subr.mxu0 0.0
        %5045 = vmatpush2.xpose.msra.mxu0 0.0
        %5046 = vmatprep.subr.mxu0 0.0
        %5047 = vmatpush2.xpose.msra.mxu0 0.0
        %5048 = vmatprep.subr.mxu0 0.0
        %5049 = vmatpush2.xpose.msra.mxu0 0.0
        %5050 = vmatprep.subr.mxu0 0.0
        %5051 = vmatpush2.xpose.msra.mxu0 0.0
        %5052 = vmatprep.mubr.f32.mxu0 0.0
        %5053 = vmatmul.mubr.f32.gmra.mxu0 %v4984
        %v5054 = vpop.f32.mrf.mxu0
        %v5055 = vadd.f32 0.0, %v5054
        %v5056 = vpop.f32.mrf.mxu0
        %5057 = vdwg.mxu0
        %5058 = vrot.lane.b32.xlu0 %v589, 104
        %v5059 = vpop.permute.xlu0 %5058
        %5060 = vrot.lane.b32.xlu0 %v722, 104
        %v5061 = vpop.permute.xlu0 %5060
        %v5062 = vsel %vm883, %v5059, 0
        %v5064 = vsel %vm883, %v5061, 0
        %5066 = vmatprep.subr.mxu0 0.0
        %5067 = vmatpush1.xpose.msra.mxu0 0.0
        %5068 = vmatprep.subr.mxu0 0.0
        %5069 = vmatpush1.xpose.msra.mxu0 0.0
        %5070 = vmatprep.subr.mxu0 0.0
        %5071 = vmatpush1.xpose.msra.mxu0 0.0
        %5072 = vmatprep.subr.mxu0 0.0
        %5073 = vmatpush1.xpose.msra.mxu0 0.0
        %5074 = vmatprep.subr.mxu0 0.0
        %5075 = vmatpush1.xpose.msra.mxu0 0.0
        %5076 = vmatprep.subr.mxu0 0.0
        %5077 = vmatpush1.xpose.msra.mxu0 0.0
        %5078 = vmatprep.subr.mxu0 0.0
        %5079 = vmatpush1.xpose.msra.mxu0 0.0
        %5080 = vmatprep.subr.mxu0 0.0
        %5081 = vmatpush1.xpose.msra.mxu0 0.0
        %5082 = vmatprep.subr.mxu0 0.0
        %5083 = vmatpush1.xpose.msra.mxu0 0.0
        %5084 = vmatprep.subr.mxu0 0.0
        %5085 = vmatpush1.xpose.msra.mxu0 0.0
        %5086 = vmatprep.subr.mxu0 0.0
        %5087 = vmatpush1.xpose.msra.mxu0 0.0
        %5088 = vmatprep.subr.mxu0 0.0
        %5089 = vmatpush1.xpose.msra.mxu0 0.0
        %5090 = vmatprep.subr.mxu0 0.0
        %5091 = vmatpush1.xpose.msra.mxu0 0.0
        %5092 = vmatprep.subr.mxu0 0.0
        %5093 = vmatpush1.xpose.msra.mxu0 0.0
        %5094 = vmatprep.subr.mxu0 0.0
        %5095 = vmatpush1.xpose.msra.mxu0 0.0
        %5096 = vmatprep.subr.mxu0 0.0
        %5097 = vmatpush1.xpose.msra.mxu0 %v5064
        %5098 = vmatprep.subr.mxu0 0.0
        %5099 = vmatpush2.xpose.msra.mxu0 0.0
        %5100 = vmatprep.subr.mxu0 0.0
        %5101 = vmatpush2.xpose.msra.mxu0 0.0
        %5102 = vmatprep.subr.mxu0 0.0
        %5103 = vmatpush2.xpose.msra.mxu0 0.0
        %5104 = vmatprep.subr.mxu0 0.0
        %5105 = vmatpush2.xpose.msra.mxu0 0.0
        %5106 = vmatprep.subr.mxu0 0.0
        %5107 = vmatpush2.xpose.msra.mxu0 0.0
        %5108 = vmatprep.subr.mxu0 0.0
        %5109 = vmatpush2.xpose.msra.mxu0 0.0
        %5110 = vmatprep.subr.mxu0 0.0
        %5111 = vmatpush2.xpose.msra.mxu0 0.0
        %5112 = vmatprep.subr.mxu0 0.0
        %5113 = vmatpush2.xpose.msra.mxu0 0.0
        %5114 = vmatprep.subr.mxu0 0.0
        %5115 = vmatpush2.xpose.msra.mxu0 0.0
        %5116 = vmatprep.subr.mxu0 0.0
        %5117 = vmatpush2.xpose.msra.mxu0 0.0
        %5118 = vmatprep.subr.mxu0 0.0
        %5119 = vmatpush2.xpose.msra.mxu0 0.0
        %5120 = vmatprep.subr.mxu0 0.0
        %5121 = vmatpush2.xpose.msra.mxu0 0.0
        %5122 = vmatprep.subr.mxu0 0.0
        %5123 = vmatpush2.xpose.msra.mxu0 0.0
        %5124 = vmatprep.subr.mxu0 0.0
        %5125 = vmatpush2.xpose.msra.mxu0 0.0
        %5126 = vmatprep.subr.mxu0 0.0
        %5127 = vmatpush2.xpose.msra.mxu0 0.0
        %5128 = vmatprep.subr.mxu0 0.0
        %5129 = vmatpush2.xpose.msra.mxu0 0.0
        %5130 = vmatprep.mubr.f32.mxu0 0.0
        %5131 = vmatmul.mubr.f32.gmra.mxu0 %v5062
        %v5132 = vpop.f32.mrf.mxu0
        %v5133 = vadd.f32 0.0, %v5132
        %v5134 = vpop.f32.mrf.mxu0
        %5135 = vdwg.mxu0
        %5136 = vrot.lane.b32.xlu0 %v594, 104
        %v5137 = vpop.permute.xlu0 %5136
        %5138 = vrot.lane.b32.xlu0 %v727, 104
        %v5139 = vpop.permute.xlu0 %5138
        %v5140 = vsel %vm883, %v5137, 0
        %v5142 = vsel %vm883, %v5139, 0
        %5144 = vmatprep.subr.mxu0 0.0
        %5145 = vmatpush1.xpose.msra.mxu0 0.0
        %5146 = vmatprep.subr.mxu0 0.0
        %5147 = vmatpush1.xpose.msra.mxu0 0.0
        %5148 = vmatprep.subr.mxu0 0.0
        %5149 = vmatpush1.xpose.msra.mxu0 0.0
        %5150 = vmatprep.subr.mxu0 0.0
        %5151 = vmatpush1.xpose.msra.mxu0 0.0
        %5152 = vmatprep.subr.mxu0 0.0
        %5153 = vmatpush1.xpose.msra.mxu0 0.0
        %5154 = vmatprep.subr.mxu0 0.0
        %5155 = vmatpush1.xpose.msra.mxu0 0.0
        %5156 = vmatprep.subr.mxu0 0.0
        %5157 = vmatpush1.xpose.msra.mxu0 0.0
        %5158 = vmatprep.subr.mxu0 0.0
        %5159 = vmatpush1.xpose.msra.mxu0 0.0
        %5160 = vmatprep.subr.mxu0 0.0
        %5161 = vmatpush1.xpose.msra.mxu0 0.0
        %5162 = vmatprep.subr.mxu0 0.0
        %5163 = vmatpush1.xpose.msra.mxu0 0.0
        %5164 = vmatprep.subr.mxu0 0.0
        %5165 = vmatpush1.xpose.msra.mxu0 0.0
        %5166 = vmatprep.subr.mxu0 0.0
        %5167 = vmatpush1.xpose.msra.mxu0 0.0
        %5168 = vmatprep.subr.mxu0 0.0
        %5169 = vmatpush1.xpose.msra.mxu0 0.0
        %5170 = vmatprep.subr.mxu0 0.0
        %5171 = vmatpush1.xpose.msra.mxu0 0.0
        %5172 = vmatprep.subr.mxu0 0.0
        %5173 = vmatpush1.xpose.msra.mxu0 0.0
        %5174 = vmatprep.subr.mxu0 0.0
        %5175 = vmatpush1.xpose.msra.mxu0 %v5142
        %5176 = vmatprep.subr.mxu0 0.0
        %5177 = vmatpush2.xpose.msra.mxu0 0.0
        %5178 = vmatprep.subr.mxu0 0.0
        %5179 = vmatpush2.xpose.msra.mxu0 0.0
        %5180 = vmatprep.subr.mxu0 0.0
        %5181 = vmatpush2.xpose.msra.mxu0 0.0
        %5182 = vmatprep.subr.mxu0 0.0
        %5183 = vmatpush2.xpose.msra.mxu0 0.0
        %5184 = vmatprep.subr.mxu0 0.0
        %5185 = vmatpush2.xpose.msra.mxu0 0.0
        %5186 = vmatprep.subr.mxu0 0.0
        %5187 = vmatpush2.xpose.msra.mxu0 0.0
        %5188 = vmatprep.subr.mxu0 0.0
        %5189 = vmatpush2.xpose.msra.mxu0 0.0
        %5190 = vmatprep.subr.mxu0 0.0
        %5191 = vmatpush2.xpose.msra.mxu0 0.0
        %5192 = vmatprep.subr.mxu0 0.0
        %5193 = vmatpush2.xpose.msra.mxu0 0.0
        %5194 = vmatprep.subr.mxu0 0.0
        %5195 = vmatpush2.xpose.msra.mxu0 0.0
        %5196 = vmatprep.subr.mxu0 0.0
        %5197 = vmatpush2.xpose.msra.mxu0 0.0
        %5198 = vmatprep.subr.mxu0 0.0
        %5199 = vmatpush2.xpose.msra.mxu0 0.0
        %5200 = vmatprep.subr.mxu0 0.0
        %5201 = vmatpush2.xpose.msra.mxu0 0.0
        %5202 = vmatprep.subr.mxu0 0.0
        %5203 = vmatpush2.xpose.msra.mxu0 0.0
        %5204 = vmatprep.subr.mxu0 0.0
        %5205 = vmatpush2.xpose.msra.mxu0 0.0
        %5206 = vmatprep.subr.mxu0 0.0
        %5207 = vmatpush2.xpose.msra.mxu0 0.0
        %5208 = vmatprep.mubr.f32.mxu0 0.0
        %5209 = vmatmul.mubr.f32.gmra.mxu0 %v5140
        %v5210 = vpop.f32.mrf.mxu0
        %v5211 = vadd.f32 0.0, %v5210
        %v5212 = vpop.f32.mrf.mxu0
        %5213 = vdwg.mxu0
        %5214 = vrot.lane.b32.xlu0 %v599, 104
        %v5215 = vpop.permute.xlu0 %5214
        %5216 = vrot.lane.b32.xlu0 %v732, 104
        %v5217 = vpop.permute.xlu0 %5216
        %v5218 = vsel %vm883, %v5215, 0
        %v5220 = vsel %vm883, %v5217, 0
        %5222 = vmatprep.subr.mxu0 0.0
        %5223 = vmatpush1.xpose.msra.mxu0 0.0
        %5224 = vmatprep.subr.mxu0 0.0
        %5225 = vmatpush1.xpose.msra.mxu0 0.0
        %5226 = vmatprep.subr.mxu0 0.0
        %5227 = vmatpush1.xpose.msra.mxu0 0.0
        %5228 = vmatprep.subr.mxu0 0.0
        %5229 = vmatpush1.xpose.msra.mxu0 0.0
        %5230 = vmatprep.subr.mxu0 0.0
        %5231 = vmatpush1.xpose.msra.mxu0 0.0
        %5232 = vmatprep.subr.mxu0 0.0
        %5233 = vmatpush1.xpose.msra.mxu0 0.0
        %5234 = vmatprep.subr.mxu0 0.0
        %5235 = vmatpush1.xpose.msra.mxu0 0.0
        %5236 = vmatprep.subr.mxu0 0.0
        %5237 = vmatpush1.xpose.msra.mxu0 0.0
        %5238 = vmatprep.subr.mxu0 0.0
        %5239 = vmatpush1.xpose.msra.mxu0 0.0
        %5240 = vmatprep.subr.mxu0 0.0
        %5241 = vmatpush1.xpose.msra.mxu0 0.0
        %5242 = vmatprep.subr.mxu0 0.0
        %5243 = vmatpush1.xpose.msra.mxu0 0.0
        %5244 = vmatprep.subr.mxu0 0.0
        %5245 = vmatpush1.xpose.msra.mxu0 0.0
        %5246 = vmatprep.subr.mxu0 0.0
        %5247 = vmatpush1.xpose.msra.mxu0 0.0
        %5248 = vmatprep.subr.mxu0 0.0
        %5249 = vmatpush1.xpose.msra.mxu0 0.0
        %5250 = vmatprep.subr.mxu0 0.0
        %5251 = vmatpush1.xpose.msra.mxu0 0.0
        %5252 = vmatprep.subr.mxu0 0.0
        %5253 = vmatpush1.xpose.msra.mxu0 %v5220
        %5254 = vmatprep.subr.mxu0 0.0
        %5255 = vmatpush2.xpose.msra.mxu0 0.0
        %5256 = vmatprep.subr.mxu0 0.0
        %5257 = vmatpush2.xpose.msra.mxu0 0.0
        %5258 = vmatprep.subr.mxu0 0.0
        %5259 = vmatpush2.xpose.msra.mxu0 0.0
        %5260 = vmatprep.subr.mxu0 0.0
        %5261 = vmatpush2.xpose.msra.mxu0 0.0
        %5262 = vmatprep.subr.mxu0 0.0
        %5263 = vmatpush2.xpose.msra.mxu0 0.0
        %5264 = vmatprep.subr.mxu0 0.0
        %5265 = vmatpush2.xpose.msra.mxu0 0.0
        %5266 = vmatprep.subr.mxu0 0.0
        %5267 = vmatpush2.xpose.msra.mxu0 0.0
        %5268 = vmatprep.subr.mxu0 0.0
        %5269 = vmatpush2.xpose.msra.mxu0 0.0
        %5270 = vmatprep.subr.mxu0 0.0
        %5271 = vmatpush2.xpose.msra.mxu0 0.0
        %5272 = vmatprep.subr.mxu0 0.0
        %5273 = vmatpush2.xpose.msra.mxu0 0.0
        %5274 = vmatprep.subr.mxu0 0.0
        %5275 = vmatpush2.xpose.msra.mxu0 0.0
        %5276 = vmatprep.subr.mxu0 0.0
        %5277 = vmatpush2.xpose.msra.mxu0 0.0
        %5278 = vmatprep.subr.mxu0 0.0
        %5279 = vmatpush2.xpose.msra.mxu0 0.0
        %5280 = vmatprep.subr.mxu0 0.0
        %5281 = vmatpush2.xpose.msra.mxu0 0.0
        %5282 = vmatprep.subr.mxu0 0.0
        %5283 = vmatpush2.xpose.msra.mxu0 0.0
        %5284 = vmatprep.subr.mxu0 0.0
        %5285 = vmatpush2.xpose.msra.mxu0 0.0
        %5286 = vmatprep.mubr.f32.mxu0 0.0
        %5287 = vmatmul.mubr.f32.gmra.mxu0 %v5218
        %v5288 = vpop.f32.mrf.mxu0
        %v5289 = vadd.f32 0.0, %v5288
        %v5290 = vpop.f32.mrf.mxu0
        %5291 = vdwg.mxu0
        %5292 = vrot.lane.b32.xlu0 %v604, 104
        %v5293 = vpop.permute.xlu0 %5292
        %5294 = vrot.lane.b32.xlu0 %v737, 104
        %v5295 = vpop.permute.xlu0 %5294
        %v5296 = vsel %vm883, %v5293, 0
        %v5298 = vsel %vm883, %v5295, 0
        %5300 = vmatprep.subr.mxu0 0.0
        %5301 = vmatpush1.xpose.msra.mxu0 0.0
        %5302 = vmatprep.subr.mxu0 0.0
        %5303 = vmatpush1.xpose.msra.mxu0 0.0
        %5304 = vmatprep.subr.mxu0 0.0
        %5305 = vmatpush1.xpose.msra.mxu0 0.0
        %5306 = vmatprep.subr.mxu0 0.0
        %5307 = vmatpush1.xpose.msra.mxu0 0.0
        %5308 = vmatprep.subr.mxu0 0.0
        %5309 = vmatpush1.xpose.msra.mxu0 0.0
        %5310 = vmatprep.subr.mxu0 0.0
        %5311 = vmatpush1.xpose.msra.mxu0 0.0
        %5312 = vmatprep.subr.mxu0 0.0
        %5313 = vmatpush1.xpose.msra.mxu0 0.0
        %5314 = vmatprep.subr.mxu0 0.0
        %5315 = vmatpush1.xpose.msra.mxu0 0.0
        %5316 = vmatprep.subr.mxu0 0.0
        %5317 = vmatpush1.xpose.msra.mxu0 0.0
        %5318 = vmatprep.subr.mxu0 0.0
        %5319 = vmatpush1.xpose.msra.mxu0 0.0
        %5320 = vmatprep.subr.mxu0 0.0
        %5321 = vmatpush1.xpose.msra.mxu0 0.0
        %5322 = vmatprep.subr.mxu0 0.0
        %5323 = vmatpush1.xpose.msra.mxu0 0.0
        %5324 = vmatprep.subr.mxu0 0.0
        %5325 = vmatpush1.xpose.msra.mxu0 0.0
        %5326 = vmatprep.subr.mxu0 0.0
        %5327 = vmatpush1.xpose.msra.mxu0 0.0
        %5328 = vmatprep.subr.mxu0 0.0
        %5329 = vmatpush1.xpose.msra.mxu0 0.0
        %5330 = vmatprep.subr.mxu0 0.0
        %5331 = vmatpush1.xpose.msra.mxu0 %v5298
        %5332 = vmatprep.subr.mxu0 0.0
        %5333 = vmatpush2.xpose.msra.mxu0 0.0
        %5334 = vmatprep.subr.mxu0 0.0
        %5335 = vmatpush2.xpose.msra.mxu0 0.0
        %5336 = vmatprep.subr.mxu0 0.0
        %5337 = vmatpush2.xpose.msra.mxu0 0.0
        %5338 = vmatprep.subr.mxu0 0.0
        %5339 = vmatpush2.xpose.msra.mxu0 0.0
        %5340 = vmatprep.subr.mxu0 0.0
        %5341 = vmatpush2.xpose.msra.mxu0 0.0
        %5342 = vmatprep.subr.mxu0 0.0
        %5343 = vmatpush2.xpose.msra.mxu0 0.0
        %5344 = vmatprep.subr.mxu0 0.0
        %5345 = vmatpush2.xpose.msra.mxu0 0.0
        %5346 = vmatprep.subr.mxu0 0.0
        %5347 = vmatpush2.xpose.msra.mxu0 0.0
        %5348 = vmatprep.subr.mxu0 0.0
        %5349 = vmatpush2.xpose.msra.mxu0 0.0
        %5350 = vmatprep.subr.mxu0 0.0
        %5351 = vmatpush2.xpose.msra.mxu0 0.0
        %5352 = vmatprep.subr.mxu0 0.0
        %5353 = vmatpush2.xpose.msra.mxu0 0.0
        %5354 = vmatprep.subr.mxu0 0.0
        %5355 = vmatpush2.xpose.msra.mxu0 0.0
        %5356 = vmatprep.subr.mxu0 0.0
        %5357 = vmatpush2.xpose.msra.mxu0 0.0
        %5358 = vmatprep.subr.mxu0 0.0
        %5359 = vmatpush2.xpose.msra.mxu0 0.0
        %5360 = vmatprep.subr.mxu0 0.0
        %5361 = vmatpush2.xpose.msra.mxu0 0.0
        %5362 = vmatprep.subr.mxu0 0.0
        %5363 = vmatpush2.xpose.msra.mxu0 0.0
        %5364 = vmatprep.mubr.f32.mxu0 0.0
        %5365 = vmatmul.mubr.f32.gmra.mxu0 %v5296
        %v5366 = vpop.f32.mrf.mxu0
        %v5367 = vadd.f32 0.0, %v5366
        %v5368 = vpop.f32.mrf.mxu0
        %5369 = vdwg.mxu0
        %5370 = vrot.lane.b32.xlu0 %v609, 104
        %v5371 = vpop.permute.xlu0 %5370
        %5372 = vrot.lane.b32.xlu0 %v742, 104
        %v5373 = vpop.permute.xlu0 %5372
        %v5374 = vsel %vm883, %v5371, 0
        %v5376 = vsel %vm883, %v5373, 0
        %5378 = vmatprep.subr.mxu0 0.0
        %5379 = vmatpush1.xpose.msra.mxu0 0.0
        %5380 = vmatprep.subr.mxu0 0.0
        %5381 = vmatpush1.xpose.msra.mxu0 0.0
        %5382 = vmatprep.subr.mxu0 0.0
        %5383 = vmatpush1.xpose.msra.mxu0 0.0
        %5384 = vmatprep.subr.mxu0 0.0
        %5385 = vmatpush1.xpose.msra.mxu0 0.0
        %5386 = vmatprep.subr.mxu0 0.0
        %5387 = vmatpush1.xpose.msra.mxu0 0.0
        %5388 = vmatprep.subr.mxu0 0.0
        %5389 = vmatpush1.xpose.msra.mxu0 0.0
        %5390 = vmatprep.subr.mxu0 0.0
        %5391 = vmatpush1.xpose.msra.mxu0 0.0
        %5392 = vmatprep.subr.mxu0 0.0
        %5393 = vmatpush1.xpose.msra.mxu0 0.0
        %5394 = vmatprep.subr.mxu0 0.0
        %5395 = vmatpush1.xpose.msra.mxu0 0.0
        %5396 = vmatprep.subr.mxu0 0.0
        %5397 = vmatpush1.xpose.msra.mxu0 0.0
        %5398 = vmatprep.subr.mxu0 0.0
        %5399 = vmatpush1.xpose.msra.mxu0 0.0
        %5400 = vmatprep.subr.mxu0 0.0
        %5401 = vmatpush1.xpose.msra.mxu0 0.0
        %5402 = vmatprep.subr.mxu0 0.0
        %5403 = vmatpush1.xpose.msra.mxu0 0.0
        %5404 = vmatprep.subr.mxu0 0.0
        %5405 = vmatpush1.xpose.msra.mxu0 0.0
        %5406 = vmatprep.subr.mxu0 0.0
        %5407 = vmatpush1.xpose.msra.mxu0 0.0
        %5408 = vmatprep.subr.mxu0 0.0
        %5409 = vmatpush1.xpose.msra.mxu0 %v5376
        %5410 = vmatprep.subr.mxu0 0.0
        %5411 = vmatpush2.xpose.msra.mxu0 0.0
        %5412 = vmatprep.subr.mxu0 0.0
        %5413 = vmatpush2.xpose.msra.mxu0 0.0
        %5414 = vmatprep.subr.mxu0 0.0
        %5415 = vmatpush2.xpose.msra.mxu0 0.0
        %5416 = vmatprep.subr.mxu0 0.0
        %5417 = vmatpush2.xpose.msra.mxu0 0.0
        %5418 = vmatprep.subr.mxu0 0.0
        %5419 = vmatpush2.xpose.msra.mxu0 0.0
        %5420 = vmatprep.subr.mxu0 0.0
        %5421 = vmatpush2.xpose.msra.mxu0 0.0
        %5422 = vmatprep.subr.mxu0 0.0
        %5423 = vmatpush2.xpose.msra.mxu0 0.0
        %5424 = vmatprep.subr.mxu0 0.0
        %5425 = vmatpush2.xpose.msra.mxu0 0.0
        %5426 = vmatprep.subr.mxu0 0.0
        %5427 = vmatpush2.xpose.msra.mxu0 0.0
        %5428 = vmatprep.subr.mxu0 0.0
        %5429 = vmatpush2.xpose.msra.mxu0 0.0
        %5430 = vmatprep.subr.mxu0 0.0
        %5431 = vmatpush2.xpose.msra.mxu0 0.0
        %5432 = vmatprep.subr.mxu0 0.0
        %5433 = vmatpush2.xpose.msra.mxu0 0.0
        %5434 = vmatprep.subr.mxu0 0.0
        %5435 = vmatpush2.xpose.msra.mxu0 0.0
        %5436 = vmatprep.subr.mxu0 0.0
        %5437 = vmatpush2.xpose.msra.mxu0 0.0
        %5438 = vmatprep.subr.mxu0 0.0
        %5439 = vmatpush2.xpose.msra.mxu0 0.0
        %5440 = vmatprep.subr.mxu0 0.0
        %5441 = vmatpush2.xpose.msra.mxu0 0.0
        %5442 = vmatprep.mubr.f32.mxu0 0.0
        %5443 = vmatmul.mubr.f32.gmra.mxu0 %v5374
        %v5444 = vpop.f32.mrf.mxu0
        %v5445 = vadd.f32 0.0, %v5444
        %v5446 = vpop.f32.mrf.mxu0
        %5447 = vdwg.mxu0
        %5448 = vrot.lane.b32.xlu0 %v614, 104
        %v5449 = vpop.permute.xlu0 %5448
        %5450 = vrot.lane.b32.xlu0 %v747, 104
        %v5451 = vpop.permute.xlu0 %5450
        %v5452 = vsel %vm883, %v5449, 0
        %v5454 = vsel %vm883, %v5451, 0
        %5456 = vmatprep.subr.mxu0 0.0
        %5457 = vmatpush1.xpose.msra.mxu0 0.0
        %5458 = vmatprep.subr.mxu0 0.0
        %5459 = vmatpush1.xpose.msra.mxu0 0.0
        %5460 = vmatprep.subr.mxu0 0.0
        %5461 = vmatpush1.xpose.msra.mxu0 0.0
        %5462 = vmatprep.subr.mxu0 0.0
        %5463 = vmatpush1.xpose.msra.mxu0 0.0
        %5464 = vmatprep.subr.mxu0 0.0
        %5465 = vmatpush1.xpose.msra.mxu0 0.0
        %5466 = vmatprep.subr.mxu0 0.0
        %5467 = vmatpush1.xpose.msra.mxu0 0.0
        %5468 = vmatprep.subr.mxu0 0.0
        %5469 = vmatpush1.xpose.msra.mxu0 0.0
        %5470 = vmatprep.subr.mxu0 0.0
        %5471 = vmatpush1.xpose.msra.mxu0 0.0
        %5472 = vmatprep.subr.mxu0 0.0
        %5473 = vmatpush1.xpose.msra.mxu0 0.0
        %5474 = vmatprep.subr.mxu0 0.0
        %5475 = vmatpush1.xpose.msra.mxu0 0.0
        %5476 = vmatprep.subr.mxu0 0.0
        %5477 = vmatpush1.xpose.msra.mxu0 0.0
        %5478 = vmatprep.subr.mxu0 0.0
        %5479 = vmatpush1.xpose.msra.mxu0 0.0
        %5480 = vmatprep.subr.mxu0 0.0
        %5481 = vmatpush1.xpose.msra.mxu0 0.0
        %5482 = vmatprep.subr.mxu0 0.0
        %5483 = vmatpush1.xpose.msra.mxu0 0.0
        %5484 = vmatprep.subr.mxu0 0.0
        %5485 = vmatpush1.xpose.msra.mxu0 0.0
        %5486 = vmatprep.subr.mxu0 0.0
        %5487 = vmatpush1.xpose.msra.mxu0 %v5454
        %5488 = vmatprep.subr.mxu0 0.0
        %5489 = vmatpush2.xpose.msra.mxu0 0.0
        %5490 = vmatprep.subr.mxu0 0.0
        %5491 = vmatpush2.xpose.msra.mxu0 0.0
        %5492 = vmatprep.subr.mxu0 0.0
        %5493 = vmatpush2.xpose.msra.mxu0 0.0
        %5494 = vmatprep.subr.mxu0 0.0
        %5495 = vmatpush2.xpose.msra.mxu0 0.0
        %5496 = vmatprep.subr.mxu0 0.0
        %5497 = vmatpush2.xpose.msra.mxu0 0.0
        %5498 = vmatprep.subr.mxu0 0.0
        %5499 = vmatpush2.xpose.msra.mxu0 0.0
        %5500 = vmatprep.subr.mxu0 0.0
        %5501 = vmatpush2.xpose.msra.mxu0 0.0
        %5502 = vmatprep.subr.mxu0 0.0
        %5503 = vmatpush2.xpose.msra.mxu0 0.0
        %5504 = vmatprep.subr.mxu0 0.0
        %5505 = vmatpush2.xpose.msra.mxu0 0.0
        %5506 = vmatprep.subr.mxu0 0.0
        %5507 = vmatpush2.xpose.msra.mxu0 0.0
        %5508 = vmatprep.subr.mxu0 0.0
        %5509 = vmatpush2.xpose.msra.mxu0 0.0
        %5510 = vmatprep.subr.mxu0 0.0
        %5511 = vmatpush2.xpose.msra.mxu0 0.0
        %5512 = vmatprep.subr.mxu0 0.0
        %5513 = vmatpush2.xpose.msra.mxu0 0.0
        %5514 = vmatprep.subr.mxu0 0.0
        %5515 = vmatpush2.xpose.msra.mxu0 0.0
        %5516 = vmatprep.subr.mxu0 0.0
        %5517 = vmatpush2.xpose.msra.mxu0 0.0
        %5518 = vmatprep.subr.mxu0 0.0
        %5519 = vmatpush2.xpose.msra.mxu0 0.0
        %5520 = vmatprep.mubr.f32.mxu0 0.0
        %5521 = vmatmul.mubr.f32.gmra.mxu0 %v5452
        %v5522 = vpop.f32.mrf.mxu0
        %v5523 = vadd.f32 0.0, %v5522
        %v5524 = vpop.f32.mrf.mxu0
        %5525 = vdwg.mxu0
        %v5526 = vsel %vm883, %v4977, -inf
        %5527 = vmax.xlane.f32.xlu0 %v5526
        %v5528 = vpop.xlane.xlu0 %5527
        %v5529 = vsel %vm883, %v5055, -inf
        %5530 = vmax.xlane.f32.xlu0 %v5529
        %v5531 = vpop.xlane.xlu0 %5530
        %v5532 = vsel %vm883, %v5133, -inf
        %5533 = vmax.xlane.f32.xlu0 %v5532
        %v5534 = vpop.xlane.xlu0 %5533
        %v5535 = vsel %vm883, %v5211, -inf
        %5536 = vmax.xlane.f32.xlu0 %v5535
        %v5537 = vpop.xlane.xlu0 %5536
        %v5538 = vsel %vm883, %v5289, -inf
        %5539 = vmax.xlane.f32.xlu0 %v5538
        %v5540 = vpop.xlane.xlu0 %5539
        %v5541 = vsel %vm883, %v5367, -inf
        %5542 = vmax.xlane.f32.xlu0 %v5541
        %v5543 = vpop.xlane.xlu0 %5542
        %v5544 = vsel %vm883, %v5445, -inf
        %5545 = vmax.xlane.f32.xlu0 %v5544
        %v5546 = vpop.xlane.xlu0 %5545
        %v5547 = vsel %vm883, %v5523, -inf
        %5548 = vmax.xlane.f32.xlu0 %v5547
        %v5549 = vpop.xlane.xlu0 %5548
        %v5550 = vsub.f32 %v4977, %v5528
        %v5551 = vsub.f32 %v5055, %v5531
        %v5552 = vsub.f32 %v5133, %v5534
        %v5553 = vsub.f32 %v5211, %v5537
        %v5554 = vsub.f32 %v5289, %v5540
        %v5555 = vsub.f32 %v5367, %v5543
        %v5556 = vsub.f32 %v5445, %v5546
        %v5557 = vsub.f32 %v5523, %v5549
        %v5558 = vmul.f32 %v5550, 1.442695
        %v5559 = vpow.pop %v5558
        %v5560 = vmul.f32 %v5551, 1.442695
        %v5561 = vpow.pop %v5560
        %v5562 = vmul.f32 %v5552, 1.442695
        %v5563 = vpow.pop %v5562
        %v5564 = vmul.f32 %v5553, 1.442695
        %v5565 = vpow.pop %v5564
        %v5566 = vmul.f32 %v5554, 1.442695
        %v5567 = vpow.pop %v5566
        %v5568 = vmul.f32 %v5555, 1.442695
        %v5569 = vpow.pop %v5568
        %v5570 = vmul.f32 %v5556, 1.442695
        %v5571 = vpow.pop %v5570
        %v5572 = vmul.f32 %v5557, 1.442695
        %v5573 = vpow.pop %v5572
        %v5574 = vsel %vm883, %v5559, 0.0
        %5575 = vadd.xlane.f32.xlu0 %v5574
        %v5576 = vpop.xlane.xlu0 %5575
        %v5577 = vsel %vm883, %v5561, 0.0
        %5578 = vadd.xlane.f32.xlu0 %v5577
        %v5579 = vpop.xlane.xlu0 %5578
        %v5580 = vsel %vm883, %v5563, 0.0
        %5581 = vadd.xlane.f32.xlu0 %v5580
        %v5582 = vpop.xlane.xlu0 %5581
        %v5583 = vsel %vm883, %v5565, 0.0
        %5584 = vadd.xlane.f32.xlu0 %v5583
        %v5585 = vpop.xlane.xlu0 %5584
        %v5586 = vsel %vm883, %v5567, 0.0
        %5587 = vadd.xlane.f32.xlu0 %v5586
        %v5588 = vpop.xlane.xlu0 %5587
        %v5589 = vsel %vm883, %v5569, 0.0
        %5590 = vadd.xlane.f32.xlu0 %v5589
        %v5591 = vpop.xlane.xlu0 %5590
        %v5592 = vsel %vm883, %v5571, 0.0
        %5593 = vadd.xlane.f32.xlu0 %v5592
        %v5594 = vpop.xlane.xlu0 %5593
        %v5595 = vsel %vm883, %v5573, 0.0
        %5596 = vadd.xlane.f32.xlu0 %v5595
        %v5597 = vpop.xlane.xlu0 %5596
        %v5598 = vrcp.pop %v5576
        %v5599 = vrcp.pop %v5579
        %v5600 = vrcp.pop %v5582
        %v5601 = vrcp.pop %v5585
        %v5602 = vrcp.pop %v5588
        %v5603 = vrcp.pop %v5591
        %v5604 = vrcp.pop %v5594
        %v5605 = vrcp.pop %v5597
        %v5606 = vmul.f32 %v5559, %v5598
        %v5607 = vmul.f32 %v5561, %v5599
        %v5608 = vmul.f32 %v5563, %v5600
        %v5609 = vmul.f32 %v5565, %v5601
        %v5610 = vmul.f32 %v5567, %v5602
        %v5611 = vmul.f32 %v5569, %v5603
        %v5612 = vmul.f32 %v5571, %v5604
        %v5613 = vmul.f32 %v5573, %v5605
        %5614 = vrot.lane.b32.xlu0 %v845, 104
        %v5615 = vpop.permute.xlu0 %5614
        %v5618 = vsel %vm883, %v5606, 0
        %5620 = vmatprep.subr.mxu0 0.0
        %5621 = vmatpush1.msra.mxu0 0.0
        %5622 = vmatprep.subr.mxu0 0.0
        %5623 = vmatpush1.msra.mxu0 0.0
        %5624 = vmatprep.subr.mxu0 0.0
        %5625 = vmatpush1.msra.mxu0 0.0
        %5626 = vmatprep.subr.mxu0 0.0
        %5627 = vmatpush1.msra.mxu0 0.0
        %5628 = vmatprep.subr.mxu0 0.0
        %5629 = vmatpush1.msra.mxu0 0.0
        %5630 = vmatprep.subr.mxu0 0.0
        %5631 = vmatpush1.msra.mxu0 0.0
        %5632 = vmatprep.subr.mxu0 0.0
        %5633 = vmatpush1.msra.mxu0 0.0
        %5634 = vmatprep.subr.mxu0 0.0
        %5635 = vmatpush1.msra.mxu0 0.0
        %5636 = vmatprep.subr.mxu0 0.0
        %5637 = vmatpush1.msra.mxu0 0.0
        %5638 = vmatprep.subr.mxu0 0.0
        %5639 = vmatpush1.msra.mxu0 0.0
        %5640 = vmatprep.subr.mxu0 0.0
        %5641 = vmatpush1.msra.mxu0 0.0
        %5642 = vmatprep.subr.mxu0 0.0
        %5643 = vmatpush1.msra.mxu0 0.0
        %5644 = vmatprep.subr.mxu0 0.0
        %5645 = vmatpush1.msra.mxu0 0.0
        %5646 = vmatprep.subr.mxu0 0.0
        %5647 = vmatpush1.msra.mxu0 0.0
        %5648 = vmatprep.subr.mxu0 0.0
        %5649 = vmatpush1.msra.mxu0 0.0
        %5650 = vmatprep.subr.mxu0 0.0
        %5651 = vmatpush1.msra.mxu0 %v5615
        %5652 = vmatprep.subr.mxu0 0.0
        %5653 = vmatpush2.msra.mxu0 0.0
        %5654 = vmatprep.subr.mxu0 0.0
        %5655 = vmatpush2.msra.mxu0 0.0
        %5656 = vmatprep.subr.mxu0 0.0
        %5657 = vmatpush2.msra.mxu0 0.0
        %5658 = vmatprep.subr.mxu0 0.0
        %5659 = vmatpush2.msra.mxu0 0.0
        %5660 = vmatprep.subr.mxu0 0.0
        %5661 = vmatpush2.msra.mxu0 0.0
        %5662 = vmatprep.subr.mxu0 0.0
        %5663 = vmatpush2.msra.mxu0 0.0
        %5664 = vmatprep.subr.mxu0 0.0
        %5665 = vmatpush2.msra.mxu0 0.0
        %5666 = vmatprep.subr.mxu0 0.0
        %5667 = vmatpush2.msra.mxu0 0.0
        %5668 = vmatprep.subr.mxu0 0.0
        %5669 = vmatpush2.msra.mxu0 0.0
        %5670 = vmatprep.subr.mxu0 0.0
        %5671 = vmatpush2.msra.mxu0 0.0
        %5672 = vmatprep.subr.mxu0 0.0
        %5673 = vmatpush2.msra.mxu0 0.0
        %5674 = vmatprep.subr.mxu0 0.0
        %5675 = vmatpush2.msra.mxu0 0.0
        %5676 = vmatprep.subr.mxu0 0.0
        %5677 = vmatpush2.msra.mxu0 0.0
        %5678 = vmatprep.subr.mxu0 0.0
        %5679 = vmatpush2.msra.mxu0 0.0
        %5680 = vmatprep.subr.mxu0 0.0
        %5681 = vmatpush2.msra.mxu0 0.0
        %5682 = vmatprep.subr.mxu0 0.0
        %5683 = vmatpush2.msra.mxu0 0.0
        %5684 = vmatprep.mubr.f32.mxu0 0.0
        %5685 = vmatmul.mubr.f32.gmra.mxu0 %v5618
        %v5686 = vpop.f32.mrf.mxu0
        %v5687 = vadd.f32 0.0, %v5686
        %v5688 = vpop.f32.mrf.mxu0
        %5689 = vdwg.mxu0
        %5690 = vrot.lane.b32.xlu0 %v850, 104
        %v5691 = vpop.permute.xlu0 %5690
        %v5694 = vsel %vm883, %v5607, 0
        %5696 = vmatprep.subr.mxu0 0.0
        %5697 = vmatpush1.msra.mxu0 0.0
        %5698 = vmatprep.subr.mxu0 0.0
        %5699 = vmatpush1.msra.mxu0 0.0
        %5700 = vmatprep.subr.mxu0 0.0
        %5701 = vmatpush1.msra.mxu0 0.0
        %5702 = vmatprep.subr.mxu0 0.0
        %5703 = vmatpush1.msra.mxu0 0.0
        %5704 = vmatprep.subr.mxu0 0.0
        %5705 = vmatpush1.msra.mxu0 0.0
        %5706 = vmatprep.subr.mxu0 0.0
        %5707 = vmatpush1.msra.mxu0 0.0
        %5708 = vmatprep.subr.mxu0 0.0
        %5709 = vmatpush1.msra.mxu0 0.0
        %5710 = vmatprep.subr.mxu0 0.0
        %5711 = vmatpush1.msra.mxu0 0.0
        %5712 = vmatprep.subr.mxu0 0.0
        %5713 = vmatpush1.msra.mxu0 0.0
        %5714 = vmatprep.subr.mxu0 0.0
        %5715 = vmatpush1.msra.mxu0 0.0
        %5716 = vmatprep.subr.mxu0 0.0
        %5717 = vmatpush1.msra.mxu0 0.0
        %5718 = vmatprep.subr.mxu0 0.0
        %5719 = vmatpush1.msra.mxu0 0.0
        %5720 = vmatprep.subr.mxu0 0.0
        %5721 = vmatpush1.msra.mxu0 0.0
        %5722 = vmatprep.subr.mxu0 0.0
        %5723 = vmatpush1.msra.mxu0 0.0
        %5724 = vmatprep.subr.mxu0 0.0
        %5725 = vmatpush1.msra.mxu0 0.0
        %5726 = vmatprep.subr.mxu0 0.0
        %5727 = vmatpush1.msra.mxu0 %v5691
        %5728 = vmatprep.subr.mxu0 0.0
        %5729 = vmatpush2.msra.mxu0 0.0
        %5730 = vmatprep.subr.mxu0 0.0
        %5731 = vmatpush2.msra.mxu0 0.0
        %5732 = vmatprep.subr.mxu0 0.0
        %5733 = vmatpush2.msra.mxu0 0.0
        %5734 = vmatprep.subr.mxu0 0.0
        %5735 = vmatpush2.msra.mxu0 0.0
        %5736 = vmatprep.subr.mxu0 0.0
        %5737 = vmatpush2.msra.mxu0 0.0
        %5738 = vmatprep.subr.mxu0 0.0
        %5739 = vmatpush2.msra.mxu0 0.0
        %5740 = vmatprep.subr.mxu0 0.0
        %5741 = vmatpush2.msra.mxu0 0.0
        %5742 = vmatprep.subr.mxu0 0.0
        %5743 = vmatpush2.msra.mxu0 0.0
        %5744 = vmatprep.subr.mxu0 0.0
        %5745 = vmatpush2.msra.mxu0 0.0
        %5746 = vmatprep.subr.mxu0 0.0
        %5747 = vmatpush2.msra.mxu0 0.0
        %5748 = vmatprep.subr.mxu0 0.0
        %5749 = vmatpush2.msra.mxu0 0.0
        %5750 = vmatprep.subr.mxu0 0.0
        %5751 = vmatpush2.msra.mxu0 0.0
        %5752 = vmatprep.subr.mxu0 0.0
        %5753 = vmatpush2.msra.mxu0 0.0
        %5754 = vmatprep.subr.mxu0 0.0
        %5755 = vmatpush2.msra.mxu0 0.0
        %5756 = vmatprep.subr.mxu0 0.0
        %5757 = vmatpush2.msra.mxu0 0.0
        %5758 = vmatprep.subr.mxu0 0.0
        %5759 = vmatpush2.msra.mxu0 0.0
        %5760 = vmatprep.mubr.f32.mxu0 0.0
        %5761 = vmatmul.mubr.f32.gmra.mxu0 %v5694
        %v5762 = vpop.f32.mrf.mxu0
        %v5763 = vadd.f32 0.0, %v5762
        %v5764 = vpop.f32.mrf.mxu0
        %5765 = vdwg.mxu0
        %5766 = vrot.lane.b32.xlu0 %v855, 104
        %v5767 = vpop.permute.xlu0 %5766
        %v5770 = vsel %vm883, %v5608, 0
        %5772 = vmatprep.subr.mxu0 0.0
        %5773 = vmatpush1.msra.mxu0 0.0
        %5774 = vmatprep.subr.mxu0 0.0
        %5775 = vmatpush1.msra.mxu0 0.0
        %5776 = vmatprep.subr.mxu0 0.0
        %5777 = vmatpush1.msra.mxu0 0.0
        %5778 = vmatprep.subr.mxu0 0.0
        %5779 = vmatpush1.msra.mxu0 0.0
        %5780 = vmatprep.subr.mxu0 0.0
        %5781 = vmatpush1.msra.mxu0 0.0
        %5782 = vmatprep.subr.mxu0 0.0
        %5783 = vmatpush1.msra.mxu0 0.0
        %5784 = vmatprep.subr.mxu0 0.0
        %5785 = vmatpush1.msra.mxu0 0.0
        %5786 = vmatprep.subr.mxu0 0.0
        %5787 = vmatpush1.msra.mxu0 0.0
        %5788 = vmatprep.subr.mxu0 0.0
        %5789 = vmatpush1.msra.mxu0 0.0
        %5790 = vmatprep.subr.mxu0 0.0
        %5791 = vmatpush1.msra.mxu0 0.0
        %5792 = vmatprep.subr.mxu0 0.0
        %5793 = vmatpush1.msra.mxu0 0.0
        %5794 = vmatprep.subr.mxu0 0.0
        %5795 = vmatpush1.msra.mxu0 0.0
        %5796 = vmatprep.subr.mxu0 0.0
        %5797 = vmatpush1.msra.mxu0 0.0
        %5798 = vmatprep.subr.mxu0 0.0
        %5799 = vmatpush1.msra.mxu0 0.0
        %5800 = vmatprep.subr.mxu0 0.0
        %5801 = vmatpush1.msra.mxu0 0.0
        %5802 = vmatprep.subr.mxu0 0.0
        %5803 = vmatpush1.msra.mxu0 %v5767
        %5804 = vmatprep.subr.mxu0 0.0
        %5805 = vmatpush2.msra.mxu0 0.0
        %5806 = vmatprep.subr.mxu0 0.0
        %5807 = vmatpush2.msra.mxu0 0.0
        %5808 = vmatprep.subr.mxu0 0.0
        %5809 = vmatpush2.msra.mxu0 0.0
        %5810 = vmatprep.subr.mxu0 0.0
        %5811 = vmatpush2.msra.mxu0 0.0
        %5812 = vmatprep.subr.mxu0 0.0
        %5813 = vmatpush2.msra.mxu0 0.0
        %5814 = vmatprep.subr.mxu0 0.0
        %5815 = vmatpush2.msra.mxu0 0.0
        %5816 = vmatprep.subr.mxu0 0.0
        %5817 = vmatpush2.msra.mxu0 0.0
        %5818 = vmatprep.subr.mxu0 0.0
        %5819 = vmatpush2.msra.mxu0 0.0
        %5820 = vmatprep.subr.mxu0 0.0
        %5821 = vmatpush2.msra.mxu0 0.0
        %5822 = vmatprep.subr.mxu0 0.0
        %5823 = vmatpush2.msra.mxu0 0.0
        %5824 = vmatprep.subr.mxu0 0.0
        %5825 = vmatpush2.msra.mxu0 0.0
        %5826 = vmatprep.subr.mxu0 0.0
        %5827 = vmatpush2.msra.mxu0 0.0
        %5828 = vmatprep.subr.mxu0 0.0
        %5829 = vmatpush2.msra.mxu0 0.0
        %5830 = vmatprep.subr.mxu0 0.0
        %5831 = vmatpush2.msra.mxu0 0.0
        %5832 = vmatprep.subr.mxu0 0.0
        %5833 = vmatpush2.msra.mxu0 0.0
        %5834 = vmatprep.subr.mxu0 0.0
        %5835 = vmatpush2.msra.mxu0 0.0
        %5836 = vmatprep.mubr.f32.mxu0 0.0
        %5837 = vmatmul.mubr.f32.gmra.mxu0 %v5770
        %v5838 = vpop.f32.mrf.mxu0
        %v5839 = vadd.f32 0.0, %v5838
        %v5840 = vpop.f32.mrf.mxu0
        %5841 = vdwg.mxu0
        %5842 = vrot.lane.b32.xlu0 %v860, 104
        %v5843 = vpop.permute.xlu0 %5842
        %v5846 = vsel %vm883, %v5609, 0
        %5848 = vmatprep.subr.mxu0 0.0
        %5849 = vmatpush1.msra.mxu0 0.0
        %5850 = vmatprep.subr.mxu0 0.0
        %5851 = vmatpush1.msra.mxu0 0.0
        %5852 = vmatprep.subr.mxu0 0.0
        %5853 = vmatpush1.msra.mxu0 0.0
        %5854 = vmatprep.subr.mxu0 0.0
        %5855 = vmatpush1.msra.mxu0 0.0
        %5856 = vmatprep.subr.mxu0 0.0
        %5857 = vmatpush1.msra.mxu0 0.0
        %5858 = vmatprep.subr.mxu0 0.0
        %5859 = vmatpush1.msra.mxu0 0.0
        %5860 = vmatprep.subr.mxu0 0.0
        %5861 = vmatpush1.msra.mxu0 0.0
        %5862 = vmatprep.subr.mxu0 0.0
        %5863 = vmatpush1.msra.mxu0 0.0
        %5864 = vmatprep.subr.mxu0 0.0
        %5865 = vmatpush1.msra.mxu0 0.0
        %5866 = vmatprep.subr.mxu0 0.0
        %5867 = vmatpush1.msra.mxu0 0.0
        %5868 = vmatprep.subr.mxu0 0.0
        %5869 = vmatpush1.msra.mxu0 0.0
        %5870 = vmatprep.subr.mxu0 0.0
        %5871 = vmatpush1.msra.mxu0 0.0
        %5872 = vmatprep.subr.mxu0 0.0
        %5873 = vmatpush1.msra.mxu0 0.0
        %5874 = vmatprep.subr.mxu0 0.0
        %5875 = vmatpush1.msra.mxu0 0.0
        %5876 = vmatprep.subr.mxu0 0.0
        %5877 = vmatpush1.msra.mxu0 0.0
        %5878 = vmatprep.subr.mxu0 0.0
        %5879 = vmatpush1.msra.mxu0 %v5843
        %5880 = vmatprep.subr.mxu0 0.0
        %5881 = vmatpush2.msra.mxu0 0.0
        %5882 = vmatprep.subr.mxu0 0.0
        %5883 = vmatpush2.msra.mxu0 0.0
        %5884 = vmatprep.subr.mxu0 0.0
        %5885 = vmatpush2.msra.mxu0 0.0
        %5886 = vmatprep.subr.mxu0 0.0
        %5887 = vmatpush2.msra.mxu0 0.0
        %5888 = vmatprep.subr.mxu0 0.0
        %5889 = vmatpush2.msra.mxu0 0.0
        %5890 = vmatprep.subr.mxu0 0.0
        %5891 = vmatpush2.msra.mxu0 0.0
        %5892 = vmatprep.subr.mxu0 0.0
        %5893 = vmatpush2.msra.mxu0 0.0
        %5894 = vmatprep.subr.mxu0 0.0
        %5895 = vmatpush2.msra.mxu0 0.0
        %5896 = vmatprep.subr.mxu0 0.0
        %5897 = vmatpush2.msra.mxu0 0.0
        %5898 = vmatprep.subr.mxu0 0.0
        %5899 = vmatpush2.msra.mxu0 0.0
        %5900 = vmatprep.subr.mxu0 0.0
        %5901 = vmatpush2.msra.mxu0 0.0
        %5902 = vmatprep.subr.mxu0 0.0
        %5903 = vmatpush2.msra.mxu0 0.0
        %5904 = vmatprep.subr.mxu0 0.0
        %5905 = vmatpush2.msra.mxu0 0.0
        %5906 = vmatprep.subr.mxu0 0.0
        %5907 = vmatpush2.msra.mxu0 0.0
        %5908 = vmatprep.subr.mxu0 0.0
        %5909 = vmatpush2.msra.mxu0 0.0
        %5910 = vmatprep.subr.mxu0 0.0
        %5911 = vmatpush2.msra.mxu0 0.0
        %5912 = vmatprep.mubr.f32.mxu0 0.0
        %5913 = vmatmul.mubr.f32.gmra.mxu0 %v5846
        %v5914 = vpop.f32.mrf.mxu0
        %v5915 = vadd.f32 0.0, %v5914
        %v5916 = vpop.f32.mrf.mxu0
        %5917 = vdwg.mxu0
        %5918 = vrot.lane.b32.xlu0 %v865, 104
        %v5919 = vpop.permute.xlu0 %5918
        %v5922 = vsel %vm883, %v5610, 0
        %5924 = vmatprep.subr.mxu0 0.0
        %5925 = vmatpush1.msra.mxu0 0.0
        %5926 = vmatprep.subr.mxu0 0.0
        %5927 = vmatpush1.msra.mxu0 0.0
        %5928 = vmatprep.subr.mxu0 0.0
        %5929 = vmatpush1.msra.mxu0 0.0
        %5930 = vmatprep.subr.mxu0 0.0
        %5931 = vmatpush1.msra.mxu0 0.0
        %5932 = vmatprep.subr.mxu0 0.0
        %5933 = vmatpush1.msra.mxu0 0.0
        %5934 = vmatprep.subr.mxu0 0.0
        %5935 = vmatpush1.msra.mxu0 0.0
        %5936 = vmatprep.subr.mxu0 0.0
        %5937 = vmatpush1.msra.mxu0 0.0
        %5938 = vmatprep.subr.mxu0 0.0
        %5939 = vmatpush1.msra.mxu0 0.0
        %5940 = vmatprep.subr.mxu0 0.0
        %5941 = vmatpush1.msra.mxu0 0.0
        %5942 = vmatprep.subr.mxu0 0.0
        %5943 = vmatpush1.msra.mxu0 0.0
        %5944 = vmatprep.subr.mxu0 0.0
        %5945 = vmatpush1.msra.mxu0 0.0
        %5946 = vmatprep.subr.mxu0 0.0
        %5947 = vmatpush1.msra.mxu0 0.0
        %5948 = vmatprep.subr.mxu0 0.0
        %5949 = vmatpush1.msra.mxu0 0.0
        %5950 = vmatprep.subr.mxu0 0.0
        %5951 = vmatpush1.msra.mxu0 0.0
        %5952 = vmatprep.subr.mxu0 0.0
        %5953 = vmatpush1.msra.mxu0 0.0
        %5954 = vmatprep.subr.mxu0 0.0
        %5955 = vmatpush1.msra.mxu0 %v5919
        %5956 = vmatprep.subr.mxu0 0.0
        %5957 = vmatpush2.msra.mxu0 0.0
        %5958 = vmatprep.subr.mxu0 0.0
        %5959 = vmatpush2.msra.mxu0 0.0
        %5960 = vmatprep.subr.mxu0 0.0
        %5961 = vmatpush2.msra.mxu0 0.0
        %5962 = vmatprep.subr.mxu0 0.0
        %5963 = vmatpush2.msra.mxu0 0.0
        %5964 = vmatprep.subr.mxu0 0.0
        %5965 = vmatpush2.msra.mxu0 0.0
        %5966 = vmatprep.subr.mxu0 0.0
        %5967 = vmatpush2.msra.mxu0 0.0
        %5968 = vmatprep.subr.mxu0 0.0
        %5969 = vmatpush2.msra.mxu0 0.0
        %5970 = vmatprep.subr.mxu0 0.0
        %5971 = vmatpush2.msra.mxu0 0.0
        %5972 = vmatprep.subr.mxu0 0.0
        %5973 = vmatpush2.msra.mxu0 0.0
        %5974 = vmatprep.subr.mxu0 0.0
        %5975 = vmatpush2.msra.mxu0 0.0
        %5976 = vmatprep.subr.mxu0 0.0
        %5977 = vmatpush2.msra.mxu0 0.0
        %5978 = vmatprep.subr.mxu0 0.0
        %5979 = vmatpush2.msra.mxu0 0.0
        %5980 = vmatprep.subr.mxu0 0.0
        %5981 = vmatpush2.msra.mxu0 0.0
        %5982 = vmatprep.subr.mxu0 0.0
        %5983 = vmatpush2.msra.mxu0 0.0
        %5984 = vmatprep.subr.mxu0 0.0
        %5985 = vmatpush2.msra.mxu0 0.0
        %5986 = vmatprep.subr.mxu0 0.0
        %5987 = vmatpush2.msra.mxu0 0.0
        %5988 = vmatprep.mubr.f32.mxu0 0.0
        %5989 = vmatmul.mubr.f32.gmra.mxu0 %v5922
        %v5990 = vpop.f32.mrf.mxu0
        %v5991 = vadd.f32 0.0, %v5990
        %v5992 = vpop.f32.mrf.mxu0
        %5993 = vdwg.mxu0
        %5994 = vrot.lane.b32.xlu0 %v870, 104
        %v5995 = vpop.permute.xlu0 %5994
        %v5998 = vsel %vm883, %v5611, 0
        %6000 = vmatprep.subr.mxu0 0.0
        %6001 = vmatpush1.msra.mxu0 0.0
        %6002 = vmatprep.subr.mxu0 0.0
        %6003 = vmatpush1.msra.mxu0 0.0
        %6004 = vmatprep.subr.mxu0 0.0
        %6005 = vmatpush1.msra.mxu0 0.0
        %6006 = vmatprep.subr.mxu0 0.0
        %6007 = vmatpush1.msra.mxu0 0.0
        %6008 = vmatprep.subr.mxu0 0.0
        %6009 = vmatpush1.msra.mxu0 0.0
        %6010 = vmatprep.subr.mxu0 0.0
        %6011 = vmatpush1.msra.mxu0 0.0
        %6012 = vmatprep.subr.mxu0 0.0
        %6013 = vmatpush1.msra.mxu0 0.0
        %6014 = vmatprep.subr.mxu0 0.0
        %6015 = vmatpush1.msra.mxu0 0.0
        %6016 = vmatprep.subr.mxu0 0.0
        %6017 = vmatpush1.msra.mxu0 0.0
        %6018 = vmatprep.subr.mxu0 0.0
        %6019 = vmatpush1.msra.mxu0 0.0
        %6020 = vmatprep.subr.mxu0 0.0
        %6021 = vmatpush1.msra.mxu0 0.0
        %6022 = vmatprep.subr.mxu0 0.0
        %6023 = vmatpush1.msra.mxu0 0.0
        %6024 = vmatprep.subr.mxu0 0.0
        %6025 = vmatpush1.msra.mxu0 0.0
        %6026 = vmatprep.subr.mxu0 0.0
        %6027 = vmatpush1.msra.mxu0 0.0
        %6028 = vmatprep.subr.mxu0 0.0
        %6029 = vmatpush1.msra.mxu0 0.0
        %6030 = vmatprep.subr.mxu0 0.0
        %6031 = vmatpush1.msra.mxu0 %v5995
        %6032 = vmatprep.subr.mxu0 0.0
        %6033 = vmatpush2.msra.mxu0 0.0
        %6034 = vmatprep.subr.mxu0 0.0
        %6035 = vmatpush2.msra.mxu0 0.0
        %6036 = vmatprep.subr.mxu0 0.0
        %6037 = vmatpush2.msra.mxu0 0.0
        %6038 = vmatprep.subr.mxu0 0.0
        %6039 = vmatpush2.msra.mxu0 0.0
        %6040 = vmatprep.subr.mxu0 0.0
        %6041 = vmatpush2.msra.mxu0 0.0
        %6042 = vmatprep.subr.mxu0 0.0
        %6043 = vmatpush2.msra.mxu0 0.0
        %6044 = vmatprep.subr.mxu0 0.0
        %6045 = vmatpush2.msra.mxu0 0.0
        %6046 = vmatprep.subr.mxu0 0.0
        %6047 = vmatpush2.msra.mxu0 0.0
        %6048 = vmatprep.subr.mxu0 0.0
        %6049 = vmatpush2.msra.mxu0 0.0
        %6050 = vmatprep.subr.mxu0 0.0
        %6051 = vmatpush2.msra.mxu0 0.0
        %6052 = vmatprep.subr.mxu0 0.0
        %6053 = vmatpush2.msra.mxu0 0.0
        %6054 = vmatprep.subr.mxu0 0.0
        %6055 = vmatpush2.msra.mxu0 0.0
        %6056 = vmatprep.subr.mxu0 0.0
        %6057 = vmatpush2.msra.mxu0 0.0
        %6058 = vmatprep.subr.mxu0 0.0
        %6059 = vmatpush2.msra.mxu0 0.0
        %6060 = vmatprep.subr.mxu0 0.0
        %6061 = vmatpush2.msra.mxu0 0.0
        %6062 = vmatprep.subr.mxu0 0.0
        %6063 = vmatpush2.msra.mxu0 0.0
        %6064 = vmatprep.mubr.f32.mxu0 0.0
        %6065 = vmatmul.mubr.f32.gmra.mxu0 %v5998
        %v6066 = vpop.f32.mrf.mxu0
        %v6067 = vadd.f32 0.0, %v6066
        %v6068 = vpop.f32.mrf.mxu0
        %6069 = vdwg.mxu0
        %6070 = vrot.lane.b32.xlu0 %v875, 104
        %v6071 = vpop.permute.xlu0 %6070
        %v6074 = vsel %vm883, %v5612, 0
        %6076 = vmatprep.subr.mxu0 0.0
        %6077 = vmatpush1.msra.mxu0 0.0
        %6078 = vmatprep.subr.mxu0 0.0
        %6079 = vmatpush1.msra.mxu0 0.0
        %6080 = vmatprep.subr.mxu0 0.0
        %6081 = vmatpush1.msra.mxu0 0.0
        %6082 = vmatprep.subr.mxu0 0.0
        %6083 = vmatpush1.msra.mxu0 0.0
        %6084 = vmatprep.subr.mxu0 0.0
        %6085 = vmatpush1.msra.mxu0 0.0
        %6086 = vmatprep.subr.mxu0 0.0
        %6087 = vmatpush1.msra.mxu0 0.0
        %6088 = vmatprep.subr.mxu0 0.0
        %6089 = vmatpush1.msra.mxu0 0.0
        %6090 = vmatprep.subr.mxu0 0.0
        %6091 = vmatpush1.msra.mxu0 0.0
        %6092 = vmatprep.subr.mxu0 0.0
        %6093 = vmatpush1.msra.mxu0 0.0
        %6094 = vmatprep.subr.mxu0 0.0
        %6095 = vmatpush1.msra.mxu0 0.0
        %6096 = vmatprep.subr.mxu0 0.0
        %6097 = vmatpush1.msra.mxu0 0.0
        %6098 = vmatprep.subr.mxu0 0.0
        %6099 = vmatpush1.msra.mxu0 0.0
        %6100 = vmatprep.subr.mxu0 0.0
        %6101 = vmatpush1.msra.mxu0 0.0
        %6102 = vmatprep.subr.mxu0 0.0
        %6103 = vmatpush1.msra.mxu0 0.0
        %6104 = vmatprep.subr.mxu0 0.0
        %6105 = vmatpush1.msra.mxu0 0.0
        %6106 = vmatprep.subr.mxu0 0.0
        %6107 = vmatpush1.msra.mxu0 %v6071
        %6108 = vmatprep.subr.mxu0 0.0
        %6109 = vmatpush2.msra.mxu0 0.0
        %6110 = vmatprep.subr.mxu0 0.0
        %6111 = vmatpush2.msra.mxu0 0.0
        %6112 = vmatprep.subr.mxu0 0.0
        %6113 = vmatpush2.msra.mxu0 0.0
        %6114 = vmatprep.subr.mxu0 0.0
        %6115 = vmatpush2.msra.mxu0 0.0
        %6116 = vmatprep.subr.mxu0 0.0
        %6117 = vmatpush2.msra.mxu0 0.0
        %6118 = vmatprep.subr.mxu0 0.0
        %6119 = vmatpush2.msra.mxu0 0.0
        %6120 = vmatprep.subr.mxu0 0.0
        %6121 = vmatpush2.msra.mxu0 0.0
        %6122 = vmatprep.subr.mxu0 0.0
        %6123 = vmatpush2.msra.mxu0 0.0
        %6124 = vmatprep.subr.mxu0 0.0
        %6125 = vmatpush2.msra.mxu0 0.0
        %6126 = vmatprep.subr.mxu0 0.0
        %6127 = vmatpush2.msra.mxu0 0.0
        %6128 = vmatprep.subr.mxu0 0.0
        %6129 = vmatpush2.msra.mxu0 0.0
        %6130 = vmatprep.subr.mxu0 0.0
        %6131 = vmatpush2.msra.mxu0 0.0
        %6132 = vmatprep.subr.mxu0 0.0
        %6133 = vmatpush2.msra.mxu0 0.0
        %6134 = vmatprep.subr.mxu0 0.0
        %6135 = vmatpush2.msra.mxu0 0.0
        %6136 = vmatprep.subr.mxu0 0.0
        %6137 = vmatpush2.msra.mxu0 0.0
        %6138 = vmatprep.subr.mxu0 0.0
        %6139 = vmatpush2.msra.mxu0 0.0
        %6140 = vmatprep.mubr.f32.mxu0 0.0
        %6141 = vmatmul.mubr.f32.gmra.mxu0 %v6074
        %v6142 = vpop.f32.mrf.mxu0
        %v6143 = vadd.f32 0.0, %v6142
        %v6144 = vpop.f32.mrf.mxu0
        %6145 = vdwg.mxu0
        %6146 = vrot.lane.b32.xlu0 %v880, 104
        %v6147 = vpop.permute.xlu0 %6146
        %v6150 = vsel %vm883, %v5613, 0
        %6152 = vmatprep.subr.mxu0 0.0
        %6153 = vmatpush1.msra.mxu0 0.0
        %6154 = vmatprep.subr.mxu0 0.0
        %6155 = vmatpush1.msra.mxu0 0.0
        %6156 = vmatprep.subr.mxu0 0.0
        %6157 = vmatpush1.msra.mxu0 0.0
        %6158 = vmatprep.subr.mxu0 0.0
        %6159 = vmatpush1.msra.mxu0 0.0
        %6160 = vmatprep.subr.mxu0 0.0
        %6161 = vmatpush1.msra.mxu0 0.0
        %6162 = vmatprep.subr.mxu0 0.0
        %6163 = vmatpush1.msra.mxu0 0.0
        %6164 = vmatprep.subr.mxu0 0.0
        %6165 = vmatpush1.msra.mxu0 0.0
        %6166 = vmatprep.subr.mxu0 0.0
        %6167 = vmatpush1.msra.mxu0 0.0
        %6168 = vmatprep.subr.mxu0 0.0
        %6169 = vmatpush1.msra.mxu0 0.0
        %6170 = vmatprep.subr.mxu0 0.0
        %6171 = vmatpush1.msra.mxu0 0.0
        %6172 = vmatprep.subr.mxu0 0.0
        %6173 = vmatpush1.msra.mxu0 0.0
        %6174 = vmatprep.subr.mxu0 0.0
        %6175 = vmatpush1.msra.mxu0 0.0
        %6176 = vmatprep.subr.mxu0 0.0
        %6177 = vmatpush1.msra.mxu0 0.0
        %6178 = vmatprep.subr.mxu0 0.0
        %6179 = vmatpush1.msra.mxu0 0.0
        %6180 = vmatprep.subr.mxu0 0.0
        %6181 = vmatpush1.msra.mxu0 0.0
        %6182 = vmatprep.subr.mxu0 0.0
        %6183 = vmatpush1.msra.mxu0 %v6147
        %6184 = vmatprep.subr.mxu0 0.0
        %6185 = vmatpush2.msra.mxu0 0.0
        %6186 = vmatprep.subr.mxu0 0.0
        %6187 = vmatpush2.msra.mxu0 0.0
        %6188 = vmatprep.subr.mxu0 0.0
        %6189 = vmatpush2.msra.mxu0 0.0
        %6190 = vmatprep.subr.mxu0 0.0
        %6191 = vmatpush2.msra.mxu0 0.0
        %6192 = vmatprep.subr.mxu0 0.0
        %6193 = vmatpush2.msra.mxu0 0.0
        %6194 = vmatprep.subr.mxu0 0.0
        %6195 = vmatpush2.msra.mxu0 0.0
        %6196 = vmatprep.subr.mxu0 0.0
        %6197 = vmatpush2.msra.mxu0 0.0
        %6198 = vmatprep.subr.mxu0 0.0
        %6199 = vmatpush2.msra.mxu0 0.0
        %6200 = vmatprep.subr.mxu0 0.0
        %6201 = vmatpush2.msra.mxu0 0.0
        %6202 = vmatprep.subr.mxu0 0.0
        %6203 = vmatpush2.msra.mxu0 0.0
        %6204 = vmatprep.subr.mxu0 0.0
        %6205 = vmatpush2.msra.mxu0 0.0
        %6206 = vmatprep.subr.mxu0 0.0
        %6207 = vmatpush2.msra.mxu0 0.0
        %6208 = vmatprep.subr.mxu0 0.0
        %6209 = vmatpush2.msra.mxu0 0.0
        %6210 = vmatprep.subr.mxu0 0.0
        %6211 = vmatpush2.msra.mxu0 0.0
        %6212 = vmatprep.subr.mxu0 0.0
        %6213 = vmatpush2.msra.mxu0 0.0
        %6214 = vmatprep.subr.mxu0 0.0
        %6215 = vmatpush2.msra.mxu0 0.0
        %6216 = vmatprep.mubr.f32.mxu0 0.0
        %6217 = vmatmul.mubr.f32.gmra.mxu0 %v6150
        %v6218 = vpop.f32.mrf.mxu0
        %v6219 = vadd.f32 0.0, %v6218
        %v6220 = vpop.f32.mrf.mxu0
        %6221 = vdwg.mxu0
        %6230 = vrot.lane.b32.xlu0 %v5687, 24
        %v6231 = vpop.permute.xlu0 %6230
        %6232 = vrot.lane.b32.xlu0 %v5763, 24
        %v6233 = vpop.permute.xlu0 %6232
        %6234 = vrot.lane.b32.xlu0 %v5839, 24
        %v6235 = vpop.permute.xlu0 %6234
        %6236 = vrot.lane.b32.xlu0 %v5915, 24
        %v6237 = vpop.permute.xlu0 %6236
        %6238 = vrot.lane.b32.xlu0 %v5991, 24
        %v6239 = vpop.permute.xlu0 %6238
        %6240 = vrot.lane.b32.xlu0 %v6067, 24
        %v6241 = vpop.permute.xlu0 %6240
        %6242 = vrot.lane.b32.xlu0 %v6143, 24
        %v6243 = vpop.permute.xlu0 %6242
        %6244 = vrot.lane.b32.xlu0 %v6219, 24
        %v6245 = vpop.permute.xlu0 %6244
        %vm6254 = vcmask 261312
        %6255 = vst.msk [vmem:[#allocation2] sm:$0xff] %vm6254, %v6231
        %6256 = vst.msk [vmem:[#allocation2 + $0x8] sm:$0xff] %vm6254, %v6233
        %6257 = vst.msk [vmem:[#allocation2 + $0x10] sm:$0xff] %vm6254, %v6235
        %6258 = vst.msk [vmem:[#allocation2 + $0x18] sm:$0xff] %vm6254, %v6237
        %6259 = vst.msk [vmem:[#allocation2 + $0x20] sm:$0xff] %vm6254, %v6239
        %6260 = vst.msk [vmem:[#allocation2 + $0x28] sm:$0xff] %vm6254, %v6241
        %6261 = vst.msk [vmem:[#allocation2 + $0x30] sm:$0xff] %vm6254, %v6243
        %6262 = vst.msk [vmem:[#allocation2 + $0x38] sm:$0xff] %vm6254, %v6245
        %v6263 = vld [vmem:[#allocation2] sm:$0xff]
        %v6264 = vld [vmem:[#allocation2 + $0x8] sm:$0xff]
        %v6265 = vld [vmem:[#allocation2 + $0x10] sm:$0xff]
        %v6266 = vld [vmem:[#allocation2 + $0x18] sm:$0xff]
        %v6267 = vld [vmem:[#allocation2 + $0x20] sm:$0xff]
        %v6268 = vld [vmem:[#allocation2 + $0x28] sm:$0xff]
        %v6269 = vld [vmem:[#allocation2 + $0x30] sm:$0xff]
        %v6270 = vld [vmem:[#allocation2 + $0x38] sm:$0xff]
        %v6271 = vld [vmem:[#allocation14] sm:$0xff]
        %v6272 = vld [vmem:[#allocation14 + $0x8] sm:$0xff]
        %v6273 = vld [vmem:[#allocation14 + $0x10] sm:$0xff]
        %v6274 = vld [vmem:[#allocation14 + $0x18] sm:$0xff]
        %v6275 = vld [vmem:[%s7] sm:$0x1]
        %v6277 = vlaneseq
        %v6278 = vshrl.u32 %v6277, 7
        %v6279 = vsub.s32 0, %v6278
        %v6280 = vrot.slane %v6275, %v6279
        %v6283 = vsel %vm487, %v6263, 0
        %v6286 = vsel %vm487, %v6264, 0
        %v6289 = vsel %vm487, %v6265, 0
        %v6292 = vsel %vm487, %v6266, 0
        %v6295 = vsel %vm487, %v6267, 0
        %v6298 = vsel %vm487, %v6268, 0
        %v6301 = vsel %vm487, %v6269, 0
        %v6304 = vsel %vm487, %v6270, 0
        %6306 = vmatprep.subr.mxu0 0.0
        %6307 = vmatpush1.msra.mxu0 0.0
        %6308 = vmatprep.subr.mxu0 0.0
        %6309 = vmatpush1.msra.mxu0 0.0
        %6310 = vmatprep.subr.mxu0 0.0
        %6311 = vmatpush1.msra.mxu0 0.0
        %6312 = vmatprep.subr.mxu0 0.0
        %6313 = vmatpush1.msra.mxu0 0.0
        %6314 = vmatprep.subr.mxu0 0.0
        %6315 = vmatpush1.msra.mxu0 0.0
        %6316 = vmatprep.subr.mxu0 0.0
        %6317 = vmatpush1.msra.mxu0 0.0
        %6318 = vmatprep.subr.mxu0 0.0
        %6319 = vmatpush1.msra.mxu0 0.0
        %6320 = vmatprep.subr.mxu0 0.0
        %6321 = vmatpush1.msra.mxu0 0.0
        %6322 = vmatprep.subr.mxu0 0.0
        %6323 = vmatpush1.msra.mxu0 0.0
        %6324 = vmatprep.subr.mxu0 0.0
        %6325 = vmatpush1.msra.mxu0 0.0
        %6326 = vmatprep.subr.mxu0 0.0
        %6327 = vmatpush1.msra.mxu0 0.0
        %6328 = vmatprep.subr.mxu0 0.0
        %6329 = vmatpush1.msra.mxu0 0.0
        %6330 = vmatprep.subr.mxu0 0.0
        %6331 = vmatpush1.msra.mxu0 %v6274
        %6332 = vmatprep.subr.mxu0 0.0
        %6333 = vmatpush1.msra.mxu0 %v6273
        %6334 = vmatprep.subr.mxu0 0.0
        %6335 = vmatpush1.msra.mxu0 %v6272
        %6336 = vmatprep.subr.mxu0 0.0
        %6337 = vmatpush1.msra.mxu0 %v6271
        %6338 = vmatprep.subr.mxu0 0.0
        %6339 = vmatpush2.msra.mxu0 0.0
        %6340 = vmatprep.subr.mxu0 0.0
        %6341 = vmatpush2.msra.mxu0 0.0
        %6342 = vmatprep.subr.mxu0 0.0
        %6343 = vmatpush2.msra.mxu0 0.0
        %6344 = vmatprep.subr.mxu0 0.0
        %6345 = vmatpush2.msra.mxu0 0.0
        %6346 = vmatprep.subr.mxu0 0.0
        %6347 = vmatpush2.msra.mxu0 0.0
        %6348 = vmatprep.subr.mxu0 0.0
        %6349 = vmatpush2.msra.mxu0 0.0
        %6350 = vmatprep.subr.mxu0 0.0
        %6351 = vmatpush2.msra.mxu0 0.0
        %6352 = vmatprep.subr.mxu0 0.0
        %6353 = vmatpush2.msra.mxu0 0.0
        %6354 = vmatprep.subr.mxu0 0.0
        %6355 = vmatpush2.msra.mxu0 0.0
        %6356 = vmatprep.subr.mxu0 0.0
        %6357 = vmatpush2.msra.mxu0 0.0
        %6358 = vmatprep.subr.mxu0 0.0
        %6359 = vmatpush2.msra.mxu0 0.0
        %6360 = vmatprep.subr.mxu0 0.0
        %6361 = vmatpush2.msra.mxu0 0.0
        %6362 = vmatprep.subr.mxu0 0.0
        %6363 = vmatpush2.msra.mxu0 0.0
        %6364 = vmatprep.subr.mxu0 0.0
        %6365 = vmatpush2.msra.mxu0 0.0
        %6366 = vmatprep.subr.mxu0 0.0
        %6367 = vmatpush2.msra.mxu0 0.0
        %6368 = vmatprep.subr.mxu0 0.0
        %6369 = vmatpush2.msra.mxu0 0.0
        %6370 = vmatprep.mubr.f32.mxu0 0.0
        %6371 = vmatmul.mubr.f32.gmra.mxu0 %v6283
        %v6372 = vpop.f32.mrf.mxu0
        %v6373 = vadd.f32 %v6280, %v6372
        %v6374 = vpop.f32.mrf.mxu0
        %6375 = vmatprep.mubr.f32.mxu0 0.0
        %6376 = vmatmul.mubr.f32.gmra.mxu0 %v6286
        %v6377 = vpop.f32.mrf.mxu0
        %v6378 = vadd.f32 %v6280, %v6377
        %v6379 = vpop.f32.mrf.mxu0
        %6380 = vmatprep.mubr.f32.mxu0 0.0
        %6381 = vmatmul.mubr.f32.gmra.mxu0 %v6289
        %v6382 = vpop.f32.mrf.mxu0
        %v6383 = vadd.f32 %v6280, %v6382
        %v6384 = vpop.f32.mrf.mxu0
        %6385 = vmatprep.mubr.f32.mxu0 0.0
        %6386 = vmatmul.mubr.f32.gmra.mxu0 %v6292
        %v6387 = vpop.f32.mrf.mxu0
        %v6388 = vadd.f32 %v6280, %v6387
        %v6389 = vpop.f32.mrf.mxu0
        %6390 = vmatprep.mubr.f32.mxu0 0.0
        %6391 = vmatmul.mubr.f32.gmra.mxu0 %v6295
        %v6392 = vpop.f32.mrf.mxu0
        %v6393 = vadd.f32 %v6280, %v6392
        %v6394 = vpop.f32.mrf.mxu0
        %6395 = vmatprep.mubr.f32.mxu0 0.0
        %6396 = vmatmul.mubr.f32.gmra.mxu0 %v6298
        %v6397 = vpop.f32.mrf.mxu0
        %v6398 = vadd.f32 %v6280, %v6397
        %v6399 = vpop.f32.mrf.mxu0
        %6400 = vmatprep.mubr.f32.mxu0 0.0
        %6401 = vmatmul.mubr.f32.gmra.mxu0 %v6301
        %v6402 = vpop.f32.mrf.mxu0
        %v6403 = vadd.f32 %v6280, %v6402
        %v6404 = vpop.f32.mrf.mxu0
        %6405 = vmatprep.mubr.f32.mxu0 0.0
        %6406 = vmatmul.mubr.f32.gmra.mxu0 %v6304
        %v6407 = vpop.f32.mrf.mxu0
        %v6408 = vadd.f32 %v6280, %v6407
        %v6409 = vpop.f32.mrf.mxu0
        %6410 = vdwg.mxu0
        %6411 = vst.msk [vmem:[%s458] sm:$0xff] %vm487, %v6373
        %6412 = vst.msk [vmem:[%s458 + $0x8] sm:$0xff] %vm487, %v6378
        %6413 = vst.msk [vmem:[%s458 + $0x10] sm:$0xff] %vm487, %v6383
        %6414 = vst.msk [vmem:[%s458 + $0x18] sm:$0xff] %vm487, %v6388
        %6415 = vst.msk [vmem:[%s458 + $0x20] sm:$0xff] %vm487, %v6393
        %6416 = vst.msk [vmem:[%s458 + $0x28] sm:$0xff] %vm487, %v6398
        %6417 = vst.msk [vmem:[%s458 + $0x30] sm:$0xff] %vm487, %v6403
        %6418 = vst.msk [vmem:[%s458 + $0x38] sm:$0xff] %vm487, %v6408
        %s6419 = sand.u32 %s221, 1
        %s6420 = scalar_lea.sflag [#allocation5], %s6419
        %s6421 = sand.u32 %s221, 1
        %s6422 = smul.addr %s6421, 64
        %s6423 = scalar_lea.vmem [#allocation15], %s6422
        // Predicated region
        $region81: #{multi_head_attention_forward.1} parent=51 // pred_check
          %p6424 = pneg %p231
        $region82: #{multi_head_attention_forward.1} parent=51 // pred_check_branch
          %6426 = sbr.rel (%p6424) target = $region84
        $region83: #{multi_head_attention_forward.1} parent=51 // pred_region
          %s6428 = ssub.s32 1024, 1024
          %6429 = vsyncadd %s6420, %s6428
          %s6430 = smul.addr %s30, 8
          %s6431 = smul.addr %s6430, 128
          %s6432 = scalar_lea.hbm %s8, %s6431
          %s6433 = sshll.u32 %s6423, 4
          %s6434 = int_to_ptr.vmem [resolvable:$true] %s6433
          %6439 = dma.vmem_to_hbm [thread:$0]  %s6434, 1024, %s6432, %s6420, 128, 128, 8
        $region84: #{multi_head_attention_forward.1} parent=51 // pred_fallthru
          _
      $region52: #{multi_head_attention_forward.1} parent=5 // pred_fallthru
        _
      %p6440 = scmp.le.s32.totalorder 2, %s25
      // Predicated region
      $region85: #{multi_head_attention_forward.1} parent=5 // pred_check
        %p6441 = pneg %p6440
      $region86: #{multi_head_attention_forward.1} parent=5 // pred_check_branch
        %6443 = sbr.rel (%p6441) target = $region88
      $region87: #{multi_head_attention_forward.1} parent=5 // pred_region
        %s6444 = ssub.s32 %s25, 2
        // Predicated region
        $region89: #{multi_head_attention_forward.1} parent=87 // pred_check
          %p6445 = pneg %p237
        $region90: #{multi_head_attention_forward.1} parent=87 // pred_check_branch
          %6447 = sbr.rel (%p6445) target = $region92
        $region91: #{multi_head_attention_forward.1} parent=87 // pred_region
          %s6448 = sand.u32 %s222, 1
          %s6449 = scalar_lea.sflag [#allocation5], %s6448
          %s6450 = sand.u32 %s222, 1
          %s6451 = smul.addr %s6450, 64
          %s6452 = scalar_lea.vmem [#allocation15], %s6451
          %6453 = dma.done %s6449, 1024
        $region92: #{multi_head_attention_forward.1} parent=87 // pred_fallthru
          _
      $region88: #{multi_head_attention_forward.1} parent=5 // pred_fallthru
        _
    $region6: #{multi_head_attention_forward.1} parent=1 // loop_footer
      %s29 = sadd.s32 1, %s25
    $region7: #{multi_head_attention_forward.1} parent=1 // loop_footer_branch
      %24 = sbr.rel target = $region3
    $region8: #{multi_head_attention_forward.1} parent=1 // loop_exit
      _
    %6454 = vsyncpa [#allocation4], 1
    %s6455 = scalar_lea.sflag [#allocation4], 1
    %6456 = vsyncpa %s6455, 1
    %6457 = vsyncpa [#allocation7], 1
    %s6458 = scalar_lea.sflag [#allocation7], 1
    %6459 = vsyncpa %s6458, 1
    %6460 = vsyncpa [#allocation10], 1
    %6461 = vsyncpa [#allocation13], 1
    %6462 = vsyncpa [#allocation5], 1
    %s6463 = scalar_lea.sflag [#allocation5], 1
    %6464 = vsyncpa %s6463, 1

</llo_original>
